<compile_context>
chip_gen: v7x
topology: tpu7x:2x2x1
jax: 0.10.0
libtpu: 0.0.40
codegen_flags: <defaults>
</compile_context>

<pallas_src>
import functools

import jax
import jax.numpy as jnp
from jax import lax
from jax.experimental import pallas as pl
from jax.experimental.pallas import tpu as pltpu


def _sigmoid(x):
    return 1.0 / (1.0 + jnp.exp(-x))


def _gelu_tanh(x):
    c = 0.7978845608028654
    return 0.5 * x * (1.0 + jnp.tanh(c * (x + 0.044715 * x * x * x)))


# --------------------------------- the kernel ---------------------------------

def block_kernel(x_im2col_ref, y_ref,
                 hw_ref, m3_ref, m7_ref, amask_ab_ref, amask_c_ref,
                 cs_ref,
                 auxw_ref, rw1_ref, rw2_ref,
                 wyb_ref, byb_ref, dwyb_ref, dbyb_ref,
                 wd_ref, bd_ref, dwd_ref, dbd_ref,
                 wpoab_ref, bpoab_ref, tempab_ref,
                 wkvc_ref, bkvc_ref, dwkvc_ref, dbkvc_ref,
                 wpoc_ref, bpoc_ref, tempc_ref,
                 mod1w_ref, mod2w1_ref, mod2w2_ref, modcw_ref, modcb_ref,
                 alpha_ref, beta_ref,
                 out_ref, *, H, W, segments):
    C = y_ref.shape[1]
    P = y_ref.shape[2]
    f32, bf16 = jnp.float32, jnp.bfloat16

    yb = y_ref[0]                                   # (C, P) f32
    yb16 = yb.astype(bf16)                          # cast once, reused

    # ----- depthwise 3x3 with precomputed edge-mask table (m3_ref: (9, P)) -----
    def dwconv3x3(x, w9, b):
        acc = w9[:, 4:5] * x + b                    # centre tap (dh=0, dw=0)
        for kh in range(3):
            for kw in range(3):
                kk = kh * 3 + kw
                if kk == 4:
                    continue
                s = (kh - 1) * W + (kw - 1)
                rolled = pltpu.roll(x, shift=(-s) % P, axis=1)
                acc = acc + w9[:, kk:kk + 1] * (rolled * m3_ref[kk:kk + 1, :])
        return acc

    # ----- block-diagonal multi-head "transposed" channel attention core -----
    def attn_core(q, k, v, temp, amask, wpo, bpo):
        q = q * lax.rsqrt(jnp.sum(q * q, axis=1, keepdims=True) + 1e-24)
        k = k * lax.rsqrt(jnp.sum(k * k, axis=1, keepdims=True) + 1e-24)
        a = lax.dot_general(q.astype(bf16), k.astype(bf16),
                            (((1,), (1,)), ((), ())), preferred_element_type=f32)
        a = a * temp + amask                        # per-row head temperature + block mask
        a = a - jnp.max(a, axis=1, keepdims=True)
        e = jnp.exp(a)
        p = e * pl.reciprocal(jnp.sum(e, axis=1, keepdims=True), approx=True)
        o = jnp.dot(p.astype(bf16), v.astype(bf16), preferred_element_type=f32)
        return jnp.dot(wpo, o.astype(bf16), preferred_element_type=f32) + bpo

    # -------------------- fft(): aux conv + adaptive frequency split --------------------
    # aux 3x3 conv as one im2col matmul (C, 9*Cin)@(9*Cin, P)
    aux = jnp.dot(auxw_ref[...], x_im2col_ref[0], preferred_element_type=f32)   # (C, P)

    pooled = jnp.mean(aux, axis=1, keepdims=True)                                # (C, 1)
    z = _gelu_tanh(jnp.dot(rw1_ref[...], pooled, preferred_element_type=f32))
    thr = _sigmoid(jnp.dot(rw2_ref[...], z, preferred_element_type=f32))         # (2, 1)
    seg_h = jnp.floor(float(H // segments) * thr[0:1, 0:1])
    seg_w = jnp.floor(float(W // segments) * thr[1:2, 0:1])

    hrow = hw_ref[0:1, :]
    wrow = hw_ref[1:2, :]
    # fftshift/unshift folded into the frequency index set: low-pass rectangle mask
    fmask = (((hrow < seg_h) | (hrow >= float(H) - seg_h)) &
             ((wrow < seg_w) | (wrow >= float(W) - seg_w))).astype(f32)          # (1, P)
    inv_p = 1.0 / float(P)
    fm_pos = fmask * inv_p
    fm_neg = fmask * (-inv_p)

    # forward DFT (norm='forward'): one bf16 matmul against [cos | sin]
    t2 = jnp.dot(aux.astype(bf16), cs_ref[...], preferred_element_type=f32)      # (C, 2P)
    m_re = t2[:, 0:P] * fm_pos
    m_im = t2[:, P:2 * P] * fm_neg
    # inverse DFT of the masked (low-pass) spectrum: one bf16 matmul on stacked [re; im]
    m_stack = jnp.concatenate([m_re, m_im], axis=0).astype(bf16)                 # (2C, P)
    r = jnp.dot(m_stack, cs_ref[...], preferred_element_type=f32)                # (2C, 2P)
    l_re = r[0:C, 0:P] - r[C:2 * C, P:2 * P]
    l_im = r[0:C, P:2 * P] + r[C:2 * C, 0:P]
    low_detail = jnp.sqrt(l_re * l_re + l_im * l_im)
    d_re = aux - l_re                               # high = x - low (complex)
    high_detail = jnp.sqrt(d_re * d_re + l_im * l_im)

    # -------------------- fused projections --------------------
    # everything sourced from y: [kv_low(2C) ; kv_high(2C) ; q_agg(C)]
    z_yb = jnp.dot(wyb_ref[...], yb16, preferred_element_type=f32) + byb_ref[...]
    z_yb = dwconv3x3(z_yb, dwyb_ref[...], dbyb_ref[...])                         # (5C, P)
    k_ab = jnp.concatenate([z_yb[0:C], z_yb[2 * C:3 * C]], axis=0)               # (2C, P)
    v_ab = jnp.concatenate([z_yb[C:2 * C], z_yb[3 * C:4 * C]], axis=0)           # (2C, P)
    q_c = z_yb[4 * C:5 * C]                                                      # (C, P)

    # detail-sourced q's: rows [0:C] from high_detail (cross_layer_low),
    # rows [C:2C] from low_detail (cross_layer_high); block-diagonal weight.
    xd = jnp.concatenate([high_detail, low_detail], axis=0).astype(bf16)         # (2C, P)
    q_ab = jnp.dot(wd_ref[...], xd, preferred_element_type=f32) + bd_ref[...]
    q_ab = dwconv3x3(q_ab, dwd_ref[...], dbd_ref[...])                           # (2C, P)

    # fused low/high cross channel-attention (2C wide, block-diagonal heads)
    o_ab = attn_core(q_ab, k_ab, v_ab, tempab_ref[...], amask_ab_ref[...],
                     wpoab_ref[...], bpoab_ref[...])                             # (2C, P)
    feat_high = o_ab[0:C]        # cross_layer_low(high_detail, y)
    feat_low = o_ab[C:2 * C]     # cross_layer_high(low_detail, y)

    # -------------------- frequency refinement (modulate) --------------------
    # modulate1(high): 7x7 spatial conv over [channel-max, channel-mean]
    two = jnp.concatenate([jnp.max(feat_high, axis=0, keepdims=True),
                           jnp.mean(feat_high, axis=0, keepdims=True)], axis=0)  # (2, P)
    acc7 = mod1w_ref[:, 24:25] * two                # centre tap (dh=0, dw=0)
    for kh in range(7):
        for kw in range(7):
            kk = kh * 7 + kw
            if kk == 24:
                continue
            s = (kh - 3) * W + (kw - 3)
            rolled = pltpu.roll(two, shift=(-s) % P, axis=1)
            acc7 = acc7 + mod1w_ref[:, kk:kk + 1] * (rolled * m7_ref[kk:kk + 1, :])
    weight1 = _sigmoid(jnp.sum(acc7, axis=0, keepdims=True))                     # (1, P)

    # modulate2(low): channel gate from global avg/max pooling through a shared MLP
    def mod2_mlp(zc):
        z1 = jnp.maximum(jnp.dot(mod2w1_ref[...], zc, preferred_element_type=f32), 0.0)
        return jnp.dot(mod2w2_ref[...], z1, preferred_element_type=f32)

    weight2 = _sigmoid(mod2_mlp(jnp.mean(feat_low, axis=1, keepdims=True)) +
                       mod2_mlp(jnp.max(feat_low, axis=1, keepdims=True)))       # (C, 1)

    agg = feat_low * weight1 + feat_high * weight2
    aggregate = (jnp.dot(modcw_ref[...], agg.astype(bf16), preferred_element_type=f32)
                 + modcb_ref[...])

    # -------------------- final cross attention (q from y, k/v from aggregate) --------------------
    kv_c = jnp.dot(wkvc_ref[...], aggregate.astype(bf16),
                   preferred_element_type=f32) + bkvc_ref[...]
    kv_c = dwconv3x3(kv_c, dwkvc_ref[...], dbkvc_ref[...])                       # (2C, P)
    out_c = attn_core(q_c, kv_c[0:C], kv_c[C:2 * C], tempc_ref[...], amask_c_ref[...],
                      wpoc_ref[...], bpoc_ref[...])                              # (C, P)

    out_ref[0] = (out_c * alpha_ref[...] + yb * beta_ref[...]).astype(out_ref.dtype)


# --------------------------------- wrapper ---------------------------------

def _bilinear_resize_nchw(x, out_h, out_w):
    """Matches F.interpolate(x, (out_h, out_w), mode='bilinear', align_corners=False)."""
    _, _, h_in, w_in = x.shape
    if (h_in, w_in) == (out_h, out_w):
        return x

    def src(out_size, in_size):
        i = (jnp.arange(out_size, dtype=jnp.float32) + 0.5) * (in_size / out_size) - 0.5
        i = jnp.maximum(i, 0.0)
        i0 = jnp.minimum(jnp.floor(i).astype(jnp.int32), in_size - 1)
        i1 = jnp.minimum(i0 + 1, in_size - 1)
        return i0, i1, i - i0.astype(jnp.float32)

    h0, h1, fh = src(out_h, h_in)
    w0, w1, fw = src(out_w, w_in)
    fh = fh[None, None, :, None]
    fw = fw[None, None, None, :]
    xh = x[:, :, h0, :] * (1.0 - fh) + x[:, :, h1, :] * fh
    return xh[:, :, :, w0] * (1.0 - fw) + xh[:, :, :, w1] * fw


def block_forward(x, y, params, num_heads, segments=128):
    B, Cin, _, _ = x.shape
    _, C, H, W = y.shape
    P = H * W
    cph = C // num_heads
    f32, bf16 = jnp.float32, jnp.bfloat16

    # --- bilinear upsample + im2col for the 3x3 aux conv (wrapper-side layout plumbing) ---
    x_up = _bilinear_resize_nchw(x.astype(f32), H, W)                     # (B, Cin, H, W)
    xpad = jnp.pad(x_up, ((0, 0), (0, 0), (1, 1), (1, 1)))
    cols = [xpad[:, :, 1 + dh:1 + dh + H, 1 + dw:1 + dw + W]
            for dh in (-1, 0, 1) for dw in (-1, 0, 1)]
    x_im2col = jnp.stack(cols, axis=1).reshape(B, 9 * Cin, P).astype(bf16)

    y_flat = y.reshape(B, C, P).astype(f32)

    # --- exact 2-D DFT twiddles, fused [cos | sin], bf16 for single-pass MXU ---
    u = jnp.arange(P, dtype=jnp.int32) // W
    v = jnp.arange(P, dtype=jnp.int32) % W
    theta = 2.0 * jnp.pi * (((u[:, None] * u[None, :]) % H) / H +
                            ((v[:, None] * v[None, :]) % W) / W)
    csmat = jnp.concatenate([jnp.cos(theta), jnp.sin(theta)], axis=1).astype(bf16)  # (P, 2P)

    # --- static index / edge-mask / attention-mask tables (hoisted out of the kernel) ---
    hh = jnp.arange(P, dtype=jnp.int32) // W
    ww = jnp.arange(P, dtype=jnp.int32) % W
    hw_idx = jnp.stack([hh, ww]).astype(f32)                              # (2, P)

    def tap_masks(r):
        rows = []
        for kh in range(2 * r + 1):
            for kw in range(2 * r + 1):
                dh, dw = kh - r, kw - r
                ok = (hh + dh >= 0) & (hh + dh < H) & (ww + dw >= 0) & (ww + dw < W)
                rows.append(ok.astype(f32))
        return jnp.stack(rows)

    m3 = tap_masks(1)                                                     # (9, P)
    m7 = tap_masks(3)                                                     # (49, P)

    def additive_block_mask(n):
        rr = jnp.arange(n)[:, None] // cph
        cc = jnp.arange(n)[None, :] // cph
        return jnp.where(rr == cc, 0.0, -1e30).astype(f32)

    amask_ab = additive_block_mask(2 * C)
    amask_c = additive_block_mask(C)

    # --- packed / fused weights ---
    def blockdiag(a, b):
        za = jnp.zeros((a.shape[0], b.shape[1]), f32)
        zb = jnp.zeros((b.shape[0], a.shape[1]), f32)
        return jnp.concatenate([jnp.concatenate([a, za], axis=1),
                                jnp.concatenate([zb, b], axis=1)], axis=0)

    A = params["cross_layer_low"]     # consumes high_detail
    Bm = params["cross_layer_high"]   # consumes low_detail
    G = params["cross_layer_agg"]

    auxw = jnp.transpose(params["aux_conv_w"], (0, 2, 3, 1)).reshape(C, 9 * Cin).astype(bf16)
    rw1 = params["rate_w1"].reshape(C // 8, C).astype(f32)
    rw2 = params["rate_w2"].reshape(2, C // 8).astype(f32)

    # fused y-sourced projection: [kv_low ; kv_high ; q_agg]  -> (5C, C)
    w_yb = jnp.concatenate([A["kv_w"].reshape(2 * C, C),
                            Bm["kv_w"].reshape(2 * C, C),
                            G["q_w"].reshape(C, C)], axis=0).astype(bf16)
    b_yb = jnp.concatenate([A["kv_b"], Bm["kv_b"], G["q_b"]]).reshape(5 * C, 1).astype(f32)
    dw_yb = jnp.concatenate([A["kv_dw_w"].reshape(2 * C, 9),
                             Bm["kv_dw_w"].reshape(2 * C, 9),
                             G["q_dw_w"].reshape(C, 9)], axis=0).astype(f32)
    db_yb = jnp.concatenate([A["kv_dw_b"], Bm["kv_dw_b"], G["q_dw_b"]]).reshape(5 * C, 1).astype(f32)

    # fused detail-sourced q projection (block-diagonal): [q_low ; q_high]
    w_d = blockdiag(A["q_w"].reshape(C, C), Bm["q_w"].reshape(C, C)).astype(bf16)
    b_d = jnp.concatenate([A["q_b"], Bm["q_b"]]).reshape(2 * C, 1).astype(f32)
    dw_d = jnp.concatenate([A["q_dw_w"].reshape(C, 9),
                            Bm["q_dw_w"].reshape(C, 9)], axis=0).astype(f32)
    db_d = jnp.concatenate([A["q_dw_b"], Bm["q_dw_b"]]).reshape(2 * C, 1).astype(f32)

    wpo_ab = blockdiag(A["po_w"].reshape(C, C), Bm["po_w"].reshape(C, C)).astype(bf16)
    bpo_ab = jnp.concatenate([A["po_b"], Bm["po_b"]]).reshape(2 * C, 1).astype(f32)
    temp_ab = jnp.concatenate(
        [jnp.repeat(A["temperature"].reshape(num_heads), cph),
         jnp.repeat(Bm["temperature"].reshape(num_heads), cph)]).reshape(2 * C, 1).astype(f32)

    w_kvc = G["kv_w"].reshape(2 * C, C).astype(bf16)
    b_kvc = G["kv_b"].reshape(2 * C, 1).astype(f32)
    dw_kvc = G["kv_dw_w"].reshape(2 * C, 9).astype(f32)
    db_kvc = G["kv_dw_b"].reshape(2 * C, 1).astype(f32)
    wpo_c = G["po_w"].reshape(C, C).astype(bf16)
    bpo_c = G["po_b"].reshape(C, 1).astype(f32)
    temp_c = jnp.repeat(G["temperature"].reshape(num_heads), cph).reshape(C, 1).astype(f32)

    mod1w = params["mod1_spatial_w"].reshape(2, 49).astype(f32)
    mod2w1 = params["mod2_w1"].reshape(C // 16, C).astype(f32)
    mod2w2 = params["mod2_w2"].reshape(C, C // 16).astype(f32)
    modcw = params["mod_conv_w"].reshape(C, C).astype(bf16)
    modcb = params["mod_conv_b"].reshape(C, 1).astype(f32)
    alpha = params["param_alpha"].reshape(C, 1).astype(f32)
    beta = params["param_beta"].reshape(C, 1).astype(f32)

    args = [x_im2col, y_flat,
            hw_idx, m3, m7, amask_ab, amask_c,
            csmat,
            auxw, rw1, rw2,
            w_yb, b_yb, dw_yb, db_yb,
            w_d, b_d, dw_d, db_d,
            wpo_ab, bpo_ab, temp_ab,
            w_kvc, b_kvc, dw_kvc, db_kvc,
            wpo_c, bpo_c, temp_c,
            mod1w, mod2w1, mod2w2, modcw, modcb,
            alpha, beta]

    def bspec(a):
        if a.ndim == 3:
            return pl.BlockSpec((1,) + a.shape[1:], lambda b: (b, 0, 0))
        return pl.BlockSpec(a.shape, lambda b: (0, 0))

    out = pl.pallas_call(
        functools.partial(block_kernel, H=H, W=W, segments=segments),
        out_shape=jax.ShapeDtypeStruct((B, C, P), jnp.float32),
        grid_spec=pltpu.PrefetchScalarGridSpec(
            num_scalar_prefetch=0,
            grid=(B,),
            in_specs=[bspec(a) for a in args],
            out_specs=pl.BlockSpec((1, C, P), lambda b: (b, 0, 0)),
        ),
        compiler_params=pltpu.CompilerParams(
            dimension_semantics=("parallel",),   # B=2 -> both v7x TensorCores busy
            vmem_limit_bytes=32 * 1024 * 1024,   # safe on v5e/v6e/v7x; ~2 MiB actually used here
        ),
    )(*args)

    return out.reshape(B, C, H, W)


# --------------------------------- params ---------------------------------

def init_params(key, dim, num_heads, input_dim=3):
    keys = iter(jax.random.split(key, 48))

    def n(*s):
        return (0.1 * jax.random.normal(next(keys), s)).astype(jnp.float32)

    def mm_params():
        return {
            "temperature": jnp.ones((num_heads, 1, 1), jnp.float32),
            "q_w": n(dim, dim, 1, 1), "q_b": n(dim),
            "q_dw_w": n(dim, 1, 3, 3), "q_dw_b": n(dim),
            "kv_w": n(2 * dim, dim, 1, 1), "kv_b": n(2 * dim),
            "kv_dw_w": n(2 * dim, 1, 3, 3), "kv_dw_b": n(2 * dim),
            "po_w": n(dim, dim, 1, 1), "po_b": n(dim),
        }

    return {
        "aux_conv_w": n(dim, input_dim, 3, 3),
        "rate_w1": n(dim // 8, dim, 1, 1),
        "rate_w2": n(2, dim // 8, 1, 1),
        "cross_layer_low": mm_params(),
        "cross_layer_high": mm_params(),
        "cross_layer_agg": mm_params(),
        "mod1_spatial_w": n(1, 2, 7, 7),
        "mod2_w1": n(dim // 16, dim, 1, 1),
        "mod2_w2": n(dim, dim // 16, 1, 1),
        "mod_conv_w": n(dim, dim, 1, 1),
        "mod_conv_b": n(dim),
        # PyTorch initializes alpha=0, beta=1; randomized here so the full path is exercised.
        "param_alpha": n(dim, 1, 1),
        "param_beta": 1.0 + n(dim, 1, 1),
    }


if __name__ == "__main__":
    dim, num_heads, input_dim = 16, 2, 3
    B, H, W = 2, 16, 16
    Hx, Wx = 8, 8

    key = jax.random.PRNGKey(0)
    kx, ky, kp = jax.random.split(key, 3)
    x = jax.random.normal(kx, (B, input_dim, Hx, Wx), dtype=jnp.float32)   # NCHW, like PyTorch
    y = jax.random.normal(ky, (B, dim, H, W), dtype=jnp.float32)
    params = init_params(kp, dim, num_heads, input_dim)

    # NOTE: segments=128 (PyTorch default) with H=W=16 gives H//segments == 0, i.e. an empty
    # low-pass mask — identical behaviour to the reference module at this size.
    fwd = jax.jit(functools.partial(block_forward, num_heads=num_heads))
    out = fwd(x, y, params)
    jax.block_until_ready(out)
    assert out.shape == y.shape and out.dtype == y.dtype
    print("KERNEL_OK")
</pallas_src>

<mosaic_0001>
module attributes {stable_mosaic.version = 11 : i64} {
  func.func @block_kernel(%arg0: i32, %arg1: memref<1x27x256xbf16, #tpu.memory_space<vmem>>, %arg2: memref<1x16x256xf32, #tpu.memory_space<vmem>>, %arg3: memref<2x256xf32, #tpu.memory_space<vmem>>, %arg4: memref<9x256xf32, #tpu.memory_space<vmem>>, %arg5: memref<49x256xf32, #tpu.memory_space<vmem>>, %arg6: memref<32x32xf32, #tpu.memory_space<vmem>>, %arg7: memref<16x16xf32, #tpu.memory_space<vmem>>, %arg8: memref<256x512xbf16, #tpu.memory_space<vmem>>, %arg9: memref<16x27xbf16, #tpu.memory_space<vmem>>, %arg10: memref<2x16xf32, #tpu.memory_space<vmem>>, %arg11: memref<2x2xf32, #tpu.memory_space<vmem>>, %arg12: memref<80x16xbf16, #tpu.memory_space<vmem>>, %arg13: memref<80x1xf32, #tpu.memory_space<vmem>>, %arg14: memref<80x9xf32, #tpu.memory_space<vmem>>, %arg15: memref<80x1xf32, #tpu.memory_space<vmem>>, %arg16: memref<32x32xbf16, #tpu.memory_space<vmem>>, %arg17: memref<32x1xf32, #tpu.memory_space<vmem>>, %arg18: memref<32x9xf32, #tpu.memory_space<vmem>>, %arg19: memref<32x1xf32, #tpu.memory_space<vmem>>, %arg20: memref<32x32xbf16, #tpu.memory_space<vmem>>, %arg21: memref<32x1xf32, #tpu.memory_space<vmem>>, %arg22: memref<32x1xf32, #tpu.memory_space<vmem>>, %arg23: memref<32x16xbf16, #tpu.memory_space<vmem>>, %arg24: memref<32x1xf32, #tpu.memory_space<vmem>>, %arg25: memref<32x9xf32, #tpu.memory_space<vmem>>, %arg26: memref<32x1xf32, #tpu.memory_space<vmem>>, %arg27: memref<16x16xbf16, #tpu.memory_space<vmem>>, %arg28: memref<16x1xf32, #tpu.memory_space<vmem>>, %arg29: memref<16x1xf32, #tpu.memory_space<vmem>>, %arg30: memref<2x49xf32, #tpu.memory_space<vmem>>, %arg31: memref<1x16xf32, #tpu.memory_space<vmem>>, %arg32: memref<16x1xf32, #tpu.memory_space<vmem>>, %arg33: memref<16x16xbf16, #tpu.memory_space<vmem>>, %arg34: memref<16x1xf32, #tpu.memory_space<vmem>>, %arg35: memref<16x1xf32, #tpu.memory_space<vmem>>, %arg36: memref<16x1xf32, #tpu.memory_space<vmem>>, %arg37: memref<1x16x256xf32, #tpu.memory_space<vmem>>) attributes {dimension_semantics = [#tpu.dimension_semantics<parallel>], iteration_bounds = array<i64: 2>, scalar_prefetch = 0 : i64, scratch_operands = 0 : i64, tpu.core_type = #tpu.core_type<tc>, window_params = [{transform_indices = @transform_0, window_bounds = array<i64: 1, 27, 256>}, {transform_indices = @transform_1, window_bounds = array<i64: 1, 16, 256>}, {pipeline_mode = #tpu.pipeline_mode<synchronous>, transform_indices = @transform_2, window_bounds = array<i64: 2, 256>}, {pipeline_mode = #tpu.pipeline_mode<synchronous>, transform_indices = @transform_3, window_bounds = array<i64: 9, 256>}, {pipeline_mode = #tpu.pipeline_mode<synchronous>, transform_indices = @transform_4, window_bounds = array<i64: 49, 256>}, {pipeline_mode = #tpu.pipeline_mode<synchronous>, transform_indices = @transform_5, window_bounds = array<i64: 32, 32>}, {pipeline_mode = #tpu.pipeline_mode<synchronous>, transform_indices = @transform_6, window_bounds = array<i64: 16, 16>}, {pipeline_mode = #tpu.pipeline_mode<synchronous>, transform_indices = @transform_7, window_bounds = array<i64: 256, 512>}, {pipeline_mode = #tpu.pipeline_mode<synchronous>, transform_indices = @transform_8, window_bounds = array<i64: 16, 27>}, {pipeline_mode = #tpu.pipeline_mode<synchronous>, transform_indices = @transform_9, window_bounds = array<i64: 2, 16>}, {pipeline_mode = #tpu.pipeline_mode<synchronous>, transform_indices = @transform_10, window_bounds = array<i64: 2, 2>}, {pipeline_mode = #tpu.pipeline_mode<synchronous>, transform_indices = @transform_11, window_bounds = array<i64: 80, 16>}, {pipeline_mode = #tpu.pipeline_mode<synchronous>, transform_indices = @transform_12, window_bounds = array<i64: 80, 1>}, {pipeline_mode = #tpu.pipeline_mode<synchronous>, transform_indices = @transform_13, window_bounds = array<i64: 80, 9>}, {pipeline_mode = #tpu.pipeline_mode<synchronous>, transform_indices = @transform_14, window_bounds = array<i64: 80, 1>}, {pipeline_mode = #tpu.pipeline_mode<synchronous>, transform_indices = @transform_15, window_bounds = array<i64: 32, 32>}, {pipeline_mode = #tpu.pipeline_mode<synchronous>, transform_indices = @transform_16, window_bounds = array<i64: 32, 1>}, {pipeline_mode = #tpu.pipeline_mode<synchronous>, transform_indices = @transform_17, window_bounds = array<i64: 32, 9>}, {pipeline_mode = #tpu.pipeline_mode<synchronous>, transform_indices = @transform_18, window_bounds = array<i64: 32, 1>}, {pipeline_mode = #tpu.pipeline_mode<synchronous>, transform_indices = @transform_19, window_bounds = array<i64: 32, 32>}, {pipeline_mode = #tpu.pipeline_mode<synchronous>, transform_indices = @transform_20, window_bounds = array<i64: 32, 1>}, {pipeline_mode = #tpu.pipeline_mode<synchronous>, transform_indices = @transform_21, window_bounds = array<i64: 32, 1>}, {pipeline_mode = #tpu.pipeline_mode<synchronous>, transform_indices = @transform_22, window_bounds = array<i64: 32, 16>}, {pipeline_mode = #tpu.pipeline_mode<synchronous>, transform_indices = @transform_23, window_bounds = array<i64: 32, 1>}, {pipeline_mode = #tpu.pipeline_mode<synchronous>, transform_indices = @transform_24, window_bounds = array<i64: 32, 9>}, {pipeline_mode = #tpu.pipeline_mode<synchronous>, transform_indices = @transform_25, window_bounds = array<i64: 32, 1>}, {pipeline_mode = #tpu.pipeline_mode<synchronous>, transform_indices = @transform_26, window_bounds = array<i64: 16, 16>}, {pipeline_mode = #tpu.pipeline_mode<synchronous>, transform_indices = @transform_27, window_bounds = array<i64: 16, 1>}, {pipeline_mode = #tpu.pipeline_mode<synchronous>, transform_indices = @transform_28, window_bounds = array<i64: 16, 1>}, {pipeline_mode = #tpu.pipeline_mode<synchronous>, transform_indices = @transform_29, window_bounds = array<i64: 2, 49>}, {pipeline_mode = #tpu.pipeline_mode<synchronous>, transform_indices = @transform_30, window_bounds = array<i64: 1, 16>}, {pipeline_mode = #tpu.pipeline_mode<synchronous>, transform_indices = @transform_31, window_bounds = array<i64: 16, 1>}, {pipeline_mode = #tpu.pipeline_mode<synchronous>, transform_indices = @transform_32, window_bounds = array<i64: 16, 16>}, {pipeline_mode = #tpu.pipeline_mode<synchronous>, transform_indices = @transform_33, window_bounds = array<i64: 16, 1>}, {pipeline_mode = #tpu.pipeline_mode<synchronous>, transform_indices = @transform_34, window_bounds = array<i64: 16, 1>}, {pipeline_mode = #tpu.pipeline_mode<synchronous>, transform_indices = @transform_35, window_bounds = array<i64: 16, 1>}, {transform_indices = @transform_36, window_bounds = array<i64: 1, 16, 256>}]} {
    %c0 = arith.constant 0 : index
    %c0_0 = arith.constant 0 : index
    %c0_1 = arith.constant 0 : index
    %0 = vector.load %arg2[%c0, %c0_0, %c0_1] : memref<1x16x256xf32, #tpu.memory_space<vmem>>, vector<1x16x256xf32>
    %1 = vector.shape_cast %0 : vector<1x16x256xf32> to vector<16x256xf32>
    %2 = arith.truncf %1 : vector<16x256xf32> to vector<16x256xbf16>
    %c0_2 = arith.constant 0 : index
    %c0_3 = arith.constant 0 : index
    %3 = vector.load %arg9[%c0_2, %c0_3] : memref<16x27xbf16, #tpu.memory_space<vmem>>, vector<16x27xbf16>
    %c0_4 = arith.constant 0 : index
    %c0_5 = arith.constant 0 : index
    %c0_6 = arith.constant 0 : index
    %4 = vector.load %arg1[%c0_4, %c0_5, %c0_6] : memref<1x27x256xbf16, #tpu.memory_space<vmem>>, vector<1x27x256xbf16>
    %5 = vector.shape_cast %4 : vector<1x27x256xbf16> to vector<27x256xbf16>
    %cst = arith.constant dense<0.000000e+00> : vector<16x256xf32>
    %6 = tpu.matmul %3, %5, %cst {dimension_numbers = #tpu.dot_dimension_numbers<[1], [0], [0], [1], [0, 0, 1, 1], [], []>} : vector<16x27xbf16>, vector<27x256xbf16>, vector<16x256xf32> -> vector<16x256xf32>
    %cst_7 = arith.constant dense<0.000000e+00> : vector<16xf32>
    %7 = vector.multi_reduction <add>, %6, %cst_7 [1] : vector<16x256xf32> to vector<16xf32>
    %8 = vector.shape_cast %7 : vector<16xf32> to vector<16x1xf32>
    %cst_8 = arith.constant 2.560000e+02 : f32
    %9 = vector.broadcast %cst_8 : f32 to vector<16x1xf32>
    %10 = arith.divf %8, %9 : vector<16x1xf32>
    %c0_9 = arith.constant 0 : index
    %c0_10 = arith.constant 0 : index
    %11 = vector.load %arg10[%c0_9, %c0_10] : memref<2x16xf32, #tpu.memory_space<vmem>>, vector<2x16xf32>
    %cst_11 = arith.constant dense<0.000000e+00> : vector<2x1xf32>
    %12 = tpu.matmul %11, %10, %cst_11 {dimension_numbers = #tpu.dot_dimension_numbers<[1], [0], [0], [1], [0, 0, 1, 1], [], []>} : vector<2x16xf32>, vector<16x1xf32>, vector<2x1xf32> -> vector<2x1xf32>
    %cst_12 = arith.constant 5.000000e-01 : f32
    %13 = vector.broadcast %cst_12 : f32 to vector<2x1xf32>
    %14 = arith.mulf %13, %12 : vector<2x1xf32>
    %cst_13 = arith.constant 4.471500e-02 : f32
    %15 = vector.broadcast %cst_13 : f32 to vector<2x1xf32>
    %16 = arith.mulf %15, %12 : vector<2x1xf32>
    %17 = arith.mulf %16, %12 : vector<2x1xf32>
    %18 = arith.mulf %17, %12 : vector<2x1xf32>
    %19 = arith.addf %12, %18 : vector<2x1xf32>
    %cst_14 = arith.constant 0.797884583 : f32
    %20 = vector.broadcast %cst_14 : f32 to vector<2x1xf32>
    %21 = arith.mulf %20, %19 : vector<2x1xf32>
    %22 = math.tanh %21 : vector<2x1xf32>
    %cst_15 = arith.constant 1.000000e+00 : f32
    %23 = vector.broadcast %cst_15 : f32 to vector<2x1xf32>
    %24 = arith.addf %23, %22 : vector<2x1xf32>
    %25 = arith.mulf %14, %24 : vector<2x1xf32>
    %c0_16 = arith.constant 0 : index
    %c0_17 = arith.constant 0 : index
    %26 = vector.load %arg11[%c0_16, %c0_17] : memref<2x2xf32, #tpu.memory_space<vmem>>, vector<2x2xf32>
    %cst_18 = arith.constant dense<0.000000e+00> : vector<2x1xf32>
    %27 = tpu.matmul %26, %25, %cst_18 {dimension_numbers = #tpu.dot_dimension_numbers<[1], [0], [0], [1], [0, 0, 1, 1], [], []>} : vector<2x2xf32>, vector<2x1xf32>, vector<2x1xf32> -> vector<2x1xf32>
    %cst_19 = arith.constant 0.000000e+00 : f32
    %28 = vector.broadcast %cst_19 : f32 to vector<2x1xf32>
    %29 = arith.subf %28, %27 : vector<2x1xf32>
    %30 = math.exp %29 : vector<2x1xf32>
    %cst_20 = arith.constant 1.000000e+00 : f32
    %31 = vector.broadcast %cst_20 : f32 to vector<2x1xf32>
    %32 = arith.addf %31, %30 : vector<2x1xf32>
    %cst_21 = arith.constant 1.000000e+00 : f32
    %33 = vector.broadcast %cst_21 : f32 to vector<2x1xf32>
    %34 = arith.divf %33, %32 : vector<2x1xf32>
    %35 = vector.extract_strided_slice %34 {offsets = [0, 0], sizes = [1, 1], strides = [1, 1]} : vector<2x1xf32> to vector<1x1xf32>
    %cst_22 = arith.constant 0.000000e+00 : f32
    %36 = vector.broadcast %cst_22 : f32 to vector<1x1xf32>
    %37 = arith.mulf %36, %35 : vector<1x1xf32>
    %38 = math.floor %37 : vector<1x1xf32>
    %39 = vector.extract_strided_slice %34 {offsets = [1, 0], sizes = [1, 1], strides = [1, 1]} : vector<2x1xf32> to vector<1x1xf32>
    %cst_23 = arith.constant 0.000000e+00 : f32
    %40 = vector.broadcast %cst_23 : f32 to vector<1x1xf32>
    %41 = arith.mulf %40, %39 : vector<1x1xf32>
    %42 = math.floor %41 : vector<1x1xf32>
    %c0_24 = arith.constant 0 : index
    %c0_25 = arith.constant 0 : index
    %43 = vector.load %arg3[%c0_24, %c0_25] : memref<2x256xf32, #tpu.memory_space<vmem>>, vector<1x256xf32>
    %c1 = arith.constant 1 : index
    %c0_26 = arith.constant 0 : index
    %44 = vector.load %arg3[%c1, %c0_26] : memref<2x256xf32, #tpu.memory_space<vmem>>, vector<1x256xf32>
    %45 = vector.broadcast %38 : vector<1x1xf32> to vector<1x256xf32>
    %46 = arith.cmpf olt, %43, %45 : vector<1x256xf32>
    %cst_27 = arith.constant 1.600000e+01 : f32
    %47 = vector.broadcast %cst_27 : f32 to vector<1x1xf32>
    %48 = arith.subf %47, %38 : vector<1x1xf32>
    %49 = vector.broadcast %48 : vector<1x1xf32> to vector<1x256xf32>
    %50 = arith.cmpf oge, %43, %49 : vector<1x256xf32>
    %51 = arith.ori %46, %50 : vector<1x256xi1>
    %52 = vector.broadcast %42 : vector<1x1xf32> to vector<1x256xf32>
    %53 = arith.cmpf olt, %44, %52 : vector<1x256xf32>
    %cst_28 = arith.constant 1.600000e+01 : f32
    %54 = vector.broadcast %cst_28 : f32 to vector<1x1xf32>
    %55 = arith.subf %54, %42 : vector<1x1xf32>
    %56 = vector.broadcast %55 : vector<1x1xf32> to vector<1x256xf32>
    %57 = arith.cmpf oge, %44, %56 : vector<1x256xf32>
    %58 = arith.ori %53, %57 : vector<1x256xi1>
    %59 = arith.andi %51, %58 : vector<1x256xi1>
    %60 = arith.extui %59 : vector<1x256xi1> to vector<1x256xi32>
    %61 = arith.sitofp %60 : vector<1x256xi32> to vector<1x256xf32>
    %cst_29 = arith.constant 3.906250e-03 : f32
    %62 = vector.broadcast %cst_29 : f32 to vector<1x256xf32>
    %63 = arith.mulf %61, %62 : vector<1x256xf32>
    %cst_30 = arith.constant -3.906250e-03 : f32
    %64 = vector.broadcast %cst_30 : f32 to vector<1x256xf32>
    %65 = arith.mulf %61, %64 : vector<1x256xf32>
    %66 = arith.truncf %6 : vector<16x256xf32> to vector<16x256xbf16>
    %c0_31 = arith.constant 0 : index
    %c0_32 = arith.constant 0 : index
    %67 = vector.load %arg8[%c0_31, %c0_32] : memref<256x512xbf16, #tpu.memory_space<vmem>>, vector<256x512xbf16>
    %cst_33 = arith.constant dense<0.000000e+00> : vector<16x512xf32>
    %68 = tpu.matmul %66, %67, %cst_33 {dimension_numbers = #tpu.dot_dimension_numbers<[1], [0], [0], [1], [0, 0, 1, 1], [], []>} : vector<16x256xbf16>, vector<256x512xbf16>, vector<16x512xf32> -> vector<16x512xf32>
    %69 = vector.extract_strided_slice %68 {offsets = [0, 0], sizes = [16, 256], strides = [1, 1]} : vector<16x512xf32> to vector<16x256xf32>
    %70 = vector.broadcast %63 : vector<1x256xf32> to vector<16x256xf32>
    %71 = arith.mulf %69, %70 : vector<16x256xf32>
    %72 = vector.extract_strided_slice %68 {offsets = [0, 256], sizes = [16, 256], strides = [1, 1]} : vector<16x512xf32> to vector<16x256xf32>
    %73 = vector.broadcast %65 : vector<1x256xf32> to vector<16x256xf32>
    %74 = arith.mulf %72, %73 : vector<16x256xf32>
    %75 = tpu.concatenate %71, %74 in 0 : vector<16x256xf32>, vector<16x256xf32> -> vector<32x256xf32>
    %76 = arith.truncf %75 : vector<32x256xf32> to vector<32x256xbf16>
    %c0_34 = arith.constant 0 : index
    %c0_35 = arith.constant 0 : index
    %77 = vector.load %arg8[%c0_34, %c0_35] : memref<256x512xbf16, #tpu.memory_space<vmem>>, vector<256x512xbf16>
    %cst_36 = arith.constant dense<0.000000e+00> : vector<32x512xf32>
    %78 = tpu.matmul %76, %77, %cst_36 {dimension_numbers = #tpu.dot_dimension_numbers<[1], [0], [0], [1], [0, 0, 1, 1], [], []>} : vector<32x256xbf16>, vector<256x512xbf16>, vector<32x512xf32> -> vector<32x512xf32>
    %79 = vector.extract_strided_slice %78 {offsets = [0, 0], sizes = [16, 256], strides = [1, 1]} : vector<32x512xf32> to vector<16x256xf32>
    %80 = vector.extract_strided_slice %78 {offsets = [16, 256], sizes = [16, 256], strides = [1, 1]} : vector<32x512xf32> to vector<16x256xf32>
    %81 = arith.subf %79, %80 : vector<16x256xf32>
    %82 = vector.extract_strided_slice %78 {offsets = [0, 256], sizes = [16, 256], strides = [1, 1]} : vector<32x512xf32> to vector<16x256xf32>
    %83 = vector.extract_strided_slice %78 {offsets = [16, 0], sizes = [16, 256], strides = [1, 1]} : vector<32x512xf32> to vector<16x256xf32>
    %84 = arith.addf %82, %83 : vector<16x256xf32>
    %85 = arith.mulf %81, %81 : vector<16x256xf32>
    %86 = arith.mulf %84, %84 : vector<16x256xf32>
    %87 = arith.addf %85, %86 : vector<16x256xf32>
    %88 = math.sqrt %87 : vector<16x256xf32>
    %89 = arith.subf %6, %81 : vector<16x256xf32>
    %90 = arith.mulf %89, %89 : vector<16x256xf32>
    %91 = arith.mulf %84, %84 : vector<16x256xf32>
    %92 = arith.addf %90, %91 : vector<16x256xf32>
    %93 = math.sqrt %92 : vector<16x256xf32>
    %c0_37 = arith.constant 0 : index
    %c0_38 = arith.constant 0 : index
    %94 = vector.load %arg12[%c0_37, %c0_38] : memref<80x16xbf16, #tpu.memory_space<vmem>>, vector<80x16xbf16>
    %cst_39 = arith.constant dense<0.000000e+00> : vector<80x256xf32>
    %95 = tpu.matmul %94, %2, %cst_39 {dimension_numbers = #tpu.dot_dimension_numbers<[1], [0], [0], [1], [0, 0, 1, 1], [], []>} : vector<80x16xbf16>, vector<16x256xbf16>, vector<80x256xf32> -> vector<80x256xf32>
    %c0_40 = arith.constant 0 : index
    %c0_41 = arith.constant 0 : index
    %96 = vector.load %arg13[%c0_40, %c0_41] : memref<80x1xf32, #tpu.memory_space<vmem>>, vector<80x1xf32>
    %97 = vector.broadcast %96 : vector<80x1xf32> to vector<80x256xf32>
    %98 = arith.addf %95, %97 : vector<80x256xf32>
    %c0_42 = arith.constant 0 : index
    %c0_43 = arith.constant 0 : index
    %99 = vector.load %arg14[%c0_42, %c0_43] : memref<80x9xf32, #tpu.memory_space<vmem>>, vector<80x9xf32>
    %c0_44 = arith.constant 0 : index
    %c0_45 = arith.constant 0 : index
    %100 = vector.load %arg15[%c0_44, %c0_45] : memref<80x1xf32, #tpu.memory_space<vmem>>, vector<80x1xf32>
    %101 = vector.extract_strided_slice %99 {offsets = [0, 4], sizes = [80, 1], strides = [1, 1]} : vector<80x9xf32> to vector<80x1xf32>
    %102 = vector.broadcast %101 : vector<80x1xf32> to vector<80x256xf32>
    %103 = arith.mulf %102, %98 : vector<80x256xf32>
    %104 = vector.broadcast %100 : vector<80x1xf32> to vector<80x256xf32>
    %105 = arith.addf %103, %104 : vector<80x256xf32>
    %c17_i32 = arith.constant 17 : i32
    %106 = tpu.dynamic_rotate %98 by %c17_i32 dim 1 : vector<80x256xf32>, i32 -> vector<80x256xf32>
    %107 = vector.extract_strided_slice %99 {offsets = [0, 0], sizes = [80, 1], strides = [1, 1]} : vector<80x9xf32> to vector<80x1xf32>
    %c0_46 = arith.constant 0 : index
    %c0_47 = arith.constant 0 : index
    %108 = vector.load %arg4[%c0_46, %c0_47] : memref<9x256xf32, #tpu.memory_space<vmem>>, vector<1x256xf32>
    %109 = vector.broadcast %108 : vector<1x256xf32> to vector<80x256xf32>
    %110 = arith.mulf %106, %109 : vector<80x256xf32>
    %111 = vector.broadcast %107 : vector<80x1xf32> to vector<80x256xf32>
    %112 = arith.mulf %111, %110 : vector<80x256xf32>
    %113 = arith.addf %105, %112 : vector<80x256xf32>
    %c16_i32 = arith.constant 16 : i32
    %114 = tpu.dynamic_rotate %98 by %c16_i32 dim 1 : vector<80x256xf32>, i32 -> vector<80x256xf32>
    %115 = vector.extract_strided_slice %99 {offsets = [0, 1], sizes = [80, 1], strides = [1, 1]} : vector<80x9xf32> to vector<80x1xf32>
    %c1_48 = arith.constant 1 : index
    %c0_49 = arith.constant 0 : index
    %116 = vector.load %arg4[%c1_48, %c0_49] : memref<9x256xf32, #tpu.memory_space<vmem>>, vector<1x256xf32>
    %117 = vector.broadcast %116 : vector<1x256xf32> to vector<80x256xf32>
    %118 = arith.mulf %114, %117 : vector<80x256xf32>
    %119 = vector.broadcast %115 : vector<80x1xf32> to vector<80x256xf32>
    %120 = arith.mulf %119, %118 : vector<80x256xf32>
    %121 = arith.addf %113, %120 : vector<80x256xf32>
    %c15_i32 = arith.constant 15 : i32
    %122 = tpu.dynamic_rotate %98 by %c15_i32 dim 1 : vector<80x256xf32>, i32 -> vector<80x256xf32>
    %123 = vector.extract_strided_slice %99 {offsets = [0, 2], sizes = [80, 1], strides = [1, 1]} : vector<80x9xf32> to vector<80x1xf32>
    %c2 = arith.constant 2 : index
    %c0_50 = arith.constant 0 : index
    %124 = vector.load %arg4[%c2, %c0_50] : memref<9x256xf32, #tpu.memory_space<vmem>>, vector<1x256xf32>
    %125 = vector.broadcast %124 : vector<1x256xf32> to vector<80x256xf32>
    %126 = arith.mulf %122, %125 : vector<80x256xf32>
    %127 = vector.broadcast %123 : vector<80x1xf32> to vector<80x256xf32>
    %128 = arith.mulf %127, %126 : vector<80x256xf32>
    %129 = arith.addf %121, %128 : vector<80x256xf32>
    %c1_i32 = arith.constant 1 : i32
    %130 = tpu.dynamic_rotate %98 by %c1_i32 dim 1 : vector<80x256xf32>, i32 -> vector<80x256xf32>
    %131 = vector.extract_strided_slice %99 {offsets = [0, 3], sizes = [80, 1], strides = [1, 1]} : vector<80x9xf32> to vector<80x1xf32>
    %c3 = arith.constant 3 : index
    %c0_51 = arith.constant 0 : index
    %132 = vector.load %arg4[%c3, %c0_51] : memref<9x256xf32, #tpu.memory_space<vmem>>, vector<1x256xf32>
    %133 = vector.broadcast %132 : vector<1x256xf32> to vector<80x256xf32>
    %134 = arith.mulf %130, %133 : vector<80x256xf32>
    %135 = vector.broadcast %131 : vector<80x1xf32> to vector<80x256xf32>
    %136 = arith.mulf %135, %134 : vector<80x256xf32>
    %137 = arith.addf %129, %136 : vector<80x256xf32>
    %c255_i32 = arith.constant 255 : i32
    %138 = tpu.dynamic_rotate %98 by %c255_i32 dim 1 : vector<80x256xf32>, i32 -> vector<80x256xf32>
    %139 = vector.extract_strided_slice %99 {offsets = [0, 5], sizes = [80, 1], strides = [1, 1]} : vector<80x9xf32> to vector<80x1xf32>
    %c5 = arith.constant 5 : index
    %c0_52 = arith.constant 0 : index
    %140 = vector.load %arg4[%c5, %c0_52] : memref<9x256xf32, #tpu.memory_space<vmem>>, vector<1x256xf32>
    %141 = vector.broadcast %140 : vector<1x256xf32> to vector<80x256xf32>
    %142 = arith.mulf %138, %141 : vector<80x256xf32>
    %143 = vector.broadcast %139 : vector<80x1xf32> to vector<80x256xf32>
    %144 = arith.mulf %143, %142 : vector<80x256xf32>
    %145 = arith.addf %137, %144 : vector<80x256xf32>
    %c241_i32 = arith.constant 241 : i32
    %146 = tpu.dynamic_rotate %98 by %c241_i32 dim 1 : vector<80x256xf32>, i32 -> vector<80x256xf32>
    %147 = vector.extract_strided_slice %99 {offsets = [0, 6], sizes = [80, 1], strides = [1, 1]} : vector<80x9xf32> to vector<80x1xf32>
    %c6 = arith.constant 6 : index
    %c0_53 = arith.constant 0 : index
    %148 = vector.load %arg4[%c6, %c0_53] : memref<9x256xf32, #tpu.memory_space<vmem>>, vector<1x256xf32>
    %149 = vector.broadcast %148 : vector<1x256xf32> to vector<80x256xf32>
    %150 = arith.mulf %146, %149 : vector<80x256xf32>
    %151 = vector.broadcast %147 : vector<80x1xf32> to vector<80x256xf32>
    %152 = arith.mulf %151, %150 : vector<80x256xf32>
    %153 = arith.addf %145, %152 : vector<80x256xf32>
    %c240_i32 = arith.constant 240 : i32
    %154 = tpu.dynamic_rotate %98 by %c240_i32 dim 1 : vector<80x256xf32>, i32 -> vector<80x256xf32>
    %155 = vector.extract_strided_slice %99 {offsets = [0, 7], sizes = [80, 1], strides = [1, 1]} : vector<80x9xf32> to vector<80x1xf32>
    %c7 = arith.constant 7 : index
    %c0_54 = arith.constant 0 : index
    %156 = vector.load %arg4[%c7, %c0_54] : memref<9x256xf32, #tpu.memory_space<vmem>>, vector<1x256xf32>
    %157 = vector.broadcast %156 : vector<1x256xf32> to vector<80x256xf32>
    %158 = arith.mulf %154, %157 : vector<80x256xf32>
    %159 = vector.broadcast %155 : vector<80x1xf32> to vector<80x256xf32>
    %160 = arith.mulf %159, %158 : vector<80x256xf32>
    %161 = arith.addf %153, %160 : vector<80x256xf32>
    %c239_i32 = arith.constant 239 : i32
    %162 = tpu.dynamic_rotate %98 by %c239_i32 dim 1 : vector<80x256xf32>, i32 -> vector<80x256xf32>
    %163 = vector.extract_strided_slice %99 {offsets = [0, 8], sizes = [80, 1], strides = [1, 1]} : vector<80x9xf32> to vector<80x1xf32>
    %c8 = arith.constant 8 : index
    %c0_55 = arith.constant 0 : index
    %164 = vector.load %arg4[%c8, %c0_55] : memref<9x256xf32, #tpu.memory_space<vmem>>, vector<1x256xf32>
    %165 = vector.broadcast %164 : vector<1x256xf32> to vector<80x256xf32>
    %166 = arith.mulf %162, %165 : vector<80x256xf32>
    %167 = vector.broadcast %163 : vector<80x1xf32> to vector<80x256xf32>
    %168 = arith.mulf %167, %166 : vector<80x256xf32>
    %169 = arith.addf %161, %168 : vector<80x256xf32>
    %170 = vector.extract_strided_slice %169 {offsets = [0, 0], sizes = [16, 256], strides = [1, 1]} : vector<80x256xf32> to vector<16x256xf32>
    %171 = vector.extract_strided_slice %169 {offsets = [32, 0], sizes = [16, 256], strides = [1, 1]} : vector<80x256xf32> to vector<16x256xf32>
    %172 = tpu.concatenate %170, %171 in 0 : vector<16x256xf32>, vector<16x256xf32> -> vector<32x256xf32>
    %173 = vector.extract_strided_slice %169 {offsets = [16, 0], sizes = [16, 256], strides = [1, 1]} : vector<80x256xf32> to vector<16x256xf32>
    %174 = vector.extract_strided_slice %169 {offsets = [48, 0], sizes = [16, 256], strides = [1, 1]} : vector<80x256xf32> to vector<16x256xf32>
    %175 = tpu.concatenate %173, %174 in 0 : vector<16x256xf32>, vector<16x256xf32> -> vector<32x256xf32>
    %176 = vector.extract_strided_slice %169 {offsets = [64, 0], sizes = [16, 256], strides = [1, 1]} : vector<80x256xf32> to vector<16x256xf32>
    %177 = tpu.concatenate %93, %88 in 0 : vector<16x256xf32>, vector<16x256xf32> -> vector<32x256xf32>
    %178 = arith.truncf %177 : vector<32x256xf32> to vector<32x256xbf16>
    %c0_56 = arith.constant 0 : index
    %c0_57 = arith.constant 0 : index
    %179 = vector.load %arg16[%c0_56, %c0_57] : memref<32x32xbf16, #tpu.memory_space<vmem>>, vector<32x32xbf16>
    %cst_58 = arith.constant dense<0.000000e+00> : vector<32x256xf32>
    %180 = tpu.matmul %179, %178, %cst_58 {dimension_numbers = #tpu.dot_dimension_numbers<[1], [0], [0], [1], [0, 0, 1, 1], [], []>} : vector<32x32xbf16>, vector<32x256xbf16>, vector<32x256xf32> -> vector<32x256xf32>
    %c0_59 = arith.constant 0 : index
    %c0_60 = arith.constant 0 : index
    %181 = vector.load %arg17[%c0_59, %c0_60] : memref<32x1xf32, #tpu.memory_space<vmem>>, vector<32x1xf32>
    %182 = vector.broadcast %181 : vector<32x1xf32> to vector<32x256xf32>
    %183 = arith.addf %180, %182 : vector<32x256xf32>
    %c0_61 = arith.constant 0 : index
    %c0_62 = arith.constant 0 : index
    %184 = vector.load %arg18[%c0_61, %c0_62] : memref<32x9xf32, #tpu.memory_space<vmem>>, vector<32x9xf32>
    %c0_63 = arith.constant 0 : index
    %c0_64 = arith.constant 0 : index
    %185 = vector.load %arg19[%c0_63, %c0_64] : memref<32x1xf32, #tpu.memory_space<vmem>>, vector<32x1xf32>
    %186 = vector.extract_strided_slice %184 {offsets = [0, 4], sizes = [32, 1], strides = [1, 1]} : vector<32x9xf32> to vector<32x1xf32>
    %187 = vector.broadcast %186 : vector<32x1xf32> to vector<32x256xf32>
    %188 = arith.mulf %187, %183 : vector<32x256xf32>
    %189 = vector.broadcast %185 : vector<32x1xf32> to vector<32x256xf32>
    %190 = arith.addf %188, %189 : vector<32x256xf32>
    %c17_i32_65 = arith.constant 17 : i32
    %191 = tpu.dynamic_rotate %183 by %c17_i32_65 dim 1 : vector<32x256xf32>, i32 -> vector<32x256xf32>
    %192 = vector.extract_strided_slice %184 {offsets = [0, 0], sizes = [32, 1], strides = [1, 1]} : vector<32x9xf32> to vector<32x1xf32>
    %c0_66 = arith.constant 0 : index
    %c0_67 = arith.constant 0 : index
    %193 = vector.load %arg4[%c0_66, %c0_67] : memref<9x256xf32, #tpu.memory_space<vmem>>, vector<1x256xf32>
    %194 = vector.broadcast %193 : vector<1x256xf32> to vector<32x256xf32>
    %195 = arith.mulf %191, %194 : vector<32x256xf32>
    %196 = vector.broadcast %192 : vector<32x1xf32> to vector<32x256xf32>
    %197 = arith.mulf %196, %195 : vector<32x256xf32>
    %198 = arith.addf %190, %197 : vector<32x256xf32>
    %c16_i32_68 = arith.constant 16 : i32
    %199 = tpu.dynamic_rotate %183 by %c16_i32_68 dim 1 : vector<32x256xf32>, i32 -> vector<32x256xf32>
    %200 = vector.extract_strided_slice %184 {offsets = [0, 1], sizes = [32, 1], strides = [1, 1]} : vector<32x9xf32> to vector<32x1xf32>
    %c1_69 = arith.constant 1 : index
    %c0_70 = arith.constant 0 : index
    %201 = vector.load %arg4[%c1_69, %c0_70] : memref<9x256xf32, #tpu.memory_space<vmem>>, vector<1x256xf32>
    %202 = vector.broadcast %201 : vector<1x256xf32> to vector<32x256xf32>
    %203 = arith.mulf %199, %202 : vector<32x256xf32>
    %204 = vector.broadcast %200 : vector<32x1xf32> to vector<32x256xf32>
    %205 = arith.mulf %204, %203 : vector<32x256xf32>
    %206 = arith.addf %198, %205 : vector<32x256xf32>
    %c15_i32_71 = arith.constant 15 : i32
    %207 = tpu.dynamic_rotate %183 by %c15_i32_71 dim 1 : vector<32x256xf32>, i32 -> vector<32x256xf32>
    %208 = vector.extract_strided_slice %184 {offsets = [0, 2], sizes = [32, 1], strides = [1, 1]} : vector<32x9xf32> to vector<32x1xf32>
    %c2_72 = arith.constant 2 : index
    %c0_73 = arith.constant 0 : index
    %209 = vector.load %arg4[%c2_72, %c0_73] : memref<9x256xf32, #tpu.memory_space<vmem>>, vector<1x256xf32>
    %210 = vector.broadcast %209 : vector<1x256xf32> to vector<32x256xf32>
    %211 = arith.mulf %207, %210 : vector<32x256xf32>
    %212 = vector.broadcast %208 : vector<32x1xf32> to vector<32x256xf32>
    %213 = arith.mulf %212, %211 : vector<32x256xf32>
    %214 = arith.addf %206, %213 : vector<32x256xf32>
    %c1_i32_74 = arith.constant 1 : i32
    %215 = tpu.dynamic_rotate %183 by %c1_i32_74 dim 1 : vector<32x256xf32>, i32 -> vector<32x256xf32>
    %216 = vector.extract_strided_slice %184 {offsets = [0, 3], sizes = [32, 1], strides = [1, 1]} : vector<32x9xf32> to vector<32x1xf32>
    %c3_75 = arith.constant 3 : index
    %c0_76 = arith.constant 0 : index
    %217 = vector.load %arg4[%c3_75, %c0_76] : memref<9x256xf32, #tpu.memory_space<vmem>>, vector<1x256xf32>
    %218 = vector.broadcast %217 : vector<1x256xf32> to vector<32x256xf32>
    %219 = arith.mulf %215, %218 : vector<32x256xf32>
    %220 = vector.broadcast %216 : vector<32x1xf32> to vector<32x256xf32>
    %221 = arith.mulf %220, %219 : vector<32x256xf32>
    %222 = arith.addf %214, %221 : vector<32x256xf32>
    %c255_i32_77 = arith.constant 255 : i32
    %223 = tpu.dynamic_rotate %183 by %c255_i32_77 dim 1 : vector<32x256xf32>, i32 -> vector<32x256xf32>
    %224 = vector.extract_strided_slice %184 {offsets = [0, 5], sizes = [32, 1], strides = [1, 1]} : vector<32x9xf32> to vector<32x1xf32>
    %c5_78 = arith.constant 5 : index
    %c0_79 = arith.constant 0 : index
    %225 = vector.load %arg4[%c5_78, %c0_79] : memref<9x256xf32, #tpu.memory_space<vmem>>, vector<1x256xf32>
    %226 = vector.broadcast %225 : vector<1x256xf32> to vector<32x256xf32>
    %227 = arith.mulf %223, %226 : vector<32x256xf32>
    %228 = vector.broadcast %224 : vector<32x1xf32> to vector<32x256xf32>
    %229 = arith.mulf %228, %227 : vector<32x256xf32>
    %230 = arith.addf %222, %229 : vector<32x256xf32>
    %c241_i32_80 = arith.constant 241 : i32
    %231 = tpu.dynamic_rotate %183 by %c241_i32_80 dim 1 : vector<32x256xf32>, i32 -> vector<32x256xf32>
    %232 = vector.extract_strided_slice %184 {offsets = [0, 6], sizes = [32, 1], strides = [1, 1]} : vector<32x9xf32> to vector<32x1xf32>
    %c6_81 = arith.constant 6 : index
    %c0_82 = arith.constant 0 : index
    %233 = vector.load %arg4[%c6_81, %c0_82] : memref<9x256xf32, #tpu.memory_space<vmem>>, vector<1x256xf32>
    %234 = vector.broadcast %233 : vector<1x256xf32> to vector<32x256xf32>
    %235 = arith.mulf %231, %234 : vector<32x256xf32>
    %236 = vector.broadcast %232 : vector<32x1xf32> to vector<32x256xf32>
    %237 = arith.mulf %236, %235 : vector<32x256xf32>
    %238 = arith.addf %230, %237 : vector<32x256xf32>
    %c240_i32_83 = arith.constant 240 : i32
    %239 = tpu.dynamic_rotate %183 by %c240_i32_83 dim 1 : vector<32x256xf32>, i32 -> vector<32x256xf32>
    %240 = vector.extract_strided_slice %184 {offsets = [0, 7], sizes = [32, 1], strides = [1, 1]} : vector<32x9xf32> to vector<32x1xf32>
    %c7_84 = arith.constant 7 : index
    %c0_85 = arith.constant 0 : index
    %241 = vector.load %arg4[%c7_84, %c0_85] : memref<9x256xf32, #tpu.memory_space<vmem>>, vector<1x256xf32>
    %242 = vector.broadcast %241 : vector<1x256xf32> to vector<32x256xf32>
    %243 = arith.mulf %239, %242 : vector<32x256xf32>
    %244 = vector.broadcast %240 : vector<32x1xf32> to vector<32x256xf32>
    %245 = arith.mulf %244, %243 : vector<32x256xf32>
    %246 = arith.addf %238, %245 : vector<32x256xf32>
    %c239_i32_86 = arith.constant 239 : i32
    %247 = tpu.dynamic_rotate %183 by %c239_i32_86 dim 1 : vector<32x256xf32>, i32 -> vector<32x256xf32>
    %248 = vector.extract_strided_slice %184 {offsets = [0, 8], sizes = [32, 1], strides = [1, 1]} : vector<32x9xf32> to vector<32x1xf32>
    %c8_87 = arith.constant 8 : index
    %c0_88 = arith.constant 0 : index
    %249 = vector.load %arg4[%c8_87, %c0_88] : memref<9x256xf32, #tpu.memory_space<vmem>>, vector<1x256xf32>
    %250 = vector.broadcast %249 : vector<1x256xf32> to vector<32x256xf32>
    %251 = arith.mulf %247, %250 : vector<32x256xf32>
    %252 = vector.broadcast %248 : vector<32x1xf32> to vector<32x256xf32>
    %253 = arith.mulf %252, %251 : vector<32x256xf32>
    %254 = arith.addf %246, %253 : vector<32x256xf32>
    %c0_89 = arith.constant 0 : index
    %c0_90 = arith.constant 0 : index
    %255 = vector.load %arg22[%c0_89, %c0_90] : memref<32x1xf32, #tpu.memory_space<vmem>>, vector<32x1xf32>
    %c0_91 = arith.constant 0 : index
    %c0_92 = arith.constant 0 : index
    %256 = vector.load %arg6[%c0_91, %c0_92] : memref<32x32xf32, #tpu.memory_space<vmem>>, vector<32x32xf32>
    %c0_93 = arith.constant 0 : index
    %c0_94 = arith.constant 0 : index
    %257 = vector.load %arg20[%c0_93, %c0_94] : memref<32x32xbf16, #tpu.memory_space<vmem>>, vector<32x32xbf16>
    %c0_95 = arith.constant 0 : index
    %c0_96 = arith.constant 0 : index
    %258 = vector.load %arg21[%c0_95, %c0_96] : memref<32x1xf32, #tpu.memory_space<vmem>>, vector<32x1xf32>
    %259 = arith.mulf %254, %254 : vector<32x256xf32>
    %cst_97 = arith.constant dense<0.000000e+00> : vector<32xf32>
    %260 = vector.multi_reduction <add>, %259, %cst_97 [1] : vector<32x256xf32> to vector<32xf32>
    %261 = vector.shape_cast %260 : vector<32xf32> to vector<32x1xf32>
    %cst_98 = arith.constant 1.000000e-24 : f32
    %262 = vector.broadcast %cst_98 : f32 to vector<32x1xf32>
    %263 = arith.addf %261, %262 : vector<32x1xf32>
    %264 = math.rsqrt %263 : vector<32x1xf32>
    %265 = vector.broadcast %264 : vector<32x1xf32> to vector<32x256xf32>
    %266 = arith.mulf %254, %265 : vector<32x256xf32>
    %267 = arith.mulf %172, %172 : vector<32x256xf32>
    %cst_99 = arith.constant dense<0.000000e+00> : vector<32xf32>
    %268 = vector.multi_reduction <add>, %267, %cst_99 [1] : vector<32x256xf32> to vector<32xf32>
    %269 = vector.shape_cast %268 : vector<32xf32> to vector<32x1xf32>
    %cst_100 = arith.constant 1.000000e-24 : f32
    %270 = vector.broadcast %cst_100 : f32 to vector<32x1xf32>
    %271 = arith.addf %269, %270 : vector<32x1xf32>
    %272 = math.rsqrt %271 : vector<32x1xf32>
    %273 = vector.broadcast %272 : vector<32x1xf32> to vector<32x256xf32>
    %274 = arith.mulf %172, %273 : vector<32x256xf32>
    %275 = arith.truncf %266 : vector<32x256xf32> to vector<32x256xbf16>
    %276 = arith.truncf %274 : vector<32x256xf32> to vector<32x256xbf16>
    %cst_101 = arith.constant dense<0.000000e+00> : vector<32x32xf32>
    %277 = tpu.matmul %275, %276, %cst_101 {dimension_numbers = #tpu.dot_dimension_numbers<[1], [1], [0], [0], [0, 0, 1, 0], [], []>} : vector<32x256xbf16>, vector<32x256xbf16>, vector<32x32xf32> -> vector<32x32xf32>
    %278 = vector.broadcast %255 : vector<32x1xf32> to vector<32x32xf32>
    %279 = arith.mulf %277, %278 : vector<32x32xf32>
    %280 = arith.addf %279, %256 : vector<32x32xf32>
    %cst_102 = arith.constant dense<0xFF800000> : vector<32xf32>
    %281 = vector.multi_reduction <maximumf>, %280, %cst_102 [1] : vector<32x32xf32> to vector<32xf32>
    %282 = vector.shape_cast %281 : vector<32xf32> to vector<32x1xf32>
    %283 = vector.broadcast %282 : vector<32x1xf32> to vector<32x32xf32>
    %284 = arith.subf %280, %283 : vector<32x32xf32>
    %285 = math.exp %284 : vector<32x32xf32>
    %cst_103 = arith.constant dense<0.000000e+00> : vector<32xf32>
    %286 = vector.multi_reduction <add>, %285, %cst_103 [1] : vector<32x32xf32> to vector<32xf32>
    %287 = vector.shape_cast %286 : vector<32xf32> to vector<32x1xf32>
    %288 = tpu.reciprocal %287 {approx = true} : vector<32x1xf32> -> vector<32x1xf32>
    %289 = vector.broadcast %288 : vector<32x1xf32> to vector<32x32xf32>
    %290 = arith.mulf %285, %289 : vector<32x32xf32>
    %291 = arith.truncf %290 : vector<32x32xf32> to vector<32x32xbf16>
    %292 = arith.truncf %175 : vector<32x256xf32> to vector<32x256xbf16>
    %cst_104 = arith.constant dense<0.000000e+00> : vector<32x256xf32>
    %293 = tpu.matmul %291, %292, %cst_104 {dimension_numbers = #tpu.dot_dimension_numbers<[1], [0], [0], [1], [0, 0, 1, 1], [], []>} : vector<32x32xbf16>, vector<32x256xbf16>, vector<32x256xf32> -> vector<32x256xf32>
    %294 = arith.truncf %293 : vector<32x256xf32> to vector<32x256xbf16>
    %cst_105 = arith.constant dense<0.000000e+00> : vector<32x256xf32>
    %295 = tpu.matmul %257, %294, %cst_105 {dimension_numbers = #tpu.dot_dimension_numbers<[1], [0], [0], [1], [0, 0, 1, 1], [], []>} : vector<32x32xbf16>, vector<32x256xbf16>, vector<32x256xf32> -> vector<32x256xf32>
    %296 = vector.broadcast %258 : vector<32x1xf32> to vector<32x256xf32>
    %297 = arith.addf %295, %296 : vector<32x256xf32>
    %298 = vector.extract_strided_slice %297 {offsets = [0, 0], sizes = [16, 256], strides = [1, 1]} : vector<32x256xf32> to vector<16x256xf32>
    %299 = vector.extract_strided_slice %297 {offsets = [16, 0], sizes = [16, 256], strides = [1, 1]} : vector<32x256xf32> to vector<16x256xf32>
    %cst_106 = arith.constant dense<0xFF800000> : vector<256xf32>
    %300 = vector.multi_reduction <maximumf>, %298, %cst_106 [0] : vector<16x256xf32> to vector<256xf32>
    %301 = vector.shape_cast %300 : vector<256xf32> to vector<1x256xf32>
    %cst_107 = arith.constant dense<0.000000e+00> : vector<256xf32>
    %302 = vector.multi_reduction <add>, %298, %cst_107 [0] : vector<16x256xf32> to vector<256xf32>
    %303 = vector.shape_cast %302 : vector<256xf32> to vector<1x256xf32>
    %cst_108 = arith.constant 1.600000e+01 : f32
    %304 = vector.broadcast %cst_108 : f32 to vector<1x256xf32>
    %305 = arith.divf %303, %304 : vector<1x256xf32>
    %306 = tpu.concatenate %301, %305 in 0 : vector<1x256xf32>, vector<1x256xf32> -> vector<2x256xf32>
    %c0_109 = arith.constant 0 : index
    %c24 = arith.constant 24 : index
    %307 = vector.load %arg30[%c0_109, %c24] : memref<2x49xf32, #tpu.memory_space<vmem>>, vector<2x1xf32>
    %308 = vector.broadcast %307 : vector<2x1xf32> to vector<2x256xf32>
    %309 = arith.mulf %308, %306 : vector<2x256xf32>
    %c51_i32 = arith.constant 51 : i32
    %310 = tpu.dynamic_rotate %306 by %c51_i32 dim 1 : vector<2x256xf32>, i32 -> vector<2x256xf32>
    %c0_110 = arith.constant 0 : index
    %c0_111 = arith.constant 0 : index
    %311 = vector.load %arg30[%c0_110, %c0_111] : memref<2x49xf32, #tpu.memory_space<vmem>>, vector<2x1xf32>
    %c0_112 = arith.constant 0 : index
    %c0_113 = arith.constant 0 : index
    %312 = vector.load %arg5[%c0_112, %c0_113] : memref<49x256xf32, #tpu.memory_space<vmem>>, vector<1x256xf32>
    %313 = vector.broadcast %312 : vector<1x256xf32> to vector<2x256xf32>
    %314 = arith.mulf %310, %313 : vector<2x256xf32>
    %315 = vector.broadcast %311 : vector<2x1xf32> to vector<2x256xf32>
    %316 = arith.mulf %315, %314 : vector<2x256xf32>
    %317 = arith.addf %309, %316 : vector<2x256xf32>
    %c50_i32 = arith.constant 50 : i32
    %318 = tpu.dynamic_rotate %306 by %c50_i32 dim 1 : vector<2x256xf32>, i32 -> vector<2x256xf32>
    %c0_114 = arith.constant 0 : index
    %c1_115 = arith.constant 1 : index
    %319 = vector.load %arg30[%c0_114, %c1_115] : memref<2x49xf32, #tpu.memory_space<vmem>>, vector<2x1xf32>
    %c1_116 = arith.constant 1 : index
    %c0_117 = arith.constant 0 : index
    %320 = vector.load %arg5[%c1_116, %c0_117] : memref<49x256xf32, #tpu.memory_space<vmem>>, vector<1x256xf32>
    %321 = vector.broadcast %320 : vector<1x256xf32> to vector<2x256xf32>
    %322 = arith.mulf %318, %321 : vector<2x256xf32>
    %323 = vector.broadcast %319 : vector<2x1xf32> to vector<2x256xf32>
    %324 = arith.mulf %323, %322 : vector<2x256xf32>
    %325 = arith.addf %317, %324 : vector<2x256xf32>
    %c49_i32 = arith.constant 49 : i32
    %326 = tpu.dynamic_rotate %306 by %c49_i32 dim 1 : vector<2x256xf32>, i32 -> vector<2x256xf32>
    %c0_118 = arith.constant 0 : index
    %c2_119 = arith.constant 2 : index
    %327 = vector.load %arg30[%c0_118, %c2_119] : memref<2x49xf32, #tpu.memory_space<vmem>>, vector<2x1xf32>
    %c2_120 = arith.constant 2 : index
    %c0_121 = arith.constant 0 : index
    %328 = vector.load %arg5[%c2_120, %c0_121] : memref<49x256xf32, #tpu.memory_space<vmem>>, vector<1x256xf32>
    %329 = vector.broadcast %328 : vector<1x256xf32> to vector<2x256xf32>
    %330 = arith.mulf %326, %329 : vector<2x256xf32>
    %331 = vector.broadcast %327 : vector<2x1xf32> to vector<2x256xf32>
    %332 = arith.mulf %331, %330 : vector<2x256xf32>
    %333 = arith.addf %325, %332 : vector<2x256xf32>
    %c48_i32 = arith.constant 48 : i32
    %334 = tpu.dynamic_rotate %306 by %c48_i32 dim 1 : vector<2x256xf32>, i32 -> vector<2x256xf32>
    %c0_122 = arith.constant 0 : index
    %c3_123 = arith.constant 3 : index
    %335 = vector.load %arg30[%c0_122, %c3_123] : memref<2x49xf32, #tpu.memory_space<vmem>>, vector<2x1xf32>
    %c3_124 = arith.constant 3 : index
    %c0_125 = arith.constant 0 : index
    %336 = vector.load %arg5[%c3_124, %c0_125] : memref<49x256xf32, #tpu.memory_space<vmem>>, vector<1x256xf32>
    %337 = vector.broadcast %336 : vector<1x256xf32> to vector<2x256xf32>
    %338 = arith.mulf %334, %337 : vector<2x256xf32>
    %339 = vector.broadcast %335 : vector<2x1xf32> to vector<2x256xf32>
    %340 = arith.mulf %339, %338 : vector<2x256xf32>
    %341 = arith.addf %333, %340 : vector<2x256xf32>
    %c47_i32 = arith.constant 47 : i32
    %342 = tpu.dynamic_rotate %306 by %c47_i32 dim 1 : vector<2x256xf32>, i32 -> vector<2x256xf32>
    %c0_126 = arith.constant 0 : index
    %c4 = arith.constant 4 : index
    %343 = vector.load %arg30[%c0_126, %c4] : memref<2x49xf32, #tpu.memory_space<vmem>>, vector<2x1xf32>
    %c4_127 = arith.constant 4 : index
    %c0_128 = arith.constant 0 : index
    %344 = vector.load %arg5[%c4_127, %c0_128] : memref<49x256xf32, #tpu.memory_space<vmem>>, vector<1x256xf32>
    %345 = vector.broadcast %344 : vector<1x256xf32> to vector<2x256xf32>
    %346 = arith.mulf %342, %345 : vector<2x256xf32>
    %347 = vector.broadcast %343 : vector<2x1xf32> to vector<2x256xf32>
    %348 = arith.mulf %347, %346 : vector<2x256xf32>
    %349 = arith.addf %341, %348 : vector<2x256xf32>
    %c46_i32 = arith.constant 46 : i32
    %350 = tpu.dynamic_rotate %306 by %c46_i32 dim 1 : vector<2x256xf32>, i32 -> vector<2x256xf32>
    %c0_129 = arith.constant 0 : index
    %c5_130 = arith.constant 5 : index
    %351 = vector.load %arg30[%c0_129, %c5_130] : memref<2x49xf32, #tpu.memory_space<vmem>>, vector<2x1xf32>
    %c5_131 = arith.constant 5 : index
    %c0_132 = arith.constant 0 : index
    %352 = vector.load %arg5[%c5_131, %c0_132] : memref<49x256xf32, #tpu.memory_space<vmem>>, vector<1x256xf32>
    %353 = vector.broadcast %352 : vector<1x256xf32> to vector<2x256xf32>
    %354 = arith.mulf %350, %353 : vector<2x256xf32>
    %355 = vector.broadcast %351 : vector<2x1xf32> to vector<2x256xf32>
    %356 = arith.mulf %355, %354 : vector<2x256xf32>
    %357 = arith.addf %349, %356 : vector<2x256xf32>
    %c45_i32 = arith.constant 45 : i32
    %358 = tpu.dynamic_rotate %306 by %c45_i32 dim 1 : vector<2x256xf32>, i32 -> vector<2x256xf32>
    %c0_133 = arith.constant 0 : index
    %c6_134 = arith.constant 6 : index
    %359 = vector.load %arg30[%c0_133, %c6_134] : memref<2x49xf32, #tpu.memory_space<vmem>>, vector<2x1xf32>
    %c6_135 = arith.constant 6 : index
    %c0_136 = arith.constant 0 : index
    %360 = vector.load %arg5[%c6_135, %c0_136] : memref<49x256xf32, #tpu.memory_space<vmem>>, vector<1x256xf32>
    %361 = vector.broadcast %360 : vector<1x256xf32> to vector<2x256xf32>
    %362 = arith.mulf %358, %361 : vector<2x256xf32>
    %363 = vector.broadcast %359 : vector<2x1xf32> to vector<2x256xf32>
    %364 = arith.mulf %363, %362 : vector<2x256xf32>
    %365 = arith.addf %357, %364 : vector<2x256xf32>
    %c35_i32 = arith.constant 35 : i32
    %366 = tpu.dynamic_rotate %306 by %c35_i32 dim 1 : vector<2x256xf32>, i32 -> vector<2x256xf32>
    %c0_137 = arith.constant 0 : index
    %c7_138 = arith.constant 7 : index
    %367 = vector.load %arg30[%c0_137, %c7_138] : memref<2x49xf32, #tpu.memory_space<vmem>>, vector<2x1xf32>
    %c7_139 = arith.constant 7 : index
    %c0_140 = arith.constant 0 : index
    %368 = vector.load %arg5[%c7_139, %c0_140] : memref<49x256xf32, #tpu.memory_space<vmem>>, vector<1x256xf32>
    %369 = vector.broadcast %368 : vector<1x256xf32> to vector<2x256xf32>
    %370 = arith.mulf %366, %369 : vector<2x256xf32>
    %371 = vector.broadcast %367 : vector<2x1xf32> to vector<2x256xf32>
    %372 = arith.mulf %371, %370 : vector<2x256xf32>
    %373 = arith.addf %365, %372 : vector<2x256xf32>
    %c34_i32 = arith.constant 34 : i32
    %374 = tpu.dynamic_rotate %306 by %c34_i32 dim 1 : vector<2x256xf32>, i32 -> vector<2x256xf32>
    %c0_141 = arith.constant 0 : index
    %c8_142 = arith.constant 8 : index
    %375 = vector.load %arg30[%c0_141, %c8_142] : memref<2x49xf32, #tpu.memory_space<vmem>>, vector<2x1xf32>
    %c8_143 = arith.constant 8 : index
    %c0_144 = arith.constant 0 : index
    %376 = vector.load %arg5[%c8_143, %c0_144] : memref<49x256xf32, #tpu.memory_space<vmem>>, vector<1x256xf32>
    %377 = vector.broadcast %376 : vector<1x256xf32> to vector<2x256xf32>
    %378 = arith.mulf %374, %377 : vector<2x256xf32>
    %379 = vector.broadcast %375 : vector<2x1xf32> to vector<2x256xf32>
    %380 = arith.mulf %379, %378 : vector<2x256xf32>
    %381 = arith.addf %373, %380 : vector<2x256xf32>
    %c33_i32 = arith.constant 33 : i32
    %382 = tpu.dynamic_rotate %306 by %c33_i32 dim 1 : vector<2x256xf32>, i32 -> vector<2x256xf32>
    %c0_145 = arith.constant 0 : index
    %c9 = arith.constant 9 : index
    %383 = vector.load %arg30[%c0_145, %c9] : memref<2x49xf32, #tpu.memory_space<vmem>>, vector<2x1xf32>
    %c9_146 = arith.constant 9 : index
    %c0_147 = arith.constant 0 : index
    %384 = vector.load %arg5[%c9_146, %c0_147] : memref<49x256xf32, #tpu.memory_space<vmem>>, vector<1x256xf32>
    %385 = vector.broadcast %384 : vector<1x256xf32> to vector<2x256xf32>
    %386 = arith.mulf %382, %385 : vector<2x256xf32>
    %387 = vector.broadcast %383 : vector<2x1xf32> to vector<2x256xf32>
    %388 = arith.mulf %387, %386 : vector<2x256xf32>
    %389 = arith.addf %381, %388 : vector<2x256xf32>
    %c32_i32 = arith.constant 32 : i32
    %390 = tpu.dynamic_rotate %306 by %c32_i32 dim 1 : vector<2x256xf32>, i32 -> vector<2x256xf32>
    %c0_148 = arith.constant 0 : index
    %c10 = arith.constant 10 : index
    %391 = vector.load %arg30[%c0_148, %c10] : memref<2x49xf32, #tpu.memory_space<vmem>>, vector<2x1xf32>
    %c10_149 = arith.constant 10 : index
    %c0_150 = arith.constant 0 : index
    %392 = vector.load %arg5[%c10_149, %c0_150] : memref<49x256xf32, #tpu.memory_space<vmem>>, vector<1x256xf32>
    %393 = vector.broadcast %392 : vector<1x256xf32> to vector<2x256xf32>
    %394 = arith.mulf %390, %393 : vector<2x256xf32>
    %395 = vector.broadcast %391 : vector<2x1xf32> to vector<2x256xf32>
    %396 = arith.mulf %395, %394 : vector<2x256xf32>
    %397 = arith.addf %389, %396 : vector<2x256xf32>
    %c31_i32 = arith.constant 31 : i32
    %398 = tpu.dynamic_rotate %306 by %c31_i32 dim 1 : vector<2x256xf32>, i32 -> vector<2x256xf32>
    %c0_151 = arith.constant 0 : index
    %c11 = arith.constant 11 : index
    %399 = vector.load %arg30[%c0_151, %c11] : memref<2x49xf32, #tpu.memory_space<vmem>>, vector<2x1xf32>
    %c11_152 = arith.constant 11 : index
    %c0_153 = arith.constant 0 : index
    %400 = vector.load %arg5[%c11_152, %c0_153] : memref<49x256xf32, #tpu.memory_space<vmem>>, vector<1x256xf32>
    %401 = vector.broadcast %400 : vector<1x256xf32> to vector<2x256xf32>
    %402 = arith.mulf %398, %401 : vector<2x256xf32>
    %403 = vector.broadcast %399 : vector<2x1xf32> to vector<2x256xf32>
    %404 = arith.mulf %403, %402 : vector<2x256xf32>
    %405 = arith.addf %397, %404 : vector<2x256xf32>
    %c30_i32 = arith.constant 30 : i32
    %406 = tpu.dynamic_rotate %306 by %c30_i32 dim 1 : vector<2x256xf32>, i32 -> vector<2x256xf32>
    %c0_154 = arith.constant 0 : index
    %c12 = arith.constant 12 : index
    %407 = vector.load %arg30[%c0_154, %c12] : memref<2x49xf32, #tpu.memory_space<vmem>>, vector<2x1xf32>
    %c12_155 = arith.constant 12 : index
    %c0_156 = arith.constant 0 : index
    %408 = vector.load %arg5[%c12_155, %c0_156] : memref<49x256xf32, #tpu.memory_space<vmem>>, vector<1x256xf32>
    %409 = vector.broadcast %408 : vector<1x256xf32> to vector<2x256xf32>
    %410 = arith.mulf %406, %409 : vector<2x256xf32>
    %411 = vector.broadcast %407 : vector<2x1xf32> to vector<2x256xf32>
    %412 = arith.mulf %411, %410 : vector<2x256xf32>
    %413 = arith.addf %405, %412 : vector<2x256xf32>
    %c29_i32 = arith.constant 29 : i32
    %414 = tpu.dynamic_rotate %306 by %c29_i32 dim 1 : vector<2x256xf32>, i32 -> vector<2x256xf32>
    %c0_157 = arith.constant 0 : index
    %c13 = arith.constant 13 : index
    %415 = vector.load %arg30[%c0_157, %c13] : memref<2x49xf32, #tpu.memory_space<vmem>>, vector<2x1xf32>
    %c13_158 = arith.constant 13 : index
    %c0_159 = arith.constant 0 : index
    %416 = vector.load %arg5[%c13_158, %c0_159] : memref<49x256xf32, #tpu.memory_space<vmem>>, vector<1x256xf32>
    %417 = vector.broadcast %416 : vector<1x256xf32> to vector<2x256xf32>
    %418 = arith.mulf %414, %417 : vector<2x256xf32>
    %419 = vector.broadcast %415 : vector<2x1xf32> to vector<2x256xf32>
    %420 = arith.mulf %419, %418 : vector<2x256xf32>
    %421 = arith.addf %413, %420 : vector<2x256xf32>
    %c19_i32 = arith.constant 19 : i32
    %422 = tpu.dynamic_rotate %306 by %c19_i32 dim 1 : vector<2x256xf32>, i32 -> vector<2x256xf32>
    %c0_160 = arith.constant 0 : index
    %c14 = arith.constant 14 : index
    %423 = vector.load %arg30[%c0_160, %c14] : memref<2x49xf32, #tpu.memory_space<vmem>>, vector<2x1xf32>
    %c14_161 = arith.constant 14 : index
    %c0_162 = arith.constant 0 : index
    %424 = vector.load %arg5[%c14_161, %c0_162] : memref<49x256xf32, #tpu.memory_space<vmem>>, vector<1x256xf32>
    %425 = vector.broadcast %424 : vector<1x256xf32> to vector<2x256xf32>
    %426 = arith.mulf %422, %425 : vector<2x256xf32>
    %427 = vector.broadcast %423 : vector<2x1xf32> to vector<2x256xf32>
    %428 = arith.mulf %427, %426 : vector<2x256xf32>
    %429 = arith.addf %421, %428 : vector<2x256xf32>
    %c18_i32 = arith.constant 18 : i32
    %430 = tpu.dynamic_rotate %306 by %c18_i32 dim 1 : vector<2x256xf32>, i32 -> vector<2x256xf32>
    %c0_163 = arith.constant 0 : index
    %c15 = arith.constant 15 : index
    %431 = vector.load %arg30[%c0_163, %c15] : memref<2x49xf32, #tpu.memory_space<vmem>>, vector<2x1xf32>
    %c15_164 = arith.constant 15 : index
    %c0_165 = arith.constant 0 : index
    %432 = vector.load %arg5[%c15_164, %c0_165] : memref<49x256xf32, #tpu.memory_space<vmem>>, vector<1x256xf32>
    %433 = vector.broadcast %432 : vector<1x256xf32> to vector<2x256xf32>
    %434 = arith.mulf %430, %433 : vector<2x256xf32>
    %435 = vector.broadcast %431 : vector<2x1xf32> to vector<2x256xf32>
    %436 = arith.mulf %435, %434 : vector<2x256xf32>
    %437 = arith.addf %429, %436 : vector<2x256xf32>
    %c17_i32_166 = arith.constant 17 : i32
    %438 = tpu.dynamic_rotate %306 by %c17_i32_166 dim 1 : vector<2x256xf32>, i32 -> vector<2x256xf32>
    %c0_167 = arith.constant 0 : index
    %c16 = arith.constant 16 : index
    %439 = vector.load %arg30[%c0_167, %c16] : memref<2x49xf32, #tpu.memory_space<vmem>>, vector<2x1xf32>
    %c16_168 = arith.constant 16 : index
    %c0_169 = arith.constant 0 : index
    %440 = vector.load %arg5[%c16_168, %c0_169] : memref<49x256xf32, #tpu.memory_space<vmem>>, vector<1x256xf32>
    %441 = vector.broadcast %440 : vector<1x256xf32> to vector<2x256xf32>
    %442 = arith.mulf %438, %441 : vector<2x256xf32>
    %443 = vector.broadcast %439 : vector<2x1xf32> to vector<2x256xf32>
    %444 = arith.mulf %443, %442 : vector<2x256xf32>
    %445 = arith.addf %437, %444 : vector<2x256xf32>
    %c16_i32_170 = arith.constant 16 : i32
    %446 = tpu.dynamic_rotate %306 by %c16_i32_170 dim 1 : vector<2x256xf32>, i32 -> vector<2x256xf32>
    %c0_171 = arith.constant 0 : index
    %c17 = arith.constant 17 : index
    %447 = vector.load %arg30[%c0_171, %c17] : memref<2x49xf32, #tpu.memory_space<vmem>>, vector<2x1xf32>
    %c17_172 = arith.constant 17 : index
    %c0_173 = arith.constant 0 : index
    %448 = vector.load %arg5[%c17_172, %c0_173] : memref<49x256xf32, #tpu.memory_space<vmem>>, vector<1x256xf32>
    %449 = vector.broadcast %448 : vector<1x256xf32> to vector<2x256xf32>
    %450 = arith.mulf %446, %449 : vector<2x256xf32>
    %451 = vector.broadcast %447 : vector<2x1xf32> to vector<2x256xf32>
    %452 = arith.mulf %451, %450 : vector<2x256xf32>
    %453 = arith.addf %445, %452 : vector<2x256xf32>
    %c15_i32_174 = arith.constant 15 : i32
    %454 = tpu.dynamic_rotate %306 by %c15_i32_174 dim 1 : vector<2x256xf32>, i32 -> vector<2x256xf32>
    %c0_175 = arith.constant 0 : index
    %c18 = arith.constant 18 : index
    %455 = vector.load %arg30[%c0_175, %c18] : memref<2x49xf32, #tpu.memory_space<vmem>>, vector<2x1xf32>
    %c18_176 = arith.constant 18 : index
    %c0_177 = arith.constant 0 : index
    %456 = vector.load %arg5[%c18_176, %c0_177] : memref<49x256xf32, #tpu.memory_space<vmem>>, vector<1x256xf32>
    %457 = vector.broadcast %456 : vector<1x256xf32> to vector<2x256xf32>
    %458 = arith.mulf %454, %457 : vector<2x256xf32>
    %459 = vector.broadcast %455 : vector<2x1xf32> to vector<2x256xf32>
    %460 = arith.mulf %459, %458 : vector<2x256xf32>
    %461 = arith.addf %453, %460 : vector<2x256xf32>
    %c14_i32 = arith.constant 14 : i32
    %462 = tpu.dynamic_rotate %306 by %c14_i32 dim 1 : vector<2x256xf32>, i32 -> vector<2x256xf32>
    %c0_178 = arith.constant 0 : index
    %c19 = arith.constant 19 : index
    %463 = vector.load %arg30[%c0_178, %c19] : memref<2x49xf32, #tpu.memory_space<vmem>>, vector<2x1xf32>
    %c19_179 = arith.constant 19 : index
    %c0_180 = arith.constant 0 : index
    %464 = vector.load %arg5[%c19_179, %c0_180] : memref<49x256xf32, #tpu.memory_space<vmem>>, vector<1x256xf32>
    %465 = vector.broadcast %464 : vector<1x256xf32> to vector<2x256xf32>
    %466 = arith.mulf %462, %465 : vector<2x256xf32>
    %467 = vector.broadcast %463 : vector<2x1xf32> to vector<2x256xf32>
    %468 = arith.mulf %467, %466 : vector<2x256xf32>
    %469 = arith.addf %461, %468 : vector<2x256xf32>
    %c13_i32 = arith.constant 13 : i32
    %470 = tpu.dynamic_rotate %306 by %c13_i32 dim 1 : vector<2x256xf32>, i32 -> vector<2x256xf32>
    %c0_181 = arith.constant 0 : index
    %c20 = arith.constant 20 : index
    %471 = vector.load %arg30[%c0_181, %c20] : memref<2x49xf32, #tpu.memory_space<vmem>>, vector<2x1xf32>
    %c20_182 = arith.constant 20 : index
    %c0_183 = arith.constant 0 : index
    %472 = vector.load %arg5[%c20_182, %c0_183] : memref<49x256xf32, #tpu.memory_space<vmem>>, vector<1x256xf32>
    %473 = vector.broadcast %472 : vector<1x256xf32> to vector<2x256xf32>
    %474 = arith.mulf %470, %473 : vector<2x256xf32>
    %475 = vector.broadcast %471 : vector<2x1xf32> to vector<2x256xf32>
    %476 = arith.mulf %475, %474 : vector<2x256xf32>
    %477 = arith.addf %469, %476 : vector<2x256xf32>
    %c3_i32 = arith.constant 3 : i32
    %478 = tpu.dynamic_rotate %306 by %c3_i32 dim 1 : vector<2x256xf32>, i32 -> vector<2x256xf32>
    %c0_184 = arith.constant 0 : index
    %c21 = arith.constant 21 : index
    %479 = vector.load %arg30[%c0_184, %c21] : memref<2x49xf32, #tpu.memory_space<vmem>>, vector<2x1xf32>
    %c21_185 = arith.constant 21 : index
    %c0_186 = arith.constant 0 : index
    %480 = vector.load %arg5[%c21_185, %c0_186] : memref<49x256xf32, #tpu.memory_space<vmem>>, vector<1x256xf32>
    %481 = vector.broadcast %480 : vector<1x256xf32> to vector<2x256xf32>
    %482 = arith.mulf %478, %481 : vector<2x256xf32>
    %483 = vector.broadcast %479 : vector<2x1xf32> to vector<2x256xf32>
    %484 = arith.mulf %483, %482 : vector<2x256xf32>
    %485 = arith.addf %477, %484 : vector<2x256xf32>
    %c2_i32 = arith.constant 2 : i32
    %486 = tpu.dynamic_rotate %306 by %c2_i32 dim 1 : vector<2x256xf32>, i32 -> vector<2x256xf32>
    %c0_187 = arith.constant 0 : index
    %c22 = arith.constant 22 : index
    %487 = vector.load %arg30[%c0_187, %c22] : memref<2x49xf32, #tpu.memory_space<vmem>>, vector<2x1xf32>
    %c22_188 = arith.constant 22 : index
    %c0_189 = arith.constant 0 : index
    %488 = vector.load %arg5[%c22_188, %c0_189] : memref<49x256xf32, #tpu.memory_space<vmem>>, vector<1x256xf32>
    %489 = vector.broadcast %488 : vector<1x256xf32> to vector<2x256xf32>
    %490 = arith.mulf %486, %489 : vector<2x256xf32>
    %491 = vector.broadcast %487 : vector<2x1xf32> to vector<2x256xf32>
    %492 = arith.mulf %491, %490 : vector<2x256xf32>
    %493 = arith.addf %485, %492 : vector<2x256xf32>
    %c1_i32_190 = arith.constant 1 : i32
    %494 = tpu.dynamic_rotate %306 by %c1_i32_190 dim 1 : vector<2x256xf32>, i32 -> vector<2x256xf32>
    %c0_191 = arith.constant 0 : index
    %c23 = arith.constant 23 : index
    %495 = vector.load %arg30[%c0_191, %c23] : memref<2x49xf32, #tpu.memory_space<vmem>>, vector<2x1xf32>
    %c23_192 = arith.constant 23 : index
    %c0_193 = arith.constant 0 : index
    %496 = vector.load %arg5[%c23_192, %c0_193] : memref<49x256xf32, #tpu.memory_space<vmem>>, vector<1x256xf32>
    %497 = vector.broadcast %496 : vector<1x256xf32> to vector<2x256xf32>
    %498 = arith.mulf %494, %497 : vector<2x256xf32>
    %499 = vector.broadcast %495 : vector<2x1xf32> to vector<2x256xf32>
    %500 = arith.mulf %499, %498 : vector<2x256xf32>
    %501 = arith.addf %493, %500 : vector<2x256xf32>
    %c255_i32_194 = arith.constant 255 : i32
    %502 = tpu.dynamic_rotate %306 by %c255_i32_194 dim 1 : vector<2x256xf32>, i32 -> vector<2x256xf32>
    %c0_195 = arith.constant 0 : index
    %c25 = arith.constant 25 : index
    %503 = vector.load %arg30[%c0_195, %c25] : memref<2x49xf32, #tpu.memory_space<vmem>>, vector<2x1xf32>
    %c25_196 = arith.constant 25 : index
    %c0_197 = arith.constant 0 : index
    %504 = vector.load %arg5[%c25_196, %c0_197] : memref<49x256xf32, #tpu.memory_space<vmem>>, vector<1x256xf32>
    %505 = vector.broadcast %504 : vector<1x256xf32> to vector<2x256xf32>
    %506 = arith.mulf %502, %505 : vector<2x256xf32>
    %507 = vector.broadcast %503 : vector<2x1xf32> to vector<2x256xf32>
    %508 = arith.mulf %507, %506 : vector<2x256xf32>
    %509 = arith.addf %501, %508 : vector<2x256xf32>
    %c254_i32 = arith.constant 254 : i32
    %510 = tpu.dynamic_rotate %306 by %c254_i32 dim 1 : vector<2x256xf32>, i32 -> vector<2x256xf32>
    %c0_198 = arith.constant 0 : index
    %c26 = arith.constant 26 : index
    %511 = vector.load %arg30[%c0_198, %c26] : memref<2x49xf32, #tpu.memory_space<vmem>>, vector<2x1xf32>
    %c26_199 = arith.constant 26 : index
    %c0_200 = arith.constant 0 : index
    %512 = vector.load %arg5[%c26_199, %c0_200] : memref<49x256xf32, #tpu.memory_space<vmem>>, vector<1x256xf32>
    %513 = vector.broadcast %512 : vector<1x256xf32> to vector<2x256xf32>
    %514 = arith.mulf %510, %513 : vector<2x256xf32>
    %515 = vector.broadcast %511 : vector<2x1xf32> to vector<2x256xf32>
    %516 = arith.mulf %515, %514 : vector<2x256xf32>
    %517 = arith.addf %509, %516 : vector<2x256xf32>
    %c253_i32 = arith.constant 253 : i32
    %518 = tpu.dynamic_rotate %306 by %c253_i32 dim 1 : vector<2x256xf32>, i32 -> vector<2x256xf32>
    %c0_201 = arith.constant 0 : index
    %c27 = arith.constant 27 : index
    %519 = vector.load %arg30[%c0_201, %c27] : memref<2x49xf32, #tpu.memory_space<vmem>>, vector<2x1xf32>
    %c27_202 = arith.constant 27 : index
    %c0_203 = arith.constant 0 : index
    %520 = vector.load %arg5[%c27_202, %c0_203] : memref<49x256xf32, #tpu.memory_space<vmem>>, vector<1x256xf32>
    %521 = vector.broadcast %520 : vector<1x256xf32> to vector<2x256xf32>
    %522 = arith.mulf %518, %521 : vector<2x256xf32>
    %523 = vector.broadcast %519 : vector<2x1xf32> to vector<2x256xf32>
    %524 = arith.mulf %523, %522 : vector<2x256xf32>
    %525 = arith.addf %517, %524 : vector<2x256xf32>
    %c243_i32 = arith.constant 243 : i32
    %526 = tpu.dynamic_rotate %306 by %c243_i32 dim 1 : vector<2x256xf32>, i32 -> vector<2x256xf32>
    %c0_204 = arith.constant 0 : index
    %c28 = arith.constant 28 : index
    %527 = vector.load %arg30[%c0_204, %c28] : memref<2x49xf32, #tpu.memory_space<vmem>>, vector<2x1xf32>
    %c28_205 = arith.constant 28 : index
    %c0_206 = arith.constant 0 : index
    %528 = vector.load %arg5[%c28_205, %c0_206] : memref<49x256xf32, #tpu.memory_space<vmem>>, vector<1x256xf32>
    %529 = vector.broadcast %528 : vector<1x256xf32> to vector<2x256xf32>
    %530 = arith.mulf %526, %529 : vector<2x256xf32>
    %531 = vector.broadcast %527 : vector<2x1xf32> to vector<2x256xf32>
    %532 = arith.mulf %531, %530 : vector<2x256xf32>
    %533 = arith.addf %525, %532 : vector<2x256xf32>
    %c242_i32 = arith.constant 242 : i32
    %534 = tpu.dynamic_rotate %306 by %c242_i32 dim 1 : vector<2x256xf32>, i32 -> vector<2x256xf32>
    %c0_207 = arith.constant 0 : index
    %c29 = arith.constant 29 : index
    %535 = vector.load %arg30[%c0_207, %c29] : memref<2x49xf32, #tpu.memory_space<vmem>>, vector<2x1xf32>
    %c29_208 = arith.constant 29 : index
    %c0_209 = arith.constant 0 : index
    %536 = vector.load %arg5[%c29_208, %c0_209] : memref<49x256xf32, #tpu.memory_space<vmem>>, vector<1x256xf32>
    %537 = vector.broadcast %536 : vector<1x256xf32> to vector<2x256xf32>
    %538 = arith.mulf %534, %537 : vector<2x256xf32>
    %539 = vector.broadcast %535 : vector<2x1xf32> to vector<2x256xf32>
    %540 = arith.mulf %539, %538 : vector<2x256xf32>
    %541 = arith.addf %533, %540 : vector<2x256xf32>
    %c241_i32_210 = arith.constant 241 : i32
    %542 = tpu.dynamic_rotate %306 by %c241_i32_210 dim 1 : vector<2x256xf32>, i32 -> vector<2x256xf32>
    %c0_211 = arith.constant 0 : index
    %c30 = arith.constant 30 : index
    %543 = vector.load %arg30[%c0_211, %c30] : memref<2x49xf32, #tpu.memory_space<vmem>>, vector<2x1xf32>
    %c30_212 = arith.constant 30 : index
    %c0_213 = arith.constant 0 : index
    %544 = vector.load %arg5[%c30_212, %c0_213] : memref<49x256xf32, #tpu.memory_space<vmem>>, vector<1x256xf32>
    %545 = vector.broadcast %544 : vector<1x256xf32> to vector<2x256xf32>
    %546 = arith.mulf %542, %545 : vector<2x256xf32>
    %547 = vector.broadcast %543 : vector<2x1xf32> to vector<2x256xf32>
    %548 = arith.mulf %547, %546 : vector<2x256xf32>
    %549 = arith.addf %541, %548 : vector<2x256xf32>
    %c240_i32_214 = arith.constant 240 : i32
    %550 = tpu.dynamic_rotate %306 by %c240_i32_214 dim 1 : vector<2x256xf32>, i32 -> vector<2x256xf32>
    %c0_215 = arith.constant 0 : index
    %c31 = arith.constant 31 : index
    %551 = vector.load %arg30[%c0_215, %c31] : memref<2x49xf32, #tpu.memory_space<vmem>>, vector<2x1xf32>
    %c31_216 = arith.constant 31 : index
    %c0_217 = arith.constant 0 : index
    %552 = vector.load %arg5[%c31_216, %c0_217] : memref<49x256xf32, #tpu.memory_space<vmem>>, vector<1x256xf32>
    %553 = vector.broadcast %552 : vector<1x256xf32> to vector<2x256xf32>
    %554 = arith.mulf %550, %553 : vector<2x256xf32>
    %555 = vector.broadcast %551 : vector<2x1xf32> to vector<2x256xf32>
    %556 = arith.mulf %555, %554 : vector<2x256xf32>
    %557 = arith.addf %549, %556 : vector<2x256xf32>
    %c239_i32_218 = arith.constant 239 : i32
    %558 = tpu.dynamic_rotate %306 by %c239_i32_218 dim 1 : vector<2x256xf32>, i32 -> vector<2x256xf32>
    %c0_219 = arith.constant 0 : index
    %c32 = arith.constant 32 : index
    %559 = vector.load %arg30[%c0_219, %c32] : memref<2x49xf32, #tpu.memory_space<vmem>>, vector<2x1xf32>
    %c32_220 = arith.constant 32 : index
    %c0_221 = arith.constant 0 : index
    %560 = vector.load %arg5[%c32_220, %c0_221] : memref<49x256xf32, #tpu.memory_space<vmem>>, vector<1x256xf32>
    %561 = vector.broadcast %560 : vector<1x256xf32> to vector<2x256xf32>
    %562 = arith.mulf %558, %561 : vector<2x256xf32>
    %563 = vector.broadcast %559 : vector<2x1xf32> to vector<2x256xf32>
    %564 = arith.mulf %563, %562 : vector<2x256xf32>
    %565 = arith.addf %557, %564 : vector<2x256xf32>
    %c238_i32 = arith.constant 238 : i32
    %566 = tpu.dynamic_rotate %306 by %c238_i32 dim 1 : vector<2x256xf32>, i32 -> vector<2x256xf32>
    %c0_222 = arith.constant 0 : index
    %c33 = arith.constant 33 : index
    %567 = vector.load %arg30[%c0_222, %c33] : memref<2x49xf32, #tpu.memory_space<vmem>>, vector<2x1xf32>
    %c33_223 = arith.constant 33 : index
    %c0_224 = arith.constant 0 : index
    %568 = vector.load %arg5[%c33_223, %c0_224] : memref<49x256xf32, #tpu.memory_space<vmem>>, vector<1x256xf32>
    %569 = vector.broadcast %568 : vector<1x256xf32> to vector<2x256xf32>
    %570 = arith.mulf %566, %569 : vector<2x256xf32>
    %571 = vector.broadcast %567 : vector<2x1xf32> to vector<2x256xf32>
    %572 = arith.mulf %571, %570 : vector<2x256xf32>
    %573 = arith.addf %565, %572 : vector<2x256xf32>
    %c237_i32 = arith.constant 237 : i32
    %574 = tpu.dynamic_rotate %306 by %c237_i32 dim 1 : vector<2x256xf32>, i32 -> vector<2x256xf32>
    %c0_225 = arith.constant 0 : index
    %c34 = arith.constant 34 : index
    %575 = vector.load %arg30[%c0_225, %c34] : memref<2x49xf32, #tpu.memory_space<vmem>>, vector<2x1xf32>
    %c34_226 = arith.constant 34 : index
    %c0_227 = arith.constant 0 : index
    %576 = vector.load %arg5[%c34_226, %c0_227] : memref<49x256xf32, #tpu.memory_space<vmem>>, vector<1x256xf32>
    %577 = vector.broadcast %576 : vector<1x256xf32> to vector<2x256xf32>
    %578 = arith.mulf %574, %577 : vector<2x256xf32>
    %579 = vector.broadcast %575 : vector<2x1xf32> to vector<2x256xf32>
    %580 = arith.mulf %579, %578 : vector<2x256xf32>
    %581 = arith.addf %573, %580 : vector<2x256xf32>
    %c227_i32 = arith.constant 227 : i32
    %582 = tpu.dynamic_rotate %306 by %c227_i32 dim 1 : vector<2x256xf32>, i32 -> vector<2x256xf32>
    %c0_228 = arith.constant 0 : index
    %c35 = arith.constant 35 : index
    %583 = vector.load %arg30[%c0_228, %c35] : memref<2x49xf32, #tpu.memory_space<vmem>>, vector<2x1xf32>
    %c35_229 = arith.constant 35 : index
    %c0_230 = arith.constant 0 : index
    %584 = vector.load %arg5[%c35_229, %c0_230] : memref<49x256xf32, #tpu.memory_space<vmem>>, vector<1x256xf32>
    %585 = vector.broadcast %584 : vector<1x256xf32> to vector<2x256xf32>
    %586 = arith.mulf %582, %585 : vector<2x256xf32>
    %587 = vector.broadcast %583 : vector<2x1xf32> to vector<2x256xf32>
    %588 = arith.mulf %587, %586 : vector<2x256xf32>
    %589 = arith.addf %581, %588 : vector<2x256xf32>
    %c226_i32 = arith.constant 226 : i32
    %590 = tpu.dynamic_rotate %306 by %c226_i32 dim 1 : vector<2x256xf32>, i32 -> vector<2x256xf32>
    %c0_231 = arith.constant 0 : index
    %c36 = arith.constant 36 : index
    %591 = vector.load %arg30[%c0_231, %c36] : memref<2x49xf32, #tpu.memory_space<vmem>>, vector<2x1xf32>
    %c36_232 = arith.constant 36 : index
    %c0_233 = arith.constant 0 : index
    %592 = vector.load %arg5[%c36_232, %c0_233] : memref<49x256xf32, #tpu.memory_space<vmem>>, vector<1x256xf32>
    %593 = vector.broadcast %592 : vector<1x256xf32> to vector<2x256xf32>
    %594 = arith.mulf %590, %593 : vector<2x256xf32>
    %595 = vector.broadcast %591 : vector<2x1xf32> to vector<2x256xf32>
    %596 = arith.mulf %595, %594 : vector<2x256xf32>
    %597 = arith.addf %589, %596 : vector<2x256xf32>
    %c225_i32 = arith.constant 225 : i32
    %598 = tpu.dynamic_rotate %306 by %c225_i32 dim 1 : vector<2x256xf32>, i32 -> vector<2x256xf32>
    %c0_234 = arith.constant 0 : index
    %c37 = arith.constant 37 : index
    %599 = vector.load %arg30[%c0_234, %c37] : memref<2x49xf32, #tpu.memory_space<vmem>>, vector<2x1xf32>
    %c37_235 = arith.constant 37 : index
    %c0_236 = arith.constant 0 : index
    %600 = vector.load %arg5[%c37_235, %c0_236] : memref<49x256xf32, #tpu.memory_space<vmem>>, vector<1x256xf32>
    %601 = vector.broadcast %600 : vector<1x256xf32> to vector<2x256xf32>
    %602 = arith.mulf %598, %601 : vector<2x256xf32>
    %603 = vector.broadcast %599 : vector<2x1xf32> to vector<2x256xf32>
    %604 = arith.mulf %603, %602 : vector<2x256xf32>
    %605 = arith.addf %597, %604 : vector<2x256xf32>
    %c224_i32 = arith.constant 224 : i32
    %606 = tpu.dynamic_rotate %306 by %c224_i32 dim 1 : vector<2x256xf32>, i32 -> vector<2x256xf32>
    %c0_237 = arith.constant 0 : index
    %c38 = arith.constant 38 : index
    %607 = vector.load %arg30[%c0_237, %c38] : memref<2x49xf32, #tpu.memory_space<vmem>>, vector<2x1xf32>
    %c38_238 = arith.constant 38 : index
    %c0_239 = arith.constant 0 : index
    %608 = vector.load %arg5[%c38_238, %c0_239] : memref<49x256xf32, #tpu.memory_space<vmem>>, vector<1x256xf32>
    %609 = vector.broadcast %608 : vector<1x256xf32> to vector<2x256xf32>
    %610 = arith.mulf %606, %609 : vector<2x256xf32>
    %611 = vector.broadcast %607 : vector<2x1xf32> to vector<2x256xf32>
    %612 = arith.mulf %611, %610 : vector<2x256xf32>
    %613 = arith.addf %605, %612 : vector<2x256xf32>
    %c223_i32 = arith.constant 223 : i32
    %614 = tpu.dynamic_rotate %306 by %c223_i32 dim 1 : vector<2x256xf32>, i32 -> vector<2x256xf32>
    %c0_240 = arith.constant 0 : index
    %c39 = arith.constant 39 : index
    %615 = vector.load %arg30[%c0_240, %c39] : memref<2x49xf32, #tpu.memory_space<vmem>>, vector<2x1xf32>
    %c39_241 = arith.constant 39 : index
    %c0_242 = arith.constant 0 : index
    %616 = vector.load %arg5[%c39_241, %c0_242] : memref<49x256xf32, #tpu.memory_space<vmem>>, vector<1x256xf32>
    %617 = vector.broadcast %616 : vector<1x256xf32> to vector<2x256xf32>
    %618 = arith.mulf %614, %617 : vector<2x256xf32>
    %619 = vector.broadcast %615 : vector<2x1xf32> to vector<2x256xf32>
    %620 = arith.mulf %619, %618 : vector<2x256xf32>
    %621 = arith.addf %613, %620 : vector<2x256xf32>
    %c222_i32 = arith.constant 222 : i32
    %622 = tpu.dynamic_rotate %306 by %c222_i32 dim 1 : vector<2x256xf32>, i32 -> vector<2x256xf32>
    %c0_243 = arith.constant 0 : index
    %c40 = arith.constant 40 : index
    %623 = vector.load %arg30[%c0_243, %c40] : memref<2x49xf32, #tpu.memory_space<vmem>>, vector<2x1xf32>
    %c40_244 = arith.constant 40 : index
    %c0_245 = arith.constant 0 : index
    %624 = vector.load %arg5[%c40_244, %c0_245] : memref<49x256xf32, #tpu.memory_space<vmem>>, vector<1x256xf32>
    %625 = vector.broadcast %624 : vector<1x256xf32> to vector<2x256xf32>
    %626 = arith.mulf %622, %625 : vector<2x256xf32>
    %627 = vector.broadcast %623 : vector<2x1xf32> to vector<2x256xf32>
    %628 = arith.mulf %627, %626 : vector<2x256xf32>
    %629 = arith.addf %621, %628 : vector<2x256xf32>
    %c221_i32 = arith.constant 221 : i32
    %630 = tpu.dynamic_rotate %306 by %c221_i32 dim 1 : vector<2x256xf32>, i32 -> vector<2x256xf32>
    %c0_246 = arith.constant 0 : index
    %c41 = arith.constant 41 : index
    %631 = vector.load %arg30[%c0_246, %c41] : memref<2x49xf32, #tpu.memory_space<vmem>>, vector<2x1xf32>
    %c41_247 = arith.constant 41 : index
    %c0_248 = arith.constant 0 : index
    %632 = vector.load %arg5[%c41_247, %c0_248] : memref<49x256xf32, #tpu.memory_space<vmem>>, vector<1x256xf32>
    %633 = vector.broadcast %632 : vector<1x256xf32> to vector<2x256xf32>
    %634 = arith.mulf %630, %633 : vector<2x256xf32>
    %635 = vector.broadcast %631 : vector<2x1xf32> to vector<2x256xf32>
    %636 = arith.mulf %635, %634 : vector<2x256xf32>
    %637 = arith.addf %629, %636 : vector<2x256xf32>
    %c211_i32 = arith.constant 211 : i32
    %638 = tpu.dynamic_rotate %306 by %c211_i32 dim 1 : vector<2x256xf32>, i32 -> vector<2x256xf32>
    %c0_249 = arith.constant 0 : index
    %c42 = arith.constant 42 : index
    %639 = vector.load %arg30[%c0_249, %c42] : memref<2x49xf32, #tpu.memory_space<vmem>>, vector<2x1xf32>
    %c42_250 = arith.constant 42 : index
    %c0_251 = arith.constant 0 : index
    %640 = vector.load %arg5[%c42_250, %c0_251] : memref<49x256xf32, #tpu.memory_space<vmem>>, vector<1x256xf32>
    %641 = vector.broadcast %640 : vector<1x256xf32> to vector<2x256xf32>
    %642 = arith.mulf %638, %641 : vector<2x256xf32>
    %643 = vector.broadcast %639 : vector<2x1xf32> to vector<2x256xf32>
    %644 = arith.mulf %643, %642 : vector<2x256xf32>
    %645 = arith.addf %637, %644 : vector<2x256xf32>
    %c210_i32 = arith.constant 210 : i32
    %646 = tpu.dynamic_rotate %306 by %c210_i32 dim 1 : vector<2x256xf32>, i32 -> vector<2x256xf32>
    %c0_252 = arith.constant 0 : index
    %c43 = arith.constant 43 : index
    %647 = vector.load %arg30[%c0_252, %c43] : memref<2x49xf32, #tpu.memory_space<vmem>>, vector<2x1xf32>
    %c43_253 = arith.constant 43 : index
    %c0_254 = arith.constant 0 : index
    %648 = vector.load %arg5[%c43_253, %c0_254] : memref<49x256xf32, #tpu.memory_space<vmem>>, vector<1x256xf32>
    %649 = vector.broadcast %648 : vector<1x256xf32> to vector<2x256xf32>
    %650 = arith.mulf %646, %649 : vector<2x256xf32>
    %651 = vector.broadcast %647 : vector<2x1xf32> to vector<2x256xf32>
    %652 = arith.mulf %651, %650 : vector<2x256xf32>
    %653 = arith.addf %645, %652 : vector<2x256xf32>
    %c209_i32 = arith.constant 209 : i32
    %654 = tpu.dynamic_rotate %306 by %c209_i32 dim 1 : vector<2x256xf32>, i32 -> vector<2x256xf32>
    %c0_255 = arith.constant 0 : index
    %c44 = arith.constant 44 : index
    %655 = vector.load %arg30[%c0_255, %c44] : memref<2x49xf32, #tpu.memory_space<vmem>>, vector<2x1xf32>
    %c44_256 = arith.constant 44 : index
    %c0_257 = arith.constant 0 : index
    %656 = vector.load %arg5[%c44_256, %c0_257] : memref<49x256xf32, #tpu.memory_space<vmem>>, vector<1x256xf32>
    %657 = vector.broadcast %656 : vector<1x256xf32> to vector<2x256xf32>
    %658 = arith.mulf %654, %657 : vector<2x256xf32>
    %659 = vector.broadcast %655 : vector<2x1xf32> to vector<2x256xf32>
    %660 = arith.mulf %659, %658 : vector<2x256xf32>
    %661 = arith.addf %653, %660 : vector<2x256xf32>
    %c208_i32 = arith.constant 208 : i32
    %662 = tpu.dynamic_rotate %306 by %c208_i32 dim 1 : vector<2x256xf32>, i32 -> vector<2x256xf32>
    %c0_258 = arith.constant 0 : index
    %c45 = arith.constant 45 : index
    %663 = vector.load %arg30[%c0_258, %c45] : memref<2x49xf32, #tpu.memory_space<vmem>>, vector<2x1xf32>
    %c45_259 = arith.constant 45 : index
    %c0_260 = arith.constant 0 : index
    %664 = vector.load %arg5[%c45_259, %c0_260] : memref<49x256xf32, #tpu.memory_space<vmem>>, vector<1x256xf32>
    %665 = vector.broadcast %664 : vector<1x256xf32> to vector<2x256xf32>
    %666 = arith.mulf %662, %665 : vector<2x256xf32>
    %667 = vector.broadcast %663 : vector<2x1xf32> to vector<2x256xf32>
    %668 = arith.mulf %667, %666 : vector<2x256xf32>
    %669 = arith.addf %661, %668 : vector<2x256xf32>
    %c207_i32 = arith.constant 207 : i32
    %670 = tpu.dynamic_rotate %306 by %c207_i32 dim 1 : vector<2x256xf32>, i32 -> vector<2x256xf32>
    %c0_261 = arith.constant 0 : index
    %c46 = arith.constant 46 : index
    %671 = vector.load %arg30[%c0_261, %c46] : memref<2x49xf32, #tpu.memory_space<vmem>>, vector<2x1xf32>
    %c46_262 = arith.constant 46 : index
    %c0_263 = arith.constant 0 : index
    %672 = vector.load %arg5[%c46_262, %c0_263] : memref<49x256xf32, #tpu.memory_space<vmem>>, vector<1x256xf32>
    %673 = vector.broadcast %672 : vector<1x256xf32> to vector<2x256xf32>
    %674 = arith.mulf %670, %673 : vector<2x256xf32>
    %675 = vector.broadcast %671 : vector<2x1xf32> to vector<2x256xf32>
    %676 = arith.mulf %675, %674 : vector<2x256xf32>
    %677 = arith.addf %669, %676 : vector<2x256xf32>
    %c206_i32 = arith.constant 206 : i32
    %678 = tpu.dynamic_rotate %306 by %c206_i32 dim 1 : vector<2x256xf32>, i32 -> vector<2x256xf32>
    %c0_264 = arith.constant 0 : index
    %c47 = arith.constant 47 : index
    %679 = vector.load %arg30[%c0_264, %c47] : memref<2x49xf32, #tpu.memory_space<vmem>>, vector<2x1xf32>
    %c47_265 = arith.constant 47 : index
    %c0_266 = arith.constant 0 : index
    %680 = vector.load %arg5[%c47_265, %c0_266] : memref<49x256xf32, #tpu.memory_space<vmem>>, vector<1x256xf32>
    %681 = vector.broadcast %680 : vector<1x256xf32> to vector<2x256xf32>
    %682 = arith.mulf %678, %681 : vector<2x256xf32>
    %683 = vector.broadcast %679 : vector<2x1xf32> to vector<2x256xf32>
    %684 = arith.mulf %683, %682 : vector<2x256xf32>
    %685 = arith.addf %677, %684 : vector<2x256xf32>
    %c205_i32 = arith.constant 205 : i32
    %686 = tpu.dynamic_rotate %306 by %c205_i32 dim 1 : vector<2x256xf32>, i32 -> vector<2x256xf32>
    %c0_267 = arith.constant 0 : index
    %c48 = arith.constant 48 : index
    %687 = vector.load %arg30[%c0_267, %c48] : memref<2x49xf32, #tpu.memory_space<vmem>>, vector<2x1xf32>
    %c48_268 = arith.constant 48 : index
    %c0_269 = arith.constant 0 : index
    %688 = vector.load %arg5[%c48_268, %c0_269] : memref<49x256xf32, #tpu.memory_space<vmem>>, vector<1x256xf32>
    %689 = vector.broadcast %688 : vector<1x256xf32> to vector<2x256xf32>
    %690 = arith.mulf %686, %689 : vector<2x256xf32>
    %691 = vector.broadcast %687 : vector<2x1xf32> to vector<2x256xf32>
    %692 = arith.mulf %691, %690 : vector<2x256xf32>
    %693 = arith.addf %685, %692 : vector<2x256xf32>
    %cst_270 = arith.constant dense<0.000000e+00> : vector<256xf32>
    %694 = vector.multi_reduction <add>, %693, %cst_270 [0] : vector<2x256xf32> to vector<256xf32>
    %695 = vector.shape_cast %694 : vector<256xf32> to vector<1x256xf32>
    %cst_271 = arith.constant 0.000000e+00 : f32
    %696 = vector.broadcast %cst_271 : f32 to vector<1x256xf32>
    %697 = arith.subf %696, %695 : vector<1x256xf32>
    %698 = math.exp %697 : vector<1x256xf32>
    %cst_272 = arith.constant 1.000000e+00 : f32
    %699 = vector.broadcast %cst_272 : f32 to vector<1x256xf32>
    %700 = arith.addf %699, %698 : vector<1x256xf32>
    %cst_273 = arith.constant 1.000000e+00 : f32
    %701 = vector.broadcast %cst_273 : f32 to vector<1x256xf32>
    %702 = arith.divf %701, %700 : vector<1x256xf32>
    %cst_274 = arith.constant dense<0.000000e+00> : vector<16xf32>
    %703 = vector.multi_reduction <add>, %299, %cst_274 [1] : vector<16x256xf32> to vector<16xf32>
    %704 = vector.shape_cast %703 : vector<16xf32> to vector<16x1xf32>
    %cst_275 = arith.constant 2.560000e+02 : f32
    %705 = vector.broadcast %cst_275 : f32 to vector<16x1xf32>
    %706 = arith.divf %704, %705 : vector<16x1xf32>
    %c0_276 = arith.constant 0 : index
    %c0_277 = arith.constant 0 : index
    %707 = vector.load %arg31[%c0_276, %c0_277] : memref<1x16xf32, #tpu.memory_space<vmem>>, vector<1x16xf32>
    %cst_278 = arith.constant dense<0.000000e+00> : vector<1x1xf32>
    %708 = tpu.matmul %707, %706, %cst_278 {dimension_numbers = #tpu.dot_dimension_numbers<[1], [0], [0], [1], [0, 0, 1, 1], [], []>} : vector<1x16xf32>, vector<16x1xf32>, vector<1x1xf32> -> vector<1x1xf32>
    %cst_279 = arith.constant 0.000000e+00 : f32
    %709 = vector.broadcast %cst_279 : f32 to vector<1x1xf32>
    %710 = arith.maximumf %708, %709 : vector<1x1xf32>
    %c0_280 = arith.constant 0 : index
    %c0_281 = arith.constant 0 : index
    %711 = vector.load %arg32[%c0_280, %c0_281] : memref<16x1xf32, #tpu.memory_space<vmem>>, vector<16x1xf32>
    %cst_282 = arith.constant dense<0.000000e+00> : vector<16x1xf32>
    %712 = tpu.matmul %711, %710, %cst_282 {dimension_numbers = #tpu.dot_dimension_numbers<[1], [0], [0], [1], [0, 0, 1, 1], [], []>} : vector<16x1xf32>, vector<1x1xf32>, vector<16x1xf32> -> vector<16x1xf32>
    %cst_283 = arith.constant dense<0xFF800000> : vector<16xf32>
    %713 = vector.multi_reduction <maximumf>, %299, %cst_283 [1] : vector<16x256xf32> to vector<16xf32>
    %714 = vector.shape_cast %713 : vector<16xf32> to vector<16x1xf32>
    %c0_284 = arith.constant 0 : index
    %c0_285 = arith.constant 0 : index
    %715 = vector.load %arg31[%c0_284, %c0_285] : memref<1x16xf32, #tpu.memory_space<vmem>>, vector<1x16xf32>
    %cst_286 = arith.constant dense<0.000000e+00> : vector<1x1xf32>
    %716 = tpu.matmul %715, %714, %cst_286 {dimension_numbers = #tpu.dot_dimension_numbers<[1], [0], [0], [1], [0, 0, 1, 1], [], []>} : vector<1x16xf32>, vector<16x1xf32>, vector<1x1xf32> -> vector<1x1xf32>
    %cst_287 = arith.constant 0.000000e+00 : f32
    %717 = vector.broadcast %cst_287 : f32 to vector<1x1xf32>
    %718 = arith.maximumf %716, %717 : vector<1x1xf32>
    %c0_288 = arith.constant 0 : index
    %c0_289 = arith.constant 0 : index
    %719 = vector.load %arg32[%c0_288, %c0_289] : memref<16x1xf32, #tpu.memory_space<vmem>>, vector<16x1xf32>
    %cst_290 = arith.constant dense<0.000000e+00> : vector<16x1xf32>
    %720 = tpu.matmul %719, %718, %cst_290 {dimension_numbers = #tpu.dot_dimension_numbers<[1], [0], [0], [1], [0, 0, 1, 1], [], []>} : vector<16x1xf32>, vector<1x1xf32>, vector<16x1xf32> -> vector<16x1xf32>
    %721 = arith.addf %712, %720 : vector<16x1xf32>
    %cst_291 = arith.constant 0.000000e+00 : f32
    %722 = vector.broadcast %cst_291 : f32 to vector<16x1xf32>
    %723 = arith.subf %722, %721 : vector<16x1xf32>
    %724 = math.exp %723 : vector<16x1xf32>
    %cst_292 = arith.constant 1.000000e+00 : f32
    %725 = vector.broadcast %cst_292 : f32 to vector<16x1xf32>
    %726 = arith.addf %725, %724 : vector<16x1xf32>
    %cst_293 = arith.constant 1.000000e+00 : f32
    %727 = vector.broadcast %cst_293 : f32 to vector<16x1xf32>
    %728 = arith.divf %727, %726 : vector<16x1xf32>
    %729 = vector.broadcast %702 : vector<1x256xf32> to vector<16x256xf32>
    %730 = arith.mulf %299, %729 : vector<16x256xf32>
    %731 = vector.broadcast %728 : vector<16x1xf32> to vector<16x256xf32>
    %732 = arith.mulf %298, %731 : vector<16x256xf32>
    %733 = arith.addf %730, %732 : vector<16x256xf32>
    %c0_294 = arith.constant 0 : index
    %c0_295 = arith.constant 0 : index
    %734 = vector.load %arg33[%c0_294, %c0_295] : memref<16x16xbf16, #tpu.memory_space<vmem>>, vector<16x16xbf16>
    %735 = arith.truncf %733 : vector<16x256xf32> to vector<16x256xbf16>
    %cst_296 = arith.constant dense<0.000000e+00> : vector<16x256xf32>
    %736 = tpu.matmul %734, %735, %cst_296 {dimension_numbers = #tpu.dot_dimension_numbers<[1], [0], [0], [1], [0, 0, 1, 1], [], []>} : vector<16x16xbf16>, vector<16x256xbf16>, vector<16x256xf32> -> vector<16x256xf32>
    %c0_297 = arith.constant 0 : index
    %c0_298 = arith.constant 0 : index
    %737 = vector.load %arg34[%c0_297, %c0_298] : memref<16x1xf32, #tpu.memory_space<vmem>>, vector<16x1xf32>
    %738 = vector.broadcast %737 : vector<16x1xf32> to vector<16x256xf32>
    %739 = arith.addf %736, %738 : vector<16x256xf32>
    %c0_299 = arith.constant 0 : index
    %c0_300 = arith.constant 0 : index
    %740 = vector.load %arg23[%c0_299, %c0_300] : memref<32x16xbf16, #tpu.memory_space<vmem>>, vector<32x16xbf16>
    %741 = arith.truncf %739 : vector<16x256xf32> to vector<16x256xbf16>
    %cst_301 = arith.constant dense<0.000000e+00> : vector<32x256xf32>
    %742 = tpu.matmul %740, %741, %cst_301 {dimension_numbers = #tpu.dot_dimension_numbers<[1], [0], [0], [1], [0, 0, 1, 1], [], []>} : vector<32x16xbf16>, vector<16x256xbf16>, vector<32x256xf32> -> vector<32x256xf32>
    %c0_302 = arith.constant 0 : index
    %c0_303 = arith.constant 0 : index
    %743 = vector.load %arg24[%c0_302, %c0_303] : memref<32x1xf32, #tpu.memory_space<vmem>>, vector<32x1xf32>
    %744 = vector.broadcast %743 : vector<32x1xf32> to vector<32x256xf32>
    %745 = arith.addf %742, %744 : vector<32x256xf32>
    %c0_304 = arith.constant 0 : index
    %c0_305 = arith.constant 0 : index
    %746 = vector.load %arg25[%c0_304, %c0_305] : memref<32x9xf32, #tpu.memory_space<vmem>>, vector<32x9xf32>
    %c0_306 = arith.constant 0 : index
    %c0_307 = arith.constant 0 : index
    %747 = vector.load %arg26[%c0_306, %c0_307] : memref<32x1xf32, #tpu.memory_space<vmem>>, vector<32x1xf32>
    %748 = vector.extract_strided_slice %746 {offsets = [0, 4], sizes = [32, 1], strides = [1, 1]} : vector<32x9xf32> to vector<32x1xf32>
    %749 = vector.broadcast %748 : vector<32x1xf32> to vector<32x256xf32>
    %750 = arith.mulf %749, %745 : vector<32x256xf32>
    %751 = vector.broadcast %747 : vector<32x1xf32> to vector<32x256xf32>
    %752 = arith.addf %750, %751 : vector<32x256xf32>
    %c17_i32_308 = arith.constant 17 : i32
    %753 = tpu.dynamic_rotate %745 by %c17_i32_308 dim 1 : vector<32x256xf32>, i32 -> vector<32x256xf32>
    %754 = vector.extract_strided_slice %746 {offsets = [0, 0], sizes = [32, 1], strides = [1, 1]} : vector<32x9xf32> to vector<32x1xf32>
    %c0_309 = arith.constant 0 : index
    %c0_310 = arith.constant 0 : index
    %755 = vector.load %arg4[%c0_309, %c0_310] : memref<9x256xf32, #tpu.memory_space<vmem>>, vector<1x256xf32>
    %756 = vector.broadcast %755 : vector<1x256xf32> to vector<32x256xf32>
    %757 = arith.mulf %753, %756 : vector<32x256xf32>
    %758 = vector.broadcast %754 : vector<32x1xf32> to vector<32x256xf32>
    %759 = arith.mulf %758, %757 : vector<32x256xf32>
    %760 = arith.addf %752, %759 : vector<32x256xf32>
    %c16_i32_311 = arith.constant 16 : i32
    %761 = tpu.dynamic_rotate %745 by %c16_i32_311 dim 1 : vector<32x256xf32>, i32 -> vector<32x256xf32>
    %762 = vector.extract_strided_slice %746 {offsets = [0, 1], sizes = [32, 1], strides = [1, 1]} : vector<32x9xf32> to vector<32x1xf32>
    %c1_312 = arith.constant 1 : index
    %c0_313 = arith.constant 0 : index
    %763 = vector.load %arg4[%c1_312, %c0_313] : memref<9x256xf32, #tpu.memory_space<vmem>>, vector<1x256xf32>
    %764 = vector.broadcast %763 : vector<1x256xf32> to vector<32x256xf32>
    %765 = arith.mulf %761, %764 : vector<32x256xf32>
    %766 = vector.broadcast %762 : vector<32x1xf32> to vector<32x256xf32>
    %767 = arith.mulf %766, %765 : vector<32x256xf32>
    %768 = arith.addf %760, %767 : vector<32x256xf32>
    %c15_i32_314 = arith.constant 15 : i32
    %769 = tpu.dynamic_rotate %745 by %c15_i32_314 dim 1 : vector<32x256xf32>, i32 -> vector<32x256xf32>
    %770 = vector.extract_strided_slice %746 {offsets = [0, 2], sizes = [32, 1], strides = [1, 1]} : vector<32x9xf32> to vector<32x1xf32>
    %c2_315 = arith.constant 2 : index
    %c0_316 = arith.constant 0 : index
    %771 = vector.load %arg4[%c2_315, %c0_316] : memref<9x256xf32, #tpu.memory_space<vmem>>, vector<1x256xf32>
    %772 = vector.broadcast %771 : vector<1x256xf32> to vector<32x256xf32>
    %773 = arith.mulf %769, %772 : vector<32x256xf32>
    %774 = vector.broadcast %770 : vector<32x1xf32> to vector<32x256xf32>
    %775 = arith.mulf %774, %773 : vector<32x256xf32>
    %776 = arith.addf %768, %775 : vector<32x256xf32>
    %c1_i32_317 = arith.constant 1 : i32
    %777 = tpu.dynamic_rotate %745 by %c1_i32_317 dim 1 : vector<32x256xf32>, i32 -> vector<32x256xf32>
    %778 = vector.extract_strided_slice %746 {offsets = [0, 3], sizes = [32, 1], strides = [1, 1]} : vector<32x9xf32> to vector<32x1xf32>
    %c3_318 = arith.constant 3 : index
    %c0_319 = arith.constant 0 : index
    %779 = vector.load %arg4[%c3_318, %c0_319] : memref<9x256xf32, #tpu.memory_space<vmem>>, vector<1x256xf32>
    %780 = vector.broadcast %779 : vector<1x256xf32> to vector<32x256xf32>
    %781 = arith.mulf %777, %780 : vector<32x256xf32>
    %782 = vector.broadcast %778 : vector<32x1xf32> to vector<32x256xf32>
    %783 = arith.mulf %782, %781 : vector<32x256xf32>
    %784 = arith.addf %776, %783 : vector<32x256xf32>
    %c255_i32_320 = arith.constant 255 : i32
    %785 = tpu.dynamic_rotate %745 by %c255_i32_320 dim 1 : vector<32x256xf32>, i32 -> vector<32x256xf32>
    %786 = vector.extract_strided_slice %746 {offsets = [0, 5], sizes = [32, 1], strides = [1, 1]} : vector<32x9xf32> to vector<32x1xf32>
    %c5_321 = arith.constant 5 : index
    %c0_322 = arith.constant 0 : index
    %787 = vector.load %arg4[%c5_321, %c0_322] : memref<9x256xf32, #tpu.memory_space<vmem>>, vector<1x256xf32>
    %788 = vector.broadcast %787 : vector<1x256xf32> to vector<32x256xf32>
    %789 = arith.mulf %785, %788 : vector<32x256xf32>
    %790 = vector.broadcast %786 : vector<32x1xf32> to vector<32x256xf32>
    %791 = arith.mulf %790, %789 : vector<32x256xf32>
    %792 = arith.addf %784, %791 : vector<32x256xf32>
    %c241_i32_323 = arith.constant 241 : i32
    %793 = tpu.dynamic_rotate %745 by %c241_i32_323 dim 1 : vector<32x256xf32>, i32 -> vector<32x256xf32>
    %794 = vector.extract_strided_slice %746 {offsets = [0, 6], sizes = [32, 1], strides = [1, 1]} : vector<32x9xf32> to vector<32x1xf32>
    %c6_324 = arith.constant 6 : index
    %c0_325 = arith.constant 0 : index
    %795 = vector.load %arg4[%c6_324, %c0_325] : memref<9x256xf32, #tpu.memory_space<vmem>>, vector<1x256xf32>
    %796 = vector.broadcast %795 : vector<1x256xf32> to vector<32x256xf32>
    %797 = arith.mulf %793, %796 : vector<32x256xf32>
    %798 = vector.broadcast %794 : vector<32x1xf32> to vector<32x256xf32>
    %799 = arith.mulf %798, %797 : vector<32x256xf32>
    %800 = arith.addf %792, %799 : vector<32x256xf32>
    %c240_i32_326 = arith.constant 240 : i32
    %801 = tpu.dynamic_rotate %745 by %c240_i32_326 dim 1 : vector<32x256xf32>, i32 -> vector<32x256xf32>
    %802 = vector.extract_strided_slice %746 {offsets = [0, 7], sizes = [32, 1], strides = [1, 1]} : vector<32x9xf32> to vector<32x1xf32>
    %c7_327 = arith.constant 7 : index
    %c0_328 = arith.constant 0 : index
    %803 = vector.load %arg4[%c7_327, %c0_328] : memref<9x256xf32, #tpu.memory_space<vmem>>, vector<1x256xf32>
    %804 = vector.broadcast %803 : vector<1x256xf32> to vector<32x256xf32>
    %805 = arith.mulf %801, %804 : vector<32x256xf32>
    %806 = vector.broadcast %802 : vector<32x1xf32> to vector<32x256xf32>
    %807 = arith.mulf %806, %805 : vector<32x256xf32>
    %808 = arith.addf %800, %807 : vector<32x256xf32>
    %c239_i32_329 = arith.constant 239 : i32
    %809 = tpu.dynamic_rotate %745 by %c239_i32_329 dim 1 : vector<32x256xf32>, i32 -> vector<32x256xf32>
    %810 = vector.extract_strided_slice %746 {offsets = [0, 8], sizes = [32, 1], strides = [1, 1]} : vector<32x9xf32> to vector<32x1xf32>
    %c8_330 = arith.constant 8 : index
    %c0_331 = arith.constant 0 : index
    %811 = vector.load %arg4[%c8_330, %c0_331] : memref<9x256xf32, #tpu.memory_space<vmem>>, vector<1x256xf32>
    %812 = vector.broadcast %811 : vector<1x256xf32> to vector<32x256xf32>
    %813 = arith.mulf %809, %812 : vector<32x256xf32>
    %814 = vector.broadcast %810 : vector<32x1xf32> to vector<32x256xf32>
    %815 = arith.mulf %814, %813 : vector<32x256xf32>
    %816 = arith.addf %808, %815 : vector<32x256xf32>
    %817 = vector.extract_strided_slice %816 {offsets = [0, 0], sizes = [16, 256], strides = [1, 1]} : vector<32x256xf32> to vector<16x256xf32>
    %818 = vector.extract_strided_slice %816 {offsets = [16, 0], sizes = [16, 256], strides = [1, 1]} : vector<32x256xf32> to vector<16x256xf32>
    %c0_332 = arith.constant 0 : index
    %c0_333 = arith.constant 0 : index
    %819 = vector.load %arg29[%c0_332, %c0_333] : memref<16x1xf32, #tpu.memory_space<vmem>>, vector<16x1xf32>
    %c0_334 = arith.constant 0 : index
    %c0_335 = arith.constant 0 : index
    %820 = vector.load %arg7[%c0_334, %c0_335] : memref<16x16xf32, #tpu.memory_space<vmem>>, vector<16x16xf32>
    %c0_336 = arith.constant 0 : index
    %c0_337 = arith.constant 0 : index
    %821 = vector.load %arg27[%c0_336, %c0_337] : memref<16x16xbf16, #tpu.memory_space<vmem>>, vector<16x16xbf16>
    %c0_338 = arith.constant 0 : index
    %c0_339 = arith.constant 0 : index
    %822 = vector.load %arg28[%c0_338, %c0_339] : memref<16x1xf32, #tpu.memory_space<vmem>>, vector<16x1xf32>
    %823 = arith.mulf %176, %176 : vector<16x256xf32>
    %cst_340 = arith.constant dense<0.000000e+00> : vector<16xf32>
    %824 = vector.multi_reduction <add>, %823, %cst_340 [1] : vector<16x256xf32> to vector<16xf32>
    %825 = vector.shape_cast %824 : vector<16xf32> to vector<16x1xf32>
    %cst_341 = arith.constant 1.000000e-24 : f32
    %826 = vector.broadcast %cst_341 : f32 to vector<16x1xf32>
    %827 = arith.addf %825, %826 : vector<16x1xf32>
    %828 = math.rsqrt %827 : vector<16x1xf32>
    %829 = vector.broadcast %828 : vector<16x1xf32> to vector<16x256xf32>
    %830 = arith.mulf %176, %829 : vector<16x256xf32>
    %831 = arith.mulf %817, %817 : vector<16x256xf32>
    %cst_342 = arith.constant dense<0.000000e+00> : vector<16xf32>
    %832 = vector.multi_reduction <add>, %831, %cst_342 [1] : vector<16x256xf32> to vector<16xf32>
    %833 = vector.shape_cast %832 : vector<16xf32> to vector<16x1xf32>
    %cst_343 = arith.constant 1.000000e-24 : f32
    %834 = vector.broadcast %cst_343 : f32 to vector<16x1xf32>
    %835 = arith.addf %833, %834 : vector<16x1xf32>
    %836 = math.rsqrt %835 : vector<16x1xf32>
    %837 = vector.broadcast %836 : vector<16x1xf32> to vector<16x256xf32>
    %838 = arith.mulf %817, %837 : vector<16x256xf32>
    %839 = arith.truncf %830 : vector<16x256xf32> to vector<16x256xbf16>
    %840 = arith.truncf %838 : vector<16x256xf32> to vector<16x256xbf16>
    %cst_344 = arith.constant dense<0.000000e+00> : vector<16x16xf32>
    %841 = tpu.matmul %839, %840, %cst_344 {dimension_numbers = #tpu.dot_dimension_numbers<[1], [1], [0], [0], [0, 0, 1, 0], [], []>} : vector<16x256xbf16>, vector<16x256xbf16>, vector<16x16xf32> -> vector<16x16xf32>
    %842 = vector.broadcast %819 : vector<16x1xf32> to vector<16x16xf32>
    %843 = arith.mulf %841, %842 : vector<16x16xf32>
    %844 = arith.addf %843, %820 : vector<16x16xf32>
    %cst_345 = arith.constant dense<0xFF800000> : vector<16xf32>
    %845 = vector.multi_reduction <maximumf>, %844, %cst_345 [1] : vector<16x16xf32> to vector<16xf32>
    %846 = vector.shape_cast %845 : vector<16xf32> to vector<16x1xf32>
    %847 = vector.broadcast %846 : vector<16x1xf32> to vector<16x16xf32>
    %848 = arith.subf %844, %847 : vector<16x16xf32>
    %849 = math.exp %848 : vector<16x16xf32>
    %cst_346 = arith.constant dense<0.000000e+00> : vector<16xf32>
    %850 = vector.multi_reduction <add>, %849, %cst_346 [1] : vector<16x16xf32> to vector<16xf32>
    %851 = vector.shape_cast %850 : vector<16xf32> to vector<16x1xf32>
    %852 = tpu.reciprocal %851 {approx = true} : vector<16x1xf32> -> vector<16x1xf32>
    %853 = vector.broadcast %852 : vector<16x1xf32> to vector<16x16xf32>
    %854 = arith.mulf %849, %853 : vector<16x16xf32>
    %855 = arith.truncf %854 : vector<16x16xf32> to vector<16x16xbf16>
    %856 = arith.truncf %818 : vector<16x256xf32> to vector<16x256xbf16>
    %cst_347 = arith.constant dense<0.000000e+00> : vector<16x256xf32>
    %857 = tpu.matmul %855, %856, %cst_347 {dimension_numbers = #tpu.dot_dimension_numbers<[1], [0], [0], [1], [0, 0, 1, 1], [], []>} : vector<16x16xbf16>, vector<16x256xbf16>, vector<16x256xf32> -> vector<16x256xf32>
    %858 = arith.truncf %857 : vector<16x256xf32> to vector<16x256xbf16>
    %cst_348 = arith.constant dense<0.000000e+00> : vector<16x256xf32>
    %859 = tpu.matmul %821, %858, %cst_348 {dimension_numbers = #tpu.dot_dimension_numbers<[1], [0], [0], [1], [0, 0, 1, 1], [], []>} : vector<16x16xbf16>, vector<16x256xbf16>, vector<16x256xf32> -> vector<16x256xf32>
    %860 = vector.broadcast %822 : vector<16x1xf32> to vector<16x256xf32>
    %861 = arith.addf %859, %860 : vector<16x256xf32>
    %c0_349 = arith.constant 0 : index
    %c0_350 = arith.constant 0 : index
    %862 = vector.load %arg35[%c0_349, %c0_350] : memref<16x1xf32, #tpu.memory_space<vmem>>, vector<16x1xf32>
    %863 = vector.broadcast %862 : vector<16x1xf32> to vector<16x256xf32>
    %864 = arith.mulf %861, %863 : vector<16x256xf32>
    %c0_351 = arith.constant 0 : index
    %c0_352 = arith.constant 0 : index
    %865 = vector.load %arg36[%c0_351, %c0_352] : memref<16x1xf32, #tpu.memory_space<vmem>>, vector<16x1xf32>
    %866 = vector.broadcast %865 : vector<16x1xf32> to vector<16x256xf32>
    %867 = arith.mulf %1, %866 : vector<16x256xf32>
    %868 = arith.addf %864, %867 : vector<16x256xf32>
    %c0_353 = arith.constant 0 : index
    %c0_354 = arith.constant 0 : index
    %c0_355 = arith.constant 0 : index
    %869 = vector.load %arg37[%c0_353, %c0_354, %c0_355] : memref<1x16x256xf32, #tpu.memory_space<vmem>>, vector<1x16x256xf32>
    %870 = vector.shape_cast %869 : vector<1x16x256xf32> to vector<16x256xf32>
    %871 = vector.shape_cast %868 : vector<16x256xf32> to vector<1x16x256xf32>
    tpu.vector_store %arg37[%c0_353, %c0_354, %c0_355], %871 {strides = array<i32>} : memref<1x16x256xf32, #tpu.memory_space<vmem>>, vector<1x16x256xf32>,
    return
  }
  func.func @transform_0(%arg0: i32) -> (i32, i32, i32) {
    %c0_i32 = arith.constant 0 : i32
    %c0_i32_0 = arith.constant 0 : i32
    %c0_i32_1 = arith.constant 0 : i32
    return %arg0, %c0_i32, %c0_i32_0 : i32, i32, i32
  }
  func.func @transform_1(%arg0: i32) -> (i32, i32, i32) {
    %c0_i32 = arith.constant 0 : i32
    %c0_i32_0 = arith.constant 0 : i32
    %c0_i32_1 = arith.constant 0 : i32
    return %arg0, %c0_i32, %c0_i32_0 : i32, i32, i32
  }
  func.func @transform_2(%arg0: i32) -> (i32, i32) {
    %c0_i32 = arith.constant 0 : i32
    %c0_i32_0 = arith.constant 0 : i32
    %c0_i32_1 = arith.constant 0 : i32
    return %c0_i32, %c0_i32_0 : i32, i32
  }
  func.func @transform_3(%arg0: i32) -> (i32, i32) {
    %c0_i32 = arith.constant 0 : i32
    %c0_i32_0 = arith.constant 0 : i32
    %c0_i32_1 = arith.constant 0 : i32
    return %c0_i32, %c0_i32_0 : i32, i32
  }
  func.func @transform_4(%arg0: i32) -> (i32, i32) {
    %c0_i32 = arith.constant 0 : i32
    %c0_i32_0 = arith.constant 0 : i32
    %c0_i32_1 = arith.constant 0 : i32
    return %c0_i32, %c0_i32_0 : i32, i32
  }
  func.func @transform_5(%arg0: i32) -> (i32, i32) {
    %c0_i32 = arith.constant 0 : i32
    %c0_i32_0 = arith.constant 0 : i32
    %c0_i32_1 = arith.constant 0 : i32
    return %c0_i32, %c0_i32_0 : i32, i32
  }
  func.func @transform_6(%arg0: i32) -> (i32, i32) {
    %c0_i32 = arith.constant 0 : i32
    %c0_i32_0 = arith.constant 0 : i32
    %c0_i32_1 = arith.constant 0 : i32
    return %c0_i32, %c0_i32_0 : i32, i32
  }
  func.func @transform_7(%arg0: i32) -> (i32, i32) {
    %c0_i32 = arith.constant 0 : i32
    %c0_i32_0 = arith.constant 0 : i32
    %c0_i32_1 = arith.constant 0 : i32
    return %c0_i32, %c0_i32_0 : i32, i32
  }
  func.func @transform_8(%arg0: i32) -> (i32, i32) {
    %c0_i32 = arith.constant 0 : i32
    %c0_i32_0 = arith.constant 0 : i32
    %c0_i32_1 = arith.constant 0 : i32
    return %c0_i32, %c0_i32_0 : i32, i32
  }
  func.func @transform_9(%arg0: i32) -> (i32, i32) {
    %c0_i32 = arith.constant 0 : i32
    %c0_i32_0 = arith.constant 0 : i32
    %c0_i32_1 = arith.constant 0 : i32
    return %c0_i32, %c0_i32_0 : i32, i32
  }
  func.func @transform_10(%arg0: i32) -> (i32, i32) {
    %c0_i32 = arith.constant 0 : i32
    %c0_i32_0 = arith.constant 0 : i32
    %c0_i32_1 = arith.constant 0 : i32
    return %c0_i32, %c0_i32_0 : i32, i32
  }
  func.func @transform_11(%arg0: i32) -> (i32, i32) {
    %c0_i32 = arith.constant 0 : i32
    %c0_i32_0 = arith.constant 0 : i32
    %c0_i32_1 = arith.constant 0 : i32
    return %c0_i32, %c0_i32_0 : i32, i32
  }
  func.func @transform_12(%arg0: i32) -> (i32, i32) {
    %c0_i32 = arith.constant 0 : i32
    %c0_i32_0 = arith.constant 0 : i32
    %c0_i32_1 = arith.constant 0 : i32
    return %c0_i32, %c0_i32_0 : i32, i32
  }
  func.func @transform_13(%arg0: i32) -> (i32, i32) {
    %c0_i32 = arith.constant 0 : i32
    %c0_i32_0 = arith.constant 0 : i32
    %c0_i32_1 = arith.constant 0 : i32
    return %c0_i32, %c0_i32_0 : i32, i32
  }
  func.func @transform_14(%arg0: i32) -> (i32, i32) {
    %c0_i32 = arith.constant 0 : i32
    %c0_i32_0 = arith.constant 0 : i32
    %c0_i32_1 = arith.constant 0 : i32
    return %c0_i32, %c0_i32_0 : i32, i32
  }
  func.func @transform_15(%arg0: i32) -> (i32, i32) {
    %c0_i32 = arith.constant 0 : i32
    %c0_i32_0 = arith.constant 0 : i32
    %c0_i32_1 = arith.constant 0 : i32
    return %c0_i32, %c0_i32_0 : i32, i32
  }
  func.func @transform_16(%arg0: i32) -> (i32, i32) {
    %c0_i32 = arith.constant 0 : i32
    %c0_i32_0 = arith.constant 0 : i32
    %c0_i32_1 = arith.constant 0 : i32
    return %c0_i32, %c0_i32_0 : i32, i32
  }
  func.func @transform_17(%arg0: i32) -> (i32, i32) {
    %c0_i32 = arith.constant 0 : i32
    %c0_i32_0 = arith.constant 0 : i32
    %c0_i32_1 = arith.constant 0 : i32
    return %c0_i32, %c0_i32_0 : i32, i32
  }
  func.func @transform_18(%arg0: i32) -> (i32, i32) {
    %c0_i32 = arith.constant 0 : i32
    %c0_i32_0 = arith.constant 0 : i32
    %c0_i32_1 = arith.constant 0 : i32
    return %c0_i32, %c0_i32_0 : i32, i32
  }
  func.func @transform_19(%arg0: i32) -> (i32, i32) {
    %c0_i32 = arith.constant 0 : i32
    %c0_i32_0 = arith.constant 0 : i32
    %c0_i32_1 = arith.constant 0 : i32
    return %c0_i32, %c0_i32_0 : i32, i32
  }
  func.func @transform_20(%arg0: i32) -> (i32, i32) {
    %c0_i32 = arith.constant 0 : i32
    %c0_i32_0 = arith.constant 0 : i32
    %c0_i32_1 = arith.constant 0 : i32
    return %c0_i32, %c0_i32_0 : i32, i32
  }
  func.func @transform_21(%arg0: i32) -> (i32, i32) {
    %c0_i32 = arith.constant 0 : i32
    %c0_i32_0 = arith.constant 0 : i32
    %c0_i32_1 = arith.constant 0 : i32
    return %c0_i32, %c0_i32_0 : i32, i32
  }
  func.func @transform_22(%arg0: i32) -> (i32, i32) {
    %c0_i32 = arith.constant 0 : i32
    %c0_i32_0 = arith.constant 0 : i32
    %c0_i32_1 = arith.constant 0 : i32
    return %c0_i32, %c0_i32_0 : i32, i32
  }
  func.func @transform_23(%arg0: i32) -> (i32, i32) {
    %c0_i32 = arith.constant 0 : i32
    %c0_i32_0 = arith.constant 0 : i32
    %c0_i32_1 = arith.constant 0 : i32
    return %c0_i32, %c0_i32_0 : i32, i32
  }
  func.func @transform_24(%arg0: i32) -> (i32, i32) {
    %c0_i32 = arith.constant 0 : i32
    %c0_i32_0 = arith.constant 0 : i32
    %c0_i32_1 = arith.constant 0 : i32
    return %c0_i32, %c0_i32_0 : i32, i32
  }
  func.func @transform_25(%arg0: i32) -> (i32, i32) {
    %c0_i32 = arith.constant 0 : i32
    %c0_i32_0 = arith.constant 0 : i32
    %c0_i32_1 = arith.constant 0 : i32
    return %c0_i32, %c0_i32_0 : i32, i32
  }
  func.func @transform_26(%arg0: i32) -> (i32, i32) {
    %c0_i32 = arith.constant 0 : i32
    %c0_i32_0 = arith.constant 0 : i32
    %c0_i32_1 = arith.constant 0 : i32
    return %c0_i32, %c0_i32_0 : i32, i32
  }
  func.func @transform_27(%arg0: i32) -> (i32, i32) {
    %c0_i32 = arith.constant 0 : i32
    %c0_i32_0 = arith.constant 0 : i32
    %c0_i32_1 = arith.constant 0 : i32
    return %c0_i32, %c0_i32_0 : i32, i32
  }
  func.func @transform_28(%arg0: i32) -> (i32, i32) {
    %c0_i32 = arith.constant 0 : i32
    %c0_i32_0 = arith.constant 0 : i32
    %c0_i32_1 = arith.constant 0 : i32
    return %c0_i32, %c0_i32_0 : i32, i32
  }
  func.func @transform_29(%arg0: i32) -> (i32, i32) {
    %c0_i32 = arith.constant 0 : i32
    %c0_i32_0 = arith.constant 0 : i32
    %c0_i32_1 = arith.constant 0 : i32
    return %c0_i32, %c0_i32_0 : i32, i32
  }
  func.func @transform_30(%arg0: i32) -> (i32, i32) {
    %c0_i32 = arith.constant 0 : i32
    %c0_i32_0 = arith.constant 0 : i32
    %c0_i32_1 = arith.constant 0 : i32
    return %c0_i32, %c0_i32_0 : i32, i32
  }
  func.func @transform_31(%arg0: i32) -> (i32, i32) {
    %c0_i32 = arith.constant 0 : i32
    %c0_i32_0 = arith.constant 0 : i32
    %c0_i32_1 = arith.constant 0 : i32
    return %c0_i32, %c0_i32_0 : i32, i32
  }
  func.func @transform_32(%arg0: i32) -> (i32, i32) {
    %c0_i32 = arith.constant 0 : i32
    %c0_i32_0 = arith.constant 0 : i32
    %c0_i32_1 = arith.constant 0 : i32
    return %c0_i32, %c0_i32_0 : i32, i32
  }
  func.func @transform_33(%arg0: i32) -> (i32, i32) {
    %c0_i32 = arith.constant 0 : i32
    %c0_i32_0 = arith.constant 0 : i32
    %c0_i32_1 = arith.constant 0 : i32
    return %c0_i32, %c0_i32_0 : i32, i32
  }
  func.func @transform_34(%arg0: i32) -> (i32, i32) {
    %c0_i32 = arith.constant 0 : i32
    %c0_i32_0 = arith.constant 0 : i32
    %c0_i32_1 = arith.constant 0 : i32
    return %c0_i32, %c0_i32_0 : i32, i32
  }
  func.func @transform_35(%arg0: i32) -> (i32, i32) {
    %c0_i32 = arith.constant 0 : i32
    %c0_i32_0 = arith.constant 0 : i32
    %c0_i32_1 = arith.constant 0 : i32
    return %c0_i32, %c0_i32_0 : i32, i32
  }
  func.func @transform_36(%arg0: i32) -> (i32, i32, i32) {
    %c0_i32 = arith.constant 0 : i32
    %c0_i32_0 = arith.constant 0 : i32
    %c0_i32_1 = arith.constant 0 : i32
    return %arg0, %c0_i32, %c0_i32_0 : i32, i32, i32
  }
}

</mosaic_0001>

<llo_original>
// kernel: block_forward.1
$region0: #{block_forward.1}
  #allocation0 [shape = 'u32[]', space=smem, size = 0x4, offset = 0x4, fixed_abs, tag = 'smem constant byte address 0x4 - core index']
  #allocation1 [shape = 'u32[144,128]{1,0:T(1,128)}', space=vmem, size = 0x12000, scoped, tag = 'internal scratch']
  %s0 = inlined_call_operand.smem [shape: u32[37], index: -1, kind: input, shape index: {}]
  %s1 = sld [smem:[%s0]]
  %s2 = scalar_lea.smem %s0, 1
  %s3 = sld [smem:[%s2]]
  %s4 = scalar_lea.smem %s0, 2
  %s5 = sld [smem:[%s4]]
  %s6 = scalar_lea.smem %s0, 3
  %s7 = sld [smem:[%s6]]
  %s8 = scalar_lea.smem %s0, 4
  %s9 = sld [smem:[%s8]]
  %s10 = scalar_lea.smem %s0, 5
  %s11 = sld [smem:[%s10]]
  %s12 = scalar_lea.smem %s0, 6
  %s13 = sld [smem:[%s12]]
  %s14 = scalar_lea.smem %s0, 7
  %s15 = sld [smem:[%s14]]
  %s16 = scalar_lea.smem %s0, 8
  %s17 = sld [smem:[%s16]]
  %s18 = scalar_lea.smem %s0, 9
  %s19 = sld [smem:[%s18]]
  %s20 = scalar_lea.smem %s0, 10
  %s21 = sld [smem:[%s20]]
  %s22 = scalar_lea.smem %s0, 11
  %s23 = sld [smem:[%s22]]
  %s24 = scalar_lea.smem %s0, 12
  %s25 = sld [smem:[%s24]]
  %s26 = scalar_lea.smem %s0, 13
  %s27 = sld [smem:[%s26]]
  %s28 = scalar_lea.smem %s0, 14
  %s29 = sld [smem:[%s28]]
  %s30 = scalar_lea.smem %s0, 15
  %s31 = sld [smem:[%s30]]
  %s32 = scalar_lea.smem %s0, 16
  %s33 = sld [smem:[%s32]]
  %s34 = scalar_lea.smem %s0, 17
  %s35 = sld [smem:[%s34]]
  %s36 = scalar_lea.smem %s0, 18
  %s37 = sld [smem:[%s36]]
  %s38 = scalar_lea.smem %s0, 19
  %s39 = sld [smem:[%s38]]
  %s40 = scalar_lea.smem %s0, 20
  %s41 = sld [smem:[%s40]]
  %s42 = scalar_lea.smem %s0, 21
  %s43 = sld [smem:[%s42]]
  %s44 = scalar_lea.smem %s0, 22
  %s45 = sld [smem:[%s44]]
  %s46 = scalar_lea.smem %s0, 23
  %s47 = sld [smem:[%s46]]
  %s48 = scalar_lea.smem %s0, 24
  %s49 = sld [smem:[%s48]]
  %s50 = scalar_lea.smem %s0, 25
  %s51 = sld [smem:[%s50]]
  %s52 = scalar_lea.smem %s0, 26
  %s53 = sld [smem:[%s52]]
  %s54 = scalar_lea.smem %s0, 27
  %s55 = sld [smem:[%s54]]
  %s56 = scalar_lea.smem %s0, 28
  %s57 = sld [smem:[%s56]]
  %s58 = scalar_lea.smem %s0, 29
  %s59 = sld [smem:[%s58]]
  %s60 = scalar_lea.smem %s0, 30
  %s61 = sld [smem:[%s60]]
  %s62 = scalar_lea.smem %s0, 31
  %s63 = sld [smem:[%s62]]
  %s64 = scalar_lea.smem %s0, 32
  %s65 = sld [smem:[%s64]]
  %s66 = scalar_lea.smem %s0, 33
  %s67 = sld [smem:[%s66]]
  %s68 = scalar_lea.smem %s0, 34
  %s69 = sld [smem:[%s68]]
  %s70 = scalar_lea.smem %s0, 35
  %s71 = sld [smem:[%s70]]
  %s72 = scalar_lea.smem %s0, 36
  %s73 = sld [smem:[%s72]]
  %s74 = sld [smem:[#allocation0]]
  $region177: #{block_forward.1} parent=0
    _
  %s76 = ssub.s32 1, %s74
  %s77 = scalar_select 0, %s76, %s74
  loop: start=0, step=1, limit=4
  $region2: #{block_forward.1} parent=0 // loop_pre_header
    _
  $region3: #{block_forward.1} parent=0 // loop_header
    %s79 = sphi 0, %s83
    %p80 = scmp.ge.s32.totalorder %s79, 4
    %s89 = sphi 0, %s91
    %s92 = sphi 0, %s89
    %s93 = sphi 0, %s92
    %s109 = sphi 0, %s93
    %s115 = sphi 0, %s117
    %s118 = sphi 0, %s115
    %s119 = sphi 0, %s118
    %s135 = sphi 0, %s119
    %s139 = sphi 0, %s139
    %s141 = sphi 0, %s139
    %s142 = sphi 0, %s141
    %s156 = sphi 0, %s142
    %s160 = sphi 0, %s160
    %s162 = sphi 0, %s160
    %s163 = sphi 0, %s162
    %s177 = sphi 0, %s163
    %s181 = sphi 0, %s181
    %s183 = sphi 0, %s181
    %s184 = sphi 0, %s183
    %s198 = sphi 0, %s184
    %s202 = sphi 0, %s202
    %s204 = sphi 0, %s202
    %s205 = sphi 0, %s204
    %s219 = sphi 0, %s205
    %s223 = sphi 0, %s223
    %s225 = sphi 0, %s223
    %s226 = sphi 0, %s225
    %s240 = sphi 0, %s226
    %s244 = sphi 0, %s244
    %s246 = sphi 0, %s244
    %s247 = sphi 0, %s246
    %s261 = sphi 0, %s247
    %s265 = sphi 0, %s265
    %s267 = sphi 0, %s265
    %s268 = sphi 0, %s267
    %s282 = sphi 0, %s268
    %s286 = sphi 0, %s286
    %s288 = sphi 0, %s286
    %s289 = sphi 0, %s288
    %s303 = sphi 0, %s289
    %s307 = sphi 0, %s307
    %s309 = sphi 0, %s307
    %s310 = sphi 0, %s309
    %s324 = sphi 0, %s310
    %s328 = sphi 0, %s328
    %s330 = sphi 0, %s328
    %s331 = sphi 0, %s330
    %s345 = sphi 0, %s331
    %s349 = sphi 0, %s349
    %s351 = sphi 0, %s349
    %s352 = sphi 0, %s351
    %s366 = sphi 0, %s352
    %s370 = sphi 0, %s370
    %s372 = sphi 0, %s370
    %s373 = sphi 0, %s372
    %s387 = sphi 0, %s373
    %s391 = sphi 0, %s391
    %s393 = sphi 0, %s391
    %s394 = sphi 0, %s393
    %s408 = sphi 0, %s394
    %s412 = sphi 0, %s412
    %s414 = sphi 0, %s412
    %s415 = sphi 0, %s414
    %s429 = sphi 0, %s415
    %s433 = sphi 0, %s433
    %s435 = sphi 0, %s433
    %s436 = sphi 0, %s435
    %s450 = sphi 0, %s436
    %s454 = sphi 0, %s454
    %s456 = sphi 0, %s454
    %s457 = sphi 0, %s456
    %s471 = sphi 0, %s457
    %s475 = sphi 0, %s475
    %s477 = sphi 0, %s475
    %s478 = sphi 0, %s477
    %s492 = sphi 0, %s478
    %s496 = sphi 0, %s496
    %s498 = sphi 0, %s496
    %s499 = sphi 0, %s498
    %s513 = sphi 0, %s499
    %s517 = sphi 0, %s517
    %s519 = sphi 0, %s517
    %s520 = sphi 0, %s519
    %s534 = sphi 0, %s520
    %s538 = sphi 0, %s538
    %s540 = sphi 0, %s538
    %s541 = sphi 0, %s540
    %s555 = sphi 0, %s541
    %s559 = sphi 0, %s559
    %s561 = sphi 0, %s559
    %s562 = sphi 0, %s561
    %s576 = sphi 0, %s562
    %s580 = sphi 0, %s580
    %s582 = sphi 0, %s580
    %s583 = sphi 0, %s582
    %s597 = sphi 0, %s583
    %s601 = sphi 0, %s601
    %s603 = sphi 0, %s601
    %s604 = sphi 0, %s603
    %s618 = sphi 0, %s604
    %s622 = sphi 0, %s622
    %s624 = sphi 0, %s622
    %s625 = sphi 0, %s624
    %s639 = sphi 0, %s625
    %s643 = sphi 0, %s643
    %s645 = sphi 0, %s643
    %s646 = sphi 0, %s645
    %s660 = sphi 0, %s646
    %s664 = sphi 0, %s664
    %s666 = sphi 0, %s664
    %s667 = sphi 0, %s666
    %s681 = sphi 0, %s667
    %s685 = sphi 0, %s685
    %s687 = sphi 0, %s685
    %s688 = sphi 0, %s687
    %s702 = sphi 0, %s688
    %s706 = sphi 0, %s706
    %s708 = sphi 0, %s706
    %s709 = sphi 0, %s708
    %s723 = sphi 0, %s709
    %s727 = sphi 0, %s727
    %s729 = sphi 0, %s727
    %s730 = sphi 0, %s729
    %s744 = sphi 0, %s730
    %s748 = sphi 0, %s748
    %s750 = sphi 0, %s748
    %s751 = sphi 0, %s750
    %s765 = sphi 0, %s751
    %s769 = sphi 0, %s769
    %s771 = sphi 0, %s769
    %s772 = sphi 0, %s771
    %s786 = sphi 0, %s772
    %s790 = sphi 0, %s790
    %s792 = sphi 0, %s790
    %s793 = sphi 0, %s792
    %s807 = sphi 0, %s793
    %s811 = sphi 0, %s811
    %s813 = sphi 0, %s811
    %s814 = sphi 0, %s813
    %s828 = sphi 0, %s814
    %s832 = sphi 0, %s832
    %s834 = sphi 0, %s832
    %s835 = sphi 0, %s834
    %s849 = sphi 0, %s835
    %s855 = sphi 0, %s857
    %s858 = sphi 0, %s855
    %s859 = sphi 0, %s858
    %s875 = sphi 0, %s859
  $region4: #{block_forward.1} parent=0 // loop_header_branch
    %82 = sbr.rel (%p80) target = $region8
  $region5: #{block_forward.1} parent=0 // loop_body
    %s84 = ssub.s32 %s79, 1
    %s85 = ssub.s32 %s79, 2
    %s86 = sadd.s32 %s79, 1
    %s87 = ssub.s32 %s79, %s86
    %p88 = scmp.eq.s32.totalorder %s87, 0
    %s90 = sadd.s32 %s89, 1
    %s91 = scalar_select %p88, %s89, %s90
    %p94 = pneg %p88
    %p95 = scmp.eq.s32.totalorder %s79, 1
    %p96 = por %p94, %p95
    %p97 = scmp.ne.s32.totalorder %s89, %s92
    %p98 = scmp.eq.s32.totalorder %s79, 0
    %p99 = por %p97, %p98
    %p100 = scmp.ne.s32.totalorder %s89, %s92
    %p101 = scmp.eq.s32.totalorder %s84, 1
    %p102 = por %p100, %p101
    %p103 = scmp.ne.s32.totalorder %s92, %s93
    %p104 = scmp.eq.s32.totalorder %s84, 0
    %p105 = por %p103, %p104
    %p106 = scmp.ne.s32.totalorder %s92, %s93
    %p107 = scmp.eq.s32.totalorder %s85, 1
    %p108 = por %p106, %p107
    %p110 = scmp.ne.s32.totalorder %s93, %s109
    %p111 = scmp.eq.s32.totalorder %s85, 0
    %p112 = por %p110, %p111
    %s113 = ssub.s32 %s79, %s86
    %p114 = scmp.eq.s32.totalorder %s113, 0
    %s116 = sadd.s32 %s115, 1
    %s117 = scalar_select %p114, %s115, %s116
    %p120 = pneg %p114
    %p121 = scmp.eq.s32.totalorder %s79, 1
    %p122 = por %p120, %p121
    %p123 = scmp.ne.s32.totalorder %s115, %s118
    %p124 = scmp.eq.s32.totalorder %s79, 0
    %p125 = por %p123, %p124
    %p126 = scmp.ne.s32.totalorder %s115, %s118
    %p127 = scmp.eq.s32.totalorder %s84, 1
    %p128 = por %p126, %p127
    %p129 = scmp.ne.s32.totalorder %s118, %s119
    %p130 = scmp.eq.s32.totalorder %s84, 0
    %p131 = por %p129, %p130
    %p132 = scmp.ne.s32.totalorder %s118, %s119
    %p133 = scmp.eq.s32.totalorder %s85, 1
    %p134 = por %p132, %p133
    %p136 = scmp.ne.s32.totalorder %s119, %s135
    %p137 = scmp.eq.s32.totalorder %s85, 0
    %p138 = por %p136, %p137
    %s140 = sadd.s32 %s139, 1
    %p143 = scmp.eq.s32.totalorder %s79, 1
    %p144 = scmp.ne.s32.totalorder %s139, %s141
    %p145 = scmp.eq.s32.totalorder %s79, 0
    %p146 = por %p144, %p145
    %p147 = scmp.ne.s32.totalorder %s139, %s141
    %p148 = scmp.eq.s32.totalorder %s84, 1
    %p149 = por %p147, %p148
    %p150 = scmp.ne.s32.totalorder %s141, %s142
    %p151 = scmp.eq.s32.totalorder %s84, 0
    %p152 = por %p150, %p151
    %p153 = scmp.ne.s32.totalorder %s141, %s142
    %p154 = scmp.eq.s32.totalorder %s85, 1
    %p155 = por %p153, %p154
    %p157 = scmp.ne.s32.totalorder %s142, %s156
    %p158 = scmp.eq.s32.totalorder %s85, 0
    %p159 = por %p157, %p158
    %s161 = sadd.s32 %s160, 1
    %p164 = scmp.eq.s32.totalorder %s79, 1
    %p165 = scmp.ne.s32.totalorder %s160, %s162
    %p166 = scmp.eq.s32.totalorder %s79, 0
    %p167 = por %p165, %p166
    %p168 = scmp.ne.s32.totalorder %s160, %s162
    %p169 = scmp.eq.s32.totalorder %s84, 1
    %p170 = por %p168, %p169
    %p171 = scmp.ne.s32.totalorder %s162, %s163
    %p172 = scmp.eq.s32.totalorder %s84, 0
    %p173 = por %p171, %p172
    %p174 = scmp.ne.s32.totalorder %s162, %s163
    %p175 = scmp.eq.s32.totalorder %s85, 1
    %p176 = por %p174, %p175
    %p178 = scmp.ne.s32.totalorder %s163, %s177
    %p179 = scmp.eq.s32.totalorder %s85, 0
    %p180 = por %p178, %p179
    %s182 = sadd.s32 %s181, 1
    %p185 = scmp.eq.s32.totalorder %s79, 1
    %p186 = scmp.ne.s32.totalorder %s181, %s183
    %p187 = scmp.eq.s32.totalorder %s79, 0
    %p188 = por %p186, %p187
    %p189 = scmp.ne.s32.totalorder %s181, %s183
    %p190 = scmp.eq.s32.totalorder %s84, 1
    %p191 = por %p189, %p190
    %p192 = scmp.ne.s32.totalorder %s183, %s184
    %p193 = scmp.eq.s32.totalorder %s84, 0
    %p194 = por %p192, %p193
    %p195 = scmp.ne.s32.totalorder %s183, %s184
    %p196 = scmp.eq.s32.totalorder %s85, 1
    %p197 = por %p195, %p196
    %p199 = scmp.ne.s32.totalorder %s184, %s198
    %p200 = scmp.eq.s32.totalorder %s85, 0
    %p201 = por %p199, %p200
    %s203 = sadd.s32 %s202, 1
    %p206 = scmp.eq.s32.totalorder %s79, 1
    %p207 = scmp.ne.s32.totalorder %s202, %s204
    %p208 = scmp.eq.s32.totalorder %s79, 0
    %p209 = por %p207, %p208
    %p210 = scmp.ne.s32.totalorder %s202, %s204
    %p211 = scmp.eq.s32.totalorder %s84, 1
    %p212 = por %p210, %p211
    %p213 = scmp.ne.s32.totalorder %s204, %s205
    %p214 = scmp.eq.s32.totalorder %s84, 0
    %p215 = por %p213, %p214
    %p216 = scmp.ne.s32.totalorder %s204, %s205
    %p217 = scmp.eq.s32.totalorder %s85, 1
    %p218 = por %p216, %p217
    %p220 = scmp.ne.s32.totalorder %s205, %s219
    %p221 = scmp.eq.s32.totalorder %s85, 0
    %p222 = por %p220, %p221
    %s224 = sadd.s32 %s223, 1
    %p227 = scmp.eq.s32.totalorder %s79, 1
    %p228 = scmp.ne.s32.totalorder %s223, %s225
    %p229 = scmp.eq.s32.totalorder %s79, 0
    %p230 = por %p228, %p229
    %p231 = scmp.ne.s32.totalorder %s223, %s225
    %p232 = scmp.eq.s32.totalorder %s84, 1
    %p233 = por %p231, %p232
    %p234 = scmp.ne.s32.totalorder %s225, %s226
    %p235 = scmp.eq.s32.totalorder %s84, 0
    %p236 = por %p234, %p235
    %p237 = scmp.ne.s32.totalorder %s225, %s226
    %p238 = scmp.eq.s32.totalorder %s85, 1
    %p239 = por %p237, %p238
    %p241 = scmp.ne.s32.totalorder %s226, %s240
    %p242 = scmp.eq.s32.totalorder %s85, 0
    %p243 = por %p241, %p242
    %s245 = sadd.s32 %s244, 1
    %p248 = scmp.eq.s32.totalorder %s79, 1
    %p249 = scmp.ne.s32.totalorder %s244, %s246
    %p250 = scmp.eq.s32.totalorder %s79, 0
    %p251 = por %p249, %p250
    %p252 = scmp.ne.s32.totalorder %s244, %s246
    %p253 = scmp.eq.s32.totalorder %s84, 1
    %p254 = por %p252, %p253
    %p255 = scmp.ne.s32.totalorder %s246, %s247
    %p256 = scmp.eq.s32.totalorder %s84, 0
    %p257 = por %p255, %p256
    %p258 = scmp.ne.s32.totalorder %s246, %s247
    %p259 = scmp.eq.s32.totalorder %s85, 1
    %p260 = por %p258, %p259
    %p262 = scmp.ne.s32.totalorder %s247, %s261
    %p263 = scmp.eq.s32.totalorder %s85, 0
    %p264 = por %p262, %p263
    %s266 = sadd.s32 %s265, 1
    %p269 = scmp.eq.s32.totalorder %s79, 1
    %p270 = scmp.ne.s32.totalorder %s265, %s267
    %p271 = scmp.eq.s32.totalorder %s79, 0
    %p272 = por %p270, %p271
    %p273 = scmp.ne.s32.totalorder %s265, %s267
    %p274 = scmp.eq.s32.totalorder %s84, 1
    %p275 = por %p273, %p274
    %p276 = scmp.ne.s32.totalorder %s267, %s268
    %p277 = scmp.eq.s32.totalorder %s84, 0
    %p278 = por %p276, %p277
    %p279 = scmp.ne.s32.totalorder %s267, %s268
    %p280 = scmp.eq.s32.totalorder %s85, 1
    %p281 = por %p279, %p280
    %p283 = scmp.ne.s32.totalorder %s268, %s282
    %p284 = scmp.eq.s32.totalorder %s85, 0
    %p285 = por %p283, %p284
    %s287 = sadd.s32 %s286, 1
    %p290 = scmp.eq.s32.totalorder %s79, 1
    %p291 = scmp.ne.s32.totalorder %s286, %s288
    %p292 = scmp.eq.s32.totalorder %s79, 0
    %p293 = por %p291, %p292
    %p294 = scmp.ne.s32.totalorder %s286, %s288
    %p295 = scmp.eq.s32.totalorder %s84, 1
    %p296 = por %p294, %p295
    %p297 = scmp.ne.s32.totalorder %s288, %s289
    %p298 = scmp.eq.s32.totalorder %s84, 0
    %p299 = por %p297, %p298
    %p300 = scmp.ne.s32.totalorder %s288, %s289
    %p301 = scmp.eq.s32.totalorder %s85, 1
    %p302 = por %p300, %p301
    %p304 = scmp.ne.s32.totalorder %s289, %s303
    %p305 = scmp.eq.s32.totalorder %s85, 0
    %p306 = por %p304, %p305
    %s308 = sadd.s32 %s307, 1
    %p311 = scmp.eq.s32.totalorder %s79, 1
    %p312 = scmp.ne.s32.totalorder %s307, %s309
    %p313 = scmp.eq.s32.totalorder %s79, 0
    %p314 = por %p312, %p313
    %p315 = scmp.ne.s32.totalorder %s307, %s309
    %p316 = scmp.eq.s32.totalorder %s84, 1
    %p317 = por %p315, %p316
    %p318 = scmp.ne.s32.totalorder %s309, %s310
    %p319 = scmp.eq.s32.totalorder %s84, 0
    %p320 = por %p318, %p319
    %p321 = scmp.ne.s32.totalorder %s309, %s310
    %p322 = scmp.eq.s32.totalorder %s85, 1
    %p323 = por %p321, %p322
    %p325 = scmp.ne.s32.totalorder %s310, %s324
    %p326 = scmp.eq.s32.totalorder %s85, 0
    %p327 = por %p325, %p326
    %s329 = sadd.s32 %s328, 1
    %p332 = scmp.eq.s32.totalorder %s79, 1
    %p333 = scmp.ne.s32.totalorder %s328, %s330
    %p334 = scmp.eq.s32.totalorder %s79, 0
    %p335 = por %p333, %p334
    %p336 = scmp.ne.s32.totalorder %s328, %s330
    %p337 = scmp.eq.s32.totalorder %s84, 1
    %p338 = por %p336, %p337
    %p339 = scmp.ne.s32.totalorder %s330, %s331
    %p340 = scmp.eq.s32.totalorder %s84, 0
    %p341 = por %p339, %p340
    %p342 = scmp.ne.s32.totalorder %s330, %s331
    %p343 = scmp.eq.s32.totalorder %s85, 1
    %p344 = por %p342, %p343
    %p346 = scmp.ne.s32.totalorder %s331, %s345
    %p347 = scmp.eq.s32.totalorder %s85, 0
    %p348 = por %p346, %p347
    %s350 = sadd.s32 %s349, 1
    %p353 = scmp.eq.s32.totalorder %s79, 1
    %p354 = scmp.ne.s32.totalorder %s349, %s351
    %p355 = scmp.eq.s32.totalorder %s79, 0
    %p356 = por %p354, %p355
    %p357 = scmp.ne.s32.totalorder %s349, %s351
    %p358 = scmp.eq.s32.totalorder %s84, 1
    %p359 = por %p357, %p358
    %p360 = scmp.ne.s32.totalorder %s351, %s352
    %p361 = scmp.eq.s32.totalorder %s84, 0
    %p362 = por %p360, %p361
    %p363 = scmp.ne.s32.totalorder %s351, %s352
    %p364 = scmp.eq.s32.totalorder %s85, 1
    %p365 = por %p363, %p364
    %p367 = scmp.ne.s32.totalorder %s352, %s366
    %p368 = scmp.eq.s32.totalorder %s85, 0
    %p369 = por %p367, %p368
    %s371 = sadd.s32 %s370, 1
    %p374 = scmp.eq.s32.totalorder %s79, 1
    %p375 = scmp.ne.s32.totalorder %s370, %s372
    %p376 = scmp.eq.s32.totalorder %s79, 0
    %p377 = por %p375, %p376
    %p378 = scmp.ne.s32.totalorder %s370, %s372
    %p379 = scmp.eq.s32.totalorder %s84, 1
    %p380 = por %p378, %p379
    %p381 = scmp.ne.s32.totalorder %s372, %s373
    %p382 = scmp.eq.s32.totalorder %s84, 0
    %p383 = por %p381, %p382
    %p384 = scmp.ne.s32.totalorder %s372, %s373
    %p385 = scmp.eq.s32.totalorder %s85, 1
    %p386 = por %p384, %p385
    %p388 = scmp.ne.s32.totalorder %s373, %s387
    %p389 = scmp.eq.s32.totalorder %s85, 0
    %p390 = por %p388, %p389
    %s392 = sadd.s32 %s391, 1
    %p395 = scmp.eq.s32.totalorder %s79, 1
    %p396 = scmp.ne.s32.totalorder %s391, %s393
    %p397 = scmp.eq.s32.totalorder %s79, 0
    %p398 = por %p396, %p397
    %p399 = scmp.ne.s32.totalorder %s391, %s393
    %p400 = scmp.eq.s32.totalorder %s84, 1
    %p401 = por %p399, %p400
    %p402 = scmp.ne.s32.totalorder %s393, %s394
    %p403 = scmp.eq.s32.totalorder %s84, 0
    %p404 = por %p402, %p403
    %p405 = scmp.ne.s32.totalorder %s393, %s394
    %p406 = scmp.eq.s32.totalorder %s85, 1
    %p407 = por %p405, %p406
    %p409 = scmp.ne.s32.totalorder %s394, %s408
    %p410 = scmp.eq.s32.totalorder %s85, 0
    %p411 = por %p409, %p410
    %s413 = sadd.s32 %s412, 1
    %p416 = scmp.eq.s32.totalorder %s79, 1
    %p417 = scmp.ne.s32.totalorder %s412, %s414
    %p418 = scmp.eq.s32.totalorder %s79, 0
    %p419 = por %p417, %p418
    %p420 = scmp.ne.s32.totalorder %s412, %s414
    %p421 = scmp.eq.s32.totalorder %s84, 1
    %p422 = por %p420, %p421
    %p423 = scmp.ne.s32.totalorder %s414, %s415
    %p424 = scmp.eq.s32.totalorder %s84, 0
    %p425 = por %p423, %p424
    %p426 = scmp.ne.s32.totalorder %s414, %s415
    %p427 = scmp.eq.s32.totalorder %s85, 1
    %p428 = por %p426, %p427
    %p430 = scmp.ne.s32.totalorder %s415, %s429
    %p431 = scmp.eq.s32.totalorder %s85, 0
    %p432 = por %p430, %p431
    %s434 = sadd.s32 %s433, 1
    %p437 = scmp.eq.s32.totalorder %s79, 1
    %p438 = scmp.ne.s32.totalorder %s433, %s435
    %p439 = scmp.eq.s32.totalorder %s79, 0
    %p440 = por %p438, %p439
    %p441 = scmp.ne.s32.totalorder %s433, %s435
    %p442 = scmp.eq.s32.totalorder %s84, 1
    %p443 = por %p441, %p442
    %p444 = scmp.ne.s32.totalorder %s435, %s436
    %p445 = scmp.eq.s32.totalorder %s84, 0
    %p446 = por %p444, %p445
    %p447 = scmp.ne.s32.totalorder %s435, %s436
    %p448 = scmp.eq.s32.totalorder %s85, 1
    %p449 = por %p447, %p448
    %p451 = scmp.ne.s32.totalorder %s436, %s450
    %p452 = scmp.eq.s32.totalorder %s85, 0
    %p453 = por %p451, %p452
    %s455 = sadd.s32 %s454, 1
    %p458 = scmp.eq.s32.totalorder %s79, 1
    %p459 = scmp.ne.s32.totalorder %s454, %s456
    %p460 = scmp.eq.s32.totalorder %s79, 0
    %p461 = por %p459, %p460
    %p462 = scmp.ne.s32.totalorder %s454, %s456
    %p463 = scmp.eq.s32.totalorder %s84, 1
    %p464 = por %p462, %p463
    %p465 = scmp.ne.s32.totalorder %s456, %s457
    %p466 = scmp.eq.s32.totalorder %s84, 0
    %p467 = por %p465, %p466
    %p468 = scmp.ne.s32.totalorder %s456, %s457
    %p469 = scmp.eq.s32.totalorder %s85, 1
    %p470 = por %p468, %p469
    %p472 = scmp.ne.s32.totalorder %s457, %s471
    %p473 = scmp.eq.s32.totalorder %s85, 0
    %p474 = por %p472, %p473
    %s476 = sadd.s32 %s475, 1
    %p479 = scmp.eq.s32.totalorder %s79, 1
    %p480 = scmp.ne.s32.totalorder %s475, %s477
    %p481 = scmp.eq.s32.totalorder %s79, 0
    %p482 = por %p480, %p481
    %p483 = scmp.ne.s32.totalorder %s475, %s477
    %p484 = scmp.eq.s32.totalorder %s84, 1
    %p485 = por %p483, %p484
    %p486 = scmp.ne.s32.totalorder %s477, %s478
    %p487 = scmp.eq.s32.totalorder %s84, 0
    %p488 = por %p486, %p487
    %p489 = scmp.ne.s32.totalorder %s477, %s478
    %p490 = scmp.eq.s32.totalorder %s85, 1
    %p491 = por %p489, %p490
    %p493 = scmp.ne.s32.totalorder %s478, %s492
    %p494 = scmp.eq.s32.totalorder %s85, 0
    %p495 = por %p493, %p494
    %s497 = sadd.s32 %s496, 1
    %p500 = scmp.eq.s32.totalorder %s79, 1
    %p501 = scmp.ne.s32.totalorder %s496, %s498
    %p502 = scmp.eq.s32.totalorder %s79, 0
    %p503 = por %p501, %p502
    %p504 = scmp.ne.s32.totalorder %s496, %s498
    %p505 = scmp.eq.s32.totalorder %s84, 1
    %p506 = por %p504, %p505
    %p507 = scmp.ne.s32.totalorder %s498, %s499
    %p508 = scmp.eq.s32.totalorder %s84, 0
    %p509 = por %p507, %p508
    %p510 = scmp.ne.s32.totalorder %s498, %s499
    %p511 = scmp.eq.s32.totalorder %s85, 1
    %p512 = por %p510, %p511
    %p514 = scmp.ne.s32.totalorder %s499, %s513
    %p515 = scmp.eq.s32.totalorder %s85, 0
    %p516 = por %p514, %p515
    %s518 = sadd.s32 %s517, 1
    %p521 = scmp.eq.s32.totalorder %s79, 1
    %p522 = scmp.ne.s32.totalorder %s517, %s519
    %p523 = scmp.eq.s32.totalorder %s79, 0
    %p524 = por %p522, %p523
    %p525 = scmp.ne.s32.totalorder %s517, %s519
    %p526 = scmp.eq.s32.totalorder %s84, 1
    %p527 = por %p525, %p526
    %p528 = scmp.ne.s32.totalorder %s519, %s520
    %p529 = scmp.eq.s32.totalorder %s84, 0
    %p530 = por %p528, %p529
    %p531 = scmp.ne.s32.totalorder %s519, %s520
    %p532 = scmp.eq.s32.totalorder %s85, 1
    %p533 = por %p531, %p532
    %p535 = scmp.ne.s32.totalorder %s520, %s534
    %p536 = scmp.eq.s32.totalorder %s85, 0
    %p537 = por %p535, %p536
    %s539 = sadd.s32 %s538, 1
    %p542 = scmp.eq.s32.totalorder %s79, 1
    %p543 = scmp.ne.s32.totalorder %s538, %s540
    %p544 = scmp.eq.s32.totalorder %s79, 0
    %p545 = por %p543, %p544
    %p546 = scmp.ne.s32.totalorder %s538, %s540
    %p547 = scmp.eq.s32.totalorder %s84, 1
    %p548 = por %p546, %p547
    %p549 = scmp.ne.s32.totalorder %s540, %s541
    %p550 = scmp.eq.s32.totalorder %s84, 0
    %p551 = por %p549, %p550
    %p552 = scmp.ne.s32.totalorder %s540, %s541
    %p553 = scmp.eq.s32.totalorder %s85, 1
    %p554 = por %p552, %p553
    %p556 = scmp.ne.s32.totalorder %s541, %s555
    %p557 = scmp.eq.s32.totalorder %s85, 0
    %p558 = por %p556, %p557
    %s560 = sadd.s32 %s559, 1
    %p563 = scmp.eq.s32.totalorder %s79, 1
    %p564 = scmp.ne.s32.totalorder %s559, %s561
    %p565 = scmp.eq.s32.totalorder %s79, 0
    %p566 = por %p564, %p565
    %p567 = scmp.ne.s32.totalorder %s559, %s561
    %p568 = scmp.eq.s32.totalorder %s84, 1
    %p569 = por %p567, %p568
    %p570 = scmp.ne.s32.totalorder %s561, %s562
    %p571 = scmp.eq.s32.totalorder %s84, 0
    %p572 = por %p570, %p571
    %p573 = scmp.ne.s32.totalorder %s561, %s562
    %p574 = scmp.eq.s32.totalorder %s85, 1
    %p575 = por %p573, %p574
    %p577 = scmp.ne.s32.totalorder %s562, %s576
    %p578 = scmp.eq.s32.totalorder %s85, 0
    %p579 = por %p577, %p578
    %s581 = sadd.s32 %s580, 1
    %p584 = scmp.eq.s32.totalorder %s79, 1
    %p585 = scmp.ne.s32.totalorder %s580, %s582
    %p586 = scmp.eq.s32.totalorder %s79, 0
    %p587 = por %p585, %p586
    %p588 = scmp.ne.s32.totalorder %s580, %s582
    %p589 = scmp.eq.s32.totalorder %s84, 1
    %p590 = por %p588, %p589
    %p591 = scmp.ne.s32.totalorder %s582, %s583
    %p592 = scmp.eq.s32.totalorder %s84, 0
    %p593 = por %p591, %p592
    %p594 = scmp.ne.s32.totalorder %s582, %s583
    %p595 = scmp.eq.s32.totalorder %s85, 1
    %p596 = por %p594, %p595
    %p598 = scmp.ne.s32.totalorder %s583, %s597
    %p599 = scmp.eq.s32.totalorder %s85, 0
    %p600 = por %p598, %p599
    %s602 = sadd.s32 %s601, 1
    %p605 = scmp.eq.s32.totalorder %s79, 1
    %p606 = scmp.ne.s32.totalorder %s601, %s603
    %p607 = scmp.eq.s32.totalorder %s79, 0
    %p608 = por %p606, %p607
    %p609 = scmp.ne.s32.totalorder %s601, %s603
    %p610 = scmp.eq.s32.totalorder %s84, 1
    %p611 = por %p609, %p610
    %p612 = scmp.ne.s32.totalorder %s603, %s604
    %p613 = scmp.eq.s32.totalorder %s84, 0
    %p614 = por %p612, %p613
    %p615 = scmp.ne.s32.totalorder %s603, %s604
    %p616 = scmp.eq.s32.totalorder %s85, 1
    %p617 = por %p615, %p616
    %p619 = scmp.ne.s32.totalorder %s604, %s618
    %p620 = scmp.eq.s32.totalorder %s85, 0
    %p621 = por %p619, %p620
    %s623 = sadd.s32 %s622, 1
    %p626 = scmp.eq.s32.totalorder %s79, 1
    %p627 = scmp.ne.s32.totalorder %s622, %s624
    %p628 = scmp.eq.s32.totalorder %s79, 0
    %p629 = por %p627, %p628
    %p630 = scmp.ne.s32.totalorder %s622, %s624
    %p631 = scmp.eq.s32.totalorder %s84, 1
    %p632 = por %p630, %p631
    %p633 = scmp.ne.s32.totalorder %s624, %s625
    %p634 = scmp.eq.s32.totalorder %s84, 0
    %p635 = por %p633, %p634
    %p636 = scmp.ne.s32.totalorder %s624, %s625
    %p637 = scmp.eq.s32.totalorder %s85, 1
    %p638 = por %p636, %p637
    %p640 = scmp.ne.s32.totalorder %s625, %s639
    %p641 = scmp.eq.s32.totalorder %s85, 0
    %p642 = por %p640, %p641
    %s644 = sadd.s32 %s643, 1
    %p647 = scmp.eq.s32.totalorder %s79, 1
    %p648 = scmp.ne.s32.totalorder %s643, %s645
    %p649 = scmp.eq.s32.totalorder %s79, 0
    %p650 = por %p648, %p649
    %p651 = scmp.ne.s32.totalorder %s643, %s645
    %p652 = scmp.eq.s32.totalorder %s84, 1
    %p653 = por %p651, %p652
    %p654 = scmp.ne.s32.totalorder %s645, %s646
    %p655 = scmp.eq.s32.totalorder %s84, 0
    %p656 = por %p654, %p655
    %p657 = scmp.ne.s32.totalorder %s645, %s646
    %p658 = scmp.eq.s32.totalorder %s85, 1
    %p659 = por %p657, %p658
    %p661 = scmp.ne.s32.totalorder %s646, %s660
    %p662 = scmp.eq.s32.totalorder %s85, 0
    %p663 = por %p661, %p662
    %s665 = sadd.s32 %s664, 1
    %p668 = scmp.eq.s32.totalorder %s79, 1
    %p669 = scmp.ne.s32.totalorder %s664, %s666
    %p670 = scmp.eq.s32.totalorder %s79, 0
    %p671 = por %p669, %p670
    %p672 = scmp.ne.s32.totalorder %s664, %s666
    %p673 = scmp.eq.s32.totalorder %s84, 1
    %p674 = por %p672, %p673
    %p675 = scmp.ne.s32.totalorder %s666, %s667
    %p676 = scmp.eq.s32.totalorder %s84, 0
    %p677 = por %p675, %p676
    %p678 = scmp.ne.s32.totalorder %s666, %s667
    %p679 = scmp.eq.s32.totalorder %s85, 1
    %p680 = por %p678, %p679
    %p682 = scmp.ne.s32.totalorder %s667, %s681
    %p683 = scmp.eq.s32.totalorder %s85, 0
    %p684 = por %p682, %p683
    %s686 = sadd.s32 %s685, 1
    %p689 = scmp.eq.s32.totalorder %s79, 1
    %p690 = scmp.ne.s32.totalorder %s685, %s687
    %p691 = scmp.eq.s32.totalorder %s79, 0
    %p692 = por %p690, %p691
    %p693 = scmp.ne.s32.totalorder %s685, %s687
    %p694 = scmp.eq.s32.totalorder %s84, 1
    %p695 = por %p693, %p694
    %p696 = scmp.ne.s32.totalorder %s687, %s688
    %p697 = scmp.eq.s32.totalorder %s84, 0
    %p698 = por %p696, %p697
    %p699 = scmp.ne.s32.totalorder %s687, %s688
    %p700 = scmp.eq.s32.totalorder %s85, 1
    %p701 = por %p699, %p700
    %p703 = scmp.ne.s32.totalorder %s688, %s702
    %p704 = scmp.eq.s32.totalorder %s85, 0
    %p705 = por %p703, %p704
    %s707 = sadd.s32 %s706, 1
    %p710 = scmp.eq.s32.totalorder %s79, 1
    %p711 = scmp.ne.s32.totalorder %s706, %s708
    %p712 = scmp.eq.s32.totalorder %s79, 0
    %p713 = por %p711, %p712
    %p714 = scmp.ne.s32.totalorder %s706, %s708
    %p715 = scmp.eq.s32.totalorder %s84, 1
    %p716 = por %p714, %p715
    %p717 = scmp.ne.s32.totalorder %s708, %s709
    %p718 = scmp.eq.s32.totalorder %s84, 0
    %p719 = por %p717, %p718
    %p720 = scmp.ne.s32.totalorder %s708, %s709
    %p721 = scmp.eq.s32.totalorder %s85, 1
    %p722 = por %p720, %p721
    %p724 = scmp.ne.s32.totalorder %s709, %s723
    %p725 = scmp.eq.s32.totalorder %s85, 0
    %p726 = por %p724, %p725
    %s728 = sadd.s32 %s727, 1
    %p731 = scmp.eq.s32.totalorder %s79, 1
    %p732 = scmp.ne.s32.totalorder %s727, %s729
    %p733 = scmp.eq.s32.totalorder %s79, 0
    %p734 = por %p732, %p733
    %p735 = scmp.ne.s32.totalorder %s727, %s729
    %p736 = scmp.eq.s32.totalorder %s84, 1
    %p737 = por %p735, %p736
    %p738 = scmp.ne.s32.totalorder %s729, %s730
    %p739 = scmp.eq.s32.totalorder %s84, 0
    %p740 = por %p738, %p739
    %p741 = scmp.ne.s32.totalorder %s729, %s730
    %p742 = scmp.eq.s32.totalorder %s85, 1
    %p743 = por %p741, %p742
    %p745 = scmp.ne.s32.totalorder %s730, %s744
    %p746 = scmp.eq.s32.totalorder %s85, 0
    %p747 = por %p745, %p746
    %s749 = sadd.s32 %s748, 1
    %p752 = scmp.eq.s32.totalorder %s79, 1
    %p753 = scmp.ne.s32.totalorder %s748, %s750
    %p754 = scmp.eq.s32.totalorder %s79, 0
    %p755 = por %p753, %p754
    %p756 = scmp.ne.s32.totalorder %s748, %s750
    %p757 = scmp.eq.s32.totalorder %s84, 1
    %p758 = por %p756, %p757
    %p759 = scmp.ne.s32.totalorder %s750, %s751
    %p760 = scmp.eq.s32.totalorder %s84, 0
    %p761 = por %p759, %p760
    %p762 = scmp.ne.s32.totalorder %s750, %s751
    %p763 = scmp.eq.s32.totalorder %s85, 1
    %p764 = por %p762, %p763
    %p766 = scmp.ne.s32.totalorder %s751, %s765
    %p767 = scmp.eq.s32.totalorder %s85, 0
    %p768 = por %p766, %p767
    %s770 = sadd.s32 %s769, 1
    %p773 = scmp.eq.s32.totalorder %s79, 1
    %p774 = scmp.ne.s32.totalorder %s769, %s771
    %p775 = scmp.eq.s32.totalorder %s79, 0
    %p776 = por %p774, %p775
    %p777 = scmp.ne.s32.totalorder %s769, %s771
    %p778 = scmp.eq.s32.totalorder %s84, 1
    %p779 = por %p777, %p778
    %p780 = scmp.ne.s32.totalorder %s771, %s772
    %p781 = scmp.eq.s32.totalorder %s84, 0
    %p782 = por %p780, %p781
    %p783 = scmp.ne.s32.totalorder %s771, %s772
    %p784 = scmp.eq.s32.totalorder %s85, 1
    %p785 = por %p783, %p784
    %p787 = scmp.ne.s32.totalorder %s772, %s786
    %p788 = scmp.eq.s32.totalorder %s85, 0
    %p789 = por %p787, %p788
    %s791 = sadd.s32 %s790, 1
    %p794 = scmp.eq.s32.totalorder %s79, 1
    %p795 = scmp.ne.s32.totalorder %s790, %s792
    %p796 = scmp.eq.s32.totalorder %s79, 0
    %p797 = por %p795, %p796
    %p798 = scmp.ne.s32.totalorder %s790, %s792
    %p799 = scmp.eq.s32.totalorder %s84, 1
    %p800 = por %p798, %p799
    %p801 = scmp.ne.s32.totalorder %s792, %s793
    %p802 = scmp.eq.s32.totalorder %s84, 0
    %p803 = por %p801, %p802
    %p804 = scmp.ne.s32.totalorder %s792, %s793
    %p805 = scmp.eq.s32.totalorder %s85, 1
    %p806 = por %p804, %p805
    %p808 = scmp.ne.s32.totalorder %s793, %s807
    %p809 = scmp.eq.s32.totalorder %s85, 0
    %p810 = por %p808, %p809
    %s812 = sadd.s32 %s811, 1
    %p815 = scmp.eq.s32.totalorder %s79, 1
    %p816 = scmp.ne.s32.totalorder %s811, %s813
    %p817 = scmp.eq.s32.totalorder %s79, 0
    %p818 = por %p816, %p817
    %p819 = scmp.ne.s32.totalorder %s811, %s813
    %p820 = scmp.eq.s32.totalorder %s84, 1
    %p821 = por %p819, %p820
    %p822 = scmp.ne.s32.totalorder %s813, %s814
    %p823 = scmp.eq.s32.totalorder %s84, 0
    %p824 = por %p822, %p823
    %p825 = scmp.ne.s32.totalorder %s813, %s814
    %p826 = scmp.eq.s32.totalorder %s85, 1
    %p827 = por %p825, %p826
    %p829 = scmp.ne.s32.totalorder %s814, %s828
    %p830 = scmp.eq.s32.totalorder %s85, 0
    %p831 = por %p829, %p830
    %s833 = sadd.s32 %s832, 1
    %p836 = scmp.eq.s32.totalorder %s79, 1
    %p837 = scmp.ne.s32.totalorder %s832, %s834
    %p838 = scmp.eq.s32.totalorder %s79, 0
    %p839 = por %p837, %p838
    %p840 = scmp.ne.s32.totalorder %s832, %s834
    %p841 = scmp.eq.s32.totalorder %s84, 1
    %p842 = por %p840, %p841
    %p843 = scmp.ne.s32.totalorder %s834, %s835
    %p844 = scmp.eq.s32.totalorder %s84, 0
    %p845 = por %p843, %p844
    %p846 = scmp.ne.s32.totalorder %s834, %s835
    %p847 = scmp.eq.s32.totalorder %s85, 1
    %p848 = por %p846, %p847
    %p850 = scmp.ne.s32.totalorder %s835, %s849
    %p851 = scmp.eq.s32.totalorder %s85, 0
    %p852 = por %p850, %p851
    %s853 = ssub.s32 %s79, %s86
    %p854 = scmp.eq.s32.totalorder %s853, 0
    %s856 = sadd.s32 %s855, 1
    %s857 = scalar_select %p854, %s855, %s856
    %p860 = pneg %p854
    %p861 = scmp.eq.s32.totalorder %s79, 1
    %p862 = por %p860, %p861
    %p863 = scmp.ne.s32.totalorder %s855, %s858
    %p864 = scmp.eq.s32.totalorder %s79, 0
    %p865 = por %p863, %p864
    %p866 = scmp.ne.s32.totalorder %s855, %s858
    %p867 = scmp.eq.s32.totalorder %s84, 1
    %p868 = por %p866, %p867
    %p869 = scmp.ne.s32.totalorder %s858, %s859
    %p870 = scmp.eq.s32.totalorder %s84, 0
    %p871 = por %p869, %p870
    %p872 = scmp.ne.s32.totalorder %s858, %s859
    %p873 = scmp.eq.s32.totalorder %s85, 1
    %p874 = por %p872, %p873
    %p876 = scmp.ne.s32.totalorder %s859, %s875
    %p877 = scmp.eq.s32.totalorder %s85, 0
    %p878 = por %p876, %p877
    %p879 = scmp.le.s32.totalorder 1, %s79
    %p880 = scmp.lt.s32.totalorder %s79, 3
    %p881 = pnand %p879, %p880
    %p882 = pneg %p881
    // Predicated region
    $region9: #{block_forward.1} parent=5 // pred_check
      _
    $region10: #{block_forward.1} parent=5 // pred_check_branch
      %884 = sbr.rel (%p881) target = $region12
    $region11: #{block_forward.1} parent=5 // pred_region
      %s885 = ssub.s32 %s79, 1
      // Predicated region
      $region13: #{block_forward.1} parent=11 // pred_check
        %p886 = pneg %p152
      $region14: #{block_forward.1} parent=11 // pred_check_branch
        %888 = sbr.rel (%p886) target = $region16
      $region15: #{block_forward.1} parent=11 // pred_region
        _
      $region16: #{block_forward.1} parent=11 // pred_fallthru
        _
      // Predicated region
      $region17: #{block_forward.1} parent=11 // pred_check
        %p889 = pneg %p173
      $region18: #{block_forward.1} parent=11 // pred_check_branch
        %891 = sbr.rel (%p889) target = $region20
      $region19: #{block_forward.1} parent=11 // pred_region
        _
      $region20: #{block_forward.1} parent=11 // pred_fallthru
        _
      // Predicated region
      $region21: #{block_forward.1} parent=11 // pred_check
        %p892 = pneg %p194
      $region22: #{block_forward.1} parent=11 // pred_check_branch
        %894 = sbr.rel (%p892) target = $region24
      $region23: #{block_forward.1} parent=11 // pred_region
        _
      $region24: #{block_forward.1} parent=11 // pred_fallthru
        _
      // Predicated region
      $region25: #{block_forward.1} parent=11 // pred_check
        %p895 = pneg %p215
      $region26: #{block_forward.1} parent=11 // pred_check_branch
        %897 = sbr.rel (%p895) target = $region28
      $region27: #{block_forward.1} parent=11 // pred_region
        _
      $region28: #{block_forward.1} parent=11 // pred_fallthru
        _
      // Predicated region
      $region29: #{block_forward.1} parent=11 // pred_check
        %p898 = pneg %p236
      $region30: #{block_forward.1} parent=11 // pred_check_branch
        %900 = sbr.rel (%p898) target = $region32
      $region31: #{block_forward.1} parent=11 // pred_region
        _
      $region32: #{block_forward.1} parent=11 // pred_fallthru
        _
      // Predicated region
      $region33: #{block_forward.1} parent=11 // pred_check
        %p901 = pneg %p257
      $region34: #{block_forward.1} parent=11 // pred_check_branch
        %903 = sbr.rel (%p901) target = $region36
      $region35: #{block_forward.1} parent=11 // pred_region
        _
      $region36: #{block_forward.1} parent=11 // pred_fallthru
        _
      // Predicated region
      $region37: #{block_forward.1} parent=11 // pred_check
        %p904 = pneg %p278
      $region38: #{block_forward.1} parent=11 // pred_check_branch
        %906 = sbr.rel (%p904) target = $region40
      $region39: #{block_forward.1} parent=11 // pred_region
        _
      $region40: #{block_forward.1} parent=11 // pred_fallthru
        _
      // Predicated region
      $region41: #{block_forward.1} parent=11 // pred_check
        %p907 = pneg %p299
      $region42: #{block_forward.1} parent=11 // pred_check_branch
        %909 = sbr.rel (%p907) target = $region44
      $region43: #{block_forward.1} parent=11 // pred_region
        _
      $region44: #{block_forward.1} parent=11 // pred_fallthru
        _
      // Predicated region
      $region45: #{block_forward.1} parent=11 // pred_check
        %p910 = pneg %p320
      $region46: #{block_forward.1} parent=11 // pred_check_branch
        %912 = sbr.rel (%p910) target = $region48
      $region47: #{block_forward.1} parent=11 // pred_region
        _
      $region48: #{block_forward.1} parent=11 // pred_fallthru
        _
      // Predicated region
      $region49: #{block_forward.1} parent=11 // pred_check
        %p913 = pneg %p341
      $region50: #{block_forward.1} parent=11 // pred_check_branch
        %915 = sbr.rel (%p913) target = $region52
      $region51: #{block_forward.1} parent=11 // pred_region
        _
      $region52: #{block_forward.1} parent=11 // pred_fallthru
        _
      // Predicated region
      $region53: #{block_forward.1} parent=11 // pred_check
        %p916 = pneg %p362
      $region54: #{block_forward.1} parent=11 // pred_check_branch
        %918 = sbr.rel (%p916) target = $region56
      $region55: #{block_forward.1} parent=11 // pred_region
        _
      $region56: #{block_forward.1} parent=11 // pred_fallthru
        _
      // Predicated region
      $region57: #{block_forward.1} parent=11 // pred_check
        %p919 = pneg %p383
      $region58: #{block_forward.1} parent=11 // pred_check_branch
        %921 = sbr.rel (%p919) target = $region60
      $region59: #{block_forward.1} parent=11 // pred_region
        _
      $region60: #{block_forward.1} parent=11 // pred_fallthru
        _
      // Predicated region
      $region61: #{block_forward.1} parent=11 // pred_check
        %p922 = pneg %p404
      $region62: #{block_forward.1} parent=11 // pred_check_branch
        %924 = sbr.rel (%p922) target = $region64
      $region63: #{block_forward.1} parent=11 // pred_region
        _
      $region64: #{block_forward.1} parent=11 // pred_fallthru
        _
      // Predicated region
      $region65: #{block_forward.1} parent=11 // pred_check
        %p925 = pneg %p425
      $region66: #{block_forward.1} parent=11 // pred_check_branch
        %927 = sbr.rel (%p925) target = $region68
      $region67: #{block_forward.1} parent=11 // pred_region
        _
      $region68: #{block_forward.1} parent=11 // pred_fallthru
        _
      // Predicated region
      $region69: #{block_forward.1} parent=11 // pred_check
        %p928 = pneg %p446
      $region70: #{block_forward.1} parent=11 // pred_check_branch
        %930 = sbr.rel (%p928) target = $region72
      $region71: #{block_forward.1} parent=11 // pred_region
        _
      $region72: #{block_forward.1} parent=11 // pred_fallthru
        _
      // Predicated region
      $region73: #{block_forward.1} parent=11 // pred_check
        %p931 = pneg %p467
      $region74: #{block_forward.1} parent=11 // pred_check_branch
        %933 = sbr.rel (%p931) target = $region76
      $region75: #{block_forward.1} parent=11 // pred_region
        _
      $region76: #{block_forward.1} parent=11 // pred_fallthru
        _
      // Predicated region
      $region77: #{block_forward.1} parent=11 // pred_check
        %p934 = pneg %p488
      $region78: #{block_forward.1} parent=11 // pred_check_branch
        %936 = sbr.rel (%p934) target = $region80
      $region79: #{block_forward.1} parent=11 // pred_region
        _
      $region80: #{block_forward.1} parent=11 // pred_fallthru
        _
      // Predicated region
      $region81: #{block_forward.1} parent=11 // pred_check
        %p937 = pneg %p509
      $region82: #{block_forward.1} parent=11 // pred_check_branch
        %939 = sbr.rel (%p937) target = $region84
      $region83: #{block_forward.1} parent=11 // pred_region
        _
      $region84: #{block_forward.1} parent=11 // pred_fallthru
        _
      // Predicated region
      $region85: #{block_forward.1} parent=11 // pred_check
        %p940 = pneg %p530
      $region86: #{block_forward.1} parent=11 // pred_check_branch
        %942 = sbr.rel (%p940) target = $region88
      $region87: #{block_forward.1} parent=11 // pred_region
        _
      $region88: #{block_forward.1} parent=11 // pred_fallthru
        _
      // Predicated region
      $region89: #{block_forward.1} parent=11 // pred_check
        %p943 = pneg %p551
      $region90: #{block_forward.1} parent=11 // pred_check_branch
        %945 = sbr.rel (%p943) target = $region92
      $region91: #{block_forward.1} parent=11 // pred_region
        _
      $region92: #{block_forward.1} parent=11 // pred_fallthru
        _
      // Predicated region
      $region93: #{block_forward.1} parent=11 // pred_check
        %p946 = pneg %p572
      $region94: #{block_forward.1} parent=11 // pred_check_branch
        %948 = sbr.rel (%p946) target = $region96
      $region95: #{block_forward.1} parent=11 // pred_region
        _
      $region96: #{block_forward.1} parent=11 // pred_fallthru
        _
      // Predicated region
      $region97: #{block_forward.1} parent=11 // pred_check
        %p949 = pneg %p593
      $region98: #{block_forward.1} parent=11 // pred_check_branch
        %951 = sbr.rel (%p949) target = $region100
      $region99: #{block_forward.1} parent=11 // pred_region
        _
      $region100: #{block_forward.1} parent=11 // pred_fallthru
        _
      // Predicated region
      $region101: #{block_forward.1} parent=11 // pred_check
        %p952 = pneg %p614
      $region102: #{block_forward.1} parent=11 // pred_check_branch
        %954 = sbr.rel (%p952) target = $region104
      $region103: #{block_forward.1} parent=11 // pred_region
        _
      $region104: #{block_forward.1} parent=11 // pred_fallthru
        _
      // Predicated region
      $region105: #{block_forward.1} parent=11 // pred_check
        %p955 = pneg %p635
      $region106: #{block_forward.1} parent=11 // pred_check_branch
        %957 = sbr.rel (%p955) target = $region108
      $region107: #{block_forward.1} parent=11 // pred_region
        _
      $region108: #{block_forward.1} parent=11 // pred_fallthru
        _
      // Predicated region
      $region109: #{block_forward.1} parent=11 // pred_check
        %p958 = pneg %p656
      $region110: #{block_forward.1} parent=11 // pred_check_branch
        %960 = sbr.rel (%p958) target = $region112
      $region111: #{block_forward.1} parent=11 // pred_region
        _
      $region112: #{block_forward.1} parent=11 // pred_fallthru
        _
      // Predicated region
      $region113: #{block_forward.1} parent=11 // pred_check
        %p961 = pneg %p677
      $region114: #{block_forward.1} parent=11 // pred_check_branch
        %963 = sbr.rel (%p961) target = $region116
      $region115: #{block_forward.1} parent=11 // pred_region
        _
      $region116: #{block_forward.1} parent=11 // pred_fallthru
        _
      // Predicated region
      $region117: #{block_forward.1} parent=11 // pred_check
        %p964 = pneg %p698
      $region118: #{block_forward.1} parent=11 // pred_check_branch
        %966 = sbr.rel (%p964) target = $region120
      $region119: #{block_forward.1} parent=11 // pred_region
        _
      $region120: #{block_forward.1} parent=11 // pred_fallthru
        _
      // Predicated region
      $region121: #{block_forward.1} parent=11 // pred_check
        %p967 = pneg %p719
      $region122: #{block_forward.1} parent=11 // pred_check_branch
        %969 = sbr.rel (%p967) target = $region124
      $region123: #{block_forward.1} parent=11 // pred_region
        _
      $region124: #{block_forward.1} parent=11 // pred_fallthru
        _
      // Predicated region
      $region125: #{block_forward.1} parent=11 // pred_check
        %p970 = pneg %p740
      $region126: #{block_forward.1} parent=11 // pred_check_branch
        %972 = sbr.rel (%p970) target = $region128
      $region127: #{block_forward.1} parent=11 // pred_region
        _
      $region128: #{block_forward.1} parent=11 // pred_fallthru
        _
      // Predicated region
      $region129: #{block_forward.1} parent=11 // pred_check
        %p973 = pneg %p761
      $region130: #{block_forward.1} parent=11 // pred_check_branch
        %975 = sbr.rel (%p973) target = $region132
      $region131: #{block_forward.1} parent=11 // pred_region
        _
      $region132: #{block_forward.1} parent=11 // pred_fallthru
        _
      // Predicated region
      $region133: #{block_forward.1} parent=11 // pred_check
        %p976 = pneg %p782
      $region134: #{block_forward.1} parent=11 // pred_check_branch
        %978 = sbr.rel (%p976) target = $region136
      $region135: #{block_forward.1} parent=11 // pred_region
        _
      $region136: #{block_forward.1} parent=11 // pred_fallthru
        _
      // Predicated region
      $region137: #{block_forward.1} parent=11 // pred_check
        %p979 = pneg %p803
      $region138: #{block_forward.1} parent=11 // pred_check_branch
        %981 = sbr.rel (%p979) target = $region140
      $region139: #{block_forward.1} parent=11 // pred_region
        _
      $region140: #{block_forward.1} parent=11 // pred_fallthru
        _
      // Predicated region
      $region141: #{block_forward.1} parent=11 // pred_check
        %p982 = pneg %p824
      $region142: #{block_forward.1} parent=11 // pred_check_branch
        %984 = sbr.rel (%p982) target = $region144
      $region143: #{block_forward.1} parent=11 // pred_region
        _
      $region144: #{block_forward.1} parent=11 // pred_fallthru
        _
      // Predicated region
      $region145: #{block_forward.1} parent=11 // pred_check
        %p985 = pneg %p845
      $region146: #{block_forward.1} parent=11 // pred_check_branch
        %987 = sbr.rel (%p985) target = $region148
      $region147: #{block_forward.1} parent=11 // pred_region
        _
      $region148: #{block_forward.1} parent=11 // pred_fallthru
        _
    $region12: #{block_forward.1} parent=5 // pred_fallthru
      _
    %p988 = scmp.lt.s32.totalorder %s79, 2
    // Predicated region
    $region149: #{block_forward.1} parent=5 // pred_check
      %p989 = pneg %p988
    $region150: #{block_forward.1} parent=5 // pred_check_branch
      %991 = sbr.rel (%p989) target = $region152
    $region151: #{block_forward.1} parent=5 // pred_region
      // Predicated region
      $region153: #{block_forward.1} parent=151 // pred_check
        %p992 = pneg %p99
      $region154: #{block_forward.1} parent=151 // pred_check_branch
        %994 = sbr.rel (%p992) target = $region156
      $region155: #{block_forward.1} parent=151 // pred_region
        %p995 = scmp.lt.s32.totalorder %s79, 1
        %s996 = scalar_select %p995, %s79, 1
        %s997 = smul.addr %s996, 8
        %s998 = smul.addr %s997, 4
        %s999 = scalar_lea.vmem %s1, %s998
      $region156: #{block_forward.1} parent=151 // pred_fallthru
        _
      // Predicated region
      $region157: #{block_forward.1} parent=151 // pred_check
        %p1000 = pneg %p125
      $region158: #{block_forward.1} parent=151 // pred_check_branch
        %1002 = sbr.rel (%p1000) target = $region160
      $region159: #{block_forward.1} parent=151 // pred_region
        %p1003 = scmp.lt.s32.totalorder %s79, 1
        %s1004 = scalar_select %p1003, %s79, 1
        %s1005 = smul.addr %s1004, 4
        %s1006 = smul.addr %s1005, 8
        %s1007 = scalar_lea.vmem %s3, %s1006
      $region160: #{block_forward.1} parent=151 // pred_fallthru
        _
    $region152: #{block_forward.1} parent=5 // pred_fallthru
      _
    %p1008 = scmp.le.s32.totalorder 1, %s79
    %p1009 = scmp.lt.s32.totalorder %s79, 3
    %p1010 = pnand %p1008, %p1009
    %p1011 = pneg %p1010
    // Predicated region
    $region161: #{block_forward.1} parent=5 // pred_check
      _
    $region162: #{block_forward.1} parent=5 // pred_check_branch
      %1013 = sbr.rel (%p1010) target = $region164
    $region163: #{block_forward.1} parent=5 // pred_region
      %s1014 = ssub.s32 %s79, 1
      %p1015 = scmp.lt.s32.totalorder %s84, 1
      %s1016 = scalar_select %p1015, %s84, 1
      %s1017 = smul.addr %s1016, 8
      %s1018 = smul.addr %s1017, 4
      %s1019 = scalar_lea.vmem %s1, %s1018
      %p1020 = pneg %p105
      %p1021 = pneg %p102
      %p1022 = scmp.lt.s32.totalorder %s84, 1
      %s1023 = scalar_select %p1022, %s84, 1
      %s1024 = smul.addr %s1023, 4
      %s1025 = smul.addr %s1024, 8
      %s1026 = scalar_lea.vmem %s3, %s1025
      %p1027 = pneg %p131
      %p1028 = pneg %p128
      %p1029 = pneg %p152
      %p1030 = pneg %p149
      %p1031 = pneg %p173
      %p1032 = pneg %p170
      %p1033 = pneg %p194
      %p1034 = pneg %p191
      %p1035 = pneg %p215
      %p1036 = pneg %p212
      %p1037 = pneg %p236
      %p1038 = pneg %p233
      %p1039 = pneg %p257
      %p1040 = pneg %p254
      %p1041 = pneg %p278
      %p1042 = pneg %p275
      %p1043 = pneg %p299
      %p1044 = pneg %p296
      %p1045 = pneg %p320
      %p1046 = pneg %p317
      %p1047 = pneg %p341
      %p1048 = pneg %p338
      %p1049 = pneg %p362
      %p1050 = pneg %p359
      %p1051 = pneg %p383
      %p1052 = pneg %p380
      %p1053 = pneg %p404
      %p1054 = pneg %p401
      %p1055 = pneg %p425
      %p1056 = pneg %p422
      %p1057 = pneg %p446
      %p1058 = pneg %p443
      %p1059 = pneg %p467
      %p1060 = pneg %p464
      %p1061 = pneg %p488
      %p1062 = pneg %p485
      %p1063 = pneg %p509
      %p1064 = pneg %p506
      %p1065 = pneg %p530
      %p1066 = pneg %p527
      %p1067 = pneg %p551
      %p1068 = pneg %p548
      %p1069 = pneg %p572
      %p1070 = pneg %p569
      %p1071 = pneg %p593
      %p1072 = pneg %p590
      %p1073 = pneg %p614
      %p1074 = pneg %p611
      %p1075 = pneg %p635
      %p1076 = pneg %p632
      %p1077 = pneg %p656
      %p1078 = pneg %p653
      %p1079 = pneg %p677
      %p1080 = pneg %p674
      %p1081 = pneg %p698
      %p1082 = pneg %p695
      %p1083 = pneg %p719
      %p1084 = pneg %p716
      %p1085 = pneg %p740
      %p1086 = pneg %p737
      %p1087 = pneg %p761
      %p1088 = pneg %p758
      %p1089 = pneg %p782
      %p1090 = pneg %p779
      %p1091 = pneg %p803
      %p1092 = pneg %p800
      %p1093 = pneg %p824
      %p1094 = pneg %p821
      %p1095 = pneg %p845
      %p1096 = pneg %p842
      %p1097 = pneg %p871
      %p1098 = pneg %p868
      %p1099 = scmp.lt.s32.totalorder %s84, 1
      %s1100 = scalar_select %p1099, %s84, 1
      %s1101 = smul.addr %s1100, 4
      %s1102 = smul.addr %s1101, 8
      %s1103 = scalar_lea.vmem %s73, %s1102
      %p1104 = scmp.lt.s32.totalorder %s84, 1
      %s1105 = scalar_select %p1104, %s84, 1
      %s1106 = smul.addr %s1105, 8
      %s1107 = smul.addr %s1106, 4
      %s1108 = scalar_lea.vmem %s1, %s1107
      %p1109 = scmp.lt.s32.totalorder %s84, 1
      %s1110 = scalar_select %p1109, %s84, 1
      %s1111 = smul.addr %s1110, 4
      %s1112 = smul.addr %s1111, 8
      %s1113 = scalar_lea.vmem %s3, %s1112
      %p1114 = scmp.lt.s32.totalorder %s84, 1
      %s1115 = scalar_select %p1114, %s84, 1
      %s1116 = smul.addr %s1115, 4
      %s1117 = smul.addr %s1116, 8
      %s1118 = scalar_lea.vmem %s73, %s1117
      %v1120 = vld [vmem:[%s1113] sm:$0xff]
      %v1121 = vld [vmem:[%s1113 + $0x8] sm:$0xff]
      %v1122 = vld [vmem:[%s1113 + $0x10] sm:$0xff]
      %v1123 = vld [vmem:[%s1113 + $0x18] sm:$0xff]
      %v1124 = vpack.c.bf16 %v1122, %v1120
      %v1125 = vpack.c.bf16 %v1123, %v1121
      %v1126 = vld [vmem:[%s17] sm:$0xf]
      %v1127 = vld [vmem:[%s17 + $0x4] sm:$0xf]
      %v1128 = vld [vmem:[%s1108] sm:$0xff]
      %v1129 = vld [vmem:[%s1108 + $0x8] sm:$0xff]
      %v1130 = vld [vmem:[%s1108 + $0x10] sm:$0xff]
      %v1131 = vld [vmem:[%s1108 + $0x18] sm:$0x33]
      %v1134 = vunpack.c.l.b16 %v1126
      %v1135 = vunpack.c.l.b16 %v1127
      %v1136 = vpack.c.b16 %v1135, %v1134
      %v1141 = vunpack.c.l.b16 %v1128
      %v1142 = vunpack.c.h.b16 %v1128
      %v1143 = vunpack.c.l.b16 %v1129
      %v1144 = vunpack.c.h.b16 %v1129
      %v1145 = vunpack.c.l.b16 %v1130
      %v1146 = vunpack.c.h.b16 %v1130
      %v1147 = vunpack.c.l.b16 %v1131
      %v1148 = vunpack.c.h.b16 %v1131
      %v1149 = vpack.c.b16 %v1143, %v1141
      %v1150 = vpack.c.b16 %v1144, %v1142
      %v1151 = vpack.c.b16 %v1147, %v1145
      %v1152 = vpack.c.b16 %v1148, %v1146
      %vm1155 = vcmask 220160
      %v1157 = vsel %vm1155, %v1136, 0
      %vm1159 = vcmask 1044480
      %vm1160 = vcmask 1045504
      %v1161 = vsel %vm1159, 4294967295, 65535
      %v1162 = vsel %vm1160, %v1161, 0
      %v1164 = vand.u32 %v1151, %v1162
      %v1167 = vand.u32 %v1152, %v1162
      %1169 = vmatprep.subr.bf16.mxu0 %v1150
      %1170 = vmatpush1.bf16.msra.mxu0 %v1149
      %1171 = vmatprep.subr.bf16.mxu0 %v1167
      %1172 = vmatpush1.bf16.msra.mxu0 %v1164
      %1173 = vmatprep.subr.bf16.mxu0 0
      %1174 = vmatpush1.bf16.msra.mxu0 0
      %1175 = vmatprep.subr.bf16.mxu0 0
      %1176 = vmatpush1.bf16.msra.mxu0 0
      %1177 = vmatprep.subr.bf16.mxu0 0
      %1178 = vmatpush1.bf16.msra.mxu0 0
      %1179 = vmatprep.subr.bf16.mxu0 0
      %1180 = vmatpush1.bf16.msra.mxu0 0
      %1181 = vmatprep.subr.bf16.mxu0 0
      %1182 = vmatpush1.bf16.msra.mxu0 0
      %1183 = vmatprep.subr.bf16.mxu0 0
      %1184 = vmatpush1.bf16.msra.mxu0 0
      %1185 = vmatprep.subr.bf16.mxu0 0
      %1186 = vmatpush1.bf16.msra.mxu0 0
      %1187 = vmatprep.subr.bf16.mxu0 0
      %1188 = vmatpush1.bf16.msra.mxu0 0
      %1189 = vmatprep.subr.bf16.mxu0 0
      %1190 = vmatpush1.bf16.msra.mxu0 0
      %1191 = vmatprep.subr.bf16.mxu0 0
      %1192 = vmatpush1.bf16.msra.mxu0 0
      %1193 = vmatprep.subr.bf16.mxu0 0
      %1194 = vmatpush1.bf16.msra.mxu0 0
      %1195 = vmatprep.subr.bf16.mxu0 0
      %1196 = vmatpush1.bf16.msra.mxu0 0
      %1197 = vmatprep.subr.bf16.mxu0 0
      %1198 = vmatpush1.bf16.msra.mxu0 0
      %1199 = vmatprep.subr.bf16.mxu0 0
      %1200 = vmatpush1.bf16.msra.mxu0 0
      %1201 = vmatprep.mubr.bf16.mxu0 0
      %1202 = vmatmul.mubr.bf16.gmra.mrb[0].mxu0 %v1157
      %v1203 = vpop.f32.mrb[0].mxu0
      %v1204 = vadd.f32 0.0, %v1203
      %v1205 = vpop.f32.mrb[0].mxu0
      %v1206 = vadd.f32 0.0, %v1205
      %v1207 = vpop.f32.mrb[0].mxu0
      %v1208 = vadd.f32 0.0, %v1207
      %v1209 = vpop.f32.mrb[0].mxu0
      %v1210 = vadd.f32 0.0, %v1209
      %1211 = vdwg.mxu0
      %v1212 = vadd.f32 %v1204, %v1206
      %1213 = vadd.xlane.f32.xlu0 %v1212
      %v1214 = vpop.xlane.xlu0 %1213
      %v1215 = vadd.f32 %v1208, %v1210
      %1216 = vadd.xlane.f32.xlu0 %v1215
      %v1217 = vpop.xlane.xlu0 %1216
      %v1218 = vrcp.pop 256.0
      %v1219 = vmul.f32 %v1214, %v1218
      %v1220 = vmul.f32 %v1217, %v1218
      %v1221 = vld [vmem:[%s19] sm:$0x3]
      %vm1222 = vcmask 130048
      %v1224 = vsel %vm1222, %v1221, 0
      %1226 = vmatprep.subr.mxu0 0.0
      %1227 = vmatpush1.msra.mxu0 %v1219
      %1228 = vmatprep.subr.mxu0 0.0
      %1229 = vmatpush1.msra.mxu0 %v1220
      %1230 = vmatprep.subr.mxu0 0.0
      %1231 = vmatpush1.msra.mxu0 0.0
      %1232 = vmatprep.subr.mxu0 0.0
      %1233 = vmatpush1.msra.mxu0 0.0
      %1234 = vmatprep.subr.mxu0 0.0
      %1235 = vmatpush1.msra.mxu0 0.0
      %1236 = vmatprep.subr.mxu0 0.0
      %1237 = vmatpush1.msra.mxu0 0.0
      %1238 = vmatprep.subr.mxu0 0.0
      %1239 = vmatpush1.msra.mxu0 0.0
      %1240 = vmatprep.subr.mxu0 0.0
      %1241 = vmatpush1.msra.mxu0 0.0
      %1242 = vmatprep.subr.mxu0 0.0
      %1243 = vmatpush1.msra.mxu0 0.0
      %1244 = vmatprep.subr.mxu0 0.0
      %1245 = vmatpush1.msra.mxu0 0.0
      %1246 = vmatprep.subr.mxu0 0.0
      %1247 = vmatpush1.msra.mxu0 0.0
      %1248 = vmatprep.subr.mxu0 0.0
      %1249 = vmatpush1.msra.mxu0 0.0
      %1250 = vmatprep.subr.mxu0 0.0
      %1251 = vmatpush1.msra.mxu0 0.0
      %1252 = vmatprep.subr.mxu0 0.0
      %1253 = vmatpush1.msra.mxu0 0.0
      %1254 = vmatprep.subr.mxu0 0.0
      %1255 = vmatpush1.msra.mxu0 0.0
      %1256 = vmatprep.subr.mxu0 0.0
      %1257 = vmatpush1.msra.mxu0 0.0
      %1258 = vmatprep.subr.mxu0 0.0
      %1259 = vmatpush1.msra.mxu0 0.0
      %1260 = vmatprep.subr.mxu0 0.0
      %1261 = vmatpush1.msra.mxu0 0.0
      %1262 = vmatprep.subr.mxu0 0.0
      %1263 = vmatpush1.msra.mxu0 0.0
      %1264 = vmatprep.subr.mxu0 0.0
      %1265 = vmatpush1.msra.mxu0 0.0
      %1266 = vmatprep.subr.mxu0 0.0
      %1267 = vmatpush1.msra.mxu0 0.0
      %1268 = vmatprep.subr.mxu0 0.0
      %1269 = vmatpush1.msra.mxu0 0.0
      %1270 = vmatprep.subr.mxu0 0.0
      %1271 = vmatpush1.msra.mxu0 0.0
      %1272 = vmatprep.subr.mxu0 0.0
      %1273 = vmatpush1.msra.mxu0 0.0
      %1274 = vmatprep.subr.mxu0 0.0
      %1275 = vmatpush1.msra.mxu0 0.0
      %1276 = vmatprep.subr.mxu0 0.0
      %1277 = vmatpush1.msra.mxu0 0.0
      %1278 = vmatprep.subr.mxu0 0.0
      %1279 = vmatpush1.msra.mxu0 0.0
      %1280 = vmatprep.subr.mxu0 0.0
      %1281 = vmatpush1.msra.mxu0 0.0
      %1282 = vmatprep.subr.mxu0 0.0
      %1283 = vmatpush1.msra.mxu0 0.0
      %1284 = vmatprep.subr.mxu0 0.0
      %1285 = vmatpush1.msra.mxu0 0.0
      %1286 = vmatprep.subr.mxu0 0.0
      %1287 = vmatpush1.msra.mxu0 0.0
      %1288 = vmatprep.subr.mxu0 0.0
      %1289 = vmatpush1.msra.mxu0 0.0
      %1290 = vmatprep.mubr.f32.mxu0 0.0
      %1291 = vmatmul.mubr.f32.gmra.mrb[0].mxu0 %v1224
      %v1292 = vpop.f32.mrb[0].mxu0
      %v1293 = vadd.f32 0.0, %v1292
      %v1294 = vpop.f32.mrb[0].mxu0
      %1295 = vdwg.mxu0
      %v1296 = vmul.f32 %v1293, 0.5
      %v1297 = vmul.f32 %v1293, 0.044715
      %v1298 = vmul.f32 %v1297, %v1293
      %v1299 = vmul.f32 %v1298, %v1293
      %v1300 = vadd.f32 %v1293, %v1299
      %v1301 = vmul.f32 %v1300, 0.7978846
      %v1302 = vtanh.pop %v1301
      %v1303 = vadd.f32 %v1302, 1.0
      %v1304 = vmul.f32 %v1296, %v1303
      %v1305 = vld [vmem:[%s21] sm:$0x3]
      %vm1306 = vcmask 15360
      %v1308 = vsel %vm1306, %v1305, 0
      %vm1310 = vcmask 1041408
      %v1312 = vsel %vm1310, %v1304, 0
      %1314 = vmatprep.subr.mxu0 0.0
      %1315 = vmatpush1.msra.mxu0 %v1312
      %1316 = vmatprep.subr.mxu0 0.0
      %1317 = vmatpush1.msra.mxu0 0.0
      %1318 = vmatprep.subr.mxu0 0.0
      %1319 = vmatpush1.msra.mxu0 0.0
      %1320 = vmatprep.subr.mxu0 0.0
      %1321 = vmatpush1.msra.mxu0 0.0
      %1322 = vmatprep.subr.mxu0 0.0
      %1323 = vmatpush1.msra.mxu0 0.0
      %1324 = vmatprep.subr.mxu0 0.0
      %1325 = vmatpush1.msra.mxu0 0.0
      %1326 = vmatprep.subr.mxu0 0.0
      %1327 = vmatpush1.msra.mxu0 0.0
      %1328 = vmatprep.subr.mxu0 0.0
      %1329 = vmatpush1.msra.mxu0 0.0
      %1330 = vmatprep.subr.mxu0 0.0
      %1331 = vmatpush1.msra.mxu0 0.0
      %1332 = vmatprep.subr.mxu0 0.0
      %1333 = vmatpush1.msra.mxu0 0.0
      %1334 = vmatprep.subr.mxu0 0.0
      %1335 = vmatpush1.msra.mxu0 0.0
      %1336 = vmatprep.subr.mxu0 0.0
      %1337 = vmatpush1.msra.mxu0 0.0
      %1338 = vmatprep.subr.mxu0 0.0
      %1339 = vmatpush1.msra.mxu0 0.0
      %1340 = vmatprep.subr.mxu0 0.0
      %1341 = vmatpush1.msra.mxu0 0.0
      %1342 = vmatprep.subr.mxu0 0.0
      %1343 = vmatpush1.msra.mxu0 0.0
      %1344 = vmatprep.subr.mxu0 0.0
      %1345 = vmatpush1.msra.mxu0 0.0
      %1346 = vmatprep.subr.mxu0 0.0
      %1347 = vmatpush1.msra.mxu0 0.0
      %1348 = vmatprep.subr.mxu0 0.0
      %1349 = vmatpush1.msra.mxu0 0.0
      %1350 = vmatprep.subr.mxu0 0.0
      %1351 = vmatpush1.msra.mxu0 0.0
      %1352 = vmatprep.subr.mxu0 0.0
      %1353 = vmatpush1.msra.mxu0 0.0
      %1354 = vmatprep.subr.mxu0 0.0
      %1355 = vmatpush1.msra.mxu0 0.0
      %1356 = vmatprep.subr.mxu0 0.0
      %1357 = vmatpush1.msra.mxu0 0.0
      %1358 = vmatprep.subr.mxu0 0.0
      %1359 = vmatpush1.msra.mxu0 0.0
      %1360 = vmatprep.subr.mxu0 0.0
      %1361 = vmatpush1.msra.mxu0 0.0
      %1362 = vmatprep.subr.mxu0 0.0
      %1363 = vmatpush1.msra.mxu0 0.0
      %1364 = vmatprep.subr.mxu0 0.0
      %1365 = vmatpush1.msra.mxu0 0.0
      %1366 = vmatprep.subr.mxu0 0.0
      %1367 = vmatpush1.msra.mxu0 0.0
      %1368 = vmatprep.subr.mxu0 0.0
      %1369 = vmatpush1.msra.mxu0 0.0
      %1370 = vmatprep.subr.mxu0 0.0
      %1371 = vmatpush1.msra.mxu0 0.0
      %1372 = vmatprep.subr.mxu0 0.0
      %1373 = vmatpush1.msra.mxu0 0.0
      %1374 = vmatprep.subr.mxu0 0.0
      %1375 = vmatpush1.msra.mxu0 0.0
      %1376 = vmatprep.subr.mxu0 0.0
      %1377 = vmatpush1.msra.mxu0 0.0
      %1378 = vmatprep.mubr.f32.mxu0 0.0
      %1379 = vmatmul.mubr.f32.gmra.mrb[0].mxu0 %v1308
      %v1380 = vpop.f32.mrb[0].mxu0
      %v1381 = vadd.f32 0.0, %v1380
      %v1382 = vpop.f32.mrb[0].mxu0
      %1383 = vdwg.mxu0
      %v1384 = vsub.f32 0.0, %v1381
      %v1385 = vmul.f32 %v1384, 1.442695
      %v1386 = vpow.pop %v1385
      %v1387 = vadd.f32 %v1386, 1.0
      %v1388 = vrcp.pop %v1387
      %v1389 = vmul.f32 1.0, %v1388
      %v1390 = vmul.f32 %v1389, 0.0
      %v1391 = vfloor.f32 %v1390
      %v1392 = vld [vmem:[%s5] ss:$2 sm:$0x3]
      %s1393 = scalar_lea.vmem %s5, 1
      %v1394 = vld [vmem:[%s1393] ss:$2 sm:$0x3]
      %1396 = vset.pattern.permute.xlu0 0
      %1397 = vperm.xlu0 %1396, %v1391
      %v1398 = vpop.permute.xlu0 %1397
      %v1399 = vlaneseq
      %v1400 = vshrl.u32 %v1399, 7
      %v1401 = vsub.s32 0, %v1400
      %v1402 = vrot.slane %v1398, %v1401
      %vm1404 = vcmp.lt.f32.partialorder %v1392, %v1402
      %v1405 = vsub.f32 16.0, %v1391
      %1407 = vset.pattern.permute.xlu0 0
      %1408 = vperm.xlu0 %1407, %v1405
      %v1409 = vpop.permute.xlu0 %1408
      %v1410 = vlaneseq
      %v1411 = vshrl.u32 %v1410, 7
      %v1412 = vsub.s32 0, %v1411
      %v1413 = vrot.slane %v1409, %v1412
      %vm1415 = vcmp.ge.f32.partialorder %v1392, %v1413
      %vm1416 = vmor %vm1404, %vm1415
      %v1417 = vlaneseq
      %v1418 = vshrl.u32 %v1417, 7
      %v1419 = vsub.s32 1, %v1418
      %v1420 = vrot.slane %v1398, %v1419
      %vm1422 = vcmp.lt.f32.partialorder %v1394, %v1420
      %v1423 = vlaneseq
      %v1424 = vshrl.u32 %v1423, 7
      %v1425 = vsub.s32 1, %v1424
      %v1426 = vrot.slane %v1409, %v1425
      %vm1428 = vcmp.ge.f32.partialorder %v1394, %v1426
      %vm1429 = vmor %vm1422, %vm1428
      %vm1430 = vmand %vm1416, %vm1429
      %v1431 = vsel %vm1430, 1, 0
      %v1432 = vcvt.s32.f32 %v1431
      %v1433 = vmul.f32 %v1432, 0.00390625
      %v1434 = vmul.f32 %v1432, -0.00390625
      %v1435 = vpack.c.bf16 %v1208, %v1204
      %v1436 = vpack.c.bf16 %v1210, %v1206
      %v1437 = vld [vmem:[%s15] sm:$0xff]
      %v1438 = vld [vmem:[%s15 + $0x8] sm:$0xff]
      %v1439 = vld [vmem:[%s15 + $0x10] sm:$0xff]
      %v1440 = vld [vmem:[%s15 + $0x18] sm:$0xff]
      %v1441 = vld [vmem:[%s15 + $0x20] sm:$0xff]
      %v1442 = vld [vmem:[%s15 + $0x28] sm:$0xff]
      %v1443 = vld [vmem:[%s15 + $0x30] sm:$0xff]
      %v1444 = vld [vmem:[%s15 + $0x38] sm:$0xff]
      %v1445 = vld [vmem:[%s15 + $0x40] sm:$0xff]
      %v1446 = vld [vmem:[%s15 + $0x48] sm:$0xff]
      %v1447 = vld [vmem:[%s15 + $0x50] sm:$0xff]
      %v1448 = vld [vmem:[%s15 + $0x58] sm:$0xff]
      %v1449 = vld [vmem:[%s15 + $0x60] sm:$0xff]
      %v1450 = vld [vmem:[%s15 + $0x68] sm:$0xff]
      %v1451 = vld [vmem:[%s15 + $0x70] sm:$0xff]
      %v1452 = vld [vmem:[%s15 + $0x78] sm:$0xff]
      %v1453 = vld [vmem:[%s15 + $0x80] sm:$0xff]
      %v1454 = vld [vmem:[%s15 + $0x88] sm:$0xff]
      %v1455 = vld [vmem:[%s15 + $0x90] sm:$0xff]
      %v1456 = vld [vmem:[%s15 + $0x98] sm:$0xff]
      %v1457 = vld [vmem:[%s15 + $0xa0] sm:$0xff]
      %v1458 = vld [vmem:[%s15 + $0xa8] sm:$0xff]
      %v1459 = vld [vmem:[%s15 + $0xb0] sm:$0xff]
      %v1460 = vld [vmem:[%s15 + $0xb8] sm:$0xff]
      %v1461 = vld [vmem:[%s15 + $0xc0] sm:$0xff]
      %v1462 = vld [vmem:[%s15 + $0xc8] sm:$0xff]
      %v1463 = vld [vmem:[%s15 + $0xd0] sm:$0xff]
      %v1464 = vld [vmem:[%s15 + $0xd8] sm:$0xff]
      %v1465 = vld [vmem:[%s15 + $0xe0] sm:$0xff]
      %v1466 = vld [vmem:[%s15 + $0xe8] sm:$0xff]
      %v1467 = vld [vmem:[%s15 + $0xf0] sm:$0xff]
      %v1468 = vld [vmem:[%s15 + $0xf8] sm:$0xff]
      %v1469 = vld [vmem:[%s15 + $0x100] sm:$0xff]
      %v1470 = vld [vmem:[%s15 + $0x108] sm:$0xff]
      %v1471 = vld [vmem:[%s15 + $0x110] sm:$0xff]
      %v1472 = vld [vmem:[%s15 + $0x118] sm:$0xff]
      %v1473 = vld [vmem:[%s15 + $0x120] sm:$0xff]
      %v1474 = vld [vmem:[%s15 + $0x128] sm:$0xff]
      %v1475 = vld [vmem:[%s15 + $0x130] sm:$0xff]
      %v1476 = vld [vmem:[%s15 + $0x138] sm:$0xff]
      %v1477 = vld [vmem:[%s15 + $0x140] sm:$0xff]
      %v1478 = vld [vmem:[%s15 + $0x148] sm:$0xff]
      %v1479 = vld [vmem:[%s15 + $0x150] sm:$0xff]
      %v1480 = vld [vmem:[%s15 + $0x158] sm:$0xff]
      %v1481 = vld [vmem:[%s15 + $0x160] sm:$0xff]
      %v1482 = vld [vmem:[%s15 + $0x168] sm:$0xff]
      %v1483 = vld [vmem:[%s15 + $0x170] sm:$0xff]
      %v1484 = vld [vmem:[%s15 + $0x178] sm:$0xff]
      %v1485 = vld [vmem:[%s15 + $0x180] sm:$0xff]
      %v1486 = vld [vmem:[%s15 + $0x188] sm:$0xff]
      %v1487 = vld [vmem:[%s15 + $0x190] sm:$0xff]
      %v1488 = vld [vmem:[%s15 + $0x198] sm:$0xff]
      %v1489 = vld [vmem:[%s15 + $0x1a0] sm:$0xff]
      %v1490 = vld [vmem:[%s15 + $0x1a8] sm:$0xff]
      %v1491 = vld [vmem:[%s15 + $0x1b0] sm:$0xff]
      %v1492 = vld [vmem:[%s15 + $0x1b8] sm:$0xff]
      %v1493 = vld [vmem:[%s15 + $0x1c0] sm:$0xff]
      %v1494 = vld [vmem:[%s15 + $0x1c8] sm:$0xff]
      %v1495 = vld [vmem:[%s15 + $0x1d0] sm:$0xff]
      %v1496 = vld [vmem:[%s15 + $0x1d8] sm:$0xff]
      %v1497 = vld [vmem:[%s15 + $0x1e0] sm:$0xff]
      %v1498 = vld [vmem:[%s15 + $0x1e8] sm:$0xff]
      %v1499 = vld [vmem:[%s15 + $0x1f0] sm:$0xff]
      %v1500 = vld [vmem:[%s15 + $0x1f8] sm:$0xff]
      %v1565 = vunpack.c.l.b16 %v1437
      %v1566 = vunpack.c.h.b16 %v1437
      %v1567 = vunpack.c.l.b16 %v1438
      %v1568 = vunpack.c.h.b16 %v1438
      %v1569 = vunpack.c.l.b16 %v1439
      %v1570 = vunpack.c.h.b16 %v1439
      %v1571 = vunpack.c.l.b16 %v1440
      %v1572 = vunpack.c.h.b16 %v1440
      %v1573 = vunpack.c.l.b16 %v1441
      %v1574 = vunpack.c.h.b16 %v1441
      %v1575 = vunpack.c.l.b16 %v1442
      %v1576 = vunpack.c.h.b16 %v1442
      %v1577 = vunpack.c.l.b16 %v1443
      %v1578 = vunpack.c.h.b16 %v1443
      %v1579 = vunpack.c.l.b16 %v1444
      %v1580 = vunpack.c.h.b16 %v1444
      %v1581 = vunpack.c.l.b16 %v1445
      %v1582 = vunpack.c.h.b16 %v1445
      %v1583 = vunpack.c.l.b16 %v1446
      %v1584 = vunpack.c.h.b16 %v1446
      %v1585 = vunpack.c.l.b16 %v1447
      %v1586 = vunpack.c.h.b16 %v1447
      %v1587 = vunpack.c.l.b16 %v1448
      %v1588 = vunpack.c.h.b16 %v1448
      %v1589 = vunpack.c.l.b16 %v1449
      %v1590 = vunpack.c.h.b16 %v1449
      %v1591 = vunpack.c.l.b16 %v1450
      %v1592 = vunpack.c.h.b16 %v1450
      %v1593 = vunpack.c.l.b16 %v1451
      %v1594 = vunpack.c.h.b16 %v1451
      %v1595 = vunpack.c.l.b16 %v1452
      %v1596 = vunpack.c.h.b16 %v1452
      %v1597 = vunpack.c.l.b16 %v1453
      %v1598 = vunpack.c.h.b16 %v1453
      %v1599 = vunpack.c.l.b16 %v1454
      %v1600 = vunpack.c.h.b16 %v1454
      %v1601 = vunpack.c.l.b16 %v1455
      %v1602 = vunpack.c.h.b16 %v1455
      %v1603 = vunpack.c.l.b16 %v1456
      %v1604 = vunpack.c.h.b16 %v1456
      %v1605 = vunpack.c.l.b16 %v1457
      %v1606 = vunpack.c.h.b16 %v1457
      %v1607 = vunpack.c.l.b16 %v1458
      %v1608 = vunpack.c.h.b16 %v1458
      %v1609 = vunpack.c.l.b16 %v1459
      %v1610 = vunpack.c.h.b16 %v1459
      %v1611 = vunpack.c.l.b16 %v1460
      %v1612 = vunpack.c.h.b16 %v1460
      %v1613 = vunpack.c.l.b16 %v1461
      %v1614 = vunpack.c.h.b16 %v1461
      %v1615 = vunpack.c.l.b16 %v1462
      %v1616 = vunpack.c.h.b16 %v1462
      %v1617 = vunpack.c.l.b16 %v1463
      %v1618 = vunpack.c.h.b16 %v1463
      %v1619 = vunpack.c.l.b16 %v1464
      %v1620 = vunpack.c.h.b16 %v1464
      %v1621 = vunpack.c.l.b16 %v1465
      %v1622 = vunpack.c.h.b16 %v1465
      %v1623 = vunpack.c.l.b16 %v1466
      %v1624 = vunpack.c.h.b16 %v1466
      %v1625 = vunpack.c.l.b16 %v1467
      %v1626 = vunpack.c.h.b16 %v1467
      %v1627 = vunpack.c.l.b16 %v1468
      %v1628 = vunpack.c.h.b16 %v1468
      %v1629 = vunpack.c.l.b16 %v1469
      %v1630 = vunpack.c.h.b16 %v1469
      %v1631 = vunpack.c.l.b16 %v1470
      %v1632 = vunpack.c.h.b16 %v1470
      %v1633 = vunpack.c.l.b16 %v1471
      %v1634 = vunpack.c.h.b16 %v1471
      %v1635 = vunpack.c.l.b16 %v1472
      %v1636 = vunpack.c.h.b16 %v1472
      %v1637 = vunpack.c.l.b16 %v1473
      %v1638 = vunpack.c.h.b16 %v1473
      %v1639 = vunpack.c.l.b16 %v1474
      %v1640 = vunpack.c.h.b16 %v1474
      %v1641 = vunpack.c.l.b16 %v1475
      %v1642 = vunpack.c.h.b16 %v1475
      %v1643 = vunpack.c.l.b16 %v1476
      %v1644 = vunpack.c.h.b16 %v1476
      %v1645 = vunpack.c.l.b16 %v1477
      %v1646 = vunpack.c.h.b16 %v1477
      %v1647 = vunpack.c.l.b16 %v1478
      %v1648 = vunpack.c.h.b16 %v1478
      %v1649 = vunpack.c.l.b16 %v1479
      %v1650 = vunpack.c.h.b16 %v1479
      %v1651 = vunpack.c.l.b16 %v1480
      %v1652 = vunpack.c.h.b16 %v1480
      %v1653 = vunpack.c.l.b16 %v1481
      %v1654 = vunpack.c.h.b16 %v1481
      %v1655 = vunpack.c.l.b16 %v1482
      %v1656 = vunpack.c.h.b16 %v1482
      %v1657 = vunpack.c.l.b16 %v1483
      %v1658 = vunpack.c.h.b16 %v1483
      %v1659 = vunpack.c.l.b16 %v1484
      %v1660 = vunpack.c.h.b16 %v1484
      %v1661 = vunpack.c.l.b16 %v1485
      %v1662 = vunpack.c.h.b16 %v1485
      %v1663 = vunpack.c.l.b16 %v1486
      %v1664 = vunpack.c.h.b16 %v1486
      %v1665 = vunpack.c.l.b16 %v1487
      %v1666 = vunpack.c.h.b16 %v1487
      %v1667 = vunpack.c.l.b16 %v1488
      %v1668 = vunpack.c.h.b16 %v1488
      %v1669 = vunpack.c.l.b16 %v1489
      %v1670 = vunpack.c.h.b16 %v1489
      %v1671 = vunpack.c.l.b16 %v1490
      %v1672 = vunpack.c.h.b16 %v1490
      %v1673 = vunpack.c.l.b16 %v1491
      %v1674 = vunpack.c.h.b16 %v1491
      %v1675 = vunpack.c.l.b16 %v1492
      %v1676 = vunpack.c.h.b16 %v1492
      %v1677 = vunpack.c.l.b16 %v1493
      %v1678 = vunpack.c.h.b16 %v1493
      %v1679 = vunpack.c.l.b16 %v1494
      %v1680 = vunpack.c.h.b16 %v1494
      %v1681 = vunpack.c.l.b16 %v1495
      %v1682 = vunpack.c.h.b16 %v1495
      %v1683 = vunpack.c.l.b16 %v1496
      %v1684 = vunpack.c.h.b16 %v1496
      %v1685 = vunpack.c.l.b16 %v1497
      %v1686 = vunpack.c.h.b16 %v1497
      %v1687 = vunpack.c.l.b16 %v1498
      %v1688 = vunpack.c.h.b16 %v1498
      %v1689 = vunpack.c.l.b16 %v1499
      %v1690 = vunpack.c.h.b16 %v1499
      %v1691 = vunpack.c.l.b16 %v1500
      %v1692 = vunpack.c.h.b16 %v1500
      %v1693 = vpack.c.b16 %v1569, %v1565
      %v1694 = vpack.c.b16 %v1570, %v1566
      %v1695 = vpack.c.b16 %v1571, %v1567
      %v1696 = vpack.c.b16 %v1572, %v1568
      %v1697 = vpack.c.b16 %v1577, %v1573
      %v1698 = vpack.c.b16 %v1578, %v1574
      %v1699 = vpack.c.b16 %v1579, %v1575
      %v1700 = vpack.c.b16 %v1580, %v1576
      %v1701 = vpack.c.b16 %v1585, %v1581
      %v1702 = vpack.c.b16 %v1586, %v1582
      %v1703 = vpack.c.b16 %v1587, %v1583
      %v1704 = vpack.c.b16 %v1588, %v1584
      %v1705 = vpack.c.b16 %v1593, %v1589
      %v1706 = vpack.c.b16 %v1594, %v1590
      %v1707 = vpack.c.b16 %v1595, %v1591
      %v1708 = vpack.c.b16 %v1596, %v1592
      %v1709 = vpack.c.b16 %v1601, %v1597
      %v1710 = vpack.c.b16 %v1602, %v1598
      %v1711 = vpack.c.b16 %v1603, %v1599
      %v1712 = vpack.c.b16 %v1604, %v1600
      %v1713 = vpack.c.b16 %v1609, %v1605
      %v1714 = vpack.c.b16 %v1610, %v1606
      %v1715 = vpack.c.b16 %v1611, %v1607
      %v1716 = vpack.c.b16 %v1612, %v1608
      %v1717 = vpack.c.b16 %v1617, %v1613
      %v1718 = vpack.c.b16 %v1618, %v1614
      %v1719 = vpack.c.b16 %v1619, %v1615
      %v1720 = vpack.c.b16 %v1620, %v1616
      %v1721 = vpack.c.b16 %v1625, %v1621
      %v1722 = vpack.c.b16 %v1626, %v1622
      %v1723 = vpack.c.b16 %v1627, %v1623
      %v1724 = vpack.c.b16 %v1628, %v1624
      %v1725 = vpack.c.b16 %v1633, %v1629
      %v1726 = vpack.c.b16 %v1634, %v1630
      %v1727 = vpack.c.b16 %v1635, %v1631
      %v1728 = vpack.c.b16 %v1636, %v1632
      %v1729 = vpack.c.b16 %v1641, %v1637
      %v1730 = vpack.c.b16 %v1642, %v1638
      %v1731 = vpack.c.b16 %v1643, %v1639
      %v1732 = vpack.c.b16 %v1644, %v1640
      %v1733 = vpack.c.b16 %v1649, %v1645
      %v1734 = vpack.c.b16 %v1650, %v1646
      %v1735 = vpack.c.b16 %v1651, %v1647
      %v1736 = vpack.c.b16 %v1652, %v1648
      %v1737 = vpack.c.b16 %v1657, %v1653
      %v1738 = vpack.c.b16 %v1658, %v1654
      %v1739 = vpack.c.b16 %v1659, %v1655
      %v1740 = vpack.c.b16 %v1660, %v1656
      %v1741 = vpack.c.b16 %v1665, %v1661
      %v1742 = vpack.c.b16 %v1666, %v1662
      %v1743 = vpack.c.b16 %v1667, %v1663
      %v1744 = vpack.c.b16 %v1668, %v1664
      %v1745 = vpack.c.b16 %v1673, %v1669
      %v1746 = vpack.c.b16 %v1674, %v1670
      %v1747 = vpack.c.b16 %v1675, %v1671
      %v1748 = vpack.c.b16 %v1676, %v1672
      %v1749 = vpack.c.b16 %v1681, %v1677
      %v1750 = vpack.c.b16 %v1682, %v1678
      %v1751 = vpack.c.b16 %v1683, %v1679
      %v1752 = vpack.c.b16 %v1684, %v1680
      %v1753 = vpack.c.b16 %v1689, %v1685
      %v1754 = vpack.c.b16 %v1690, %v1686
      %v1755 = vpack.c.b16 %v1691, %v1687
      %v1756 = vpack.c.b16 %v1692, %v1688
      %1821 = vmatprep.subr.bf16.mxu0 %v1694
      %1822 = vmatpush1.bf16.msra.mxu0 %v1693
      %1823 = vmatprep.subr.bf16.mxu0 %v1698
      %1824 = vmatpush1.bf16.msra.mxu0 %v1697
      %1825 = vmatprep.subr.bf16.mxu0 %v1702
      %1826 = vmatpush1.bf16.msra.mxu0 %v1701
      %1827 = vmatprep.subr.bf16.mxu0 %v1706
      %1828 = vmatpush1.bf16.msra.mxu0 %v1705
      %1829 = vmatprep.subr.bf16.mxu0 %v1710
      %1830 = vmatpush1.bf16.msra.mxu0 %v1709
      %1831 = vmatprep.subr.bf16.mxu0 %v1714
      %1832 = vmatpush1.bf16.msra.mxu0 %v1713
      %1833 = vmatprep.subr.bf16.mxu0 %v1718
      %1834 = vmatpush1.bf16.msra.mxu0 %v1717
      %1835 = vmatprep.subr.bf16.mxu0 %v1722
      %1836 = vmatpush1.bf16.msra.mxu0 %v1721
      %1837 = vmatprep.subr.bf16.mxu0 %v1726
      %1838 = vmatpush1.bf16.msra.mxu0 %v1725
      %1839 = vmatprep.subr.bf16.mxu0 %v1730
      %1840 = vmatpush1.bf16.msra.mxu0 %v1729
      %1841 = vmatprep.subr.bf16.mxu0 %v1734
      %1842 = vmatpush1.bf16.msra.mxu0 %v1733
      %1843 = vmatprep.subr.bf16.mxu0 %v1738
      %1844 = vmatpush1.bf16.msra.mxu0 %v1737
      %1845 = vmatprep.subr.bf16.mxu0 %v1742
      %1846 = vmatpush1.bf16.msra.mxu0 %v1741
      %1847 = vmatprep.subr.bf16.mxu0 %v1746
      %1848 = vmatpush1.bf16.msra.mxu0 %v1745
      %1849 = vmatprep.subr.bf16.mxu0 %v1750
      %1850 = vmatpush1.bf16.msra.mxu0 %v1749
      %1851 = vmatprep.subr.bf16.mxu0 %v1754
      %1852 = vmatpush1.bf16.msra.mxu0 %v1753
      %1853 = vmatprep.mubr.bf16.mxu0 %v1436
      %1854 = vmatmul.mubr.bf16.gmra.mrb[0].mxu0 %v1435
      %v1855 = vpop.f32.mrb[0].mxu0
      %v1856 = vadd.f32 0.0, %v1855
      %v1857 = vpop.f32.mrb[0].mxu0
      %v1858 = vadd.f32 0.0, %v1857
      %v1859 = vpop.f32.mrb[0].mxu0
      %v1860 = vadd.f32 0.0, %v1859
      %v1861 = vpop.f32.mrb[0].mxu0
      %v1862 = vadd.f32 0.0, %v1861
      %1863 = vdwg.mxu0
      %1864 = vmatprep.subr.bf16.mxu0 %v1696
      %1865 = vmatpush1.bf16.msra.mxu0 %v1695
      %1866 = vmatprep.subr.bf16.mxu0 %v1700
      %1867 = vmatpush1.bf16.msra.mxu0 %v1699
      %1868 = vmatprep.subr.bf16.mxu0 %v1704
      %1869 = vmatpush1.bf16.msra.mxu0 %v1703
      %1870 = vmatprep.subr.bf16.mxu0 %v1708
      %1871 = vmatpush1.bf16.msra.mxu0 %v1707
      %1872 = vmatprep.subr.bf16.mxu0 %v1712
      %1873 = vmatpush1.bf16.msra.mxu0 %v1711
      %1874 = vmatprep.subr.bf16.mxu0 %v1716
      %1875 = vmatpush1.bf16.msra.mxu0 %v1715
      %1876 = vmatprep.subr.bf16.mxu0 %v1720
      %1877 = vmatpush1.bf16.msra.mxu0 %v1719
      %1878 = vmatprep.subr.bf16.mxu0 %v1724
      %1879 = vmatpush1.bf16.msra.mxu0 %v1723
      %1880 = vmatprep.subr.bf16.mxu0 %v1728
      %1881 = vmatpush1.bf16.msra.mxu0 %v1727
      %1882 = vmatprep.subr.bf16.mxu0 %v1732
      %1883 = vmatpush1.bf16.msra.mxu0 %v1731
      %1884 = vmatprep.subr.bf16.mxu0 %v1736
      %1885 = vmatpush1.bf16.msra.mxu0 %v1735
      %1886 = vmatprep.subr.bf16.mxu0 %v1740
      %1887 = vmatpush1.bf16.msra.mxu0 %v1739
      %1888 = vmatprep.subr.bf16.mxu0 %v1744
      %1889 = vmatpush1.bf16.msra.mxu0 %v1743
      %1890 = vmatprep.subr.bf16.mxu0 %v1748
      %1891 = vmatpush1.bf16.msra.mxu0 %v1747
      %1892 = vmatprep.subr.bf16.mxu0 %v1752
      %1893 = vmatpush1.bf16.msra.mxu0 %v1751
      %1894 = vmatprep.subr.bf16.mxu0 %v1756
      %1895 = vmatpush1.bf16.msra.mxu0 %v1755
      %1896 = vmatprep.mubr.bf16.mxu0 %v1436
      %1897 = vmatmul.mubr.bf16.gmra.mrb[0].mxu0 %v1435
      %v1898 = vpop.f32.mrb[0].mxu0
      %v1899 = vadd.f32 0.0, %v1898
      %v1900 = vpop.f32.mrb[0].mxu0
      %v1901 = vadd.f32 0.0, %v1900
      %v1902 = vpop.f32.mrb[0].mxu0
      %v1903 = vadd.f32 0.0, %v1902
      %v1904 = vpop.f32.mrb[0].mxu0
      %v1905 = vadd.f32 0.0, %v1904
      %1906 = vdwg.mxu0
      %v1908 = vlaneseq
      %v1909 = vshrl.u32 %v1908, 7
      %v1910 = vsub.s32 0, %v1909
      %v1911 = vrot.slane %v1433, %v1910
      %v1912 = vlaneseq
      %v1913 = vshrl.u32 %v1912, 7
      %v1914 = vsub.s32 1, %v1913
      %v1915 = vrot.slane %v1433, %v1914
      %v1918 = vmul.f32 %v1856, %v1911
      %v1919 = vmul.f32 %v1858, %v1915
      %v1920 = vmul.f32 %v1860, %v1911
      %v1921 = vmul.f32 %v1862, %v1915
      %v1923 = vlaneseq
      %v1924 = vshrl.u32 %v1923, 7
      %v1925 = vsub.s32 0, %v1924
      %v1926 = vrot.slane %v1434, %v1925
      %v1927 = vlaneseq
      %v1928 = vshrl.u32 %v1927, 7
      %v1929 = vsub.s32 1, %v1928
      %v1930 = vrot.slane %v1434, %v1929
      %v1933 = vmul.f32 %v1899, %v1926
      %v1934 = vmul.f32 %v1901, %v1930
      %v1935 = vmul.f32 %v1903, %v1926
      %v1936 = vmul.f32 %v1905, %v1930
      %v1937 = vpack.c.bf16 %v1920, %v1918
      %v1938 = vpack.c.bf16 %v1921, %v1919
      %v1939 = vpack.c.bf16 %v1935, %v1933
      %v1940 = vpack.c.bf16 %v1936, %v1934
      %1941 = vmatprep.subr.bf16.mxu0 %v1694
      %1942 = vmatpush1.bf16.msra.mxu0 %v1693
      %1943 = vmatprep.subr.bf16.mxu0 %v1698
      %1944 = vmatpush1.bf16.msra.mxu0 %v1697
      %1945 = vmatprep.subr.bf16.mxu0 %v1702
      %1946 = vmatpush1.bf16.msra.mxu0 %v1701
      %1947 = vmatprep.subr.bf16.mxu0 %v1706
      %1948 = vmatpush1.bf16.msra.mxu0 %v1705
      %1949 = vmatprep.subr.bf16.mxu0 %v1710
      %1950 = vmatpush1.bf16.msra.mxu0 %v1709
      %1951 = vmatprep.subr.bf16.mxu0 %v1714
      %1952 = vmatpush1.bf16.msra.mxu0 %v1713
      %1953 = vmatprep.subr.bf16.mxu0 %v1718
      %1954 = vmatpush1.bf16.msra.mxu0 %v1717
      %1955 = vmatprep.subr.bf16.mxu0 %v1722
      %1956 = vmatpush1.bf16.msra.mxu0 %v1721
      %1957 = vmatprep.subr.bf16.mxu0 %v1726
      %1958 = vmatpush1.bf16.msra.mxu0 %v1725
      %1959 = vmatprep.subr.bf16.mxu0 %v1730
      %1960 = vmatpush1.bf16.msra.mxu0 %v1729
      %1961 = vmatprep.subr.bf16.mxu0 %v1734
      %1962 = vmatpush1.bf16.msra.mxu0 %v1733
      %1963 = vmatprep.subr.bf16.mxu0 %v1738
      %1964 = vmatpush1.bf16.msra.mxu0 %v1737
      %1965 = vmatprep.subr.bf16.mxu0 %v1742
      %1966 = vmatpush1.bf16.msra.mxu0 %v1741
      %1967 = vmatprep.subr.bf16.mxu0 %v1746
      %1968 = vmatpush1.bf16.msra.mxu0 %v1745
      %1969 = vmatprep.subr.bf16.mxu0 %v1750
      %1970 = vmatpush1.bf16.msra.mxu0 %v1749
      %1971 = vmatprep.subr.bf16.mxu0 %v1754
      %1972 = vmatpush1.bf16.msra.mxu0 %v1753
      %1973 = vmatprep.mubr.bf16.mxu0 %v1938
      %1974 = vmatmul.mubr.bf16.gmra.mrb[0].mxu0 %v1937
      %v1975 = vpop.f32.mrb[0].mxu0
      %v1976 = vadd.f32 0.0, %v1975
      %v1977 = vpop.f32.mrb[0].mxu0
      %v1978 = vadd.f32 0.0, %v1977
      %v1979 = vpop.f32.mrb[0].mxu0
      %v1980 = vadd.f32 0.0, %v1979
      %v1981 = vpop.f32.mrb[0].mxu0
      %v1982 = vadd.f32 0.0, %v1981
      %1983 = vmatprep.mubr.bf16.mxu0 %v1940
      %1984 = vmatmul.mubr.bf16.gmra.mrb[0].mxu0 %v1939
      %v1985 = vpop.f32.mrb[0].mxu0
      %v1986 = vadd.f32 0.0, %v1985
      %v1987 = vpop.f32.mrb[0].mxu0
      %v1988 = vadd.f32 0.0, %v1987
      %v1989 = vpop.f32.mrb[0].mxu0
      %v1990 = vadd.f32 0.0, %v1989
      %v1991 = vpop.f32.mrb[0].mxu0
      %v1992 = vadd.f32 0.0, %v1991
      %1993 = vdwg.mxu0
      %1994 = vmatprep.subr.bf16.mxu0 %v1696
      %1995 = vmatpush1.bf16.msra.mxu0 %v1695
      %1996 = vmatprep.subr.bf16.mxu0 %v1700
      %1997 = vmatpush1.bf16.msra.mxu0 %v1699
      %1998 = vmatprep.subr.bf16.mxu0 %v1704
      %1999 = vmatpush1.bf16.msra.mxu0 %v1703
      %2000 = vmatprep.subr.bf16.mxu0 %v1708
      %2001 = vmatpush1.bf16.msra.mxu0 %v1707
      %2002 = vmatprep.subr.bf16.mxu0 %v1712
      %2003 = vmatpush1.bf16.msra.mxu0 %v1711
      %2004 = vmatprep.subr.bf16.mxu0 %v1716
      %2005 = vmatpush1.bf16.msra.mxu0 %v1715
      %2006 = vmatprep.subr.bf16.mxu0 %v1720
      %2007 = vmatpush1.bf16.msra.mxu0 %v1719
      %2008 = vmatprep.subr.bf16.mxu0 %v1724
      %2009 = vmatpush1.bf16.msra.mxu0 %v1723
      %2010 = vmatprep.subr.bf16.mxu0 %v1728
      %2011 = vmatpush1.bf16.msra.mxu0 %v1727
      %2012 = vmatprep.subr.bf16.mxu0 %v1732
      %2013 = vmatpush1.bf16.msra.mxu0 %v1731
      %2014 = vmatprep.subr.bf16.mxu0 %v1736
      %2015 = vmatpush1.bf16.msra.mxu0 %v1735
      %2016 = vmatprep.subr.bf16.mxu0 %v1740
      %2017 = vmatpush1.bf16.msra.mxu0 %v1739
      %2018 = vmatprep.subr.bf16.mxu0 %v1744
      %2019 = vmatpush1.bf16.msra.mxu0 %v1743
      %2020 = vmatprep.subr.bf16.mxu0 %v1748
      %2021 = vmatpush1.bf16.msra.mxu0 %v1747
      %2022 = vmatprep.subr.bf16.mxu0 %v1752
      %2023 = vmatpush1.bf16.msra.mxu0 %v1751
      %2024 = vmatprep.subr.bf16.mxu0 %v1756
      %2025 = vmatpush1.bf16.msra.mxu0 %v1755
      %2026 = vmatprep.mubr.bf16.mxu0 %v1938
      %2027 = vmatmul.mubr.bf16.gmra.mrb[0].mxu0 %v1937
      %v2028 = vpop.f32.mrb[0].mxu0
      %v2029 = vadd.f32 0.0, %v2028
      %v2030 = vpop.f32.mrb[0].mxu0
      %v2031 = vadd.f32 0.0, %v2030
      %v2032 = vpop.f32.mrb[0].mxu0
      %v2033 = vadd.f32 0.0, %v2032
      %v2034 = vpop.f32.mrb[0].mxu0
      %v2035 = vadd.f32 0.0, %v2034
      %2036 = vmatprep.mubr.bf16.mxu0 %v1940
      %2037 = vmatmul.mubr.bf16.gmra.mrb[0].mxu0 %v1939
      %v2038 = vpop.f32.mrb[0].mxu0
      %v2039 = vadd.f32 0.0, %v2038
      %v2040 = vpop.f32.mrb[0].mxu0
      %v2041 = vadd.f32 0.0, %v2040
      %v2042 = vpop.f32.mrb[0].mxu0
      %v2043 = vadd.f32 0.0, %v2042
      %v2044 = vpop.f32.mrb[0].mxu0
      %v2045 = vadd.f32 0.0, %v2044
      %2046 = vdwg.mxu0
      %v2047 = vsub.f32 %v1976, %v2039
      %v2048 = vsub.f32 %v1978, %v2041
      %v2049 = vsub.f32 %v1980, %v2043
      %v2050 = vsub.f32 %v1982, %v2045
      %v2051 = vadd.f32 %v2029, %v1986
      %v2052 = vadd.f32 %v2031, %v1988
      %v2053 = vadd.f32 %v2033, %v1990
      %v2054 = vadd.f32 %v2035, %v1992
      %v2055 = vmul.f32 %v2047, %v2047
      %v2056 = vmul.f32 %v2048, %v2048
      %v2057 = vmul.f32 %v2049, %v2049
      %v2058 = vmul.f32 %v2050, %v2050
      %v2059 = vmul.f32 %v2051, %v2051
      %v2060 = vmul.f32 %v2052, %v2052
      %v2061 = vmul.f32 %v2053, %v2053
      %v2062 = vmul.f32 %v2054, %v2054
      %v2063 = vadd.f32 %v2055, %v2059
      %v2064 = vadd.f32 %v2056, %v2060
      %v2065 = vadd.f32 %v2057, %v2061
      %v2066 = vadd.f32 %v2058, %v2062
      %v2067 = vrsqrt.pop %v2063
      %v2068 = vmul.f32 %v2063, %v2067
      %vm2069 = vcmp.eq.f32.partialorder %v2063, inf
      %v2070 = vsel %vm2069, %v2063, %v2068
      %vm2071 = vcmp.eq.f32.partialorder %v2063, 0.0
      %v2072 = vand.u32 %v2063, 2147483648
      %v2073 = vsel %vm2071, %v2072, %v2070
      %v2074 = vrsqrt.pop %v2064
      %v2075 = vmul.f32 %v2064, %v2074
      %vm2076 = vcmp.eq.f32.partialorder %v2064, inf
      %v2077 = vsel %vm2076, %v2064, %v2075
      %vm2078 = vcmp.eq.f32.partialorder %v2064, 0.0
      %v2079 = vand.u32 %v2064, 2147483648
      %v2080 = vsel %vm2078, %v2079, %v2077
      %v2081 = vrsqrt.pop %v2065
      %v2082 = vmul.f32 %v2065, %v2081
      %vm2083 = vcmp.eq.f32.partialorder %v2065, inf
      %v2084 = vsel %vm2083, %v2065, %v2082
      %vm2085 = vcmp.eq.f32.partialorder %v2065, 0.0
      %v2086 = vand.u32 %v2065, 2147483648
      %v2087 = vsel %vm2085, %v2086, %v2084
      %v2088 = vrsqrt.pop %v2066
      %v2089 = vmul.f32 %v2066, %v2088
      %vm2090 = vcmp.eq.f32.partialorder %v2066, inf
      %v2091 = vsel %vm2090, %v2066, %v2089
      %vm2092 = vcmp.eq.f32.partialorder %v2066, 0.0
      %v2093 = vand.u32 %v2066, 2147483648
      %v2094 = vsel %vm2092, %v2093, %v2091
      %v2095 = vsub.f32 %v1204, %v2047
      %v2096 = vsub.f32 %v1206, %v2048
      %v2097 = vsub.f32 %v1208, %v2049
      %v2098 = vsub.f32 %v1210, %v2050
      %v2099 = vmul.f32 %v2095, %v2095
      %v2100 = vmul.f32 %v2096, %v2096
      %v2101 = vmul.f32 %v2097, %v2097
      %v2102 = vmul.f32 %v2098, %v2098
      %v2103 = vadd.f32 %v2099, %v2059
      %v2104 = vadd.f32 %v2100, %v2060
      %v2105 = vadd.f32 %v2101, %v2061
      %v2106 = vadd.f32 %v2102, %v2062
      %v2107 = vrsqrt.pop %v2103
      %v2108 = vmul.f32 %v2103, %v2107
      %vm2109 = vcmp.eq.f32.partialorder %v2103, inf
      %v2110 = vsel %vm2109, %v2103, %v2108
      %vm2111 = vcmp.eq.f32.partialorder %v2103, 0.0
      %v2112 = vand.u32 %v2103, 2147483648
      %v2113 = vsel %vm2111, %v2112, %v2110
      %v2114 = vrsqrt.pop %v2104
      %v2115 = vmul.f32 %v2104, %v2114
      %vm2116 = vcmp.eq.f32.partialorder %v2104, inf
      %v2117 = vsel %vm2116, %v2104, %v2115
      %vm2118 = vcmp.eq.f32.partialorder %v2104, 0.0
      %v2119 = vand.u32 %v2104, 2147483648
      %v2120 = vsel %vm2118, %v2119, %v2117
      %v2121 = vrsqrt.pop %v2105
      %v2122 = vmul.f32 %v2105, %v2121
      %vm2123 = vcmp.eq.f32.partialorder %v2105, inf
      %v2124 = vsel %vm2123, %v2105, %v2122
      %vm2125 = vcmp.eq.f32.partialorder %v2105, 0.0
      %v2126 = vand.u32 %v2105, 2147483648
      %v2127 = vsel %vm2125, %v2126, %v2124
      %v2128 = vrsqrt.pop %v2106
      %v2129 = vmul.f32 %v2106, %v2128
      %vm2130 = vcmp.eq.f32.partialorder %v2106, inf
      %v2131 = vsel %vm2130, %v2106, %v2129
      %vm2132 = vcmp.eq.f32.partialorder %v2106, 0.0
      %v2133 = vand.u32 %v2106, 2147483648
      %v2134 = vsel %vm2132, %v2133, %v2131
      %v2135 = vld [vmem:[%s23] sm:$0xf]
      %v2136 = vld [vmem:[%s23 + $0x4] sm:$0xf]
      %v2137 = vld [vmem:[%s23 + $0x8] sm:$0xf]
      %v2138 = vld [vmem:[%s23 + $0xc] sm:$0xf]
      %v2139 = vld [vmem:[%s23 + $0x10] sm:$0xf]
      %v2140 = vld [vmem:[%s23 + $0x14] sm:$0xf]
      %v2141 = vld [vmem:[%s23 + $0x18] sm:$0xf]
      %v2142 = vld [vmem:[%s23 + $0x1c] sm:$0xf]
      %v2143 = vld [vmem:[%s23 + $0x20] sm:$0xf]
      %v2144 = vld [vmem:[%s23 + $0x24] sm:$0xf]
      %v2145 = vld [vmem:[%s25] sm:$0xff]
      %v2146 = vld [vmem:[%s25 + $0x8] sm:$0xff]
      %v2147 = vld [vmem:[%s25 + $0x10] sm:$0xff]
      %v2148 = vld [vmem:[%s25 + $0x18] sm:$0xff]
      %v2149 = vld [vmem:[%s25 + $0x20] sm:$0xff]
      %v2150 = vld [vmem:[%s25 + $0x28] sm:$0xff]
      %v2151 = vld [vmem:[%s25 + $0x30] sm:$0xff]
      %v2152 = vld [vmem:[%s25 + $0x38] sm:$0xff]
      %v2153 = vld [vmem:[%s25 + $0x40] sm:$0xff]
      %v2154 = vld [vmem:[%s25 + $0x48] sm:$0xff]
      %2156 = vset.pattern.permute.xlu0 0
      %2157 = vperm.xlu0 %2156, %v2145
      %v2158 = vpop.permute.xlu0 %2157
      %2161 = vset.pattern.permute.xlu0 0
      %2162 = vperm.xlu0 %2161, %v2146
      %v2163 = vpop.permute.xlu0 %2162
      %2166 = vset.pattern.permute.xlu0 0
      %2167 = vperm.xlu0 %2166, %v2147
      %v2168 = vpop.permute.xlu0 %2167
      %2171 = vset.pattern.permute.xlu0 0
      %2172 = vperm.xlu0 %2171, %v2148
      %v2173 = vpop.permute.xlu0 %2172
      %2176 = vset.pattern.permute.xlu0 0
      %2177 = vperm.xlu0 %2176, %v2149
      %v2178 = vpop.permute.xlu0 %2177
      %2181 = vset.pattern.permute.xlu0 0
      %2182 = vperm.xlu0 %2181, %v2150
      %v2183 = vpop.permute.xlu0 %2182
      %2186 = vset.pattern.permute.xlu0 0
      %2187 = vperm.xlu0 %2186, %v2151
      %v2188 = vpop.permute.xlu0 %2187
      %2191 = vset.pattern.permute.xlu0 0
      %2192 = vperm.xlu0 %2191, %v2152
      %v2193 = vpop.permute.xlu0 %2192
      %2196 = vset.pattern.permute.xlu0 0
      %2197 = vperm.xlu0 %2196, %v2153
      %v2198 = vpop.permute.xlu0 %2197
      %2201 = vset.pattern.permute.xlu0 0
      %2202 = vperm.xlu0 %2201, %v2154
      %v2203 = vpop.permute.xlu0 %2202
      %v2215 = vunpack.c.l.b16 %v2135
      %v2216 = vunpack.c.l.b16 %v2136
      %v2217 = vunpack.c.l.b16 %v2137
      %v2218 = vunpack.c.l.b16 %v2138
      %v2219 = vunpack.c.l.b16 %v2139
      %v2220 = vunpack.c.l.b16 %v2140
      %v2221 = vunpack.c.l.b16 %v2141
      %v2222 = vunpack.c.l.b16 %v2142
      %v2223 = vunpack.c.l.b16 %v2143
      %v2224 = vunpack.c.l.b16 %v2144
      %v2225 = vpack.c.b16 %v2216, %v2215
      %v2226 = vpack.c.b16 %v2218, %v2217
      %v2227 = vpack.c.b16 %v2220, %v2219
      %v2228 = vpack.c.b16 %v2222, %v2221
      %v2229 = vpack.c.b16 %v2224, %v2223
      %v2231 = vsel %vm1222, %v2225, 0
      %v2234 = vsel %vm1222, %v2226, 0
      %v2237 = vsel %vm1222, %v2227, 0
      %v2240 = vsel %vm1222, %v2228, 0
      %v2243 = vsel %vm1222, %v2229, 0
      %2245 = vmatprep.subr.bf16.mxu0 %v1125
      %2246 = vmatpush1.bf16.msra.mxu0 %v1124
      %2247 = vmatprep.subr.bf16.mxu0 0
      %2248 = vmatpush1.bf16.msra.mxu0 0
      %2249 = vmatprep.subr.bf16.mxu0 0
      %2250 = vmatpush1.bf16.msra.mxu0 0
      %2251 = vmatprep.subr.bf16.mxu0 0
      %2252 = vmatpush1.bf16.msra.mxu0 0
      %2253 = vmatprep.subr.bf16.mxu0 0
      %2254 = vmatpush1.bf16.msra.mxu0 0
      %2255 = vmatprep.subr.bf16.mxu0 0
      %2256 = vmatpush1.bf16.msra.mxu0 0
      %2257 = vmatprep.subr.bf16.mxu0 0
      %2258 = vmatpush1.bf16.msra.mxu0 0
      %2259 = vmatprep.subr.bf16.mxu0 0
      %2260 = vmatpush1.bf16.msra.mxu0 0
      %2261 = vmatprep.subr.bf16.mxu0 0
      %2262 = vmatpush1.bf16.msra.mxu0 0
      %2263 = vmatprep.subr.bf16.mxu0 0
      %2264 = vmatpush1.bf16.msra.mxu0 0
      %2265 = vmatprep.subr.bf16.mxu0 0
      %2266 = vmatpush1.bf16.msra.mxu0 0
      %2267 = vmatprep.subr.bf16.mxu0 0
      %2268 = vmatpush1.bf16.msra.mxu0 0
      %2269 = vmatprep.subr.bf16.mxu0 0
      %2270 = vmatpush1.bf16.msra.mxu0 0
      %2271 = vmatprep.subr.bf16.mxu0 0
      %2272 = vmatpush1.bf16.msra.mxu0 0
      %2273 = vmatprep.subr.bf16.mxu0 0
      %2274 = vmatpush1.bf16.msra.mxu0 0
      %2275 = vmatprep.subr.bf16.mxu0 0
      %2276 = vmatpush1.bf16.msra.mxu0 0
      %2277 = vmatprep.mubr.bf16.mxu0 0
      %2278 = vmatmul.mubr.bf16.gmra.mrb[0].mxu0 %v2231
      %v2279 = vpop.f32.mrb[0].mxu0
      %v2280 = vadd.f32 %v2158, %v2279
      %v2281 = vpop.f32.mrb[0].mxu0
      %v2282 = vadd.f32 %v2158, %v2281
      %v2283 = vpop.f32.mrb[0].mxu0
      %v2284 = vadd.f32 %v2163, %v2283
      %v2285 = vpop.f32.mrb[0].mxu0
      %v2286 = vadd.f32 %v2163, %v2285
      %2287 = vmatprep.mubr.bf16.mxu0 0
      %2288 = vmatmul.mubr.bf16.gmra.mrb[0].mxu0 %v2234
      %v2289 = vpop.f32.mrb[0].mxu0
      %v2290 = vadd.f32 %v2168, %v2289
      %v2291 = vpop.f32.mrb[0].mxu0
      %v2292 = vadd.f32 %v2168, %v2291
      %v2293 = vpop.f32.mrb[0].mxu0
      %v2294 = vadd.f32 %v2173, %v2293
      %v2295 = vpop.f32.mrb[0].mxu0
      %v2296 = vadd.f32 %v2173, %v2295
      %2297 = vmatprep.mubr.bf16.mxu0 0
      %2298 = vmatmul.mubr.bf16.gmra.mrb[0].mxu0 %v2237
      %v2299 = vpop.f32.mrb[0].mxu0
      %v2300 = vadd.f32 %v2178, %v2299
      %v2301 = vpop.f32.mrb[0].mxu0
      %v2302 = vadd.f32 %v2178, %v2301
      %v2303 = vpop.f32.mrb[0].mxu0
      %v2304 = vadd.f32 %v2183, %v2303
      %v2305 = vpop.f32.mrb[0].mxu0
      %v2306 = vadd.f32 %v2183, %v2305
      %2307 = vmatprep.mubr.bf16.mxu0 0
      %2308 = vmatmul.mubr.bf16.gmra.mrb[0].mxu0 %v2240
      %v2309 = vpop.f32.mrb[0].mxu0
      %v2310 = vadd.f32 %v2188, %v2309
      %v2311 = vpop.f32.mrb[0].mxu0
      %v2312 = vadd.f32 %v2188, %v2311
      %v2313 = vpop.f32.mrb[0].mxu0
      %v2314 = vadd.f32 %v2193, %v2313
      %v2315 = vpop.f32.mrb[0].mxu0
      %v2316 = vadd.f32 %v2193, %v2315
      %2317 = vmatprep.mubr.bf16.mxu0 0
      %2318 = vmatmul.mubr.bf16.gmra.mrb[0].mxu0 %v2243
      %v2319 = vpop.f32.mrb[0].mxu0
      %v2320 = vadd.f32 %v2198, %v2319
      %v2321 = vpop.f32.mrb[0].mxu0
      %v2322 = vadd.f32 %v2198, %v2321
      %v2323 = vpop.f32.mrb[0].mxu0
      %v2324 = vadd.f32 %v2203, %v2323
      %v2325 = vpop.f32.mrb[0].mxu0
      %v2326 = vadd.f32 %v2203, %v2325
      %2327 = vdwg.mxu0
      %v2328 = vld [vmem:[%s27] sm:$0xff]
      %v2329 = vld [vmem:[%s27 + $0x8] sm:$0xff]
      %v2330 = vld [vmem:[%s27 + $0x10] sm:$0xff]
      %v2331 = vld [vmem:[%s27 + $0x18] sm:$0xff]
      %v2332 = vld [vmem:[%s27 + $0x20] sm:$0xff]
      %v2333 = vld [vmem:[%s27 + $0x28] sm:$0xff]
      %v2334 = vld [vmem:[%s27 + $0x30] sm:$0xff]
      %v2335 = vld [vmem:[%s27 + $0x38] sm:$0xff]
      %v2336 = vld [vmem:[%s27 + $0x40] sm:$0xff]
      %v2337 = vld [vmem:[%s27 + $0x48] sm:$0xff]
      %v2338 = vld [vmem:[%s29] sm:$0xff]
      %v2339 = vld [vmem:[%s29 + $0x8] sm:$0xff]
      %v2340 = vld [vmem:[%s29 + $0x10] sm:$0xff]
      %v2341 = vld [vmem:[%s29 + $0x18] sm:$0xff]
      %v2342 = vld [vmem:[%s29 + $0x20] sm:$0xff]
      %v2343 = vld [vmem:[%s29 + $0x28] sm:$0xff]
      %v2344 = vld [vmem:[%s29 + $0x30] sm:$0xff]
      %v2345 = vld [vmem:[%s29 + $0x38] sm:$0xff]
      %v2346 = vld [vmem:[%s29 + $0x40] sm:$0xff]
      %v2347 = vld [vmem:[%s29 + $0x48] sm:$0xff]
      %2349 = vset.pattern.permute.xlu0 4
      %2350 = vperm.xlu0 %2349, %v2328
      %v2351 = vpop.permute.xlu0 %2350
      %2354 = vset.pattern.permute.xlu0 4
      %2355 = vperm.xlu0 %2354, %v2329
      %v2356 = vpop.permute.xlu0 %2355
      %2359 = vset.pattern.permute.xlu0 4
      %2360 = vperm.xlu0 %2359, %v2330
      %v2361 = vpop.permute.xlu0 %2360
      %2364 = vset.pattern.permute.xlu0 4
      %2365 = vperm.xlu0 %2364, %v2331
      %v2366 = vpop.permute.xlu0 %2365
      %2369 = vset.pattern.permute.xlu0 4
      %2370 = vperm.xlu0 %2369, %v2332
      %v2371 = vpop.permute.xlu0 %2370
      %2374 = vset.pattern.permute.xlu0 4
      %2375 = vperm.xlu0 %2374, %v2333
      %v2376 = vpop.permute.xlu0 %2375
      %2379 = vset.pattern.permute.xlu0 4
      %2380 = vperm.xlu0 %2379, %v2334
      %v2381 = vpop.permute.xlu0 %2380
      %2384 = vset.pattern.permute.xlu0 4
      %2385 = vperm.xlu0 %2384, %v2335
      %v2386 = vpop.permute.xlu0 %2385
      %2389 = vset.pattern.permute.xlu0 4
      %2390 = vperm.xlu0 %2389, %v2336
      %v2391 = vpop.permute.xlu0 %2390
      %2394 = vset.pattern.permute.xlu0 4
      %2395 = vperm.xlu0 %2394, %v2337
      %v2396 = vpop.permute.xlu0 %2395
      %v2398 = vmul.f32 %v2351, %v2280
      %v2399 = vmul.f32 %v2351, %v2282
      %v2400 = vmul.f32 %v2356, %v2284
      %v2401 = vmul.f32 %v2356, %v2286
      %v2402 = vmul.f32 %v2361, %v2290
      %v2403 = vmul.f32 %v2361, %v2292
      %v2404 = vmul.f32 %v2366, %v2294
      %v2405 = vmul.f32 %v2366, %v2296
      %v2406 = vmul.f32 %v2371, %v2300
      %v2407 = vmul.f32 %v2371, %v2302
      %v2408 = vmul.f32 %v2376, %v2304
      %v2409 = vmul.f32 %v2376, %v2306
      %v2410 = vmul.f32 %v2381, %v2310
      %v2411 = vmul.f32 %v2381, %v2312
      %v2412 = vmul.f32 %v2386, %v2314
      %v2413 = vmul.f32 %v2386, %v2316
      %v2414 = vmul.f32 %v2391, %v2320
      %v2415 = vmul.f32 %v2391, %v2322
      %v2416 = vmul.f32 %v2396, %v2324
      %v2417 = vmul.f32 %v2396, %v2326
      %2419 = vset.pattern.permute.xlu0 0
      %2420 = vperm.xlu0 %2419, %v2338
      %v2421 = vpop.permute.xlu0 %2420
      %2424 = vset.pattern.permute.xlu0 0
      %2425 = vperm.xlu0 %2424, %v2339
      %v2426 = vpop.permute.xlu0 %2425
      %2429 = vset.pattern.permute.xlu0 0
      %2430 = vperm.xlu0 %2429, %v2340
      %v2431 = vpop.permute.xlu0 %2430
      %2434 = vset.pattern.permute.xlu0 0
      %2435 = vperm.xlu0 %2434, %v2341
      %v2436 = vpop.permute.xlu0 %2435
      %2439 = vset.pattern.permute.xlu0 0
      %2440 = vperm.xlu0 %2439, %v2342
      %v2441 = vpop.permute.xlu0 %2440
      %2444 = vset.pattern.permute.xlu0 0
      %2445 = vperm.xlu0 %2444, %v2343
      %v2446 = vpop.permute.xlu0 %2445
      %2449 = vset.pattern.permute.xlu0 0
      %2450 = vperm.xlu0 %2449, %v2344
      %v2451 = vpop.permute.xlu0 %2450
      %2454 = vset.pattern.permute.xlu0 0
      %2455 = vperm.xlu0 %2454, %v2345
      %v2456 = vpop.permute.xlu0 %2455
      %2459 = vset.pattern.permute.xlu0 0
      %2460 = vperm.xlu0 %2459, %v2346
      %v2461 = vpop.permute.xlu0 %2460
      %2464 = vset.pattern.permute.xlu0 0
      %2465 = vperm.xlu0 %2464, %v2347
      %v2466 = vpop.permute.xlu0 %2465
      %v2468 = vadd.f32 %v2398, %v2421
      %v2469 = vadd.f32 %v2399, %v2421
      %v2470 = vadd.f32 %v2400, %v2426
      %v2471 = vadd.f32 %v2401, %v2426
      %v2472 = vadd.f32 %v2402, %v2431
      %v2473 = vadd.f32 %v2403, %v2431
      %v2474 = vadd.f32 %v2404, %v2436
      %v2475 = vadd.f32 %v2405, %v2436
      %v2476 = vadd.f32 %v2406, %v2441
      %v2477 = vadd.f32 %v2407, %v2441
      %v2478 = vadd.f32 %v2408, %v2446
      %v2479 = vadd.f32 %v2409, %v2446
      %v2480 = vadd.f32 %v2410, %v2451
      %v2481 = vadd.f32 %v2411, %v2451
      %v2482 = vadd.f32 %v2412, %v2456
      %v2483 = vadd.f32 %v2413, %v2456
      %v2484 = vadd.f32 %v2414, %v2461
      %v2485 = vadd.f32 %v2415, %v2461
      %v2486 = vadd.f32 %v2416, %v2466
      %v2487 = vadd.f32 %v2417, %v2466
      %2488 = vrot.lane.b32.xlu0 %v2280, 17
      %v2489 = vpop.permute.xlu0 %2488
      %2490 = vrot.lane.b32.xlu0 %v2284, 17
      %v2491 = vpop.permute.xlu0 %2490
      %2492 = vrot.lane.b32.xlu0 %v2290, 17
      %v2493 = vpop.permute.xlu0 %2492
      %2494 = vrot.lane.b32.xlu0 %v2294, 17
      %v2495 = vpop.permute.xlu0 %2494
      %2496 = vrot.lane.b32.xlu0 %v2300, 17
      %v2497 = vpop.permute.xlu0 %2496
      %2498 = vrot.lane.b32.xlu0 %v2304, 17
      %v2499 = vpop.permute.xlu0 %2498
      %2500 = vrot.lane.b32.xlu0 %v2310, 17
      %v2501 = vpop.permute.xlu0 %2500
      %2502 = vrot.lane.b32.xlu0 %v2314, 17
      %v2503 = vpop.permute.xlu0 %2502
      %2504 = vrot.lane.b32.xlu0 %v2320, 17
      %v2505 = vpop.permute.xlu0 %2504
      %2506 = vrot.lane.b32.xlu0 %v2324, 17
      %v2507 = vpop.permute.xlu0 %2506
      %2508 = vrot.lane.b32.xlu0 %v2282, 17
      %v2509 = vpop.permute.xlu0 %2508
      %2510 = vrot.lane.b32.xlu0 %v2286, 17
      %v2511 = vpop.permute.xlu0 %2510
      %2512 = vrot.lane.b32.xlu0 %v2292, 17
      %v2513 = vpop.permute.xlu0 %2512
      %2514 = vrot.lane.b32.xlu0 %v2296, 17
      %v2515 = vpop.permute.xlu0 %2514
      %2516 = vrot.lane.b32.xlu0 %v2302, 17
      %v2517 = vpop.permute.xlu0 %2516
      %2518 = vrot.lane.b32.xlu0 %v2306, 17
      %v2519 = vpop.permute.xlu0 %2518
      %2520 = vrot.lane.b32.xlu0 %v2312, 17
      %v2521 = vpop.permute.xlu0 %2520
      %2522 = vrot.lane.b32.xlu0 %v2316, 17
      %v2523 = vpop.permute.xlu0 %2522
      %2524 = vrot.lane.b32.xlu0 %v2322, 17
      %v2525 = vpop.permute.xlu0 %2524
      %2526 = vrot.lane.b32.xlu0 %v2326, 17
      %v2527 = vpop.permute.xlu0 %2526
      %v2528 = vlaneseq
      %v2529 = vand.u32 %v2528, 127
      %vm2530 = vcmp.lt.s32.totalorder %v2529, 17
      %v2531 = vsel %vm2530, %v2489, %v2509
      %v2532 = vsel %vm2530, %v2491, %v2511
      %v2533 = vsel %vm2530, %v2493, %v2513
      %v2534 = vsel %vm2530, %v2495, %v2515
      %v2535 = vsel %vm2530, %v2497, %v2517
      %v2536 = vsel %vm2530, %v2499, %v2519
      %v2537 = vsel %vm2530, %v2501, %v2521
      %v2538 = vsel %vm2530, %v2503, %v2523
      %v2539 = vsel %vm2530, %v2505, %v2525
      %v2540 = vsel %vm2530, %v2507, %v2527
      %v2541 = vsel %vm2530, %v2509, %v2489
      %v2542 = vsel %vm2530, %v2511, %v2491
      %v2543 = vsel %vm2530, %v2513, %v2493
      %v2544 = vsel %vm2530, %v2515, %v2495
      %v2545 = vsel %vm2530, %v2517, %v2497
      %v2546 = vsel %vm2530, %v2519, %v2499
      %v2547 = vsel %vm2530, %v2521, %v2501
      %v2548 = vsel %vm2530, %v2523, %v2503
      %v2549 = vsel %vm2530, %v2525, %v2505
      %v2550 = vsel %vm2530, %v2527, %v2507
      %v2551 = vld [vmem:[%s7] ss:$8 sm:$0x3]
      %v2553 = vlaneseq
      %v2554 = vshrl.u32 %v2553, 7
      %v2555 = vsub.s32 0, %v2554
      %v2556 = vrot.slane %v2551, %v2555
      %v2557 = vlaneseq
      %v2558 = vshrl.u32 %v2557, 7
      %v2559 = vsub.s32 1, %v2558
      %v2560 = vrot.slane %v2551, %v2559
      %v2563 = vmul.f32 %v2541, %v2556
      %v2564 = vmul.f32 %v2531, %v2560
      %v2565 = vmul.f32 %v2542, %v2556
      %v2566 = vmul.f32 %v2532, %v2560
      %v2567 = vmul.f32 %v2543, %v2556
      %v2568 = vmul.f32 %v2533, %v2560
      %v2569 = vmul.f32 %v2544, %v2556
      %v2570 = vmul.f32 %v2534, %v2560
      %v2571 = vmul.f32 %v2545, %v2556
      %v2572 = vmul.f32 %v2535, %v2560
      %v2573 = vmul.f32 %v2546, %v2556
      %v2574 = vmul.f32 %v2536, %v2560
      %v2575 = vmul.f32 %v2547, %v2556
      %v2576 = vmul.f32 %v2537, %v2560
      %v2577 = vmul.f32 %v2548, %v2556
      %v2578 = vmul.f32 %v2538, %v2560
      %v2579 = vmul.f32 %v2549, %v2556
      %v2580 = vmul.f32 %v2539, %v2560
      %v2581 = vmul.f32 %v2550, %v2556
      %v2582 = vmul.f32 %v2540, %v2560
      %2583 = vset.pattern.permute.xlu0 0
      %2584 = vperm.xlu0 %2583, %v2328
      %v2585 = vpop.permute.xlu0 %2584
      %2587 = vset.pattern.permute.xlu0 0
      %2588 = vperm.xlu0 %2587, %v2329
      %v2589 = vpop.permute.xlu0 %2588
      %2591 = vset.pattern.permute.xlu0 0
      %2592 = vperm.xlu0 %2591, %v2330
      %v2593 = vpop.permute.xlu0 %2592
      %2595 = vset.pattern.permute.xlu0 0
      %2596 = vperm.xlu0 %2595, %v2331
      %v2597 = vpop.permute.xlu0 %2596
      %2599 = vset.pattern.permute.xlu0 0
      %2600 = vperm.xlu0 %2599, %v2332
      %v2601 = vpop.permute.xlu0 %2600
      %2603 = vset.pattern.permute.xlu0 0
      %2604 = vperm.xlu0 %2603, %v2333
      %v2605 = vpop.permute.xlu0 %2604
      %2607 = vset.pattern.permute.xlu0 0
      %2608 = vperm.xlu0 %2607, %v2334
      %v2609 = vpop.permute.xlu0 %2608
      %2611 = vset.pattern.permute.xlu0 0
      %2612 = vperm.xlu0 %2611, %v2335
      %v2613 = vpop.permute.xlu0 %2612
      %2615 = vset.pattern.permute.xlu0 0
      %2616 = vperm.xlu0 %2615, %v2336
      %v2617 = vpop.permute.xlu0 %2616
      %2619 = vset.pattern.permute.xlu0 0
      %2620 = vperm.xlu0 %2619, %v2337
      %v2621 = vpop.permute.xlu0 %2620
      %v2623 = vmul.f32 %v2585, %v2563
      %v2624 = vmul.f32 %v2585, %v2564
      %v2625 = vmul.f32 %v2589, %v2565
      %v2626 = vmul.f32 %v2589, %v2566
      %v2627 = vmul.f32 %v2593, %v2567
      %v2628 = vmul.f32 %v2593, %v2568
      %v2629 = vmul.f32 %v2597, %v2569
      %v2630 = vmul.f32 %v2597, %v2570
      %v2631 = vmul.f32 %v2601, %v2571
      %v2632 = vmul.f32 %v2601, %v2572
      %v2633 = vmul.f32 %v2605, %v2573
      %v2634 = vmul.f32 %v2605, %v2574
      %v2635 = vmul.f32 %v2609, %v2575
      %v2636 = vmul.f32 %v2609, %v2576
      %v2637 = vmul.f32 %v2613, %v2577
      %v2638 = vmul.f32 %v2613, %v2578
      %v2639 = vmul.f32 %v2617, %v2579
      %v2640 = vmul.f32 %v2617, %v2580
      %v2641 = vmul.f32 %v2621, %v2581
      %v2642 = vmul.f32 %v2621, %v2582
      %v2643 = vadd.f32 %v2468, %v2623
      %v2644 = vadd.f32 %v2469, %v2624
      %v2645 = vadd.f32 %v2470, %v2625
      %v2646 = vadd.f32 %v2471, %v2626
      %v2647 = vadd.f32 %v2472, %v2627
      %v2648 = vadd.f32 %v2473, %v2628
      %v2649 = vadd.f32 %v2474, %v2629
      %v2650 = vadd.f32 %v2475, %v2630
      %v2651 = vadd.f32 %v2476, %v2631
      %v2652 = vadd.f32 %v2477, %v2632
      %v2653 = vadd.f32 %v2478, %v2633
      %v2654 = vadd.f32 %v2479, %v2634
      %v2655 = vadd.f32 %v2480, %v2635
      %v2656 = vadd.f32 %v2481, %v2636
      %v2657 = vadd.f32 %v2482, %v2637
      %v2658 = vadd.f32 %v2483, %v2638
      %v2659 = vadd.f32 %v2484, %v2639
      %v2660 = vadd.f32 %v2485, %v2640
      %v2661 = vadd.f32 %v2486, %v2641
      %v2662 = vadd.f32 %v2487, %v2642
      %2663 = vrot.lane.b32.xlu0 %v2280, 16
      %v2664 = vpop.permute.xlu0 %2663
      %2665 = vrot.lane.b32.xlu0 %v2284, 16
      %v2666 = vpop.permute.xlu0 %2665
      %2667 = vrot.lane.b32.xlu0 %v2290, 16
      %v2668 = vpop.permute.xlu0 %2667
      %2669 = vrot.lane.b32.xlu0 %v2294, 16
      %v2670 = vpop.permute.xlu0 %2669
      %2671 = vrot.lane.b32.xlu0 %v2300, 16
      %v2672 = vpop.permute.xlu0 %2671
      %2673 = vrot.lane.b32.xlu0 %v2304, 16
      %v2674 = vpop.permute.xlu0 %2673
      %2675 = vrot.lane.b32.xlu0 %v2310, 16
      %v2676 = vpop.permute.xlu0 %2675
      %2677 = vrot.lane.b32.xlu0 %v2314, 16
      %v2678 = vpop.permute.xlu0 %2677
      %2679 = vrot.lane.b32.xlu0 %v2320, 16
      %v2680 = vpop.permute.xlu0 %2679
      %2681 = vrot.lane.b32.xlu0 %v2324, 16
      %v2682 = vpop.permute.xlu0 %2681
      %2683 = vrot.lane.b32.xlu0 %v2282, 16
      %v2684 = vpop.permute.xlu0 %2683
      %2685 = vrot.lane.b32.xlu0 %v2286, 16
      %v2686 = vpop.permute.xlu0 %2685
      %2687 = vrot.lane.b32.xlu0 %v2292, 16
      %v2688 = vpop.permute.xlu0 %2687
      %2689 = vrot.lane.b32.xlu0 %v2296, 16
      %v2690 = vpop.permute.xlu0 %2689
      %2691 = vrot.lane.b32.xlu0 %v2302, 16
      %v2692 = vpop.permute.xlu0 %2691
      %2693 = vrot.lane.b32.xlu0 %v2306, 16
      %v2694 = vpop.permute.xlu0 %2693
      %2695 = vrot.lane.b32.xlu0 %v2312, 16
      %v2696 = vpop.permute.xlu0 %2695
      %2697 = vrot.lane.b32.xlu0 %v2316, 16
      %v2698 = vpop.permute.xlu0 %2697
      %2699 = vrot.lane.b32.xlu0 %v2322, 16
      %v2700 = vpop.permute.xlu0 %2699
      %2701 = vrot.lane.b32.xlu0 %v2326, 16
      %v2702 = vpop.permute.xlu0 %2701
      %vm2703 = vcmp.lt.s32.totalorder %v2529, 16
      %v2704 = vsel %vm2703, %v2664, %v2684
      %v2705 = vsel %vm2703, %v2666, %v2686
      %v2706 = vsel %vm2703, %v2668, %v2688
      %v2707 = vsel %vm2703, %v2670, %v2690
      %v2708 = vsel %vm2703, %v2672, %v2692
      %v2709 = vsel %vm2703, %v2674, %v2694
      %v2710 = vsel %vm2703, %v2676, %v2696
      %v2711 = vsel %vm2703, %v2678, %v2698
      %v2712 = vsel %vm2703, %v2680, %v2700
      %v2713 = vsel %vm2703, %v2682, %v2702
      %v2714 = vsel %vm2703, %v2684, %v2664
      %v2715 = vsel %vm2703, %v2686, %v2666
      %v2716 = vsel %vm2703, %v2688, %v2668
      %v2717 = vsel %vm2703, %v2690, %v2670
      %v2718 = vsel %vm2703, %v2692, %v2672
      %v2719 = vsel %vm2703, %v2694, %v2674
      %v2720 = vsel %vm2703, %v2696, %v2676
      %v2721 = vsel %vm2703, %v2698, %v2678
      %v2722 = vsel %vm2703, %v2700, %v2680
      %v2723 = vsel %vm2703, %v2702, %v2682
      %s2724 = scalar_lea.vmem %s7, 1
      %v2725 = vld [vmem:[%s2724] ss:$8 sm:$0x3]
      %v2727 = vlaneseq
      %v2728 = vshrl.u32 %v2727, 7
      %v2729 = vsub.s32 0, %v2728
      %v2730 = vrot.slane %v2725, %v2729
      %v2731 = vlaneseq
      %v2732 = vshrl.u32 %v2731, 7
      %v2733 = vsub.s32 1, %v2732
      %v2734 = vrot.slane %v2725, %v2733
      %v2737 = vmul.f32 %v2714, %v2730
      %v2738 = vmul.f32 %v2704, %v2734
      %v2739 = vmul.f32 %v2715, %v2730
      %v2740 = vmul.f32 %v2705, %v2734
      %v2741 = vmul.f32 %v2716, %v2730
      %v2742 = vmul.f32 %v2706, %v2734
      %v2743 = vmul.f32 %v2717, %v2730
      %v2744 = vmul.f32 %v2707, %v2734
      %v2745 = vmul.f32 %v2718, %v2730
      %v2746 = vmul.f32 %v2708, %v2734
      %v2747 = vmul.f32 %v2719, %v2730
      %v2748 = vmul.f32 %v2709, %v2734
      %v2749 = vmul.f32 %v2720, %v2730
      %v2750 = vmul.f32 %v2710, %v2734
      %v2751 = vmul.f32 %v2721, %v2730
      %v2752 = vmul.f32 %v2711, %v2734
      %v2753 = vmul.f32 %v2722, %v2730
      %v2754 = vmul.f32 %v2712, %v2734
      %v2755 = vmul.f32 %v2723, %v2730
      %v2756 = vmul.f32 %v2713, %v2734
      %2757 = vset.pattern.permute.xlu0 1
      %2758 = vperm.xlu0 %2757, %v2328
      %v2759 = vpop.permute.xlu0 %2758
      %2761 = vset.pattern.permute.xlu0 1
      %2762 = vperm.xlu0 %2761, %v2329
      %v2763 = vpop.permute.xlu0 %2762
      %2765 = vset.pattern.permute.xlu0 1
      %2766 = vperm.xlu0 %2765, %v2330
      %v2767 = vpop.permute.xlu0 %2766
      %2769 = vset.pattern.permute.xlu0 1
      %2770 = vperm.xlu0 %2769, %v2331
      %v2771 = vpop.permute.xlu0 %2770
      %2773 = vset.pattern.permute.xlu0 1
      %2774 = vperm.xlu0 %2773, %v2332
      %v2775 = vpop.permute.xlu0 %2774
      %2777 = vset.pattern.permute.xlu0 1
      %2778 = vperm.xlu0 %2777, %v2333
      %v2779 = vpop.permute.xlu0 %2778
      %2781 = vset.pattern.permute.xlu0 1
      %2782 = vperm.xlu0 %2781, %v2334
      %v2783 = vpop.permute.xlu0 %2782
      %2785 = vset.pattern.permute.xlu0 1
      %2786 = vperm.xlu0 %2785, %v2335
      %v2787 = vpop.permute.xlu0 %2786
      %2789 = vset.pattern.permute.xlu0 1
      %2790 = vperm.xlu0 %2789, %v2336
      %v2791 = vpop.permute.xlu0 %2790
      %2793 = vset.pattern.permute.xlu0 1
      %2794 = vperm.xlu0 %2793, %v2337
      %v2795 = vpop.permute.xlu0 %2794
      %v2797 = vmul.f32 %v2759, %v2737
      %v2798 = vmul.f32 %v2759, %v2738
      %v2799 = vmul.f32 %v2763, %v2739
      %v2800 = vmul.f32 %v2763, %v2740
      %v2801 = vmul.f32 %v2767, %v2741
      %v2802 = vmul.f32 %v2767, %v2742
      %v2803 = vmul.f32 %v2771, %v2743
      %v2804 = vmul.f32 %v2771, %v2744
      %v2805 = vmul.f32 %v2775, %v2745
      %v2806 = vmul.f32 %v2775, %v2746
      %v2807 = vmul.f32 %v2779, %v2747
      %v2808 = vmul.f32 %v2779, %v2748
      %v2809 = vmul.f32 %v2783, %v2749
      %v2810 = vmul.f32 %v2783, %v2750
      %v2811 = vmul.f32 %v2787, %v2751
      %v2812 = vmul.f32 %v2787, %v2752
      %v2813 = vmul.f32 %v2791, %v2753
      %v2814 = vmul.f32 %v2791, %v2754
      %v2815 = vmul.f32 %v2795, %v2755
      %v2816 = vmul.f32 %v2795, %v2756
      %v2817 = vadd.f32 %v2643, %v2797
      %v2818 = vadd.f32 %v2644, %v2798
      %v2819 = vadd.f32 %v2645, %v2799
      %v2820 = vadd.f32 %v2646, %v2800
      %v2821 = vadd.f32 %v2647, %v2801
      %v2822 = vadd.f32 %v2648, %v2802
      %v2823 = vadd.f32 %v2649, %v2803
      %v2824 = vadd.f32 %v2650, %v2804
      %v2825 = vadd.f32 %v2651, %v2805
      %v2826 = vadd.f32 %v2652, %v2806
      %v2827 = vadd.f32 %v2653, %v2807
      %v2828 = vadd.f32 %v2654, %v2808
      %v2829 = vadd.f32 %v2655, %v2809
      %v2830 = vadd.f32 %v2656, %v2810
      %v2831 = vadd.f32 %v2657, %v2811
      %v2832 = vadd.f32 %v2658, %v2812
      %v2833 = vadd.f32 %v2659, %v2813
      %v2834 = vadd.f32 %v2660, %v2814
      %v2835 = vadd.f32 %v2661, %v2815
      %v2836 = vadd.f32 %v2662, %v2816
      %2837 = vrot.lane.b32.xlu0 %v2280, 15
      %v2838 = vpop.permute.xlu0 %2837
      %2839 = vrot.lane.b32.xlu0 %v2284, 15
      %v2840 = vpop.permute.xlu0 %2839
      %2841 = vrot.lane.b32.xlu0 %v2290, 15
      %v2842 = vpop.permute.xlu0 %2841
      %2843 = vrot.lane.b32.xlu0 %v2294, 15
      %v2844 = vpop.permute.xlu0 %2843
      %2845 = vrot.lane.b32.xlu0 %v2300, 15
      %v2846 = vpop.permute.xlu0 %2845
      %2847 = vrot.lane.b32.xlu0 %v2304, 15
      %v2848 = vpop.permute.xlu0 %2847
      %2849 = vrot.lane.b32.xlu0 %v2310, 15
      %v2850 = vpop.permute.xlu0 %2849
      %2851 = vrot.lane.b32.xlu0 %v2314, 15
      %v2852 = vpop.permute.xlu0 %2851
      %2853 = vrot.lane.b32.xlu0 %v2320, 15
      %v2854 = vpop.permute.xlu0 %2853
      %2855 = vrot.lane.b32.xlu0 %v2324, 15
      %v2856 = vpop.permute.xlu0 %2855
      %2857 = vrot.lane.b32.xlu0 %v2282, 15
      %v2858 = vpop.permute.xlu0 %2857
      %2859 = vrot.lane.b32.xlu0 %v2286, 15
      %v2860 = vpop.permute.xlu0 %2859
      %2861 = vrot.lane.b32.xlu0 %v2292, 15
      %v2862 = vpop.permute.xlu0 %2861
      %2863 = vrot.lane.b32.xlu0 %v2296, 15
      %v2864 = vpop.permute.xlu0 %2863
      %2865 = vrot.lane.b32.xlu0 %v2302, 15
      %v2866 = vpop.permute.xlu0 %2865
      %2867 = vrot.lane.b32.xlu0 %v2306, 15
      %v2868 = vpop.permute.xlu0 %2867
      %2869 = vrot.lane.b32.xlu0 %v2312, 15
      %v2870 = vpop.permute.xlu0 %2869
      %2871 = vrot.lane.b32.xlu0 %v2316, 15
      %v2872 = vpop.permute.xlu0 %2871
      %2873 = vrot.lane.b32.xlu0 %v2322, 15
      %v2874 = vpop.permute.xlu0 %2873
      %2875 = vrot.lane.b32.xlu0 %v2326, 15
      %v2876 = vpop.permute.xlu0 %2875
      %vm2877 = vcmp.lt.s32.totalorder %v2529, 15
      %v2878 = vsel %vm2877, %v2838, %v2858
      %v2879 = vsel %vm2877, %v2840, %v2860
      %v2880 = vsel %vm2877, %v2842, %v2862
      %v2881 = vsel %vm2877, %v2844, %v2864
      %v2882 = vsel %vm2877, %v2846, %v2866
      %v2883 = vsel %vm2877, %v2848, %v2868
      %v2884 = vsel %vm2877, %v2850, %v2870
      %v2885 = vsel %vm2877, %v2852, %v2872
      %v2886 = vsel %vm2877, %v2854, %v2874
      %v2887 = vsel %vm2877, %v2856, %v2876
      %v2888 = vsel %vm2877, %v2858, %v2838
      %v2889 = vsel %vm2877, %v2860, %v2840
      %v2890 = vsel %vm2877, %v2862, %v2842
      %v2891 = vsel %vm2877, %v2864, %v2844
      %v2892 = vsel %vm2877, %v2866, %v2846
      %v2893 = vsel %vm2877, %v2868, %v2848
      %v2894 = vsel %vm2877, %v2870, %v2850
      %v2895 = vsel %vm2877, %v2872, %v2852
      %v2896 = vsel %vm2877, %v2874, %v2854
      %v2897 = vsel %vm2877, %v2876, %v2856
      %s2898 = scalar_lea.vmem %s7, 2
      %v2899 = vld [vmem:[%s2898] ss:$8 sm:$0x3]
      %v2901 = vlaneseq
      %v2902 = vshrl.u32 %v2901, 7
      %v2903 = vsub.s32 0, %v2902
      %v2904 = vrot.slane %v2899, %v2903
      %v2905 = vlaneseq
      %v2906 = vshrl.u32 %v2905, 7
      %v2907 = vsub.s32 1, %v2906
      %v2908 = vrot.slane %v2899, %v2907
      %v2911 = vmul.f32 %v2888, %v2904
      %v2912 = vmul.f32 %v2878, %v2908
      %v2913 = vmul.f32 %v2889, %v2904
      %v2914 = vmul.f32 %v2879, %v2908
      %v2915 = vmul.f32 %v2890, %v2904
      %v2916 = vmul.f32 %v2880, %v2908
      %v2917 = vmul.f32 %v2891, %v2904
      %v2918 = vmul.f32 %v2881, %v2908
      %v2919 = vmul.f32 %v2892, %v2904
      %v2920 = vmul.f32 %v2882, %v2908
      %v2921 = vmul.f32 %v2893, %v2904
      %v2922 = vmul.f32 %v2883, %v2908
      %v2923 = vmul.f32 %v2894, %v2904
      %v2924 = vmul.f32 %v2884, %v2908
      %v2925 = vmul.f32 %v2895, %v2904
      %v2926 = vmul.f32 %v2885, %v2908
      %v2927 = vmul.f32 %v2896, %v2904
      %v2928 = vmul.f32 %v2886, %v2908
      %v2929 = vmul.f32 %v2897, %v2904
      %v2930 = vmul.f32 %v2887, %v2908
      %2931 = vset.pattern.permute.xlu0 2
      %2932 = vperm.xlu0 %2931, %v2328
      %v2933 = vpop.permute.xlu0 %2932
      %2935 = vset.pattern.permute.xlu0 2
      %2936 = vperm.xlu0 %2935, %v2329
      %v2937 = vpop.permute.xlu0 %2936
      %2939 = vset.pattern.permute.xlu0 2
      %2940 = vperm.xlu0 %2939, %v2330
      %v2941 = vpop.permute.xlu0 %2940
      %2943 = vset.pattern.permute.xlu0 2
      %2944 = vperm.xlu0 %2943, %v2331
      %v2945 = vpop.permute.xlu0 %2944
      %2947 = vset.pattern.permute.xlu0 2
      %2948 = vperm.xlu0 %2947, %v2332
      %v2949 = vpop.permute.xlu0 %2948
      %2951 = vset.pattern.permute.xlu0 2
      %2952 = vperm.xlu0 %2951, %v2333
      %v2953 = vpop.permute.xlu0 %2952
      %2955 = vset.pattern.permute.xlu0 2
      %2956 = vperm.xlu0 %2955, %v2334
      %v2957 = vpop.permute.xlu0 %2956
      %2959 = vset.pattern.permute.xlu0 2
      %2960 = vperm.xlu0 %2959, %v2335
      %v2961 = vpop.permute.xlu0 %2960
      %2963 = vset.pattern.permute.xlu0 2
      %2964 = vperm.xlu0 %2963, %v2336
      %v2965 = vpop.permute.xlu0 %2964
      %2967 = vset.pattern.permute.xlu0 2
      %2968 = vperm.xlu0 %2967, %v2337
      %v2969 = vpop.permute.xlu0 %2968
      %v2971 = vmul.f32 %v2933, %v2911
      %v2972 = vmul.f32 %v2933, %v2912
      %v2973 = vmul.f32 %v2937, %v2913
      %v2974 = vmul.f32 %v2937, %v2914
      %v2975 = vmul.f32 %v2941, %v2915
      %v2976 = vmul.f32 %v2941, %v2916
      %v2977 = vmul.f32 %v2945, %v2917
      %v2978 = vmul.f32 %v2945, %v2918
      %v2979 = vmul.f32 %v2949, %v2919
      %v2980 = vmul.f32 %v2949, %v2920
      %v2981 = vmul.f32 %v2953, %v2921
      %v2982 = vmul.f32 %v2953, %v2922
      %v2983 = vmul.f32 %v2957, %v2923
      %v2984 = vmul.f32 %v2957, %v2924
      %v2985 = vmul.f32 %v2961, %v2925
      %v2986 = vmul.f32 %v2961, %v2926
      %v2987 = vmul.f32 %v2965, %v2927
      %v2988 = vmul.f32 %v2965, %v2928
      %v2989 = vmul.f32 %v2969, %v2929
      %v2990 = vmul.f32 %v2969, %v2930
      %v2991 = vadd.f32 %v2817, %v2971
      %v2992 = vadd.f32 %v2818, %v2972
      %v2993 = vadd.f32 %v2819, %v2973
      %v2994 = vadd.f32 %v2820, %v2974
      %v2995 = vadd.f32 %v2821, %v2975
      %v2996 = vadd.f32 %v2822, %v2976
      %v2997 = vadd.f32 %v2823, %v2977
      %v2998 = vadd.f32 %v2824, %v2978
      %v2999 = vadd.f32 %v2825, %v2979
      %v3000 = vadd.f32 %v2826, %v2980
      %v3001 = vadd.f32 %v2827, %v2981
      %v3002 = vadd.f32 %v2828, %v2982
      %v3003 = vadd.f32 %v2829, %v2983
      %v3004 = vadd.f32 %v2830, %v2984
      %v3005 = vadd.f32 %v2831, %v2985
      %v3006 = vadd.f32 %v2832, %v2986
      %v3007 = vadd.f32 %v2833, %v2987
      %v3008 = vadd.f32 %v2834, %v2988
      %v3009 = vadd.f32 %v2835, %v2989
      %v3010 = vadd.f32 %v2836, %v2990
      %3011 = vrot.lane.b32.xlu0 %v2280, 1
      %v3012 = vpop.permute.xlu0 %3011
      %3013 = vrot.lane.b32.xlu0 %v2284, 1
      %v3014 = vpop.permute.xlu0 %3013
      %3015 = vrot.lane.b32.xlu0 %v2290, 1
      %v3016 = vpop.permute.xlu0 %3015
      %3017 = vrot.lane.b32.xlu0 %v2294, 1
      %v3018 = vpop.permute.xlu0 %3017
      %3019 = vrot.lane.b32.xlu0 %v2300, 1
      %v3020 = vpop.permute.xlu0 %3019
      %3021 = vrot.lane.b32.xlu0 %v2304, 1
      %v3022 = vpop.permute.xlu0 %3021
      %3023 = vrot.lane.b32.xlu0 %v2310, 1
      %v3024 = vpop.permute.xlu0 %3023
      %3025 = vrot.lane.b32.xlu0 %v2314, 1
      %v3026 = vpop.permute.xlu0 %3025
      %3027 = vrot.lane.b32.xlu0 %v2320, 1
      %v3028 = vpop.permute.xlu0 %3027
      %3029 = vrot.lane.b32.xlu0 %v2324, 1
      %v3030 = vpop.permute.xlu0 %3029
      %3031 = vrot.lane.b32.xlu0 %v2282, 1
      %v3032 = vpop.permute.xlu0 %3031
      %3033 = vrot.lane.b32.xlu0 %v2286, 1
      %v3034 = vpop.permute.xlu0 %3033
      %3035 = vrot.lane.b32.xlu0 %v2292, 1
      %v3036 = vpop.permute.xlu0 %3035
      %3037 = vrot.lane.b32.xlu0 %v2296, 1
      %v3038 = vpop.permute.xlu0 %3037
      %3039 = vrot.lane.b32.xlu0 %v2302, 1
      %v3040 = vpop.permute.xlu0 %3039
      %3041 = vrot.lane.b32.xlu0 %v2306, 1
      %v3042 = vpop.permute.xlu0 %3041
      %3043 = vrot.lane.b32.xlu0 %v2312, 1
      %v3044 = vpop.permute.xlu0 %3043
      %3045 = vrot.lane.b32.xlu0 %v2316, 1
      %v3046 = vpop.permute.xlu0 %3045
      %3047 = vrot.lane.b32.xlu0 %v2322, 1
      %v3048 = vpop.permute.xlu0 %3047
      %3049 = vrot.lane.b32.xlu0 %v2326, 1
      %v3050 = vpop.permute.xlu0 %3049
      %vm3051 = vcmp.lt.s32.totalorder %v2529, 1
      %v3052 = vsel %vm3051, %v3012, %v3032
      %v3053 = vsel %vm3051, %v3014, %v3034
      %v3054 = vsel %vm3051, %v3016, %v3036
      %v3055 = vsel %vm3051, %v3018, %v3038
      %v3056 = vsel %vm3051, %v3020, %v3040
      %v3057 = vsel %vm3051, %v3022, %v3042
      %v3058 = vsel %vm3051, %v3024, %v3044
      %v3059 = vsel %vm3051, %v3026, %v3046
      %v3060 = vsel %vm3051, %v3028, %v3048
      %v3061 = vsel %vm3051, %v3030, %v3050
      %v3062 = vsel %vm3051, %v3032, %v3012
      %v3063 = vsel %vm3051, %v3034, %v3014
      %v3064 = vsel %vm3051, %v3036, %v3016
      %v3065 = vsel %vm3051, %v3038, %v3018
      %v3066 = vsel %vm3051, %v3040, %v3020
      %v3067 = vsel %vm3051, %v3042, %v3022
      %v3068 = vsel %vm3051, %v3044, %v3024
      %v3069 = vsel %vm3051, %v3046, %v3026
      %v3070 = vsel %vm3051, %v3048, %v3028
      %v3071 = vsel %vm3051, %v3050, %v3030
      %s3072 = scalar_lea.vmem %s7, 3
      %v3073 = vld [vmem:[%s3072] ss:$8 sm:$0x3]
      %v3075 = vlaneseq
      %v3076 = vshrl.u32 %v3075, 7
      %v3077 = vsub.s32 0, %v3076
      %v3078 = vrot.slane %v3073, %v3077
      %v3079 = vlaneseq
      %v3080 = vshrl.u32 %v3079, 7
      %v3081 = vsub.s32 1, %v3080
      %v3082 = vrot.slane %v3073, %v3081
      %v3085 = vmul.f32 %v3062, %v3078
      %v3086 = vmul.f32 %v3052, %v3082
      %v3087 = vmul.f32 %v3063, %v3078
      %v3088 = vmul.f32 %v3053, %v3082
      %v3089 = vmul.f32 %v3064, %v3078
      %v3090 = vmul.f32 %v3054, %v3082
      %v3091 = vmul.f32 %v3065, %v3078
      %v3092 = vmul.f32 %v3055, %v3082
      %v3093 = vmul.f32 %v3066, %v3078
      %v3094 = vmul.f32 %v3056, %v3082
      %v3095 = vmul.f32 %v3067, %v3078
      %v3096 = vmul.f32 %v3057, %v3082
      %v3097 = vmul.f32 %v3068, %v3078
      %v3098 = vmul.f32 %v3058, %v3082
      %v3099 = vmul.f32 %v3069, %v3078
      %v3100 = vmul.f32 %v3059, %v3082
      %v3101 = vmul.f32 %v3070, %v3078
      %v3102 = vmul.f32 %v3060, %v3082
      %v3103 = vmul.f32 %v3071, %v3078
      %v3104 = vmul.f32 %v3061, %v3082
      %3105 = vset.pattern.permute.xlu0 3
      %3106 = vperm.xlu0 %3105, %v2328
      %v3107 = vpop.permute.xlu0 %3106
      %3109 = vset.pattern.permute.xlu0 3
      %3110 = vperm.xlu0 %3109, %v2329
      %v3111 = vpop.permute.xlu0 %3110
      %3113 = vset.pattern.permute.xlu0 3
      %3114 = vperm.xlu0 %3113, %v2330
      %v3115 = vpop.permute.xlu0 %3114
      %3117 = vset.pattern.permute.xlu0 3
      %3118 = vperm.xlu0 %3117, %v2331
      %v3119 = vpop.permute.xlu0 %3118
      %3121 = vset.pattern.permute.xlu0 3
      %3122 = vperm.xlu0 %3121, %v2332
      %v3123 = vpop.permute.xlu0 %3122
      %3125 = vset.pattern.permute.xlu0 3
      %3126 = vperm.xlu0 %3125, %v2333
      %v3127 = vpop.permute.xlu0 %3126
      %3129 = vset.pattern.permute.xlu0 3
      %3130 = vperm.xlu0 %3129, %v2334
      %v3131 = vpop.permute.xlu0 %3130
      %3133 = vset.pattern.permute.xlu0 3
      %3134 = vperm.xlu0 %3133, %v2335
      %v3135 = vpop.permute.xlu0 %3134
      %3137 = vset.pattern.permute.xlu0 3
      %3138 = vperm.xlu0 %3137, %v2336
      %v3139 = vpop.permute.xlu0 %3138
      %3141 = vset.pattern.permute.xlu0 3
      %3142 = vperm.xlu0 %3141, %v2337
      %v3143 = vpop.permute.xlu0 %3142
      %v3145 = vmul.f32 %v3107, %v3085
      %v3146 = vmul.f32 %v3107, %v3086
      %v3147 = vmul.f32 %v3111, %v3087
      %v3148 = vmul.f32 %v3111, %v3088
      %v3149 = vmul.f32 %v3115, %v3089
      %v3150 = vmul.f32 %v3115, %v3090
      %v3151 = vmul.f32 %v3119, %v3091
      %v3152 = vmul.f32 %v3119, %v3092
      %v3153 = vmul.f32 %v3123, %v3093
      %v3154 = vmul.f32 %v3123, %v3094
      %v3155 = vmul.f32 %v3127, %v3095
      %v3156 = vmul.f32 %v3127, %v3096
      %v3157 = vmul.f32 %v3131, %v3097
      %v3158 = vmul.f32 %v3131, %v3098
      %v3159 = vmul.f32 %v3135, %v3099
      %v3160 = vmul.f32 %v3135, %v3100
      %v3161 = vmul.f32 %v3139, %v3101
      %v3162 = vmul.f32 %v3139, %v3102
      %v3163 = vmul.f32 %v3143, %v3103
      %v3164 = vmul.f32 %v3143, %v3104
      %v3165 = vadd.f32 %v2991, %v3145
      %v3166 = vadd.f32 %v2992, %v3146
      %v3167 = vadd.f32 %v2993, %v3147
      %v3168 = vadd.f32 %v2994, %v3148
      %v3169 = vadd.f32 %v2995, %v3149
      %v3170 = vadd.f32 %v2996, %v3150
      %v3171 = vadd.f32 %v2997, %v3151
      %v3172 = vadd.f32 %v2998, %v3152
      %v3173 = vadd.f32 %v2999, %v3153
      %v3174 = vadd.f32 %v3000, %v3154
      %v3175 = vadd.f32 %v3001, %v3155
      %v3176 = vadd.f32 %v3002, %v3156
      %v3177 = vadd.f32 %v3003, %v3157
      %v3178 = vadd.f32 %v3004, %v3158
      %v3179 = vadd.f32 %v3005, %v3159
      %v3180 = vadd.f32 %v3006, %v3160
      %v3181 = vadd.f32 %v3007, %v3161
      %v3182 = vadd.f32 %v3008, %v3162
      %v3183 = vadd.f32 %v3009, %v3163
      %v3184 = vadd.f32 %v3010, %v3164
      %3185 = vrot.lane.b32.xlu0 %v2280, 127
      %v3186 = vpop.permute.xlu0 %3185
      %3187 = vrot.lane.b32.xlu0 %v2284, 127
      %v3188 = vpop.permute.xlu0 %3187
      %3189 = vrot.lane.b32.xlu0 %v2290, 127
      %v3190 = vpop.permute.xlu0 %3189
      %3191 = vrot.lane.b32.xlu0 %v2294, 127
      %v3192 = vpop.permute.xlu0 %3191
      %3193 = vrot.lane.b32.xlu0 %v2300, 127
      %v3194 = vpop.permute.xlu0 %3193
      %3195 = vrot.lane.b32.xlu0 %v2304, 127
      %v3196 = vpop.permute.xlu0 %3195
      %3197 = vrot.lane.b32.xlu0 %v2310, 127
      %v3198 = vpop.permute.xlu0 %3197
      %3199 = vrot.lane.b32.xlu0 %v2314, 127
      %v3200 = vpop.permute.xlu0 %3199
      %3201 = vrot.lane.b32.xlu0 %v2320, 127
      %v3202 = vpop.permute.xlu0 %3201
      %3203 = vrot.lane.b32.xlu0 %v2324, 127
      %v3204 = vpop.permute.xlu0 %3203
      %3205 = vrot.lane.b32.xlu0 %v2282, 127
      %v3206 = vpop.permute.xlu0 %3205
      %3207 = vrot.lane.b32.xlu0 %v2286, 127
      %v3208 = vpop.permute.xlu0 %3207
      %3209 = vrot.lane.b32.xlu0 %v2292, 127
      %v3210 = vpop.permute.xlu0 %3209
      %3211 = vrot.lane.b32.xlu0 %v2296, 127
      %v3212 = vpop.permute.xlu0 %3211
      %3213 = vrot.lane.b32.xlu0 %v2302, 127
      %v3214 = vpop.permute.xlu0 %3213
      %3215 = vrot.lane.b32.xlu0 %v2306, 127
      %v3216 = vpop.permute.xlu0 %3215
      %3217 = vrot.lane.b32.xlu0 %v2312, 127
      %v3218 = vpop.permute.xlu0 %3217
      %3219 = vrot.lane.b32.xlu0 %v2316, 127
      %v3220 = vpop.permute.xlu0 %3219
      %3221 = vrot.lane.b32.xlu0 %v2322, 127
      %v3222 = vpop.permute.xlu0 %3221
      %3223 = vrot.lane.b32.xlu0 %v2326, 127
      %v3224 = vpop.permute.xlu0 %3223
      %vm3225 = vcmp.lt.s32.totalorder %v2529, 127
      %v3226 = vsel %vm3225, %v3186, %v3206
      %v3227 = vsel %vm3225, %v3188, %v3208
      %v3228 = vsel %vm3225, %v3190, %v3210
      %v3229 = vsel %vm3225, %v3192, %v3212
      %v3230 = vsel %vm3225, %v3194, %v3214
      %v3231 = vsel %vm3225, %v3196, %v3216
      %v3232 = vsel %vm3225, %v3198, %v3218
      %v3233 = vsel %vm3225, %v3200, %v3220
      %v3234 = vsel %vm3225, %v3202, %v3222
      %v3235 = vsel %vm3225, %v3204, %v3224
      %v3236 = vsel %vm3225, %v3206, %v3186
      %v3237 = vsel %vm3225, %v3208, %v3188
      %v3238 = vsel %vm3225, %v3210, %v3190
      %v3239 = vsel %vm3225, %v3212, %v3192
      %v3240 = vsel %vm3225, %v3214, %v3194
      %v3241 = vsel %vm3225, %v3216, %v3196
      %v3242 = vsel %vm3225, %v3218, %v3198
      %v3243 = vsel %vm3225, %v3220, %v3200
      %v3244 = vsel %vm3225, %v3222, %v3202
      %v3245 = vsel %vm3225, %v3224, %v3204
      %s3246 = scalar_lea.vmem %s7, 5
      %v3247 = vld [vmem:[%s3246] ss:$8 sm:$0x3]
      %v3249 = vlaneseq
      %v3250 = vshrl.u32 %v3249, 7
      %v3251 = vsub.s32 0, %v3250
      %v3252 = vrot.slane %v3247, %v3251
      %v3253 = vlaneseq
      %v3254 = vshrl.u32 %v3253, 7
      %v3255 = vsub.s32 1, %v3254
      %v3256 = vrot.slane %v3247, %v3255
      %v3259 = vmul.f32 %v3226, %v3252
      %v3260 = vmul.f32 %v3236, %v3256
      %v3261 = vmul.f32 %v3227, %v3252
      %v3262 = vmul.f32 %v3237, %v3256
      %v3263 = vmul.f32 %v3228, %v3252
      %v3264 = vmul.f32 %v3238, %v3256
      %v3265 = vmul.f32 %v3229, %v3252
      %v3266 = vmul.f32 %v3239, %v3256
      %v3267 = vmul.f32 %v3230, %v3252
      %v3268 = vmul.f32 %v3240, %v3256
      %v3269 = vmul.f32 %v3231, %v3252
      %v3270 = vmul.f32 %v3241, %v3256
      %v3271 = vmul.f32 %v3232, %v3252
      %v3272 = vmul.f32 %v3242, %v3256
      %v3273 = vmul.f32 %v3233, %v3252
      %v3274 = vmul.f32 %v3243, %v3256
      %v3275 = vmul.f32 %v3234, %v3252
      %v3276 = vmul.f32 %v3244, %v3256
      %v3277 = vmul.f32 %v3235, %v3252
      %v3278 = vmul.f32 %v3245, %v3256
      %3279 = vset.pattern.permute.xlu0 5
      %3280 = vperm.xlu0 %3279, %v2328
      %v3281 = vpop.permute.xlu0 %3280
      %3283 = vset.pattern.permute.xlu0 5
      %3284 = vperm.xlu0 %3283, %v2329
      %v3285 = vpop.permute.xlu0 %3284
      %3287 = vset.pattern.permute.xlu0 5
      %3288 = vperm.xlu0 %3287, %v2330
      %v3289 = vpop.permute.xlu0 %3288
      %3291 = vset.pattern.permute.xlu0 5
      %3292 = vperm.xlu0 %3291, %v2331
      %v3293 = vpop.permute.xlu0 %3292
      %3295 = vset.pattern.permute.xlu0 5
      %3296 = vperm.xlu0 %3295, %v2332
      %v3297 = vpop.permute.xlu0 %3296
      %3299 = vset.pattern.permute.xlu0 5
      %3300 = vperm.xlu0 %3299, %v2333
      %v3301 = vpop.permute.xlu0 %3300
      %3303 = vset.pattern.permute.xlu0 5
      %3304 = vperm.xlu0 %3303, %v2334
      %v3305 = vpop.permute.xlu0 %3304
      %3307 = vset.pattern.permute.xlu0 5
      %3308 = vperm.xlu0 %3307, %v2335
      %v3309 = vpop.permute.xlu0 %3308
      %3311 = vset.pattern.permute.xlu0 5
      %3312 = vperm.xlu0 %3311, %v2336
      %v3313 = vpop.permute.xlu0 %3312
      %3315 = vset.pattern.permute.xlu0 5
      %3316 = vperm.xlu0 %3315, %v2337
      %v3317 = vpop.permute.xlu0 %3316
      %v3319 = vmul.f32 %v3281, %v3259
      %v3320 = vmul.f32 %v3281, %v3260
      %v3321 = vmul.f32 %v3285, %v3261
      %v3322 = vmul.f32 %v3285, %v3262
      %v3323 = vmul.f32 %v3289, %v3263
      %v3324 = vmul.f32 %v3289, %v3264
      %v3325 = vmul.f32 %v3293, %v3265
      %v3326 = vmul.f32 %v3293, %v3266
      %v3327 = vmul.f32 %v3297, %v3267
      %v3328 = vmul.f32 %v3297, %v3268
      %v3329 = vmul.f32 %v3301, %v3269
      %v3330 = vmul.f32 %v3301, %v3270
      %v3331 = vmul.f32 %v3305, %v3271
      %v3332 = vmul.f32 %v3305, %v3272
      %v3333 = vmul.f32 %v3309, %v3273
      %v3334 = vmul.f32 %v3309, %v3274
      %v3335 = vmul.f32 %v3313, %v3275
      %v3336 = vmul.f32 %v3313, %v3276
      %v3337 = vmul.f32 %v3317, %v3277
      %v3338 = vmul.f32 %v3317, %v3278
      %v3339 = vadd.f32 %v3165, %v3319
      %v3340 = vadd.f32 %v3166, %v3320
      %v3341 = vadd.f32 %v3167, %v3321
      %v3342 = vadd.f32 %v3168, %v3322
      %v3343 = vadd.f32 %v3169, %v3323
      %v3344 = vadd.f32 %v3170, %v3324
      %v3345 = vadd.f32 %v3171, %v3325
      %v3346 = vadd.f32 %v3172, %v3326
      %v3347 = vadd.f32 %v3173, %v3327
      %v3348 = vadd.f32 %v3174, %v3328
      %v3349 = vadd.f32 %v3175, %v3329
      %v3350 = vadd.f32 %v3176, %v3330
      %v3351 = vadd.f32 %v3177, %v3331
      %v3352 = vadd.f32 %v3178, %v3332
      %v3353 = vadd.f32 %v3179, %v3333
      %v3354 = vadd.f32 %v3180, %v3334
      %v3355 = vadd.f32 %v3181, %v3335
      %v3356 = vadd.f32 %v3182, %v3336
      %v3357 = vadd.f32 %v3183, %v3337
      %v3358 = vadd.f32 %v3184, %v3338
      %3359 = vrot.lane.b32.xlu0 %v2280, 113
      %v3360 = vpop.permute.xlu0 %3359
      %3361 = vrot.lane.b32.xlu0 %v2284, 113
      %v3362 = vpop.permute.xlu0 %3361
      %3363 = vrot.lane.b32.xlu0 %v2290, 113
      %v3364 = vpop.permute.xlu0 %3363
      %3365 = vrot.lane.b32.xlu0 %v2294, 113
      %v3366 = vpop.permute.xlu0 %3365
      %3367 = vrot.lane.b32.xlu0 %v2300, 113
      %v3368 = vpop.permute.xlu0 %3367
      %3369 = vrot.lane.b32.xlu0 %v2304, 113
      %v3370 = vpop.permute.xlu0 %3369
      %3371 = vrot.lane.b32.xlu0 %v2310, 113
      %v3372 = vpop.permute.xlu0 %3371
      %3373 = vrot.lane.b32.xlu0 %v2314, 113
      %v3374 = vpop.permute.xlu0 %3373
      %3375 = vrot.lane.b32.xlu0 %v2320, 113
      %v3376 = vpop.permute.xlu0 %3375
      %3377 = vrot.lane.b32.xlu0 %v2324, 113
      %v3378 = vpop.permute.xlu0 %3377
      %3379 = vrot.lane.b32.xlu0 %v2282, 113
      %v3380 = vpop.permute.xlu0 %3379
      %3381 = vrot.lane.b32.xlu0 %v2286, 113
      %v3382 = vpop.permute.xlu0 %3381
      %3383 = vrot.lane.b32.xlu0 %v2292, 113
      %v3384 = vpop.permute.xlu0 %3383
      %3385 = vrot.lane.b32.xlu0 %v2296, 113
      %v3386 = vpop.permute.xlu0 %3385
      %3387 = vrot.lane.b32.xlu0 %v2302, 113
      %v3388 = vpop.permute.xlu0 %3387
      %3389 = vrot.lane.b32.xlu0 %v2306, 113
      %v3390 = vpop.permute.xlu0 %3389
      %3391 = vrot.lane.b32.xlu0 %v2312, 113
      %v3392 = vpop.permute.xlu0 %3391
      %3393 = vrot.lane.b32.xlu0 %v2316, 113
      %v3394 = vpop.permute.xlu0 %3393
      %3395 = vrot.lane.b32.xlu0 %v2322, 113
      %v3396 = vpop.permute.xlu0 %3395
      %3397 = vrot.lane.b32.xlu0 %v2326, 113
      %v3398 = vpop.permute.xlu0 %3397
      %vm3399 = vcmp.lt.s32.totalorder %v2529, 113
      %v3400 = vsel %vm3399, %v3360, %v3380
      %v3401 = vsel %vm3399, %v3362, %v3382
      %v3402 = vsel %vm3399, %v3364, %v3384
      %v3403 = vsel %vm3399, %v3366, %v3386
      %v3404 = vsel %vm3399, %v3368, %v3388
      %v3405 = vsel %vm3399, %v3370, %v3390
      %v3406 = vsel %vm3399, %v3372, %v3392
      %v3407 = vsel %vm3399, %v3374, %v3394
      %v3408 = vsel %vm3399, %v3376, %v3396
      %v3409 = vsel %vm3399, %v3378, %v3398
      %v3410 = vsel %vm3399, %v3380, %v3360
      %v3411 = vsel %vm3399, %v3382, %v3362
      %v3412 = vsel %vm3399, %v3384, %v3364
      %v3413 = vsel %vm3399, %v3386, %v3366
      %v3414 = vsel %vm3399, %v3388, %v3368
      %v3415 = vsel %vm3399, %v3390, %v3370
      %v3416 = vsel %vm3399, %v3392, %v3372
      %v3417 = vsel %vm3399, %v3394, %v3374
      %v3418 = vsel %vm3399, %v3396, %v3376
      %v3419 = vsel %vm3399, %v3398, %v3378
      %s3420 = scalar_lea.vmem %s7, 6
      %v3421 = vld [vmem:[%s3420] ss:$8 sm:$0x3]
      %v3423 = vlaneseq
      %v3424 = vshrl.u32 %v3423, 7
      %v3425 = vsub.s32 0, %v3424
      %v3426 = vrot.slane %v3421, %v3425
      %v3427 = vlaneseq
      %v3428 = vshrl.u32 %v3427, 7
      %v3429 = vsub.s32 1, %v3428
      %v3430 = vrot.slane %v3421, %v3429
      %v3433 = vmul.f32 %v3400, %v3426
      %v3434 = vmul.f32 %v3410, %v3430
      %v3435 = vmul.f32 %v3401, %v3426
      %v3436 = vmul.f32 %v3411, %v3430
      %v3437 = vmul.f32 %v3402, %v3426
      %v3438 = vmul.f32 %v3412, %v3430
      %v3439 = vmul.f32 %v3403, %v3426
      %v3440 = vmul.f32 %v3413, %v3430
      %v3441 = vmul.f32 %v3404, %v3426
      %v3442 = vmul.f32 %v3414, %v3430
      %v3443 = vmul.f32 %v3405, %v3426
      %v3444 = vmul.f32 %v3415, %v3430
      %v3445 = vmul.f32 %v3406, %v3426
      %v3446 = vmul.f32 %v3416, %v3430
      %v3447 = vmul.f32 %v3407, %v3426
      %v3448 = vmul.f32 %v3417, %v3430
      %v3449 = vmul.f32 %v3408, %v3426
      %v3450 = vmul.f32 %v3418, %v3430
      %v3451 = vmul.f32 %v3409, %v3426
      %v3452 = vmul.f32 %v3419, %v3430
      %3453 = vset.pattern.permute.xlu0 6
      %3454 = vperm.xlu0 %3453, %v2328
      %v3455 = vpop.permute.xlu0 %3454
      %3457 = vset.pattern.permute.xlu0 6
      %3458 = vperm.xlu0 %3457, %v2329
      %v3459 = vpop.permute.xlu0 %3458
      %3461 = vset.pattern.permute.xlu0 6
      %3462 = vperm.xlu0 %3461, %v2330
      %v3463 = vpop.permute.xlu0 %3462
      %3465 = vset.pattern.permute.xlu0 6
      %3466 = vperm.xlu0 %3465, %v2331
      %v3467 = vpop.permute.xlu0 %3466
      %3469 = vset.pattern.permute.xlu0 6
      %3470 = vperm.xlu0 %3469, %v2332
      %v3471 = vpop.permute.xlu0 %3470
      %3473 = vset.pattern.permute.xlu0 6
      %3474 = vperm.xlu0 %3473, %v2333
      %v3475 = vpop.permute.xlu0 %3474
      %3477 = vset.pattern.permute.xlu0 6
      %3478 = vperm.xlu0 %3477, %v2334
      %v3479 = vpop.permute.xlu0 %3478
      %3481 = vset.pattern.permute.xlu0 6
      %3482 = vperm.xlu0 %3481, %v2335
      %v3483 = vpop.permute.xlu0 %3482
      %3485 = vset.pattern.permute.xlu0 6
      %3486 = vperm.xlu0 %3485, %v2336
      %v3487 = vpop.permute.xlu0 %3486
      %3489 = vset.pattern.permute.xlu0 6
      %3490 = vperm.xlu0 %3489, %v2337
      %v3491 = vpop.permute.xlu0 %3490
      %v3493 = vmul.f32 %v3455, %v3433
      %v3494 = vmul.f32 %v3455, %v3434
      %v3495 = vmul.f32 %v3459, %v3435
      %v3496 = vmul.f32 %v3459, %v3436
      %v3497 = vmul.f32 %v3463, %v3437
      %v3498 = vmul.f32 %v3463, %v3438
      %v3499 = vmul.f32 %v3467, %v3439
      %v3500 = vmul.f32 %v3467, %v3440
      %v3501 = vmul.f32 %v3471, %v3441
      %v3502 = vmul.f32 %v3471, %v3442
      %v3503 = vmul.f32 %v3475, %v3443
      %v3504 = vmul.f32 %v3475, %v3444
      %v3505 = vmul.f32 %v3479, %v3445
      %v3506 = vmul.f32 %v3479, %v3446
      %v3507 = vmul.f32 %v3483, %v3447
      %v3508 = vmul.f32 %v3483, %v3448
      %v3509 = vmul.f32 %v3487, %v3449
      %v3510 = vmul.f32 %v3487, %v3450
      %v3511 = vmul.f32 %v3491, %v3451
      %v3512 = vmul.f32 %v3491, %v3452
      %v3513 = vadd.f32 %v3339, %v3493
      %v3514 = vadd.f32 %v3340, %v3494
      %v3515 = vadd.f32 %v3341, %v3495
      %v3516 = vadd.f32 %v3342, %v3496
      %v3517 = vadd.f32 %v3343, %v3497
      %v3518 = vadd.f32 %v3344, %v3498
      %v3519 = vadd.f32 %v3345, %v3499
      %v3520 = vadd.f32 %v3346, %v3500
      %v3521 = vadd.f32 %v3347, %v3501
      %v3522 = vadd.f32 %v3348, %v3502
      %v3523 = vadd.f32 %v3349, %v3503
      %v3524 = vadd.f32 %v3350, %v3504
      %v3525 = vadd.f32 %v3351, %v3505
      %v3526 = vadd.f32 %v3352, %v3506
      %v3527 = vadd.f32 %v3353, %v3507
      %v3528 = vadd.f32 %v3354, %v3508
      %v3529 = vadd.f32 %v3355, %v3509
      %v3530 = vadd.f32 %v3356, %v3510
      %v3531 = vadd.f32 %v3357, %v3511
      %v3532 = vadd.f32 %v3358, %v3512
      %3533 = vrot.lane.b32.xlu0 %v2280, 112
      %v3534 = vpop.permute.xlu0 %3533
      %3535 = vrot.lane.b32.xlu0 %v2284, 112
      %v3536 = vpop.permute.xlu0 %3535
      %3537 = vrot.lane.b32.xlu0 %v2290, 112
      %v3538 = vpop.permute.xlu0 %3537
      %3539 = vrot.lane.b32.xlu0 %v2294, 112
      %v3540 = vpop.permute.xlu0 %3539
      %3541 = vrot.lane.b32.xlu0 %v2300, 112
      %v3542 = vpop.permute.xlu0 %3541
      %3543 = vrot.lane.b32.xlu0 %v2304, 112
      %v3544 = vpop.permute.xlu0 %3543
      %3545 = vrot.lane.b32.xlu0 %v2310, 112
      %v3546 = vpop.permute.xlu0 %3545
      %3547 = vrot.lane.b32.xlu0 %v2314, 112
      %v3548 = vpop.permute.xlu0 %3547
      %3549 = vrot.lane.b32.xlu0 %v2320, 112
      %v3550 = vpop.permute.xlu0 %3549
      %3551 = vrot.lane.b32.xlu0 %v2324, 112
      %v3552 = vpop.permute.xlu0 %3551
      %3553 = vrot.lane.b32.xlu0 %v2282, 112
      %v3554 = vpop.permute.xlu0 %3553
      %3555 = vrot.lane.b32.xlu0 %v2286, 112
      %v3556 = vpop.permute.xlu0 %3555
      %3557 = vrot.lane.b32.xlu0 %v2292, 112
      %v3558 = vpop.permute.xlu0 %3557
      %3559 = vrot.lane.b32.xlu0 %v2296, 112
      %v3560 = vpop.permute.xlu0 %3559
      %3561 = vrot.lane.b32.xlu0 %v2302, 112
      %v3562 = vpop.permute.xlu0 %3561
      %3563 = vrot.lane.b32.xlu0 %v2306, 112
      %v3564 = vpop.permute.xlu0 %3563
      %3565 = vrot.lane.b32.xlu0 %v2312, 112
      %v3566 = vpop.permute.xlu0 %3565
      %3567 = vrot.lane.b32.xlu0 %v2316, 112
      %v3568 = vpop.permute.xlu0 %3567
      %3569 = vrot.lane.b32.xlu0 %v2322, 112
      %v3570 = vpop.permute.xlu0 %3569
      %3571 = vrot.lane.b32.xlu0 %v2326, 112
      %v3572 = vpop.permute.xlu0 %3571
      %vm3573 = vcmp.lt.s32.totalorder %v2529, 112
      %v3574 = vsel %vm3573, %v3534, %v3554
      %v3575 = vsel %vm3573, %v3536, %v3556
      %v3576 = vsel %vm3573, %v3538, %v3558
      %v3577 = vsel %vm3573, %v3540, %v3560
      %v3578 = vsel %vm3573, %v3542, %v3562
      %v3579 = vsel %vm3573, %v3544, %v3564
      %v3580 = vsel %vm3573, %v3546, %v3566
      %v3581 = vsel %vm3573, %v3548, %v3568
      %v3582 = vsel %vm3573, %v3550, %v3570
      %v3583 = vsel %vm3573, %v3552, %v3572
      %v3584 = vsel %vm3573, %v3554, %v3534
      %v3585 = vsel %vm3573, %v3556, %v3536
      %v3586 = vsel %vm3573, %v3558, %v3538
      %v3587 = vsel %vm3573, %v3560, %v3540
      %v3588 = vsel %vm3573, %v3562, %v3542
      %v3589 = vsel %vm3573, %v3564, %v3544
      %v3590 = vsel %vm3573, %v3566, %v3546
      %v3591 = vsel %vm3573, %v3568, %v3548
      %v3592 = vsel %vm3573, %v3570, %v3550
      %v3593 = vsel %vm3573, %v3572, %v3552
      %s3594 = scalar_lea.vmem %s7, 7
      %v3595 = vld [vmem:[%s3594] ss:$8 sm:$0x3]
      %v3597 = vlaneseq
      %v3598 = vshrl.u32 %v3597, 7
      %v3599 = vsub.s32 0, %v3598
      %v3600 = vrot.slane %v3595, %v3599
      %v3601 = vlaneseq
      %v3602 = vshrl.u32 %v3601, 7
      %v3603 = vsub.s32 1, %v3602
      %v3604 = vrot.slane %v3595, %v3603
      %v3607 = vmul.f32 %v3574, %v3600
      %v3608 = vmul.f32 %v3584, %v3604
      %v3609 = vmul.f32 %v3575, %v3600
      %v3610 = vmul.f32 %v3585, %v3604
      %v3611 = vmul.f32 %v3576, %v3600
      %v3612 = vmul.f32 %v3586, %v3604
      %v3613 = vmul.f32 %v3577, %v3600
      %v3614 = vmul.f32 %v3587, %v3604
      %v3615 = vmul.f32 %v3578, %v3600
      %v3616 = vmul.f32 %v3588, %v3604
      %v3617 = vmul.f32 %v3579, %v3600
      %v3618 = vmul.f32 %v3589, %v3604
      %v3619 = vmul.f32 %v3580, %v3600
      %v3620 = vmul.f32 %v3590, %v3604
      %v3621 = vmul.f32 %v3581, %v3600
      %v3622 = vmul.f32 %v3591, %v3604
      %v3623 = vmul.f32 %v3582, %v3600
      %v3624 = vmul.f32 %v3592, %v3604
      %v3625 = vmul.f32 %v3583, %v3600
      %v3626 = vmul.f32 %v3593, %v3604
      %3627 = vset.pattern.permute.xlu0 7
      %3628 = vperm.xlu0 %3627, %v2328
      %v3629 = vpop.permute.xlu0 %3628
      %3631 = vset.pattern.permute.xlu0 7
      %3632 = vperm.xlu0 %3631, %v2329
      %v3633 = vpop.permute.xlu0 %3632
      %3635 = vset.pattern.permute.xlu0 7
      %3636 = vperm.xlu0 %3635, %v2330
      %v3637 = vpop.permute.xlu0 %3636
      %3639 = vset.pattern.permute.xlu0 7
      %3640 = vperm.xlu0 %3639, %v2331
      %v3641 = vpop.permute.xlu0 %3640
      %3643 = vset.pattern.permute.xlu0 7
      %3644 = vperm.xlu0 %3643, %v2332
      %v3645 = vpop.permute.xlu0 %3644
      %3647 = vset.pattern.permute.xlu0 7
      %3648 = vperm.xlu0 %3647, %v2333
      %v3649 = vpop.permute.xlu0 %3648
      %3651 = vset.pattern.permute.xlu0 7
      %3652 = vperm.xlu0 %3651, %v2334
      %v3653 = vpop.permute.xlu0 %3652
      %3655 = vset.pattern.permute.xlu0 7
      %3656 = vperm.xlu0 %3655, %v2335
      %v3657 = vpop.permute.xlu0 %3656
      %3659 = vset.pattern.permute.xlu0 7
      %3660 = vperm.xlu0 %3659, %v2336
      %v3661 = vpop.permute.xlu0 %3660
      %3663 = vset.pattern.permute.xlu0 7
      %3664 = vperm.xlu0 %3663, %v2337
      %v3665 = vpop.permute.xlu0 %3664
      %v3667 = vmul.f32 %v3629, %v3607
      %v3668 = vmul.f32 %v3629, %v3608
      %v3669 = vmul.f32 %v3633, %v3609
      %v3670 = vmul.f32 %v3633, %v3610
      %v3671 = vmul.f32 %v3637, %v3611
      %v3672 = vmul.f32 %v3637, %v3612
      %v3673 = vmul.f32 %v3641, %v3613
      %v3674 = vmul.f32 %v3641, %v3614
      %v3675 = vmul.f32 %v3645, %v3615
      %v3676 = vmul.f32 %v3645, %v3616
      %v3677 = vmul.f32 %v3649, %v3617
      %v3678 = vmul.f32 %v3649, %v3618
      %v3679 = vmul.f32 %v3653, %v3619
      %v3680 = vmul.f32 %v3653, %v3620
      %v3681 = vmul.f32 %v3657, %v3621
      %v3682 = vmul.f32 %v3657, %v3622
      %v3683 = vmul.f32 %v3661, %v3623
      %v3684 = vmul.f32 %v3661, %v3624
      %v3685 = vmul.f32 %v3665, %v3625
      %v3686 = vmul.f32 %v3665, %v3626
      %v3687 = vadd.f32 %v3513, %v3667
      %v3688 = vadd.f32 %v3514, %v3668
      %v3689 = vadd.f32 %v3515, %v3669
      %v3690 = vadd.f32 %v3516, %v3670
      %v3691 = vadd.f32 %v3517, %v3671
      %v3692 = vadd.f32 %v3518, %v3672
      %v3693 = vadd.f32 %v3519, %v3673
      %v3694 = vadd.f32 %v3520, %v3674
      %v3695 = vadd.f32 %v3521, %v3675
      %v3696 = vadd.f32 %v3522, %v3676
      %v3697 = vadd.f32 %v3523, %v3677
      %v3698 = vadd.f32 %v3524, %v3678
      %v3699 = vadd.f32 %v3525, %v3679
      %v3700 = vadd.f32 %v3526, %v3680
      %v3701 = vadd.f32 %v3527, %v3681
      %v3702 = vadd.f32 %v3528, %v3682
      %v3703 = vadd.f32 %v3529, %v3683
      %v3704 = vadd.f32 %v3530, %v3684
      %v3705 = vadd.f32 %v3531, %v3685
      %v3706 = vadd.f32 %v3532, %v3686
      %3707 = vrot.lane.b32.xlu0 %v2280, 111
      %v3708 = vpop.permute.xlu0 %3707
      %3709 = vrot.lane.b32.xlu0 %v2284, 111
      %v3710 = vpop.permute.xlu0 %3709
      %3711 = vrot.lane.b32.xlu0 %v2290, 111
      %v3712 = vpop.permute.xlu0 %3711
      %3713 = vrot.lane.b32.xlu0 %v2294, 111
      %v3714 = vpop.permute.xlu0 %3713
      %3715 = vrot.lane.b32.xlu0 %v2300, 111
      %v3716 = vpop.permute.xlu0 %3715
      %3717 = vrot.lane.b32.xlu0 %v2304, 111
      %v3718 = vpop.permute.xlu0 %3717
      %3719 = vrot.lane.b32.xlu0 %v2310, 111
      %v3720 = vpop.permute.xlu0 %3719
      %3721 = vrot.lane.b32.xlu0 %v2314, 111
      %v3722 = vpop.permute.xlu0 %3721
      %3723 = vrot.lane.b32.xlu0 %v2320, 111
      %v3724 = vpop.permute.xlu0 %3723
      %3725 = vrot.lane.b32.xlu0 %v2324, 111
      %v3726 = vpop.permute.xlu0 %3725
      %3727 = vrot.lane.b32.xlu0 %v2282, 111
      %v3728 = vpop.permute.xlu0 %3727
      %3729 = vrot.lane.b32.xlu0 %v2286, 111
      %v3730 = vpop.permute.xlu0 %3729
      %3731 = vrot.lane.b32.xlu0 %v2292, 111
      %v3732 = vpop.permute.xlu0 %3731
      %3733 = vrot.lane.b32.xlu0 %v2296, 111
      %v3734 = vpop.permute.xlu0 %3733
      %3735 = vrot.lane.b32.xlu0 %v2302, 111
      %v3736 = vpop.permute.xlu0 %3735
      %3737 = vrot.lane.b32.xlu0 %v2306, 111
      %v3738 = vpop.permute.xlu0 %3737
      %3739 = vrot.lane.b32.xlu0 %v2312, 111
      %v3740 = vpop.permute.xlu0 %3739
      %3741 = vrot.lane.b32.xlu0 %v2316, 111
      %v3742 = vpop.permute.xlu0 %3741
      %3743 = vrot.lane.b32.xlu0 %v2322, 111
      %v3744 = vpop.permute.xlu0 %3743
      %3745 = vrot.lane.b32.xlu0 %v2326, 111
      %v3746 = vpop.permute.xlu0 %3745
      %vm3747 = vcmp.lt.s32.totalorder %v2529, 111
      %v3748 = vsel %vm3747, %v3708, %v3728
      %v3749 = vsel %vm3747, %v3710, %v3730
      %v3750 = vsel %vm3747, %v3712, %v3732
      %v3751 = vsel %vm3747, %v3714, %v3734
      %v3752 = vsel %vm3747, %v3716, %v3736
      %v3753 = vsel %vm3747, %v3718, %v3738
      %v3754 = vsel %vm3747, %v3720, %v3740
      %v3755 = vsel %vm3747, %v3722, %v3742
      %v3756 = vsel %vm3747, %v3724, %v3744
      %v3757 = vsel %vm3747, %v3726, %v3746
      %v3758 = vsel %vm3747, %v3728, %v3708
      %v3759 = vsel %vm3747, %v3730, %v3710
      %v3760 = vsel %vm3747, %v3732, %v3712
      %v3761 = vsel %vm3747, %v3734, %v3714
      %v3762 = vsel %vm3747, %v3736, %v3716
      %v3763 = vsel %vm3747, %v3738, %v3718
      %v3764 = vsel %vm3747, %v3740, %v3720
      %v3765 = vsel %vm3747, %v3742, %v3722
      %v3766 = vsel %vm3747, %v3744, %v3724
      %v3767 = vsel %vm3747, %v3746, %v3726
      %s3768 = scalar_lea.vmem %s7, 16
      %v3769 = vld [vmem:[%s3768] ss:$8 sm:$0x3]
      %v3771 = vlaneseq
      %v3772 = vshrl.u32 %v3771, 7
      %v3773 = vsub.s32 0, %v3772
      %v3774 = vrot.slane %v3769, %v3773
      %v3775 = vlaneseq
      %v3776 = vshrl.u32 %v3775, 7
      %v3777 = vsub.s32 1, %v3776
      %v3778 = vrot.slane %v3769, %v3777
      %v3781 = vmul.f32 %v3748, %v3774
      %v3782 = vmul.f32 %v3758, %v3778
      %v3783 = vmul.f32 %v3749, %v3774
      %v3784 = vmul.f32 %v3759, %v3778
      %v3785 = vmul.f32 %v3750, %v3774
      %v3786 = vmul.f32 %v3760, %v3778
      %v3787 = vmul.f32 %v3751, %v3774
      %v3788 = vmul.f32 %v3761, %v3778
      %v3789 = vmul.f32 %v3752, %v3774
      %v3790 = vmul.f32 %v3762, %v3778
      %v3791 = vmul.f32 %v3753, %v3774
      %v3792 = vmul.f32 %v3763, %v3778
      %v3793 = vmul.f32 %v3754, %v3774
      %v3794 = vmul.f32 %v3764, %v3778
      %v3795 = vmul.f32 %v3755, %v3774
      %v3796 = vmul.f32 %v3765, %v3778
      %v3797 = vmul.f32 %v3756, %v3774
      %v3798 = vmul.f32 %v3766, %v3778
      %v3799 = vmul.f32 %v3757, %v3774
      %v3800 = vmul.f32 %v3767, %v3778
      %3801 = vset.pattern.permute.xlu0 8
      %3802 = vperm.xlu0 %3801, %v2328
      %v3803 = vpop.permute.xlu0 %3802
      %3805 = vset.pattern.permute.xlu0 8
      %3806 = vperm.xlu0 %3805, %v2329
      %v3807 = vpop.permute.xlu0 %3806
      %3809 = vset.pattern.permute.xlu0 8
      %3810 = vperm.xlu0 %3809, %v2330
      %v3811 = vpop.permute.xlu0 %3810
      %3813 = vset.pattern.permute.xlu0 8
      %3814 = vperm.xlu0 %3813, %v2331
      %v3815 = vpop.permute.xlu0 %3814
      %3817 = vset.pattern.permute.xlu0 8
      %3818 = vperm.xlu0 %3817, %v2332
      %v3819 = vpop.permute.xlu0 %3818
      %3821 = vset.pattern.permute.xlu0 8
      %3822 = vperm.xlu0 %3821, %v2333
      %v3823 = vpop.permute.xlu0 %3822
      %3825 = vset.pattern.permute.xlu0 8
      %3826 = vperm.xlu0 %3825, %v2334
      %v3827 = vpop.permute.xlu0 %3826
      %3829 = vset.pattern.permute.xlu0 8
      %3830 = vperm.xlu0 %3829, %v2335
      %v3831 = vpop.permute.xlu0 %3830
      %3833 = vset.pattern.permute.xlu0 8
      %3834 = vperm.xlu0 %3833, %v2336
      %v3835 = vpop.permute.xlu0 %3834
      %3837 = vset.pattern.permute.xlu0 8
      %3838 = vperm.xlu0 %3837, %v2337
      %v3839 = vpop.permute.xlu0 %3838
      %v3841 = vmul.f32 %v3803, %v3781
      %v3842 = vmul.f32 %v3803, %v3782
      %v3843 = vmul.f32 %v3807, %v3783
      %v3844 = vmul.f32 %v3807, %v3784
      %v3845 = vmul.f32 %v3811, %v3785
      %v3846 = vmul.f32 %v3811, %v3786
      %v3847 = vmul.f32 %v3815, %v3787
      %v3848 = vmul.f32 %v3815, %v3788
      %v3849 = vmul.f32 %v3819, %v3789
      %v3850 = vmul.f32 %v3819, %v3790
      %v3851 = vmul.f32 %v3823, %v3791
      %v3852 = vmul.f32 %v3823, %v3792
      %v3853 = vmul.f32 %v3827, %v3793
      %v3854 = vmul.f32 %v3827, %v3794
      %v3855 = vmul.f32 %v3831, %v3795
      %v3856 = vmul.f32 %v3831, %v3796
      %v3857 = vmul.f32 %v3835, %v3797
      %v3858 = vmul.f32 %v3835, %v3798
      %v3859 = vmul.f32 %v3839, %v3799
      %v3860 = vmul.f32 %v3839, %v3800
      %v3861 = vadd.f32 %v3687, %v3841
      %v3862 = vadd.f32 %v3688, %v3842
      %v3863 = vadd.f32 %v3689, %v3843
      %v3864 = vadd.f32 %v3690, %v3844
      %v3865 = vadd.f32 %v3691, %v3845
      %v3866 = vadd.f32 %v3692, %v3846
      %v3867 = vadd.f32 %v3693, %v3847
      %v3868 = vadd.f32 %v3694, %v3848
      %v3869 = vadd.f32 %v3695, %v3849
      %v3870 = vadd.f32 %v3696, %v3850
      %v3871 = vadd.f32 %v3697, %v3851
      %v3872 = vadd.f32 %v3698, %v3852
      %v3873 = vadd.f32 %v3699, %v3853
      %v3874 = vadd.f32 %v3700, %v3854
      %v3875 = vadd.f32 %v3701, %v3855
      %v3876 = vadd.f32 %v3702, %v3856
      %v3877 = vadd.f32 %v3703, %v3857
      %v3878 = vadd.f32 %v3704, %v3858
      %v3879 = vadd.f32 %v3705, %v3859
      %v3880 = vadd.f32 %v3706, %v3860
      %v3881 = vpack.c.bf16 %v2127, %v2113
      %v3882 = vpack.c.bf16 %v2134, %v2120
      %v3883 = vpack.c.bf16 %v2087, %v2073
      %v3884 = vpack.c.bf16 %v2094, %v2080
      %v3885 = vld [vmem:[%s31] sm:$0xf]
      %v3886 = vld [vmem:[%s31 + $0x4] sm:$0xf]
      %v3887 = vld [vmem:[%s31 + $0x8] sm:$0xf]
      %v3888 = vld [vmem:[%s31 + $0xc] sm:$0xf]
      %v3889 = vld [vmem:[%s33] sm:$0xff]
      %v3890 = vld [vmem:[%s33 + $0x8] sm:$0xff]
      %v3891 = vld [vmem:[%s33 + $0x10] sm:$0xff]
      %v3892 = vld [vmem:[%s33 + $0x18] sm:$0xff]
      %3894 = vset.pattern.permute.xlu0 0
      %3895 = vperm.xlu0 %3894, %v3889
      %v3896 = vpop.permute.xlu0 %3895
      %3899 = vset.pattern.permute.xlu0 0
      %3900 = vperm.xlu0 %3899, %v3890
      %v3901 = vpop.permute.xlu0 %3900
      %3904 = vset.pattern.permute.xlu0 0
      %3905 = vperm.xlu0 %3904, %v3891
      %v3906 = vpop.permute.xlu0 %3905
      %3909 = vset.pattern.permute.xlu0 0
      %3910 = vperm.xlu0 %3909, %v3892
      %v3911 = vpop.permute.xlu0 %3910
      %v3917 = vunpack.c.l.b16 %v3885
      %v3918 = vunpack.c.l.b16 %v3886
      %v3919 = vunpack.c.l.b16 %v3887
      %v3920 = vunpack.c.l.b16 %v3888
      %v3921 = vpack.c.b16 %v3918, %v3917
      %v3922 = vpack.c.b16 %v3920, %v3919
      %vm3923 = vcmask 261120
      %v3925 = vsel %vm3923, %v3921, 0
      %v3928 = vsel %vm3923, %v3922, 0
      %3930 = vmatprep.subr.bf16.mxu0 %v3882
      %3931 = vmatpush1.bf16.msra.mxu0 %v3881
      %3932 = vmatprep.subr.bf16.mxu0 %v3884
      %3933 = vmatpush1.bf16.msra.mxu0 %v3883
      %3934 = vmatprep.subr.bf16.mxu0 0
      %3935 = vmatpush1.bf16.msra.mxu0 0
      %3936 = vmatprep.subr.bf16.mxu0 0
      %3937 = vmatpush1.bf16.msra.mxu0 0
      %3938 = vmatprep.subr.bf16.mxu0 0
      %3939 = vmatpush1.bf16.msra.mxu0 0
      %3940 = vmatprep.subr.bf16.mxu0 0
      %3941 = vmatpush1.bf16.msra.mxu0 0
      %3942 = vmatprep.subr.bf16.mxu0 0
      %3943 = vmatpush1.bf16.msra.mxu0 0
      %3944 = vmatprep.subr.bf16.mxu0 0
      %3945 = vmatpush1.bf16.msra.mxu0 0
      %3946 = vmatprep.subr.bf16.mxu0 0
      %3947 = vmatpush1.bf16.msra.mxu0 0
      %3948 = vmatprep.subr.bf16.mxu0 0
      %3949 = vmatpush1.bf16.msra.mxu0 0
      %3950 = vmatprep.subr.bf16.mxu0 0
      %3951 = vmatpush1.bf16.msra.mxu0 0
      %3952 = vmatprep.subr.bf16.mxu0 0
      %3953 = vmatpush1.bf16.msra.mxu0 0
      %3954 = vmatprep.subr.bf16.mxu0 0
      %3955 = vmatpush1.bf16.msra.mxu0 0
      %3956 = vmatprep.subr.bf16.mxu0 0
      %3957 = vmatpush1.bf16.msra.mxu0 0
      %3958 = vmatprep.subr.bf16.mxu0 0
      %3959 = vmatpush1.bf16.msra.mxu0 0
      %3960 = vmatprep.subr.bf16.mxu0 0
      %3961 = vmatpush1.bf16.msra.mxu0 0
      %3962 = vmatprep.mubr.bf16.mxu0 0
      %3963 = vmatmul.mubr.bf16.gmra.mrb[0].mxu0 %v3925
      %v3964 = vpop.f32.mrb[0].mxu0
      %v3965 = vadd.f32 %v3896, %v3964
      %v3966 = vpop.f32.mrb[0].mxu0
      %v3967 = vadd.f32 %v3896, %v3966
      %v3968 = vpop.f32.mrb[0].mxu0
      %v3969 = vadd.f32 %v3901, %v3968
      %v3970 = vpop.f32.mrb[0].mxu0
      %v3971 = vadd.f32 %v3901, %v3970
      %3972 = vmatprep.mubr.bf16.mxu0 0
      %3973 = vmatmul.mubr.bf16.gmra.mrb[0].mxu0 %v3928
      %v3974 = vpop.f32.mrb[0].mxu0
      %v3975 = vadd.f32 %v3906, %v3974
      %v3976 = vpop.f32.mrb[0].mxu0
      %v3977 = vadd.f32 %v3906, %v3976
      %v3978 = vpop.f32.mrb[0].mxu0
      %v3979 = vadd.f32 %v3911, %v3978
      %v3980 = vpop.f32.mrb[0].mxu0
      %v3981 = vadd.f32 %v3911, %v3980
      %3982 = vdwg.mxu0
      %v3983 = vld [vmem:[%s35] sm:$0xff]
      %v3984 = vld [vmem:[%s35 + $0x8] sm:$0xff]
      %v3985 = vld [vmem:[%s35 + $0x10] sm:$0xff]
      %v3986 = vld [vmem:[%s35 + $0x18] sm:$0xff]
      %v3987 = vld [vmem:[%s37] sm:$0xff]
      %v3988 = vld [vmem:[%s37 + $0x8] sm:$0xff]
      %v3989 = vld [vmem:[%s37 + $0x10] sm:$0xff]
      %v3990 = vld [vmem:[%s37 + $0x18] sm:$0xff]
      %3992 = vset.pattern.permute.xlu0 4
      %3993 = vperm.xlu0 %3992, %v3983
      %v3994 = vpop.permute.xlu0 %3993
      %3997 = vset.pattern.permute.xlu0 4
      %3998 = vperm.xlu0 %3997, %v3984
      %v3999 = vpop.permute.xlu0 %3998
      %4002 = vset.pattern.permute.xlu0 4
      %4003 = vperm.xlu0 %4002, %v3985
      %v4004 = vpop.permute.xlu0 %4003
      %4007 = vset.pattern.permute.xlu0 4
      %4008 = vperm.xlu0 %4007, %v3986
      %v4009 = vpop.permute.xlu0 %4008
      %v4011 = vmul.f32 %v3994, %v3965
      %v4012 = vmul.f32 %v3994, %v3967
      %v4013 = vmul.f32 %v3999, %v3969
      %v4014 = vmul.f32 %v3999, %v3971
      %v4015 = vmul.f32 %v4004, %v3975
      %v4016 = vmul.f32 %v4004, %v3977
      %v4017 = vmul.f32 %v4009, %v3979
      %v4018 = vmul.f32 %v4009, %v3981
      %4020 = vset.pattern.permute.xlu0 0
      %4021 = vperm.xlu0 %4020, %v3987
      %v4022 = vpop.permute.xlu0 %4021
      %4025 = vset.pattern.permute.xlu0 0
      %4026 = vperm.xlu0 %4025, %v3988
      %v4027 = vpop.permute.xlu0 %4026
      %4030 = vset.pattern.permute.xlu0 0
      %4031 = vperm.xlu0 %4030, %v3989
      %v4032 = vpop.permute.xlu0 %4031
      %4035 = vset.pattern.permute.xlu0 0
      %4036 = vperm.xlu0 %4035, %v3990
      %v4037 = vpop.permute.xlu0 %4036
      %v4039 = vadd.f32 %v4011, %v4022
      %v4040 = vadd.f32 %v4012, %v4022
      %v4041 = vadd.f32 %v4013, %v4027
      %v4042 = vadd.f32 %v4014, %v4027
      %v4043 = vadd.f32 %v4015, %v4032
      %v4044 = vadd.f32 %v4016, %v4032
      %v4045 = vadd.f32 %v4017, %v4037
      %v4046 = vadd.f32 %v4018, %v4037
      %4047 = vrot.lane.b32.xlu0 %v3965, 17
      %v4048 = vpop.permute.xlu0 %4047
      %4049 = vrot.lane.b32.xlu0 %v3969, 17
      %v4050 = vpop.permute.xlu0 %4049
      %4051 = vrot.lane.b32.xlu0 %v3975, 17
      %v4052 = vpop.permute.xlu0 %4051
      %4053 = vrot.lane.b32.xlu0 %v3979, 17
      %v4054 = vpop.permute.xlu0 %4053
      %4055 = vrot.lane.b32.xlu0 %v3967, 17
      %v4056 = vpop.permute.xlu0 %4055
      %4057 = vrot.lane.b32.xlu0 %v3971, 17
      %v4058 = vpop.permute.xlu0 %4057
      %4059 = vrot.lane.b32.xlu0 %v3977, 17
      %v4060 = vpop.permute.xlu0 %4059
      %4061 = vrot.lane.b32.xlu0 %v3981, 17
      %v4062 = vpop.permute.xlu0 %4061
      %v4063 = vsel %vm2530, %v4048, %v4056
      %v4064 = vsel %vm2530, %v4050, %v4058
      %v4065 = vsel %vm2530, %v4052, %v4060
      %v4066 = vsel %vm2530, %v4054, %v4062
      %v4067 = vsel %vm2530, %v4056, %v4048
      %v4068 = vsel %vm2530, %v4058, %v4050
      %v4069 = vsel %vm2530, %v4060, %v4052
      %v4070 = vsel %vm2530, %v4062, %v4054
      %v4071 = vmul.f32 %v4067, %v2556
      %v4072 = vmul.f32 %v4063, %v2560
      %v4073 = vmul.f32 %v4068, %v2556
      %v4074 = vmul.f32 %v4064, %v2560
      %v4075 = vmul.f32 %v4069, %v2556
      %v4076 = vmul.f32 %v4065, %v2560
      %v4077 = vmul.f32 %v4070, %v2556
      %v4078 = vmul.f32 %v4066, %v2560
      %4079 = vset.pattern.permute.xlu0 0
      %4080 = vperm.xlu0 %4079, %v3983
      %v4081 = vpop.permute.xlu0 %4080
      %4083 = vset.pattern.permute.xlu0 0
      %4084 = vperm.xlu0 %4083, %v3984
      %v4085 = vpop.permute.xlu0 %4084
      %4087 = vset.pattern.permute.xlu0 0
      %4088 = vperm.xlu0 %4087, %v3985
      %v4089 = vpop.permute.xlu0 %4088
      %4091 = vset.pattern.permute.xlu0 0
      %4092 = vperm.xlu0 %4091, %v3986
      %v4093 = vpop.permute.xlu0 %4092
      %v4095 = vmul.f32 %v4081, %v4071
      %v4096 = vmul.f32 %v4081, %v4072
      %v4097 = vmul.f32 %v4085, %v4073
      %v4098 = vmul.f32 %v4085, %v4074
      %v4099 = vmul.f32 %v4089, %v4075
      %v4100 = vmul.f32 %v4089, %v4076
      %v4101 = vmul.f32 %v4093, %v4077
      %v4102 = vmul.f32 %v4093, %v4078
      %v4103 = vadd.f32 %v4039, %v4095
      %v4104 = vadd.f32 %v4040, %v4096
      %v4105 = vadd.f32 %v4041, %v4097
      %v4106 = vadd.f32 %v4042, %v4098
      %v4107 = vadd.f32 %v4043, %v4099
      %v4108 = vadd.f32 %v4044, %v4100
      %v4109 = vadd.f32 %v4045, %v4101
      %v4110 = vadd.f32 %v4046, %v4102
      %4111 = vrot.lane.b32.xlu0 %v3965, 16
      %v4112 = vpop.permute.xlu0 %4111
      %4113 = vrot.lane.b32.xlu0 %v3969, 16
      %v4114 = vpop.permute.xlu0 %4113
      %4115 = vrot.lane.b32.xlu0 %v3975, 16
      %v4116 = vpop.permute.xlu0 %4115
      %4117 = vrot.lane.b32.xlu0 %v3979, 16
      %v4118 = vpop.permute.xlu0 %4117
      %4119 = vrot.lane.b32.xlu0 %v3967, 16
      %v4120 = vpop.permute.xlu0 %4119
      %4121 = vrot.lane.b32.xlu0 %v3971, 16
      %v4122 = vpop.permute.xlu0 %4121
      %4123 = vrot.lane.b32.xlu0 %v3977, 16
      %v4124 = vpop.permute.xlu0 %4123
      %4125 = vrot.lane.b32.xlu0 %v3981, 16
      %v4126 = vpop.permute.xlu0 %4125
      %v4127 = vsel %vm2703, %v4112, %v4120
      %v4128 = vsel %vm2703, %v4114, %v4122
      %v4129 = vsel %vm2703, %v4116, %v4124
      %v4130 = vsel %vm2703, %v4118, %v4126
      %v4131 = vsel %vm2703, %v4120, %v4112
      %v4132 = vsel %vm2703, %v4122, %v4114
      %v4133 = vsel %vm2703, %v4124, %v4116
      %v4134 = vsel %vm2703, %v4126, %v4118
      %v4135 = vmul.f32 %v4131, %v2730
      %v4136 = vmul.f32 %v4127, %v2734
      %v4137 = vmul.f32 %v4132, %v2730
      %v4138 = vmul.f32 %v4128, %v2734
      %v4139 = vmul.f32 %v4133, %v2730
      %v4140 = vmul.f32 %v4129, %v2734
      %v4141 = vmul.f32 %v4134, %v2730
      %v4142 = vmul.f32 %v4130, %v2734
      %4143 = vset.pattern.permute.xlu0 1
      %4144 = vperm.xlu0 %4143, %v3983
      %v4145 = vpop.permute.xlu0 %4144
      %4147 = vset.pattern.permute.xlu0 1
      %4148 = vperm.xlu0 %4147, %v3984
      %v4149 = vpop.permute.xlu0 %4148
      %4151 = vset.pattern.permute.xlu0 1
      %4152 = vperm.xlu0 %4151, %v3985
      %v4153 = vpop.permute.xlu0 %4152
      %4155 = vset.pattern.permute.xlu0 1
      %4156 = vperm.xlu0 %4155, %v3986
      %v4157 = vpop.permute.xlu0 %4156
      %v4159 = vmul.f32 %v4145, %v4135
      %v4160 = vmul.f32 %v4145, %v4136
      %v4161 = vmul.f32 %v4149, %v4137
      %v4162 = vmul.f32 %v4149, %v4138
      %v4163 = vmul.f32 %v4153, %v4139
      %v4164 = vmul.f32 %v4153, %v4140
      %v4165 = vmul.f32 %v4157, %v4141
      %v4166 = vmul.f32 %v4157, %v4142
      %v4167 = vadd.f32 %v4103, %v4159
      %v4168 = vadd.f32 %v4104, %v4160
      %v4169 = vadd.f32 %v4105, %v4161
      %v4170 = vadd.f32 %v4106, %v4162
      %v4171 = vadd.f32 %v4107, %v4163
      %v4172 = vadd.f32 %v4108, %v4164
      %v4173 = vadd.f32 %v4109, %v4165
      %v4174 = vadd.f32 %v4110, %v4166
      %4175 = vrot.lane.b32.xlu0 %v3965, 15
      %v4176 = vpop.permute.xlu0 %4175
      %4177 = vrot.lane.b32.xlu0 %v3969, 15
      %v4178 = vpop.permute.xlu0 %4177
      %4179 = vrot.lane.b32.xlu0 %v3975, 15
      %v4180 = vpop.permute.xlu0 %4179
      %4181 = vrot.lane.b32.xlu0 %v3979, 15
      %v4182 = vpop.permute.xlu0 %4181
      %4183 = vrot.lane.b32.xlu0 %v3967, 15
      %v4184 = vpop.permute.xlu0 %4183
      %4185 = vrot.lane.b32.xlu0 %v3971, 15
      %v4186 = vpop.permute.xlu0 %4185
      %4187 = vrot.lane.b32.xlu0 %v3977, 15
      %v4188 = vpop.permute.xlu0 %4187
      %4189 = vrot.lane.b32.xlu0 %v3981, 15
      %v4190 = vpop.permute.xlu0 %4189
      %v4191 = vsel %vm2877, %v4176, %v4184
      %v4192 = vsel %vm2877, %v4178, %v4186
      %v4193 = vsel %vm2877, %v4180, %v4188
      %v4194 = vsel %vm2877, %v4182, %v4190
      %v4195 = vsel %vm2877, %v4184, %v4176
      %v4196 = vsel %vm2877, %v4186, %v4178
      %v4197 = vsel %vm2877, %v4188, %v4180
      %v4198 = vsel %vm2877, %v4190, %v4182
      %v4199 = vmul.f32 %v4195, %v2904
      %v4200 = vmul.f32 %v4191, %v2908
      %v4201 = vmul.f32 %v4196, %v2904
      %v4202 = vmul.f32 %v4192, %v2908
      %v4203 = vmul.f32 %v4197, %v2904
      %v4204 = vmul.f32 %v4193, %v2908
      %v4205 = vmul.f32 %v4198, %v2904
      %v4206 = vmul.f32 %v4194, %v2908
      %4207 = vset.pattern.permute.xlu0 2
      %4208 = vperm.xlu0 %4207, %v3983
      %v4209 = vpop.permute.xlu0 %4208
      %4211 = vset.pattern.permute.xlu0 2
      %4212 = vperm.xlu0 %4211, %v3984
      %v4213 = vpop.permute.xlu0 %4212
      %4215 = vset.pattern.permute.xlu0 2
      %4216 = vperm.xlu0 %4215, %v3985
      %v4217 = vpop.permute.xlu0 %4216
      %4219 = vset.pattern.permute.xlu0 2
      %4220 = vperm.xlu0 %4219, %v3986
      %v4221 = vpop.permute.xlu0 %4220
      %v4223 = vmul.f32 %v4209, %v4199
      %v4224 = vmul.f32 %v4209, %v4200
      %v4225 = vmul.f32 %v4213, %v4201
      %v4226 = vmul.f32 %v4213, %v4202
      %v4227 = vmul.f32 %v4217, %v4203
      %v4228 = vmul.f32 %v4217, %v4204
      %v4229 = vmul.f32 %v4221, %v4205
      %v4230 = vmul.f32 %v4221, %v4206
      %v4231 = vadd.f32 %v4167, %v4223
      %v4232 = vadd.f32 %v4168, %v4224
      %v4233 = vadd.f32 %v4169, %v4225
      %v4234 = vadd.f32 %v4170, %v4226
      %v4235 = vadd.f32 %v4171, %v4227
      %v4236 = vadd.f32 %v4172, %v4228
      %v4237 = vadd.f32 %v4173, %v4229
      %v4238 = vadd.f32 %v4174, %v4230
      %4239 = vrot.lane.b32.xlu0 %v3965, 1
      %v4240 = vpop.permute.xlu0 %4239
      %4241 = vrot.lane.b32.xlu0 %v3969, 1
      %v4242 = vpop.permute.xlu0 %4241
      %4243 = vrot.lane.b32.xlu0 %v3975, 1
      %v4244 = vpop.permute.xlu0 %4243
      %4245 = vrot.lane.b32.xlu0 %v3979, 1
      %v4246 = vpop.permute.xlu0 %4245
      %4247 = vrot.lane.b32.xlu0 %v3967, 1
      %v4248 = vpop.permute.xlu0 %4247
      %4249 = vrot.lane.b32.xlu0 %v3971, 1
      %v4250 = vpop.permute.xlu0 %4249
      %4251 = vrot.lane.b32.xlu0 %v3977, 1
      %v4252 = vpop.permute.xlu0 %4251
      %4253 = vrot.lane.b32.xlu0 %v3981, 1
      %v4254 = vpop.permute.xlu0 %4253
      %v4255 = vsel %vm3051, %v4240, %v4248
      %v4256 = vsel %vm3051, %v4242, %v4250
      %v4257 = vsel %vm3051, %v4244, %v4252
      %v4258 = vsel %vm3051, %v4246, %v4254
      %v4259 = vsel %vm3051, %v4248, %v4240
      %v4260 = vsel %vm3051, %v4250, %v4242
      %v4261 = vsel %vm3051, %v4252, %v4244
      %v4262 = vsel %vm3051, %v4254, %v4246
      %v4263 = vmul.f32 %v4259, %v3078
      %v4264 = vmul.f32 %v4255, %v3082
      %v4265 = vmul.f32 %v4260, %v3078
      %v4266 = vmul.f32 %v4256, %v3082
      %v4267 = vmul.f32 %v4261, %v3078
      %v4268 = vmul.f32 %v4257, %v3082
      %v4269 = vmul.f32 %v4262, %v3078
      %v4270 = vmul.f32 %v4258, %v3082
      %4271 = vset.pattern.permute.xlu0 3
      %4272 = vperm.xlu0 %4271, %v3983
      %v4273 = vpop.permute.xlu0 %4272
      %4275 = vset.pattern.permute.xlu0 3
      %4276 = vperm.xlu0 %4275, %v3984
      %v4277 = vpop.permute.xlu0 %4276
      %4279 = vset.pattern.permute.xlu0 3
      %4280 = vperm.xlu0 %4279, %v3985
      %v4281 = vpop.permute.xlu0 %4280
      %4283 = vset.pattern.permute.xlu0 3
      %4284 = vperm.xlu0 %4283, %v3986
      %v4285 = vpop.permute.xlu0 %4284
      %v4287 = vmul.f32 %v4273, %v4263
      %v4288 = vmul.f32 %v4273, %v4264
      %v4289 = vmul.f32 %v4277, %v4265
      %v4290 = vmul.f32 %v4277, %v4266
      %v4291 = vmul.f32 %v4281, %v4267
      %v4292 = vmul.f32 %v4281, %v4268
      %v4293 = vmul.f32 %v4285, %v4269
      %v4294 = vmul.f32 %v4285, %v4270
      %v4295 = vadd.f32 %v4231, %v4287
      %v4296 = vadd.f32 %v4232, %v4288
      %v4297 = vadd.f32 %v4233, %v4289
      %v4298 = vadd.f32 %v4234, %v4290
      %v4299 = vadd.f32 %v4235, %v4291
      %v4300 = vadd.f32 %v4236, %v4292
      %v4301 = vadd.f32 %v4237, %v4293
      %v4302 = vadd.f32 %v4238, %v4294
      %4303 = vrot.lane.b32.xlu0 %v3965, 127
      %v4304 = vpop.permute.xlu0 %4303
      %4305 = vrot.lane.b32.xlu0 %v3969, 127
      %v4306 = vpop.permute.xlu0 %4305
      %4307 = vrot.lane.b32.xlu0 %v3975, 127
      %v4308 = vpop.permute.xlu0 %4307
      %4309 = vrot.lane.b32.xlu0 %v3979, 127
      %v4310 = vpop.permute.xlu0 %4309
      %4311 = vrot.lane.b32.xlu0 %v3967, 127
      %v4312 = vpop.permute.xlu0 %4311
      %4313 = vrot.lane.b32.xlu0 %v3971, 127
      %v4314 = vpop.permute.xlu0 %4313
      %4315 = vrot.lane.b32.xlu0 %v3977, 127
      %v4316 = vpop.permute.xlu0 %4315
      %4317 = vrot.lane.b32.xlu0 %v3981, 127
      %v4318 = vpop.permute.xlu0 %4317
      %v4319 = vsel %vm3225, %v4304, %v4312
      %v4320 = vsel %vm3225, %v4306, %v4314
      %v4321 = vsel %vm3225, %v4308, %v4316
      %v4322 = vsel %vm3225, %v4310, %v4318
      %v4323 = vsel %vm3225, %v4312, %v4304
      %v4324 = vsel %vm3225, %v4314, %v4306
      %v4325 = vsel %vm3225, %v4316, %v4308
      %v4326 = vsel %vm3225, %v4318, %v4310
      %v4327 = vmul.f32 %v4319, %v3252
      %v4328 = vmul.f32 %v4323, %v3256
      %v4329 = vmul.f32 %v4320, %v3252
      %v4330 = vmul.f32 %v4324, %v3256
      %v4331 = vmul.f32 %v4321, %v3252
      %v4332 = vmul.f32 %v4325, %v3256
      %v4333 = vmul.f32 %v4322, %v3252
      %v4334 = vmul.f32 %v4326, %v3256
      %4335 = vset.pattern.permute.xlu0 5
      %4336 = vperm.xlu0 %4335, %v3983
      %v4337 = vpop.permute.xlu0 %4336
      %4339 = vset.pattern.permute.xlu0 5
      %4340 = vperm.xlu0 %4339, %v3984
      %v4341 = vpop.permute.xlu0 %4340
      %4343 = vset.pattern.permute.xlu0 5
      %4344 = vperm.xlu0 %4343, %v3985
      %v4345 = vpop.permute.xlu0 %4344
      %4347 = vset.pattern.permute.xlu0 5
      %4348 = vperm.xlu0 %4347, %v3986
      %v4349 = vpop.permute.xlu0 %4348
      %v4351 = vmul.f32 %v4337, %v4327
      %v4352 = vmul.f32 %v4337, %v4328
      %v4353 = vmul.f32 %v4341, %v4329
      %v4354 = vmul.f32 %v4341, %v4330
      %v4355 = vmul.f32 %v4345, %v4331
      %v4356 = vmul.f32 %v4345, %v4332
      %v4357 = vmul.f32 %v4349, %v4333
      %v4358 = vmul.f32 %v4349, %v4334
      %v4359 = vadd.f32 %v4295, %v4351
      %v4360 = vadd.f32 %v4296, %v4352
      %v4361 = vadd.f32 %v4297, %v4353
      %v4362 = vadd.f32 %v4298, %v4354
      %v4363 = vadd.f32 %v4299, %v4355
      %v4364 = vadd.f32 %v4300, %v4356
      %v4365 = vadd.f32 %v4301, %v4357
      %v4366 = vadd.f32 %v4302, %v4358
      %4367 = vrot.lane.b32.xlu0 %v3965, 113
      %v4368 = vpop.permute.xlu0 %4367
      %4369 = vrot.lane.b32.xlu0 %v3969, 113
      %v4370 = vpop.permute.xlu0 %4369
      %4371 = vrot.lane.b32.xlu0 %v3975, 113
      %v4372 = vpop.permute.xlu0 %4371
      %4373 = vrot.lane.b32.xlu0 %v3979, 113
      %v4374 = vpop.permute.xlu0 %4373
      %4375 = vrot.lane.b32.xlu0 %v3967, 113
      %v4376 = vpop.permute.xlu0 %4375
      %4377 = vrot.lane.b32.xlu0 %v3971, 113
      %v4378 = vpop.permute.xlu0 %4377
      %4379 = vrot.lane.b32.xlu0 %v3977, 113
      %v4380 = vpop.permute.xlu0 %4379
      %4381 = vrot.lane.b32.xlu0 %v3981, 113
      %v4382 = vpop.permute.xlu0 %4381
      %v4383 = vsel %vm3399, %v4368, %v4376
      %v4384 = vsel %vm3399, %v4370, %v4378
      %v4385 = vsel %vm3399, %v4372, %v4380
      %v4386 = vsel %vm3399, %v4374, %v4382
      %v4387 = vsel %vm3399, %v4376, %v4368
      %v4388 = vsel %vm3399, %v4378, %v4370
      %v4389 = vsel %vm3399, %v4380, %v4372
      %v4390 = vsel %vm3399, %v4382, %v4374
      %v4391 = vmul.f32 %v4383, %v3426
      %v4392 = vmul.f32 %v4387, %v3430
      %v4393 = vmul.f32 %v4384, %v3426
      %v4394 = vmul.f32 %v4388, %v3430
      %v4395 = vmul.f32 %v4385, %v3426
      %v4396 = vmul.f32 %v4389, %v3430
      %v4397 = vmul.f32 %v4386, %v3426
      %v4398 = vmul.f32 %v4390, %v3430
      %4399 = vset.pattern.permute.xlu0 6
      %4400 = vperm.xlu0 %4399, %v3983
      %v4401 = vpop.permute.xlu0 %4400
      %4403 = vset.pattern.permute.xlu0 6
      %4404 = vperm.xlu0 %4403, %v3984
      %v4405 = vpop.permute.xlu0 %4404
      %4407 = vset.pattern.permute.xlu0 6
      %4408 = vperm.xlu0 %4407, %v3985
      %v4409 = vpop.permute.xlu0 %4408
      %4411 = vset.pattern.permute.xlu0 6
      %4412 = vperm.xlu0 %4411, %v3986
      %v4413 = vpop.permute.xlu0 %4412
      %v4415 = vmul.f32 %v4401, %v4391
      %v4416 = vmul.f32 %v4401, %v4392
      %v4417 = vmul.f32 %v4405, %v4393
      %v4418 = vmul.f32 %v4405, %v4394
      %v4419 = vmul.f32 %v4409, %v4395
      %v4420 = vmul.f32 %v4409, %v4396
      %v4421 = vmul.f32 %v4413, %v4397
      %v4422 = vmul.f32 %v4413, %v4398
      %v4423 = vadd.f32 %v4359, %v4415
      %v4424 = vadd.f32 %v4360, %v4416
      %v4425 = vadd.f32 %v4361, %v4417
      %v4426 = vadd.f32 %v4362, %v4418
      %v4427 = vadd.f32 %v4363, %v4419
      %v4428 = vadd.f32 %v4364, %v4420
      %v4429 = vadd.f32 %v4365, %v4421
      %v4430 = vadd.f32 %v4366, %v4422
      %4431 = vrot.lane.b32.xlu0 %v3965, 112
      %v4432 = vpop.permute.xlu0 %4431
      %4433 = vrot.lane.b32.xlu0 %v3969, 112
      %v4434 = vpop.permute.xlu0 %4433
      %4435 = vrot.lane.b32.xlu0 %v3975, 112
      %v4436 = vpop.permute.xlu0 %4435
      %4437 = vrot.lane.b32.xlu0 %v3979, 112
      %v4438 = vpop.permute.xlu0 %4437
      %4439 = vrot.lane.b32.xlu0 %v3967, 112
      %v4440 = vpop.permute.xlu0 %4439
      %4441 = vrot.lane.b32.xlu0 %v3971, 112
      %v4442 = vpop.permute.xlu0 %4441
      %4443 = vrot.lane.b32.xlu0 %v3977, 112
      %v4444 = vpop.permute.xlu0 %4443
      %4445 = vrot.lane.b32.xlu0 %v3981, 112
      %v4446 = vpop.permute.xlu0 %4445
      %v4447 = vsel %vm3573, %v4432, %v4440
      %v4448 = vsel %vm3573, %v4434, %v4442
      %v4449 = vsel %vm3573, %v4436, %v4444
      %v4450 = vsel %vm3573, %v4438, %v4446
      %v4451 = vsel %vm3573, %v4440, %v4432
      %v4452 = vsel %vm3573, %v4442, %v4434
      %v4453 = vsel %vm3573, %v4444, %v4436
      %v4454 = vsel %vm3573, %v4446, %v4438
      %v4455 = vmul.f32 %v4447, %v3600
      %v4456 = vmul.f32 %v4451, %v3604
      %v4457 = vmul.f32 %v4448, %v3600
      %v4458 = vmul.f32 %v4452, %v3604
      %v4459 = vmul.f32 %v4449, %v3600
      %v4460 = vmul.f32 %v4453, %v3604
      %v4461 = vmul.f32 %v4450, %v3600
      %v4462 = vmul.f32 %v4454, %v3604
      %4463 = vset.pattern.permute.xlu0 7
      %4464 = vperm.xlu0 %4463, %v3983
      %v4465 = vpop.permute.xlu0 %4464
      %4467 = vset.pattern.permute.xlu0 7
      %4468 = vperm.xlu0 %4467, %v3984
      %v4469 = vpop.permute.xlu0 %4468
      %4471 = vset.pattern.permute.xlu0 7
      %4472 = vperm.xlu0 %4471, %v3985
      %v4473 = vpop.permute.xlu0 %4472
      %4475 = vset.pattern.permute.xlu0 7
      %4476 = vperm.xlu0 %4475, %v3986
      %v4477 = vpop.permute.xlu0 %4476
      %v4479 = vmul.f32 %v4465, %v4455
      %v4480 = vmul.f32 %v4465, %v4456
      %v4481 = vmul.f32 %v4469, %v4457
      %v4482 = vmul.f32 %v4469, %v4458
      %v4483 = vmul.f32 %v4473, %v4459
      %v4484 = vmul.f32 %v4473, %v4460
      %v4485 = vmul.f32 %v4477, %v4461
      %v4486 = vmul.f32 %v4477, %v4462
      %v4487 = vadd.f32 %v4423, %v4479
      %v4488 = vadd.f32 %v4424, %v4480
      %v4489 = vadd.f32 %v4425, %v4481
      %v4490 = vadd.f32 %v4426, %v4482
      %v4491 = vadd.f32 %v4427, %v4483
      %v4492 = vadd.f32 %v4428, %v4484
      %v4493 = vadd.f32 %v4429, %v4485
      %v4494 = vadd.f32 %v4430, %v4486
      %4495 = vrot.lane.b32.xlu0 %v3965, 111
      %v4496 = vpop.permute.xlu0 %4495
      %4497 = vrot.lane.b32.xlu0 %v3969, 111
      %v4498 = vpop.permute.xlu0 %4497
      %4499 = vrot.lane.b32.xlu0 %v3975, 111
      %v4500 = vpop.permute.xlu0 %4499
      %4501 = vrot.lane.b32.xlu0 %v3979, 111
      %v4502 = vpop.permute.xlu0 %4501
      %4503 = vrot.lane.b32.xlu0 %v3967, 111
      %v4504 = vpop.permute.xlu0 %4503
      %4505 = vrot.lane.b32.xlu0 %v3971, 111
      %v4506 = vpop.permute.xlu0 %4505
      %4507 = vrot.lane.b32.xlu0 %v3977, 111
      %v4508 = vpop.permute.xlu0 %4507
      %4509 = vrot.lane.b32.xlu0 %v3981, 111
      %v4510 = vpop.permute.xlu0 %4509
      %v4511 = vsel %vm3747, %v4496, %v4504
      %v4512 = vsel %vm3747, %v4498, %v4506
      %v4513 = vsel %vm3747, %v4500, %v4508
      %v4514 = vsel %vm3747, %v4502, %v4510
      %v4515 = vsel %vm3747, %v4504, %v4496
      %v4516 = vsel %vm3747, %v4506, %v4498
      %v4517 = vsel %vm3747, %v4508, %v4500
      %v4518 = vsel %vm3747, %v4510, %v4502
      %v4519 = vmul.f32 %v4511, %v3774
      %v4520 = vmul.f32 %v4515, %v3778
      %v4521 = vmul.f32 %v4512, %v3774
      %v4522 = vmul.f32 %v4516, %v3778
      %v4523 = vmul.f32 %v4513, %v3774
      %v4524 = vmul.f32 %v4517, %v3778
      %v4525 = vmul.f32 %v4514, %v3774
      %v4526 = vmul.f32 %v4518, %v3778
      %4527 = vset.pattern.permute.xlu0 8
      %4528 = vperm.xlu0 %4527, %v3983
      %v4529 = vpop.permute.xlu0 %4528
      %4531 = vset.pattern.permute.xlu0 8
      %4532 = vperm.xlu0 %4531, %v3984
      %v4533 = vpop.permute.xlu0 %4532
      %4535 = vset.pattern.permute.xlu0 8
      %4536 = vperm.xlu0 %4535, %v3985
      %v4537 = vpop.permute.xlu0 %4536
      %4539 = vset.pattern.permute.xlu0 8
      %4540 = vperm.xlu0 %4539, %v3986
      %v4541 = vpop.permute.xlu0 %4540
      %v4543 = vmul.f32 %v4529, %v4519
      %v4544 = vmul.f32 %v4529, %v4520
      %v4545 = vmul.f32 %v4533, %v4521
      %v4546 = vmul.f32 %v4533, %v4522
      %v4547 = vmul.f32 %v4537, %v4523
      %v4548 = vmul.f32 %v4537, %v4524
      %v4549 = vmul.f32 %v4541, %v4525
      %v4550 = vmul.f32 %v4541, %v4526
      %v4551 = vadd.f32 %v4487, %v4543
      %v4552 = vadd.f32 %v4488, %v4544
      %v4553 = vadd.f32 %v4489, %v4545
      %v4554 = vadd.f32 %v4490, %v4546
      %v4555 = vadd.f32 %v4491, %v4547
      %v4556 = vadd.f32 %v4492, %v4548
      %v4557 = vadd.f32 %v4493, %v4549
      %v4558 = vadd.f32 %v4494, %v4550
      %v4559 = vld [vmem:[%s43] sm:$0xff]
      %v4560 = vld [vmem:[%s43 + $0x8] sm:$0xff]
      %v4561 = vld [vmem:[%s43 + $0x10] sm:$0xff]
      %v4562 = vld [vmem:[%s43 + $0x18] sm:$0xff]
      %v4563 = vld [vmem:[%s11] sm:$0xff]
      %v4564 = vld [vmem:[%s11 + $0x8] sm:$0xff]
      %v4565 = vld [vmem:[%s11 + $0x10] sm:$0xff]
      %v4566 = vld [vmem:[%s11 + $0x18] sm:$0xff]
      %v4567 = vld [vmem:[%s39] sm:$0xf]
      %v4568 = vld [vmem:[%s39 + $0x4] sm:$0xf]
      %v4569 = vld [vmem:[%s39 + $0x8] sm:$0xf]
      %v4570 = vld [vmem:[%s39 + $0xc] sm:$0xf]
      %v4571 = vld [vmem:[%s41] sm:$0xff]
      %v4572 = vld [vmem:[%s41 + $0x8] sm:$0xff]
      %v4573 = vld [vmem:[%s41 + $0x10] sm:$0xff]
      %v4574 = vld [vmem:[%s41 + $0x18] sm:$0xff]
      %v4575 = vmul.f32 %v4551, %v4551
      %v4576 = vmul.f32 %v4552, %v4552
      %v4577 = vmul.f32 %v4553, %v4553
      %v4578 = vmul.f32 %v4554, %v4554
      %v4579 = vmul.f32 %v4555, %v4555
      %v4580 = vmul.f32 %v4556, %v4556
      %v4581 = vmul.f32 %v4557, %v4557
      %v4582 = vmul.f32 %v4558, %v4558
      %v4583 = vadd.f32 %v4575, %v4576
      %4584 = vadd.xlane.f32.xlu0 %v4583
      %v4585 = vpop.xlane.xlu0 %4584
      %v4586 = vadd.f32 %v4577, %v4578
      %4587 = vadd.xlane.f32.xlu0 %v4586
      %v4588 = vpop.xlane.xlu0 %4587
      %v4589 = vadd.f32 %v4579, %v4580
      %4590 = vadd.xlane.f32.xlu0 %v4589
      %v4591 = vpop.xlane.xlu0 %4590
      %v4592 = vadd.f32 %v4581, %v4582
      %4593 = vadd.xlane.f32.xlu0 %v4592
      %v4594 = vpop.xlane.xlu0 %4593
      %v4595 = vadd.f32 %v4585, 1e-24
      %v4596 = vadd.f32 %v4588, 1e-24
      %v4597 = vadd.f32 %v4591, 1e-24
      %v4598 = vadd.f32 %v4594, 1e-24
      %v4599 = vrsqrt.pop %v4595
      %v4600 = vrsqrt.pop %v4596
      %v4601 = vrsqrt.pop %v4597
      %v4602 = vrsqrt.pop %v4598
      %v4603 = vmul.f32 %v4551, %v4599
      %v4604 = vmul.f32 %v4552, %v4599
      %v4605 = vmul.f32 %v4553, %v4600
      %v4606 = vmul.f32 %v4554, %v4600
      %v4607 = vmul.f32 %v4555, %v4601
      %v4608 = vmul.f32 %v4556, %v4601
      %v4609 = vmul.f32 %v4557, %v4602
      %v4610 = vmul.f32 %v4558, %v4602
      %v4611 = vmul.f32 %v3861, %v3861
      %v4612 = vmul.f32 %v3862, %v3862
      %v4613 = vmul.f32 %v3863, %v3863
      %v4614 = vmul.f32 %v3864, %v3864
      %v4615 = vmul.f32 %v3869, %v3869
      %v4616 = vmul.f32 %v3870, %v3870
      %v4617 = vmul.f32 %v3871, %v3871
      %v4618 = vmul.f32 %v3872, %v3872
      %v4619 = vadd.f32 %v4611, %v4612
      %4620 = vadd.xlane.f32.xlu0 %v4619
      %v4621 = vpop.xlane.xlu0 %4620
      %v4622 = vadd.f32 %v4613, %v4614
      %4623 = vadd.xlane.f32.xlu0 %v4622
      %v4624 = vpop.xlane.xlu0 %4623
      %v4625 = vadd.f32 %v4615, %v4616
      %4626 = vadd.xlane.f32.xlu0 %v4625
      %v4627 = vpop.xlane.xlu0 %4626
      %v4628 = vadd.f32 %v4617, %v4618
      %4629 = vadd.xlane.f32.xlu0 %v4628
      %v4630 = vpop.xlane.xlu0 %4629
      %v4631 = vadd.f32 %v4621, 1e-24
      %v4632 = vadd.f32 %v4624, 1e-24
      %v4633 = vadd.f32 %v4627, 1e-24
      %v4634 = vadd.f32 %v4630, 1e-24
      %v4635 = vrsqrt.pop %v4631
      %v4636 = vrsqrt.pop %v4632
      %v4637 = vrsqrt.pop %v4633
      %v4638 = vrsqrt.pop %v4634
      %v4639 = vmul.f32 %v3861, %v4635
      %v4640 = vmul.f32 %v3862, %v4635
      %v4641 = vmul.f32 %v3863, %v4636
      %v4642 = vmul.f32 %v3864, %v4636
      %v4643 = vmul.f32 %v3869, %v4637
      %v4644 = vmul.f32 %v3870, %v4637
      %v4645 = vmul.f32 %v3871, %v4638
      %v4646 = vmul.f32 %v3872, %v4638
      %v4647 = vpack.c.bf16 %v4605, %v4603
      %v4648 = vpack.c.bf16 %v4606, %v4604
      %v4649 = vpack.c.bf16 %v4609, %v4607
      %v4650 = vpack.c.bf16 %v4610, %v4608
      %v4651 = vpack.c.bf16 %v4641, %v4639
      %v4652 = vpack.c.bf16 %v4642, %v4640
      %v4653 = vpack.c.bf16 %v4645, %v4643
      %v4654 = vpack.c.bf16 %v4646, %v4644
      %4655 = vmatprep.subr.bf16.mxu0 %v4652
      %4656 = vmatpush1.bf16.xpose.msra.mxu0 %v4651
      %4657 = vmatprep.subr.bf16.mxu0 %v4654
      %4658 = vmatpush1.bf16.xpose.msra.mxu0 %v4653
      %4659 = vmatprep.subr.bf16.mxu0 0
      %4660 = vmatpush1.bf16.xpose.msra.mxu0 0
      %4661 = vmatprep.subr.bf16.mxu0 0
      %4662 = vmatpush1.bf16.xpose.msra.mxu0 0
      %4663 = vmatprep.subr.bf16.mxu0 0
      %4664 = vmatpush1.bf16.xpose.msra.mxu0 0
      %4665 = vmatprep.subr.bf16.mxu0 0
      %4666 = vmatpush1.bf16.xpose.msra.mxu0 0
      %4667 = vmatprep.subr.bf16.mxu0 0
      %4668 = vmatpush1.bf16.xpose.msra.mxu0 0
      %4669 = vmatprep.subr.bf16.mxu0 0
      %4670 = vmatpush1.bf16.xpose.msra.mxu0 0
      %4671 = vmatprep.subr.bf16.mxu0 0
      %4672 = vmatpush1.bf16.xpose.msra.mxu0 0
      %4673 = vmatprep.subr.bf16.mxu0 0
      %4674 = vmatpush1.bf16.xpose.msra.mxu0 0
      %4675 = vmatprep.subr.bf16.mxu0 0
      %4676 = vmatpush1.bf16.xpose.msra.mxu0 0
      %4677 = vmatprep.subr.bf16.mxu0 0
      %4678 = vmatpush1.bf16.xpose.msra.mxu0 0
      %4679 = vmatprep.subr.bf16.mxu0 0
      %4680 = vmatpush1.bf16.xpose.msra.mxu0 0
      %4681 = vmatprep.subr.bf16.mxu0 0
      %4682 = vmatpush1.bf16.xpose.msra.mxu0 0
      %4683 = vmatprep.subr.bf16.mxu0 0
      %4684 = vmatpush1.bf16.xpose.msra.mxu0 0
      %4685 = vmatprep.subr.bf16.mxu0 0
      %4686 = vmatpush1.bf16.xpose.msra.mxu0 0
      %4687 = vmatprep.mubr.bf16.mxu0 %v4648
      %4688 = vmatmul.mubr.bf16.gmra.mrb[0].mxu0 %v4647
      %v4689 = vpop.f32.mrb[0].mxu0
      %v4690 = vadd.f32 0.0, %v4689
      %v4691 = vpop.f32.mrb[0].mxu0
      %v4692 = vpop.f32.mrb[0].mxu0
      %v4693 = vadd.f32 0.0, %v4692
      %v4694 = vpop.f32.mrb[0].mxu0
      %4695 = vmatprep.mubr.bf16.mxu0 %v4650
      %4696 = vmatmul.mubr.bf16.gmra.mrb[0].mxu0 %v4649
      %v4697 = vpop.f32.mrb[0].mxu0
      %v4698 = vadd.f32 0.0, %v4697
      %v4699 = vpop.f32.mrb[0].mxu0
      %v4700 = vpop.f32.mrb[0].mxu0
      %v4701 = vadd.f32 0.0, %v4700
      %v4702 = vpop.f32.mrb[0].mxu0
      %4703 = vdwg.mxu0
      %4705 = vset.pattern.permute.xlu0 0
      %4706 = vperm.xlu0 %4705, %v4559
      %v4707 = vpop.permute.xlu0 %4706
      %4710 = vset.pattern.permute.xlu0 0
      %4711 = vperm.xlu0 %4710, %v4560
      %v4712 = vpop.permute.xlu0 %4711
      %4715 = vset.pattern.permute.xlu0 0
      %4716 = vperm.xlu0 %4715, %v4561
      %v4717 = vpop.permute.xlu0 %4716
      %4720 = vset.pattern.permute.xlu0 0
      %4721 = vperm.xlu0 %4720, %v4562
      %v4722 = vpop.permute.xlu0 %4721
      %v4724 = vmul.f32 %v4690, %v4707
      %v4725 = vmul.f32 %v4693, %v4712
      %v4726 = vmul.f32 %v4698, %v4717
      %v4727 = vmul.f32 %v4701, %v4722
      %v4728 = vadd.f32 %v4724, %v4563
      %v4729 = vadd.f32 %v4725, %v4564
      %v4730 = vadd.f32 %v4726, %v4565
      %v4731 = vadd.f32 %v4727, %v4566
      %v4732 = vsel %vm3923, %v4728, -inf
      %4733 = vmax.xlane.f32.xlu0 %v4732
      %v4734 = vpop.xlane.xlu0 %4733
      %v4735 = vsel %vm3923, %v4729, -inf
      %4736 = vmax.xlane.f32.xlu0 %v4735
      %v4737 = vpop.xlane.xlu0 %4736
      %v4738 = vsel %vm3923, %v4730, -inf
      %4739 = vmax.xlane.f32.xlu0 %v4738
      %v4740 = vpop.xlane.xlu0 %4739
      %v4741 = vsel %vm3923, %v4731, -inf
      %4742 = vmax.xlane.f32.xlu0 %v4741
      %v4743 = vpop.xlane.xlu0 %4742
      %v4744 = vsub.f32 %v4728, %v4734
      %v4745 = vsub.f32 %v4729, %v4737
      %v4746 = vsub.f32 %v4730, %v4740
      %v4747 = vsub.f32 %v4731, %v4743
      %v4748 = vmul.f32 %v4744, 1.442695
      %v4749 = vpow.pop %v4748
      %v4750 = vmul.f32 %v4745, 1.442695
      %v4751 = vpow.pop %v4750
      %v4752 = vmul.f32 %v4746, 1.442695
      %v4753 = vpow.pop %v4752
      %v4754 = vmul.f32 %v4747, 1.442695
      %v4755 = vpow.pop %v4754
      %v4756 = vsel %vm3923, %v4749, 0.0
      %4757 = vadd.xlane.f32.xlu0 %v4756
      %v4758 = vpop.xlane.xlu0 %4757
      %v4759 = vsel %vm3923, %v4751, 0.0
      %4760 = vadd.xlane.f32.xlu0 %v4759
      %v4761 = vpop.xlane.xlu0 %4760
      %v4762 = vsel %vm3923, %v4753, 0.0
      %4763 = vadd.xlane.f32.xlu0 %v4762
      %v4764 = vpop.xlane.xlu0 %4763
      %v4765 = vsel %vm3923, %v4755, 0.0
      %4766 = vadd.xlane.f32.xlu0 %v4765
      %v4767 = vpop.xlane.xlu0 %4766
      %v4768 = vrcp.pop %v4758
      %v4769 = vrcp.pop %v4761
      %v4770 = vrcp.pop %v4764
      %v4771 = vrcp.pop %v4767
      %v4772 = vmul.f32 %v4749, %v4768
      %v4773 = vmul.f32 %v4751, %v4769
      %v4774 = vmul.f32 %v4753, %v4770
      %v4775 = vmul.f32 %v4755, %v4771
      %v4776 = vpack.c.bf16 %v4773, %v4772
      %v4777 = vpack.c.bf16 %v4775, %v4774
      %v4778 = vpack.c.bf16 %v3867, %v3865
      %v4779 = vpack.c.bf16 %v3868, %v3866
      %v4780 = vpack.c.bf16 %v3875, %v3873
      %v4781 = vpack.c.bf16 %v3876, %v3874
      %v4783 = vsel %vm3923, %v4776, 0
      %v4786 = vsel %vm3923, %v4777, 0
      %4788 = vmatprep.subr.bf16.mxu0 %v4779
      %4789 = vmatpush1.bf16.msra.mxu0 %v4778
      %4790 = vmatprep.subr.bf16.mxu0 %v4781
      %4791 = vmatpush1.bf16.msra.mxu0 %v4780
      %4792 = vmatprep.subr.bf16.mxu0 0
      %4793 = vmatpush1.bf16.msra.mxu0 0
      %4794 = vmatprep.subr.bf16.mxu0 0
      %4795 = vmatpush1.bf16.msra.mxu0 0
      %4796 = vmatprep.subr.bf16.mxu0 0
      %4797 = vmatpush1.bf16.msra.mxu0 0
      %4798 = vmatprep.subr.bf16.mxu0 0
      %4799 = vmatpush1.bf16.msra.mxu0 0
      %4800 = vmatprep.subr.bf16.mxu0 0
      %4801 = vmatpush1.bf16.msra.mxu0 0
      %4802 = vmatprep.subr.bf16.mxu0 0
      %4803 = vmatpush1.bf16.msra.mxu0 0
      %4804 = vmatprep.subr.bf16.mxu0 0
      %4805 = vmatpush1.bf16.msra.mxu0 0
      %4806 = vmatprep.subr.bf16.mxu0 0
      %4807 = vmatpush1.bf16.msra.mxu0 0
      %4808 = vmatprep.subr.bf16.mxu0 0
      %4809 = vmatpush1.bf16.msra.mxu0 0
      %4810 = vmatprep.subr.bf16.mxu0 0
      %4811 = vmatpush1.bf16.msra.mxu0 0
      %4812 = vmatprep.subr.bf16.mxu0 0
      %4813 = vmatpush1.bf16.msra.mxu0 0
      %4814 = vmatprep.subr.bf16.mxu0 0
      %4815 = vmatpush1.bf16.msra.mxu0 0
      %4816 = vmatprep.subr.bf16.mxu0 0
      %4817 = vmatpush1.bf16.msra.mxu0 0
      %4818 = vmatprep.subr.bf16.mxu0 0
      %4819 = vmatpush1.bf16.msra.mxu0 0
      %4820 = vmatprep.mubr.bf16.mxu0 0
      %4821 = vmatmul.mubr.bf16.gmra.mrb[0].mxu0 %v4783
      %v4822 = vpop.f32.mrb[0].mxu0
      %v4823 = vadd.f32 0.0, %v4822
      %v4824 = vpop.f32.mrb[0].mxu0
      %v4825 = vadd.f32 0.0, %v4824
      %v4826 = vpop.f32.mrb[0].mxu0
      %v4827 = vadd.f32 0.0, %v4826
      %v4828 = vpop.f32.mrb[0].mxu0
      %v4829 = vadd.f32 0.0, %v4828
      %4830 = vmatprep.mubr.bf16.mxu0 0
      %4831 = vmatmul.mubr.bf16.gmra.mrb[0].mxu0 %v4786
      %v4832 = vpop.f32.mrb[0].mxu0
      %v4833 = vadd.f32 0.0, %v4832
      %v4834 = vpop.f32.mrb[0].mxu0
      %v4835 = vadd.f32 0.0, %v4834
      %v4836 = vpop.f32.mrb[0].mxu0
      %v4837 = vadd.f32 0.0, %v4836
      %v4838 = vpop.f32.mrb[0].mxu0
      %v4839 = vadd.f32 0.0, %v4838
      %4840 = vdwg.mxu0
      %v4841 = vpack.c.bf16 %v4827, %v4823
      %v4842 = vpack.c.bf16 %v4829, %v4825
      %v4843 = vpack.c.bf16 %v4837, %v4833
      %v4844 = vpack.c.bf16 %v4839, %v4835
      %4846 = vset.pattern.permute.xlu0 0
      %4847 = vperm.xlu0 %4846, %v4571
      %v4848 = vpop.permute.xlu0 %4847
      %4851 = vset.pattern.permute.xlu0 0
      %4852 = vperm.xlu0 %4851, %v4572
      %v4853 = vpop.permute.xlu0 %4852
      %4856 = vset.pattern.permute.xlu0 0
      %4857 = vperm.xlu0 %4856, %v4573
      %v4858 = vpop.permute.xlu0 %4857
      %4861 = vset.pattern.permute.xlu0 0
      %4862 = vperm.xlu0 %4861, %v4574
      %v4863 = vpop.permute.xlu0 %4862
      %v4869 = vunpack.c.l.b16 %v4567
      %v4870 = vunpack.c.l.b16 %v4568
      %v4871 = vunpack.c.l.b16 %v4569
      %v4872 = vunpack.c.l.b16 %v4570
      %v4873 = vpack.c.b16 %v4870, %v4869
      %v4874 = vpack.c.b16 %v4872, %v4871
      %v4876 = vsel %vm3923, %v4873, 0
      %v4879 = vsel %vm3923, %v4874, 0
      %4881 = vmatprep.subr.bf16.mxu0 %v4842
      %4882 = vmatpush1.bf16.msra.mxu0 %v4841
      %4883 = vmatprep.subr.bf16.mxu0 %v4844
      %4884 = vmatpush1.bf16.msra.mxu0 %v4843
      %4885 = vmatprep.subr.bf16.mxu0 0
      %4886 = vmatpush1.bf16.msra.mxu0 0
      %4887 = vmatprep.subr.bf16.mxu0 0
      %4888 = vmatpush1.bf16.msra.mxu0 0
      %4889 = vmatprep.subr.bf16.mxu0 0
      %4890 = vmatpush1.bf16.msra.mxu0 0
      %4891 = vmatprep.subr.bf16.mxu0 0
      %4892 = vmatpush1.bf16.msra.mxu0 0
      %4893 = vmatprep.subr.bf16.mxu0 0
      %4894 = vmatpush1.bf16.msra.mxu0 0
      %4895 = vmatprep.subr.bf16.mxu0 0
      %4896 = vmatpush1.bf16.msra.mxu0 0
      %4897 = vmatprep.subr.bf16.mxu0 0
      %4898 = vmatpush1.bf16.msra.mxu0 0
      %4899 = vmatprep.subr.bf16.mxu0 0
      %4900 = vmatpush1.bf16.msra.mxu0 0
      %4901 = vmatprep.subr.bf16.mxu0 0
      %4902 = vmatpush1.bf16.msra.mxu0 0
      %4903 = vmatprep.subr.bf16.mxu0 0
      %4904 = vmatpush1.bf16.msra.mxu0 0
      %4905 = vmatprep.subr.bf16.mxu0 0
      %4906 = vmatpush1.bf16.msra.mxu0 0
      %4907 = vmatprep.subr.bf16.mxu0 0
      %4908 = vmatpush1.bf16.msra.mxu0 0
      %4909 = vmatprep.subr.bf16.mxu0 0
      %4910 = vmatpush1.bf16.msra.mxu0 0
      %4911 = vmatprep.subr.bf16.mxu0 0
      %4912 = vmatpush1.bf16.msra.mxu0 0
      %4913 = vmatprep.mubr.bf16.mxu0 0
      %4914 = vmatmul.mubr.bf16.gmra.mrb[0].mxu0 %v4876
      %v4915 = vpop.f32.mrb[0].mxu0
      %v4916 = vadd.f32 %v4848, %v4915
      %v4917 = vpop.f32.mrb[0].mxu0
      %v4918 = vadd.f32 %v4848, %v4917
      %v4919 = vpop.f32.mrb[0].mxu0
      %v4920 = vadd.f32 %v4853, %v4919
      %v4921 = vpop.f32.mrb[0].mxu0
      %v4922 = vadd.f32 %v4853, %v4921
      %4923 = vmatprep.mubr.bf16.mxu0 0
      %4924 = vmatmul.mubr.bf16.gmra.mrb[0].mxu0 %v4879
      %v4925 = vpop.f32.mrb[0].mxu0
      %v4926 = vadd.f32 %v4858, %v4925
      %v4927 = vpop.f32.mrb[0].mxu0
      %v4928 = vadd.f32 %v4858, %v4927
      %v4929 = vpop.f32.mrb[0].mxu0
      %v4930 = vadd.f32 %v4863, %v4929
      %v4931 = vpop.f32.mrb[0].mxu0
      %v4932 = vadd.f32 %v4863, %v4931
      %4933 = vdwg.mxu0
      %v4934 = vmax.f32 %v4916, %v4920
      %v4935 = vrot.slane %v4934, 4
      %v4936 = vmax.f32 %v4934, %v4935
      %v4937 = vrot.slane %v4936, 2
      %v4938 = vmax.f32 %v4936, %v4937
      %v4939 = vrot.slane %v4938, 1
      %v4940 = vmax.f32 %v4938, %v4939
      %v4941 = vmax.f32 %v4918, %v4922
      %v4942 = vrot.slane %v4941, 4
      %v4943 = vmax.f32 %v4941, %v4942
      %v4944 = vrot.slane %v4943, 2
      %v4945 = vmax.f32 %v4943, %v4944
      %v4946 = vrot.slane %v4945, 1
      %v4947 = vmax.f32 %v4945, %v4946
      %v4948 = vadd.f32 %v4916, %v4920
      %v4949 = vrot.slane %v4948, 4
      %v4950 = vadd.f32 %v4948, %v4949
      %v4951 = vrot.slane %v4950, 2
      %v4952 = vadd.f32 %v4950, %v4951
      %v4953 = vrot.slane %v4952, 1
      %v4954 = vadd.f32 %v4952, %v4953
      %v4955 = vadd.f32 %v4918, %v4922
      %v4956 = vrot.slane %v4955, 4
      %v4957 = vadd.f32 %v4955, %v4956
      %v4958 = vrot.slane %v4957, 2
      %v4959 = vadd.f32 %v4957, %v4958
      %v4960 = vrot.slane %v4959, 1
      %v4961 = vadd.f32 %v4959, %v4960
      %v4962 = vrcp.pop 16.0
      %v4963 = vmul.f32 %v4954, %v4962
      %v4964 = vmul.f32 %v4961, %v4962
      %vm4965 = vcmask 1040384
      %v4966 = vsel %vm4965, %v4940, %v4963
      %v4967 = vsel %vm4965, %v4947, %v4964
      %v4968 = vld [vmem:[%s59] sm:$0x3]
      %4970 = vset.pattern.permute.xlu0 24
      %4971 = vperm.xlu0 %4970, %v4968
      %v4972 = vpop.permute.xlu0 %4971
      %v4974 = vmul.f32 %v4972, %v4966
      %v4975 = vmul.f32 %v4972, %v4967
      %4976 = vrot.lane.b32.xlu0 %v4966, 51
      %v4977 = vpop.permute.xlu0 %4976
      %4978 = vrot.lane.b32.xlu0 %v4967, 51
      %v4979 = vpop.permute.xlu0 %4978
      %vm4980 = vcmp.lt.s32.totalorder %v2529, 51
      %v4981 = vsel %vm4980, %v4977, %v4979
      %v4982 = vsel %vm4980, %v4979, %v4977
      %v4983 = vld [vmem:[%s9] ss:$8 sm:$0x3]
      %v4985 = vlaneseq
      %v4986 = vshrl.u32 %v4985, 7
      %v4987 = vsub.s32 0, %v4986
      %v4988 = vrot.slane %v4983, %v4987
      %v4989 = vlaneseq
      %v4990 = vshrl.u32 %v4989, 7
      %v4991 = vsub.s32 1, %v4990
      %v4992 = vrot.slane %v4983, %v4991
      %v4995 = vmul.f32 %v4982, %v4988
      %v4996 = vmul.f32 %v4981, %v4992
      %4997 = vset.pattern.permute.xlu0 0
      %4998 = vperm.xlu0 %4997, %v4968
      %v4999 = vpop.permute.xlu0 %4998
      %v5001 = vmul.f32 %v4999, %v4995
      %v5002 = vmul.f32 %v4999, %v4996
      %v5003 = vadd.f32 %v4974, %v5001
      %v5004 = vadd.f32 %v4975, %v5002
      %5005 = vrot.lane.b32.xlu0 %v4966, 50
      %v5006 = vpop.permute.xlu0 %5005
      %5007 = vrot.lane.b32.xlu0 %v4967, 50
      %v5008 = vpop.permute.xlu0 %5007
      %vm5009 = vcmp.lt.s32.totalorder %v2529, 50
      %v5010 = vsel %vm5009, %v5006, %v5008
      %v5011 = vsel %vm5009, %v5008, %v5006
      %s5012 = scalar_lea.vmem %s9, 1
      %v5013 = vld [vmem:[%s5012] ss:$8 sm:$0x3]
      %v5015 = vlaneseq
      %v5016 = vshrl.u32 %v5015, 7
      %v5017 = vsub.s32 0, %v5016
      %v5018 = vrot.slane %v5013, %v5017
      %v5019 = vlaneseq
      %v5020 = vshrl.u32 %v5019, 7
      %v5021 = vsub.s32 1, %v5020
      %v5022 = vrot.slane %v5013, %v5021
      %v5025 = vmul.f32 %v5011, %v5018
      %v5026 = vmul.f32 %v5010, %v5022
      %5027 = vset.pattern.permute.xlu0 1
      %5028 = vperm.xlu0 %5027, %v4968
      %v5029 = vpop.permute.xlu0 %5028
      %v5031 = vmul.f32 %v5029, %v5025
      %v5032 = vmul.f32 %v5029, %v5026
      %v5033 = vadd.f32 %v5003, %v5031
      %v5034 = vadd.f32 %v5004, %v5032
      %5035 = vrot.lane.b32.xlu0 %v4966, 49
      %v5036 = vpop.permute.xlu0 %5035
      %5037 = vrot.lane.b32.xlu0 %v4967, 49
      %v5038 = vpop.permute.xlu0 %5037
      %vm5039 = vcmp.lt.s32.totalorder %v2529, 49
      %v5040 = vsel %vm5039, %v5036, %v5038
      %v5041 = vsel %vm5039, %v5038, %v5036
      %s5042 = scalar_lea.vmem %s9, 2
      %v5043 = vld [vmem:[%s5042] ss:$8 sm:$0x3]
      %v5045 = vlaneseq
      %v5046 = vshrl.u32 %v5045, 7
      %v5047 = vsub.s32 0, %v5046
      %v5048 = vrot.slane %v5043, %v5047
      %v5049 = vlaneseq
      %v5050 = vshrl.u32 %v5049, 7
      %v5051 = vsub.s32 1, %v5050
      %v5052 = vrot.slane %v5043, %v5051
      %v5055 = vmul.f32 %v5041, %v5048
      %v5056 = vmul.f32 %v5040, %v5052
      %5057 = vset.pattern.permute.xlu0 2
      %5058 = vperm.xlu0 %5057, %v4968
      %v5059 = vpop.permute.xlu0 %5058
      %v5061 = vmul.f32 %v5059, %v5055
      %v5062 = vmul.f32 %v5059, %v5056
      %v5063 = vadd.f32 %v5033, %v5061
      %v5064 = vadd.f32 %v5034, %v5062
      %5065 = vrot.lane.b32.xlu0 %v4966, 48
      %v5066 = vpop.permute.xlu0 %5065
      %5067 = vrot.lane.b32.xlu0 %v4967, 48
      %v5068 = vpop.permute.xlu0 %5067
      %vm5069 = vcmp.lt.s32.totalorder %v2529, 48
      %v5070 = vsel %vm5069, %v5066, %v5068
      %v5071 = vsel %vm5069, %v5068, %v5066
      %s5072 = scalar_lea.vmem %s9, 3
      %v5073 = vld [vmem:[%s5072] ss:$8 sm:$0x3]
      %v5075 = vlaneseq
      %v5076 = vshrl.u32 %v5075, 7
      %v5077 = vsub.s32 0, %v5076
      %v5078 = vrot.slane %v5073, %v5077
      %v5079 = vlaneseq
      %v5080 = vshrl.u32 %v5079, 7
      %v5081 = vsub.s32 1, %v5080
      %v5082 = vrot.slane %v5073, %v5081
      %v5085 = vmul.f32 %v5071, %v5078
      %v5086 = vmul.f32 %v5070, %v5082
      %5087 = vset.pattern.permute.xlu0 3
      %5088 = vperm.xlu0 %5087, %v4968
      %v5089 = vpop.permute.xlu0 %5088
      %v5091 = vmul.f32 %v5089, %v5085
      %v5092 = vmul.f32 %v5089, %v5086
      %v5093 = vadd.f32 %v5063, %v5091
      %v5094 = vadd.f32 %v5064, %v5092
      %5095 = vrot.lane.b32.xlu0 %v4966, 47
      %v5096 = vpop.permute.xlu0 %5095
      %5097 = vrot.lane.b32.xlu0 %v4967, 47
      %v5098 = vpop.permute.xlu0 %5097
      %vm5099 = vcmp.lt.s32.totalorder %v2529, 47
      %v5100 = vsel %vm5099, %v5096, %v5098
      %v5101 = vsel %vm5099, %v5098, %v5096
      %s5102 = scalar_lea.vmem %s9, 4
      %v5103 = vld [vmem:[%s5102] ss:$8 sm:$0x3]
      %v5105 = vlaneseq
      %v5106 = vshrl.u32 %v5105, 7
      %v5107 = vsub.s32 0, %v5106
      %v5108 = vrot.slane %v5103, %v5107
      %v5109 = vlaneseq
      %v5110 = vshrl.u32 %v5109, 7
      %v5111 = vsub.s32 1, %v5110
      %v5112 = vrot.slane %v5103, %v5111
      %v5115 = vmul.f32 %v5101, %v5108
      %v5116 = vmul.f32 %v5100, %v5112
      %5117 = vset.pattern.permute.xlu0 4
      %5118 = vperm.xlu0 %5117, %v4968
      %v5119 = vpop.permute.xlu0 %5118
      %v5121 = vmul.f32 %v5119, %v5115
      %v5122 = vmul.f32 %v5119, %v5116
      %v5123 = vadd.f32 %v5093, %v5121
      %v5124 = vadd.f32 %v5094, %v5122
      %5125 = vrot.lane.b32.xlu0 %v4966, 46
      %v5126 = vpop.permute.xlu0 %5125
      %5127 = vrot.lane.b32.xlu0 %v4967, 46
      %v5128 = vpop.permute.xlu0 %5127
      %vm5129 = vcmp.lt.s32.totalorder %v2529, 46
      %v5130 = vsel %vm5129, %v5126, %v5128
      %v5131 = vsel %vm5129, %v5128, %v5126
      %s5132 = scalar_lea.vmem %s9, 5
      %v5133 = vld [vmem:[%s5132] ss:$8 sm:$0x3]
      %v5135 = vlaneseq
      %v5136 = vshrl.u32 %v5135, 7
      %v5137 = vsub.s32 0, %v5136
      %v5138 = vrot.slane %v5133, %v5137
      %v5139 = vlaneseq
      %v5140 = vshrl.u32 %v5139, 7
      %v5141 = vsub.s32 1, %v5140
      %v5142 = vrot.slane %v5133, %v5141
      %v5145 = vmul.f32 %v5131, %v5138
      %v5146 = vmul.f32 %v5130, %v5142
      %5147 = vset.pattern.permute.xlu0 5
      %5148 = vperm.xlu0 %5147, %v4968
      %v5149 = vpop.permute.xlu0 %5148
      %v5151 = vmul.f32 %v5149, %v5145
      %v5152 = vmul.f32 %v5149, %v5146
      %v5153 = vadd.f32 %v5123, %v5151
      %v5154 = vadd.f32 %v5124, %v5152
      %5155 = vrot.lane.b32.xlu0 %v4966, 45
      %v5156 = vpop.permute.xlu0 %5155
      %5157 = vrot.lane.b32.xlu0 %v4967, 45
      %v5158 = vpop.permute.xlu0 %5157
      %vm5159 = vcmp.lt.s32.totalorder %v2529, 45
      %v5160 = vsel %vm5159, %v5156, %v5158
      %v5161 = vsel %vm5159, %v5158, %v5156
      %s5162 = scalar_lea.vmem %s9, 6
      %v5163 = vld [vmem:[%s5162] ss:$8 sm:$0x3]
      %v5165 = vlaneseq
      %v5166 = vshrl.u32 %v5165, 7
      %v5167 = vsub.s32 0, %v5166
      %v5168 = vrot.slane %v5163, %v5167
      %v5169 = vlaneseq
      %v5170 = vshrl.u32 %v5169, 7
      %v5171 = vsub.s32 1, %v5170
      %v5172 = vrot.slane %v5163, %v5171
      %v5175 = vmul.f32 %v5161, %v5168
      %v5176 = vmul.f32 %v5160, %v5172
      %5177 = vset.pattern.permute.xlu0 6
      %5178 = vperm.xlu0 %5177, %v4968
      %v5179 = vpop.permute.xlu0 %5178
      %v5181 = vmul.f32 %v5179, %v5175
      %v5182 = vmul.f32 %v5179, %v5176
      %v5183 = vadd.f32 %v5153, %v5181
      %v5184 = vadd.f32 %v5154, %v5182
      %5185 = vrot.lane.b32.xlu0 %v4966, 35
      %v5186 = vpop.permute.xlu0 %5185
      %5187 = vrot.lane.b32.xlu0 %v4967, 35
      %v5188 = vpop.permute.xlu0 %5187
      %vm5189 = vcmp.lt.s32.totalorder %v2529, 35
      %v5190 = vsel %vm5189, %v5186, %v5188
      %v5191 = vsel %vm5189, %v5188, %v5186
      %s5192 = scalar_lea.vmem %s9, 7
      %v5193 = vld [vmem:[%s5192] ss:$8 sm:$0x3]
      %v5195 = vlaneseq
      %v5196 = vshrl.u32 %v5195, 7
      %v5197 = vsub.s32 0, %v5196
      %v5198 = vrot.slane %v5193, %v5197
      %v5199 = vlaneseq
      %v5200 = vshrl.u32 %v5199, 7
      %v5201 = vsub.s32 1, %v5200
      %v5202 = vrot.slane %v5193, %v5201
      %v5205 = vmul.f32 %v5191, %v5198
      %v5206 = vmul.f32 %v5190, %v5202
      %5207 = vset.pattern.permute.xlu0 7
      %5208 = vperm.xlu0 %5207, %v4968
      %v5209 = vpop.permute.xlu0 %5208
      %v5211 = vmul.f32 %v5209, %v5205
      %v5212 = vmul.f32 %v5209, %v5206
      %v5213 = vadd.f32 %v5183, %v5211
      %v5214 = vadd.f32 %v5184, %v5212
      %5215 = vrot.lane.b32.xlu0 %v4966, 34
      %v5216 = vpop.permute.xlu0 %5215
      %5217 = vrot.lane.b32.xlu0 %v4967, 34
      %v5218 = vpop.permute.xlu0 %5217
      %vm5219 = vcmp.lt.s32.totalorder %v2529, 34
      %v5220 = vsel %vm5219, %v5216, %v5218
      %v5221 = vsel %vm5219, %v5218, %v5216
      %s5222 = scalar_lea.vmem %s9, 16
      %v5223 = vld [vmem:[%s5222] ss:$8 sm:$0x3]
      %v5225 = vlaneseq
      %v5226 = vshrl.u32 %v5225, 7
      %v5227 = vsub.s32 0, %v5226
      %v5228 = vrot.slane %v5223, %v5227
      %v5229 = vlaneseq
      %v5230 = vshrl.u32 %v5229, 7
      %v5231 = vsub.s32 1, %v5230
      %v5232 = vrot.slane %v5223, %v5231
      %v5235 = vmul.f32 %v5221, %v5228
      %v5236 = vmul.f32 %v5220, %v5232
      %5237 = vset.pattern.permute.xlu0 8
      %5238 = vperm.xlu0 %5237, %v4968
      %v5239 = vpop.permute.xlu0 %5238
      %v5241 = vmul.f32 %v5239, %v5235
      %v5242 = vmul.f32 %v5239, %v5236
      %v5243 = vadd.f32 %v5213, %v5241
      %v5244 = vadd.f32 %v5214, %v5242
      %5245 = vrot.lane.b32.xlu0 %v4966, 33
      %v5246 = vpop.permute.xlu0 %5245
      %5247 = vrot.lane.b32.xlu0 %v4967, 33
      %v5248 = vpop.permute.xlu0 %5247
      %vm5249 = vcmp.lt.s32.totalorder %v2529, 33
      %v5250 = vsel %vm5249, %v5246, %v5248
      %v5251 = vsel %vm5249, %v5248, %v5246
      %s5252 = scalar_lea.vmem %s9, 17
      %v5253 = vld [vmem:[%s5252] ss:$8 sm:$0x3]
      %v5255 = vlaneseq
      %v5256 = vshrl.u32 %v5255, 7
      %v5257 = vsub.s32 0, %v5256
      %v5258 = vrot.slane %v5253, %v5257
      %v5259 = vlaneseq
      %v5260 = vshrl.u32 %v5259, 7
      %v5261 = vsub.s32 1, %v5260
      %v5262 = vrot.slane %v5253, %v5261
      %v5265 = vmul.f32 %v5251, %v5258
      %v5266 = vmul.f32 %v5250, %v5262
      %5267 = vset.pattern.permute.xlu0 9
      %5268 = vperm.xlu0 %5267, %v4968
      %v5269 = vpop.permute.xlu0 %5268
      %v5271 = vmul.f32 %v5269, %v5265
      %v5272 = vmul.f32 %v5269, %v5266
      %v5273 = vadd.f32 %v5243, %v5271
      %v5274 = vadd.f32 %v5244, %v5272
      %5275 = vrot.lane.b32.xlu0 %v4966, 32
      %v5276 = vpop.permute.xlu0 %5275
      %5277 = vrot.lane.b32.xlu0 %v4967, 32
      %v5278 = vpop.permute.xlu0 %5277
      %vm5279 = vcmp.lt.s32.totalorder %v2529, 32
      %v5280 = vsel %vm5279, %v5276, %v5278
      %v5281 = vsel %vm5279, %v5278, %v5276
      %s5282 = scalar_lea.vmem %s9, 18
      %v5283 = vld [vmem:[%s5282] ss:$8 sm:$0x3]
      %v5285 = vlaneseq
      %v5286 = vshrl.u32 %v5285, 7
      %v5287 = vsub.s32 0, %v5286
      %v5288 = vrot.slane %v5283, %v5287
      %v5289 = vlaneseq
      %v5290 = vshrl.u32 %v5289, 7
      %v5291 = vsub.s32 1, %v5290
      %v5292 = vrot.slane %v5283, %v5291
      %v5295 = vmul.f32 %v5281, %v5288
      %v5296 = vmul.f32 %v5280, %v5292
      %5297 = vset.pattern.permute.xlu0 10
      %5298 = vperm.xlu0 %5297, %v4968
      %v5299 = vpop.permute.xlu0 %5298
      %v5301 = vmul.f32 %v5299, %v5295
      %v5302 = vmul.f32 %v5299, %v5296
      %v5303 = vadd.f32 %v5273, %v5301
      %v5304 = vadd.f32 %v5274, %v5302
      %5305 = vrot.lane.b32.xlu0 %v4966, 31
      %v5306 = vpop.permute.xlu0 %5305
      %5307 = vrot.lane.b32.xlu0 %v4967, 31
      %v5308 = vpop.permute.xlu0 %5307
      %vm5309 = vcmp.lt.s32.totalorder %v2529, 31
      %v5310 = vsel %vm5309, %v5306, %v5308
      %v5311 = vsel %vm5309, %v5308, %v5306
      %s5312 = scalar_lea.vmem %s9, 19
      %v5313 = vld [vmem:[%s5312] ss:$8 sm:$0x3]
      %v5315 = vlaneseq
      %v5316 = vshrl.u32 %v5315, 7
      %v5317 = vsub.s32 0, %v5316
      %v5318 = vrot.slane %v5313, %v5317
      %v5319 = vlaneseq
      %v5320 = vshrl.u32 %v5319, 7
      %v5321 = vsub.s32 1, %v5320
      %v5322 = vrot.slane %v5313, %v5321
      %v5325 = vmul.f32 %v5311, %v5318
      %v5326 = vmul.f32 %v5310, %v5322
      %5327 = vset.pattern.permute.xlu0 11
      %5328 = vperm.xlu0 %5327, %v4968
      %v5329 = vpop.permute.xlu0 %5328
      %v5331 = vmul.f32 %v5329, %v5325
      %v5332 = vmul.f32 %v5329, %v5326
      %v5333 = vadd.f32 %v5303, %v5331
      %v5334 = vadd.f32 %v5304, %v5332
      %5335 = vrot.lane.b32.xlu0 %v4966, 30
      %v5336 = vpop.permute.xlu0 %5335
      %5337 = vrot.lane.b32.xlu0 %v4967, 30
      %v5338 = vpop.permute.xlu0 %5337
      %vm5339 = vcmp.lt.s32.totalorder %v2529, 30
      %v5340 = vsel %vm5339, %v5336, %v5338
      %v5341 = vsel %vm5339, %v5338, %v5336
      %s5342 = scalar_lea.vmem %s9, 20
      %v5343 = vld [vmem:[%s5342] ss:$8 sm:$0x3]
      %v5345 = vlaneseq
      %v5346 = vshrl.u32 %v5345, 7
      %v5347 = vsub.s32 0, %v5346
      %v5348 = vrot.slane %v5343, %v5347
      %v5349 = vlaneseq
      %v5350 = vshrl.u32 %v5349, 7
      %v5351 = vsub.s32 1, %v5350
      %v5352 = vrot.slane %v5343, %v5351
      %v5355 = vmul.f32 %v5341, %v5348
      %v5356 = vmul.f32 %v5340, %v5352
      %5357 = vset.pattern.permute.xlu0 12
      %5358 = vperm.xlu0 %5357, %v4968
      %v5359 = vpop.permute.xlu0 %5358
      %v5361 = vmul.f32 %v5359, %v5355
      %v5362 = vmul.f32 %v5359, %v5356
      %v5363 = vadd.f32 %v5333, %v5361
      %v5364 = vadd.f32 %v5334, %v5362
      %5365 = vrot.lane.b32.xlu0 %v4966, 29
      %v5366 = vpop.permute.xlu0 %5365
      %5367 = vrot.lane.b32.xlu0 %v4967, 29
      %v5368 = vpop.permute.xlu0 %5367
      %vm5369 = vcmp.lt.s32.totalorder %v2529, 29
      %v5370 = vsel %vm5369, %v5366, %v5368
      %v5371 = vsel %vm5369, %v5368, %v5366
      %s5372 = scalar_lea.vmem %s9, 21
      %v5373 = vld [vmem:[%s5372] ss:$8 sm:$0x3]
      %v5375 = vlaneseq
      %v5376 = vshrl.u32 %v5375, 7
      %v5377 = vsub.s32 0, %v5376
      %v5378 = vrot.slane %v5373, %v5377
      %v5379 = vlaneseq
      %v5380 = vshrl.u32 %v5379, 7
      %v5381 = vsub.s32 1, %v5380
      %v5382 = vrot.slane %v5373, %v5381
      %v5385 = vmul.f32 %v5371, %v5378
      %v5386 = vmul.f32 %v5370, %v5382
      %5387 = vset.pattern.permute.xlu0 13
      %5388 = vperm.xlu0 %5387, %v4968
      %v5389 = vpop.permute.xlu0 %5388
      %v5391 = vmul.f32 %v5389, %v5385
      %v5392 = vmul.f32 %v5389, %v5386
      %v5393 = vadd.f32 %v5363, %v5391
      %v5394 = vadd.f32 %v5364, %v5392
      %5395 = vrot.lane.b32.xlu0 %v4966, 19
      %v5396 = vpop.permute.xlu0 %5395
      %5397 = vrot.lane.b32.xlu0 %v4967, 19
      %v5398 = vpop.permute.xlu0 %5397
      %vm5399 = vcmp.lt.s32.totalorder %v2529, 19
      %v5400 = vsel %vm5399, %v5396, %v5398
      %v5401 = vsel %vm5399, %v5398, %v5396
      %s5402 = scalar_lea.vmem %s9, 22
      %v5403 = vld [vmem:[%s5402] ss:$8 sm:$0x3]
      %v5405 = vlaneseq
      %v5406 = vshrl.u32 %v5405, 7
      %v5407 = vsub.s32 0, %v5406
      %v5408 = vrot.slane %v5403, %v5407
      %v5409 = vlaneseq
      %v5410 = vshrl.u32 %v5409, 7
      %v5411 = vsub.s32 1, %v5410
      %v5412 = vrot.slane %v5403, %v5411
      %v5415 = vmul.f32 %v5401, %v5408
      %v5416 = vmul.f32 %v5400, %v5412
      %5417 = vset.pattern.permute.xlu0 14
      %5418 = vperm.xlu0 %5417, %v4968
      %v5419 = vpop.permute.xlu0 %5418
      %v5421 = vmul.f32 %v5419, %v5415
      %v5422 = vmul.f32 %v5419, %v5416
      %v5423 = vadd.f32 %v5393, %v5421
      %v5424 = vadd.f32 %v5394, %v5422
      %5425 = vrot.lane.b32.xlu0 %v4966, 18
      %v5426 = vpop.permute.xlu0 %5425
      %5427 = vrot.lane.b32.xlu0 %v4967, 18
      %v5428 = vpop.permute.xlu0 %5427
      %vm5429 = vcmp.lt.s32.totalorder %v2529, 18
      %v5430 = vsel %vm5429, %v5426, %v5428
      %v5431 = vsel %vm5429, %v5428, %v5426
      %s5432 = scalar_lea.vmem %s9, 23
      %v5433 = vld [vmem:[%s5432] ss:$8 sm:$0x3]
      %v5435 = vlaneseq
      %v5436 = vshrl.u32 %v5435, 7
      %v5437 = vsub.s32 0, %v5436
      %v5438 = vrot.slane %v5433, %v5437
      %v5439 = vlaneseq
      %v5440 = vshrl.u32 %v5439, 7
      %v5441 = vsub.s32 1, %v5440
      %v5442 = vrot.slane %v5433, %v5441
      %v5445 = vmul.f32 %v5431, %v5438
      %v5446 = vmul.f32 %v5430, %v5442
      %5447 = vset.pattern.permute.xlu0 15
      %5448 = vperm.xlu0 %5447, %v4968
      %v5449 = vpop.permute.xlu0 %5448
      %v5451 = vmul.f32 %v5449, %v5445
      %v5452 = vmul.f32 %v5449, %v5446
      %v5453 = vadd.f32 %v5423, %v5451
      %v5454 = vadd.f32 %v5424, %v5452
      %5455 = vrot.lane.b32.xlu0 %v4966, 17
      %v5456 = vpop.permute.xlu0 %5455
      %5457 = vrot.lane.b32.xlu0 %v4967, 17
      %v5458 = vpop.permute.xlu0 %5457
      %v5459 = vsel %vm2530, %v5456, %v5458
      %v5460 = vsel %vm2530, %v5458, %v5456
      %s5461 = scalar_lea.vmem %s9, 32
      %v5462 = vld [vmem:[%s5461] ss:$8 sm:$0x3]
      %v5464 = vlaneseq
      %v5465 = vshrl.u32 %v5464, 7
      %v5466 = vsub.s32 0, %v5465
      %v5467 = vrot.slane %v5462, %v5466
      %v5468 = vlaneseq
      %v5469 = vshrl.u32 %v5468, 7
      %v5470 = vsub.s32 1, %v5469
      %v5471 = vrot.slane %v5462, %v5470
      %v5474 = vmul.f32 %v5460, %v5467
      %v5475 = vmul.f32 %v5459, %v5471
      %5476 = vset.pattern.permute.xlu0 16
      %5477 = vperm.xlu0 %5476, %v4968
      %v5478 = vpop.permute.xlu0 %5477
      %v5480 = vmul.f32 %v5478, %v5474
      %v5481 = vmul.f32 %v5478, %v5475
      %v5482 = vadd.f32 %v5453, %v5480
      %v5483 = vadd.f32 %v5454, %v5481
      %5484 = vrot.lane.b32.xlu0 %v4966, 16
      %v5485 = vpop.permute.xlu0 %5484
      %5486 = vrot.lane.b32.xlu0 %v4967, 16
      %v5487 = vpop.permute.xlu0 %5486
      %v5488 = vsel %vm2703, %v5485, %v5487
      %v5489 = vsel %vm2703, %v5487, %v5485
      %s5490 = scalar_lea.vmem %s9, 33
      %v5491 = vld [vmem:[%s5490] ss:$8 sm:$0x3]
      %v5493 = vlaneseq
      %v5494 = vshrl.u32 %v5493, 7
      %v5495 = vsub.s32 0, %v5494
      %v5496 = vrot.slane %v5491, %v5495
      %v5497 = vlaneseq
      %v5498 = vshrl.u32 %v5497, 7
      %v5499 = vsub.s32 1, %v5498
      %v5500 = vrot.slane %v5491, %v5499
      %v5503 = vmul.f32 %v5489, %v5496
      %v5504 = vmul.f32 %v5488, %v5500
      %5505 = vset.pattern.permute.xlu0 17
      %5506 = vperm.xlu0 %5505, %v4968
      %v5507 = vpop.permute.xlu0 %5506
      %v5509 = vmul.f32 %v5507, %v5503
      %v5510 = vmul.f32 %v5507, %v5504
      %v5511 = vadd.f32 %v5482, %v5509
      %v5512 = vadd.f32 %v5483, %v5510
      %5513 = vrot.lane.b32.xlu0 %v4966, 15
      %v5514 = vpop.permute.xlu0 %5513
      %5515 = vrot.lane.b32.xlu0 %v4967, 15
      %v5516 = vpop.permute.xlu0 %5515
      %v5517 = vsel %vm2877, %v5514, %v5516
      %v5518 = vsel %vm2877, %v5516, %v5514
      %s5519 = scalar_lea.vmem %s9, 34
      %v5520 = vld [vmem:[%s5519] ss:$8 sm:$0x3]
      %v5522 = vlaneseq
      %v5523 = vshrl.u32 %v5522, 7
      %v5524 = vsub.s32 0, %v5523
      %v5525 = vrot.slane %v5520, %v5524
      %v5526 = vlaneseq
      %v5527 = vshrl.u32 %v5526, 7
      %v5528 = vsub.s32 1, %v5527
      %v5529 = vrot.slane %v5520, %v5528
      %v5532 = vmul.f32 %v5518, %v5525
      %v5533 = vmul.f32 %v5517, %v5529
      %5534 = vset.pattern.permute.xlu0 18
      %5535 = vperm.xlu0 %5534, %v4968
      %v5536 = vpop.permute.xlu0 %5535
      %v5538 = vmul.f32 %v5536, %v5532
      %v5539 = vmul.f32 %v5536, %v5533
      %v5540 = vadd.f32 %v5511, %v5538
      %v5541 = vadd.f32 %v5512, %v5539
      %5542 = vrot.lane.b32.xlu0 %v4966, 14
      %v5543 = vpop.permute.xlu0 %5542
      %5544 = vrot.lane.b32.xlu0 %v4967, 14
      %v5545 = vpop.permute.xlu0 %5544
      %vm5546 = vcmp.lt.s32.totalorder %v2529, 14
      %v5547 = vsel %vm5546, %v5543, %v5545
      %v5548 = vsel %vm5546, %v5545, %v5543
      %s5549 = scalar_lea.vmem %s9, 35
      %v5550 = vld [vmem:[%s5549] ss:$8 sm:$0x3]
      %v5552 = vlaneseq
      %v5553 = vshrl.u32 %v5552, 7
      %v5554 = vsub.s32 0, %v5553
      %v5555 = vrot.slane %v5550, %v5554
      %v5556 = vlaneseq
      %v5557 = vshrl.u32 %v5556, 7
      %v5558 = vsub.s32 1, %v5557
      %v5559 = vrot.slane %v5550, %v5558
      %v5562 = vmul.f32 %v5548, %v5555
      %v5563 = vmul.f32 %v5547, %v5559
      %5564 = vset.pattern.permute.xlu0 19
      %5565 = vperm.xlu0 %5564, %v4968
      %v5566 = vpop.permute.xlu0 %5565
      %v5568 = vmul.f32 %v5566, %v5562
      %v5569 = vmul.f32 %v5566, %v5563
      %v5570 = vadd.f32 %v5540, %v5568
      %v5571 = vadd.f32 %v5541, %v5569
      %5572 = vrot.lane.b32.xlu0 %v4966, 13
      %v5573 = vpop.permute.xlu0 %5572
      %5574 = vrot.lane.b32.xlu0 %v4967, 13
      %v5575 = vpop.permute.xlu0 %5574
      %vm5576 = vcmp.lt.s32.totalorder %v2529, 13
      %v5577 = vsel %vm5576, %v5573, %v5575
      %v5578 = vsel %vm5576, %v5575, %v5573
      %s5579 = scalar_lea.vmem %s9, 36
      %v5580 = vld [vmem:[%s5579] ss:$8 sm:$0x3]
      %v5582 = vlaneseq
      %v5583 = vshrl.u32 %v5582, 7
      %v5584 = vsub.s32 0, %v5583
      %v5585 = vrot.slane %v5580, %v5584
      %v5586 = vlaneseq
      %v5587 = vshrl.u32 %v5586, 7
      %v5588 = vsub.s32 1, %v5587
      %v5589 = vrot.slane %v5580, %v5588
      %v5592 = vmul.f32 %v5578, %v5585
      %v5593 = vmul.f32 %v5577, %v5589
      %5594 = vset.pattern.permute.xlu0 20
      %5595 = vperm.xlu0 %5594, %v4968
      %v5596 = vpop.permute.xlu0 %5595
      %v5598 = vmul.f32 %v5596, %v5592
      %v5599 = vmul.f32 %v5596, %v5593
      %v5600 = vadd.f32 %v5570, %v5598
      %v5601 = vadd.f32 %v5571, %v5599
      %5602 = vrot.lane.b32.xlu0 %v4966, 3
      %v5603 = vpop.permute.xlu0 %5602
      %5604 = vrot.lane.b32.xlu0 %v4967, 3
      %v5605 = vpop.permute.xlu0 %5604
      %vm5606 = vcmp.lt.s32.totalorder %v2529, 3
      %v5607 = vsel %vm5606, %v5603, %v5605
      %v5608 = vsel %vm5606, %v5605, %v5603
      %s5609 = scalar_lea.vmem %s9, 37
      %v5610 = vld [vmem:[%s5609] ss:$8 sm:$0x3]
      %v5612 = vlaneseq
      %v5613 = vshrl.u32 %v5612, 7
      %v5614 = vsub.s32 0, %v5613
      %v5615 = vrot.slane %v5610, %v5614
      %v5616 = vlaneseq
      %v5617 = vshrl.u32 %v5616, 7
      %v5618 = vsub.s32 1, %v5617
      %v5619 = vrot.slane %v5610, %v5618
      %v5622 = vmul.f32 %v5608, %v5615
      %v5623 = vmul.f32 %v5607, %v5619
      %5624 = vset.pattern.permute.xlu0 21
      %5625 = vperm.xlu0 %5624, %v4968
      %v5626 = vpop.permute.xlu0 %5625
      %v5628 = vmul.f32 %v5626, %v5622
      %v5629 = vmul.f32 %v5626, %v5623
      %v5630 = vadd.f32 %v5600, %v5628
      %v5631 = vadd.f32 %v5601, %v5629
      %5632 = vrot.lane.b32.xlu0 %v4966, 2
      %v5633 = vpop.permute.xlu0 %5632
      %5634 = vrot.lane.b32.xlu0 %v4967, 2
      %v5635 = vpop.permute.xlu0 %5634
      %vm5636 = vcmp.lt.s32.totalorder %v2529, 2
      %v5637 = vsel %vm5636, %v5633, %v5635
      %v5638 = vsel %vm5636, %v5635, %v5633
      %s5639 = scalar_lea.vmem %s9, 38
      %v5640 = vld [vmem:[%s5639] ss:$8 sm:$0x3]
      %v5642 = vlaneseq
      %v5643 = vshrl.u32 %v5642, 7
      %v5644 = vsub.s32 0, %v5643
      %v5645 = vrot.slane %v5640, %v5644
      %v5646 = vlaneseq
      %v5647 = vshrl.u32 %v5646, 7
      %v5648 = vsub.s32 1, %v5647
      %v5649 = vrot.slane %v5640, %v5648
      %v5652 = vmul.f32 %v5638, %v5645
      %v5653 = vmul.f32 %v5637, %v5649
      %5654 = vset.pattern.permute.xlu0 22
      %5655 = vperm.xlu0 %5654, %v4968
      %v5656 = vpop.permute.xlu0 %5655
      %v5658 = vmul.f32 %v5656, %v5652
      %v5659 = vmul.f32 %v5656, %v5653
      %v5660 = vadd.f32 %v5630, %v5658
      %v5661 = vadd.f32 %v5631, %v5659
      %5662 = vrot.lane.b32.xlu0 %v4966, 1
      %v5663 = vpop.permute.xlu0 %5662
      %5664 = vrot.lane.b32.xlu0 %v4967, 1
      %v5665 = vpop.permute.xlu0 %5664
      %v5666 = vsel %vm3051, %v5663, %v5665
      %v5667 = vsel %vm3051, %v5665, %v5663
      %s5668 = scalar_lea.vmem %s9, 39
      %v5669 = vld [vmem:[%s5668] ss:$8 sm:$0x3]
      %v5671 = vlaneseq
      %v5672 = vshrl.u32 %v5671, 7
      %v5673 = vsub.s32 0, %v5672
      %v5674 = vrot.slane %v5669, %v5673
      %v5675 = vlaneseq
      %v5676 = vshrl.u32 %v5675, 7
      %v5677 = vsub.s32 1, %v5676
      %v5678 = vrot.slane %v5669, %v5677
      %v5681 = vmul.f32 %v5667, %v5674
      %v5682 = vmul.f32 %v5666, %v5678
      %5683 = vset.pattern.permute.xlu0 23
      %5684 = vperm.xlu0 %5683, %v4968
      %v5685 = vpop.permute.xlu0 %5684
      %v5687 = vmul.f32 %v5685, %v5681
      %v5688 = vmul.f32 %v5685, %v5682
      %v5689 = vadd.f32 %v5660, %v5687
      %v5690 = vadd.f32 %v5661, %v5688
      %5691 = vrot.lane.b32.xlu0 %v4966, 127
      %v5692 = vpop.permute.xlu0 %5691
      %5693 = vrot.lane.b32.xlu0 %v4967, 127
      %v5694 = vpop.permute.xlu0 %5693
      %v5695 = vsel %vm3225, %v5692, %v5694
      %v5696 = vsel %vm3225, %v5694, %v5692
      %s5697 = scalar_lea.vmem %s9, 49
      %v5698 = vld [vmem:[%s5697] ss:$8 sm:$0x3]
      %v5700 = vlaneseq
      %v5701 = vshrl.u32 %v5700, 7
      %v5702 = vsub.s32 0, %v5701
      %v5703 = vrot.slane %v5698, %v5702
      %v5704 = vlaneseq
      %v5705 = vshrl.u32 %v5704, 7
      %v5706 = vsub.s32 1, %v5705
      %v5707 = vrot.slane %v5698, %v5706
      %v5710 = vmul.f32 %v5695, %v5703
      %v5711 = vmul.f32 %v5696, %v5707
      %5712 = vset.pattern.permute.xlu0 25
      %5713 = vperm.xlu0 %5712, %v4968
      %v5714 = vpop.permute.xlu0 %5713
      %v5716 = vmul.f32 %v5714, %v5710
      %v5717 = vmul.f32 %v5714, %v5711
      %v5718 = vadd.f32 %v5689, %v5716
      %v5719 = vadd.f32 %v5690, %v5717
      %5720 = vrot.lane.b32.xlu0 %v4966, 126
      %v5721 = vpop.permute.xlu0 %5720
      %5722 = vrot.lane.b32.xlu0 %v4967, 126
      %v5723 = vpop.permute.xlu0 %5722
      %vm5724 = vcmp.lt.s32.totalorder %v2529, 126
      %v5725 = vsel %vm5724, %v5721, %v5723
      %v5726 = vsel %vm5724, %v5723, %v5721
      %s5727 = scalar_lea.vmem %s9, 50
      %v5728 = vld [vmem:[%s5727] ss:$8 sm:$0x3]
      %v5730 = vlaneseq
      %v5731 = vshrl.u32 %v5730, 7
      %v5732 = vsub.s32 0, %v5731
      %v5733 = vrot.slane %v5728, %v5732
      %v5734 = vlaneseq
      %v5735 = vshrl.u32 %v5734, 7
      %v5736 = vsub.s32 1, %v5735
      %v5737 = vrot.slane %v5728, %v5736
      %v5740 = vmul.f32 %v5725, %v5733
      %v5741 = vmul.f32 %v5726, %v5737
      %5742 = vset.pattern.permute.xlu0 26
      %5743 = vperm.xlu0 %5742, %v4968
      %v5744 = vpop.permute.xlu0 %5743
      %v5746 = vmul.f32 %v5744, %v5740
      %v5747 = vmul.f32 %v5744, %v5741
      %v5748 = vadd.f32 %v5718, %v5746
      %v5749 = vadd.f32 %v5719, %v5747
      %5750 = vrot.lane.b32.xlu0 %v4966, 125
      %v5751 = vpop.permute.xlu0 %5750
      %5752 = vrot.lane.b32.xlu0 %v4967, 125
      %v5753 = vpop.permute.xlu0 %5752
      %vm5754 = vcmp.lt.s32.totalorder %v2529, 125
      %v5755 = vsel %vm5754, %v5751, %v5753
      %v5756 = vsel %vm5754, %v5753, %v5751
      %s5757 = scalar_lea.vmem %s9, 51
      %v5758 = vld [vmem:[%s5757] ss:$8 sm:$0x3]
      %v5760 = vlaneseq
      %v5761 = vshrl.u32 %v5760, 7
      %v5762 = vsub.s32 0, %v5761
      %v5763 = vrot.slane %v5758, %v5762
      %v5764 = vlaneseq
      %v5765 = vshrl.u32 %v5764, 7
      %v5766 = vsub.s32 1, %v5765
      %v5767 = vrot.slane %v5758, %v5766
      %v5770 = vmul.f32 %v5755, %v5763
      %v5771 = vmul.f32 %v5756, %v5767
      %5772 = vset.pattern.permute.xlu0 27
      %5773 = vperm.xlu0 %5772, %v4968
      %v5774 = vpop.permute.xlu0 %5773
      %v5776 = vmul.f32 %v5774, %v5770
      %v5777 = vmul.f32 %v5774, %v5771
      %v5778 = vadd.f32 %v5748, %v5776
      %v5779 = vadd.f32 %v5749, %v5777
      %5780 = vrot.lane.b32.xlu0 %v4966, 115
      %v5781 = vpop.permute.xlu0 %5780
      %5782 = vrot.lane.b32.xlu0 %v4967, 115
      %v5783 = vpop.permute.xlu0 %5782
      %vm5784 = vcmp.lt.s32.totalorder %v2529, 115
      %v5785 = vsel %vm5784, %v5781, %v5783
      %v5786 = vsel %vm5784, %v5783, %v5781
      %s5787 = scalar_lea.vmem %s9, 52
      %v5788 = vld [vmem:[%s5787] ss:$8 sm:$0x3]
      %v5790 = vlaneseq
      %v5791 = vshrl.u32 %v5790, 7
      %v5792 = vsub.s32 0, %v5791
      %v5793 = vrot.slane %v5788, %v5792
      %v5794 = vlaneseq
      %v5795 = vshrl.u32 %v5794, 7
      %v5796 = vsub.s32 1, %v5795
      %v5797 = vrot.slane %v5788, %v5796
      %v5800 = vmul.f32 %v5785, %v5793
      %v5801 = vmul.f32 %v5786, %v5797
      %5802 = vset.pattern.permute.xlu0 28
      %5803 = vperm.xlu0 %5802, %v4968
      %v5804 = vpop.permute.xlu0 %5803
      %v5806 = vmul.f32 %v5804, %v5800
      %v5807 = vmul.f32 %v5804, %v5801
      %v5808 = vadd.f32 %v5778, %v5806
      %v5809 = vadd.f32 %v5779, %v5807
      %5810 = vrot.lane.b32.xlu0 %v4966, 114
      %v5811 = vpop.permute.xlu0 %5810
      %5812 = vrot.lane.b32.xlu0 %v4967, 114
      %v5813 = vpop.permute.xlu0 %5812
      %vm5814 = vcmp.lt.s32.totalorder %v2529, 114
      %v5815 = vsel %vm5814, %v5811, %v5813
      %v5816 = vsel %vm5814, %v5813, %v5811
      %s5817 = scalar_lea.vmem %s9, 53
      %v5818 = vld [vmem:[%s5817] ss:$8 sm:$0x3]
      %v5820 = vlaneseq
      %v5821 = vshrl.u32 %v5820, 7
      %v5822 = vsub.s32 0, %v5821
      %v5823 = vrot.slane %v5818, %v5822
      %v5824 = vlaneseq
      %v5825 = vshrl.u32 %v5824, 7
      %v5826 = vsub.s32 1, %v5825
      %v5827 = vrot.slane %v5818, %v5826
      %v5830 = vmul.f32 %v5815, %v5823
      %v5831 = vmul.f32 %v5816, %v5827
      %5832 = vset.pattern.permute.xlu0 29
      %5833 = vperm.xlu0 %5832, %v4968
      %v5834 = vpop.permute.xlu0 %5833
      %v5836 = vmul.f32 %v5834, %v5830
      %v5837 = vmul.f32 %v5834, %v5831
      %v5838 = vadd.f32 %v5808, %v5836
      %v5839 = vadd.f32 %v5809, %v5837
      %5840 = vrot.lane.b32.xlu0 %v4966, 113
      %v5841 = vpop.permute.xlu0 %5840
      %5842 = vrot.lane.b32.xlu0 %v4967, 113
      %v5843 = vpop.permute.xlu0 %5842
      %v5844 = vsel %vm3399, %v5841, %v5843
      %v5845 = vsel %vm3399, %v5843, %v5841
      %s5846 = scalar_lea.vmem %s9, 54
      %v5847 = vld [vmem:[%s5846] ss:$8 sm:$0x3]
      %v5849 = vlaneseq
      %v5850 = vshrl.u32 %v5849, 7
      %v5851 = vsub.s32 0, %v5850
      %v5852 = vrot.slane %v5847, %v5851
      %v5853 = vlaneseq
      %v5854 = vshrl.u32 %v5853, 7
      %v5855 = vsub.s32 1, %v5854
      %v5856 = vrot.slane %v5847, %v5855
      %v5859 = vmul.f32 %v5844, %v5852
      %v5860 = vmul.f32 %v5845, %v5856
      %5861 = vset.pattern.permute.xlu0 30
      %5862 = vperm.xlu0 %5861, %v4968
      %v5863 = vpop.permute.xlu0 %5862
      %v5865 = vmul.f32 %v5863, %v5859
      %v5866 = vmul.f32 %v5863, %v5860
      %v5867 = vadd.f32 %v5838, %v5865
      %v5868 = vadd.f32 %v5839, %v5866
      %5869 = vrot.lane.b32.xlu0 %v4966, 112
      %v5870 = vpop.permute.xlu0 %5869
      %5871 = vrot.lane.b32.xlu0 %v4967, 112
      %v5872 = vpop.permute.xlu0 %5871
      %v5873 = vsel %vm3573, %v5870, %v5872
      %v5874 = vsel %vm3573, %v5872, %v5870
      %s5875 = scalar_lea.vmem %s9, 55
      %v5876 = vld [vmem:[%s5875] ss:$8 sm:$0x3]
      %v5878 = vlaneseq
      %v5879 = vshrl.u32 %v5878, 7
      %v5880 = vsub.s32 0, %v5879
      %v5881 = vrot.slane %v5876, %v5880
      %v5882 = vlaneseq
      %v5883 = vshrl.u32 %v5882, 7
      %v5884 = vsub.s32 1, %v5883
      %v5885 = vrot.slane %v5876, %v5884
      %v5888 = vmul.f32 %v5873, %v5881
      %v5889 = vmul.f32 %v5874, %v5885
      %5890 = vset.pattern.permute.xlu0 31
      %5891 = vperm.xlu0 %5890, %v4968
      %v5892 = vpop.permute.xlu0 %5891
      %v5894 = vmul.f32 %v5892, %v5888
      %v5895 = vmul.f32 %v5892, %v5889
      %v5896 = vadd.f32 %v5867, %v5894
      %v5897 = vadd.f32 %v5868, %v5895
      %5898 = vrot.lane.b32.xlu0 %v4966, 111
      %v5899 = vpop.permute.xlu0 %5898
      %5900 = vrot.lane.b32.xlu0 %v4967, 111
      %v5901 = vpop.permute.xlu0 %5900
      %v5902 = vsel %vm3747, %v5899, %v5901
      %v5903 = vsel %vm3747, %v5901, %v5899
      %s5904 = scalar_lea.vmem %s9, 64
      %v5905 = vld [vmem:[%s5904] ss:$8 sm:$0x3]
      %v5907 = vlaneseq
      %v5908 = vshrl.u32 %v5907, 7
      %v5909 = vsub.s32 0, %v5908
      %v5910 = vrot.slane %v5905, %v5909
      %v5911 = vlaneseq
      %v5912 = vshrl.u32 %v5911, 7
      %v5913 = vsub.s32 1, %v5912
      %v5914 = vrot.slane %v5905, %v5913
      %v5917 = vmul.f32 %v5902, %v5910
      %v5918 = vmul.f32 %v5903, %v5914
      %5919 = vset.pattern.permute.xlu0 32
      %5920 = vperm.xlu0 %5919, %v4968
      %v5921 = vpop.permute.xlu0 %5920
      %v5923 = vmul.f32 %v5921, %v5917
      %v5924 = vmul.f32 %v5921, %v5918
      %v5925 = vadd.f32 %v5896, %v5923
      %v5926 = vadd.f32 %v5897, %v5924
      %5927 = vrot.lane.b32.xlu0 %v4966, 110
      %v5928 = vpop.permute.xlu0 %5927
      %5929 = vrot.lane.b32.xlu0 %v4967, 110
      %v5930 = vpop.permute.xlu0 %5929
      %vm5931 = vcmp.lt.s32.totalorder %v2529, 110
      %v5932 = vsel %vm5931, %v5928, %v5930
      %v5933 = vsel %vm5931, %v5930, %v5928
      %s5934 = scalar_lea.vmem %s9, 65
      %v5935 = vld [vmem:[%s5934] ss:$8 sm:$0x3]
      %v5937 = vlaneseq
      %v5938 = vshrl.u32 %v5937, 7
      %v5939 = vsub.s32 0, %v5938
      %v5940 = vrot.slane %v5935, %v5939
      %v5941 = vlaneseq
      %v5942 = vshrl.u32 %v5941, 7
      %v5943 = vsub.s32 1, %v5942
      %v5944 = vrot.slane %v5935, %v5943
      %v5947 = vmul.f32 %v5932, %v5940
      %v5948 = vmul.f32 %v5933, %v5944
      %5949 = vset.pattern.permute.xlu0 33
      %5950 = vperm.xlu0 %5949, %v4968
      %v5951 = vpop.permute.xlu0 %5950
      %v5953 = vmul.f32 %v5951, %v5947
      %v5954 = vmul.f32 %v5951, %v5948
      %v5955 = vadd.f32 %v5925, %v5953
      %v5956 = vadd.f32 %v5926, %v5954
      %5957 = vrot.lane.b32.xlu0 %v4966, 109
      %v5958 = vpop.permute.xlu0 %5957
      %5959 = vrot.lane.b32.xlu0 %v4967, 109
      %v5960 = vpop.permute.xlu0 %5959
      %vm5961 = vcmp.lt.s32.totalorder %v2529, 109
      %v5962 = vsel %vm5961, %v5958, %v5960
      %v5963 = vsel %vm5961, %v5960, %v5958
      %s5964 = scalar_lea.vmem %s9, 66
      %v5965 = vld [vmem:[%s5964] ss:$8 sm:$0x3]
      %v5967 = vlaneseq
      %v5968 = vshrl.u32 %v5967, 7
      %v5969 = vsub.s32 0, %v5968
      %v5970 = vrot.slane %v5965, %v5969
      %v5971 = vlaneseq
      %v5972 = vshrl.u32 %v5971, 7
      %v5973 = vsub.s32 1, %v5972
      %v5974 = vrot.slane %v5965, %v5973
      %v5977 = vmul.f32 %v5962, %v5970
      %v5978 = vmul.f32 %v5963, %v5974
      %5979 = vset.pattern.permute.xlu0 34
      %5980 = vperm.xlu0 %5979, %v4968
      %v5981 = vpop.permute.xlu0 %5980
      %v5983 = vmul.f32 %v5981, %v5977
      %v5984 = vmul.f32 %v5981, %v5978
      %v5985 = vadd.f32 %v5955, %v5983
      %v5986 = vadd.f32 %v5956, %v5984
      %5987 = vrot.lane.b32.xlu0 %v4966, 99
      %v5988 = vpop.permute.xlu0 %5987
      %5989 = vrot.lane.b32.xlu0 %v4967, 99
      %v5990 = vpop.permute.xlu0 %5989
      %vm5991 = vcmp.lt.s32.totalorder %v2529, 99
      %v5992 = vsel %vm5991, %v5988, %v5990
      %v5993 = vsel %vm5991, %v5990, %v5988
      %s5994 = scalar_lea.vmem %s9, 67
      %v5995 = vld [vmem:[%s5994] ss:$8 sm:$0x3]
      %v5997 = vlaneseq
      %v5998 = vshrl.u32 %v5997, 7
      %v5999 = vsub.s32 0, %v5998
      %v6000 = vrot.slane %v5995, %v5999
      %v6001 = vlaneseq
      %v6002 = vshrl.u32 %v6001, 7
      %v6003 = vsub.s32 1, %v6002
      %v6004 = vrot.slane %v5995, %v6003
      %v6007 = vmul.f32 %v5992, %v6000
      %v6008 = vmul.f32 %v5993, %v6004
      %6009 = vset.pattern.permute.xlu0 35
      %6010 = vperm.xlu0 %6009, %v4968
      %v6011 = vpop.permute.xlu0 %6010
      %v6013 = vmul.f32 %v6011, %v6007
      %v6014 = vmul.f32 %v6011, %v6008
      %v6015 = vadd.f32 %v5985, %v6013
      %v6016 = vadd.f32 %v5986, %v6014
      %6017 = vrot.lane.b32.xlu0 %v4966, 98
      %v6018 = vpop.permute.xlu0 %6017
      %6019 = vrot.lane.b32.xlu0 %v4967, 98
      %v6020 = vpop.permute.xlu0 %6019
      %vm6021 = vcmp.lt.s32.totalorder %v2529, 98
      %v6022 = vsel %vm6021, %v6018, %v6020
      %v6023 = vsel %vm6021, %v6020, %v6018
      %s6024 = scalar_lea.vmem %s9, 68
      %v6025 = vld [vmem:[%s6024] ss:$8 sm:$0x3]
      %v6027 = vlaneseq
      %v6028 = vshrl.u32 %v6027, 7
      %v6029 = vsub.s32 0, %v6028
      %v6030 = vrot.slane %v6025, %v6029
      %v6031 = vlaneseq
      %v6032 = vshrl.u32 %v6031, 7
      %v6033 = vsub.s32 1, %v6032
      %v6034 = vrot.slane %v6025, %v6033
      %v6037 = vmul.f32 %v6022, %v6030
      %v6038 = vmul.f32 %v6023, %v6034
      %6039 = vset.pattern.permute.xlu0 36
      %6040 = vperm.xlu0 %6039, %v4968
      %v6041 = vpop.permute.xlu0 %6040
      %v6043 = vmul.f32 %v6041, %v6037
      %v6044 = vmul.f32 %v6041, %v6038
      %v6045 = vadd.f32 %v6015, %v6043
      %v6046 = vadd.f32 %v6016, %v6044
      %6047 = vrot.lane.b32.xlu0 %v4966, 97
      %v6048 = vpop.permute.xlu0 %6047
      %6049 = vrot.lane.b32.xlu0 %v4967, 97
      %v6050 = vpop.permute.xlu0 %6049
      %vm6051 = vcmp.lt.s32.totalorder %v2529, 97
      %v6052 = vsel %vm6051, %v6048, %v6050
      %v6053 = vsel %vm6051, %v6050, %v6048
      %s6054 = scalar_lea.vmem %s9, 69
      %v6055 = vld [vmem:[%s6054] ss:$8 sm:$0x3]
      %v6057 = vlaneseq
      %v6058 = vshrl.u32 %v6057, 7
      %v6059 = vsub.s32 0, %v6058
      %v6060 = vrot.slane %v6055, %v6059
      %v6061 = vlaneseq
      %v6062 = vshrl.u32 %v6061, 7
      %v6063 = vsub.s32 1, %v6062
      %v6064 = vrot.slane %v6055, %v6063
      %v6067 = vmul.f32 %v6052, %v6060
      %v6068 = vmul.f32 %v6053, %v6064
      %6069 = vset.pattern.permute.xlu0 37
      %6070 = vperm.xlu0 %6069, %v4968
      %v6071 = vpop.permute.xlu0 %6070
      %v6073 = vmul.f32 %v6071, %v6067
      %v6074 = vmul.f32 %v6071, %v6068
      %v6075 = vadd.f32 %v6045, %v6073
      %v6076 = vadd.f32 %v6046, %v6074
      %6077 = vrot.lane.b32.xlu0 %v4966, 96
      %v6078 = vpop.permute.xlu0 %6077
      %6079 = vrot.lane.b32.xlu0 %v4967, 96
      %v6080 = vpop.permute.xlu0 %6079
      %vm6081 = vcmp.lt.s32.totalorder %v2529, 96
      %v6082 = vsel %vm6081, %v6078, %v6080
      %v6083 = vsel %vm6081, %v6080, %v6078
      %s6084 = scalar_lea.vmem %s9, 70
      %v6085 = vld [vmem:[%s6084] ss:$8 sm:$0x3]
      %v6087 = vlaneseq
      %v6088 = vshrl.u32 %v6087, 7
      %v6089 = vsub.s32 0, %v6088
      %v6090 = vrot.slane %v6085, %v6089
      %v6091 = vlaneseq
      %v6092 = vshrl.u32 %v6091, 7
      %v6093 = vsub.s32 1, %v6092
      %v6094 = vrot.slane %v6085, %v6093
      %v6097 = vmul.f32 %v6082, %v6090
      %v6098 = vmul.f32 %v6083, %v6094
      %6099 = vset.pattern.permute.xlu0 38
      %6100 = vperm.xlu0 %6099, %v4968
      %v6101 = vpop.permute.xlu0 %6100
      %v6103 = vmul.f32 %v6101, %v6097
      %v6104 = vmul.f32 %v6101, %v6098
      %v6105 = vadd.f32 %v6075, %v6103
      %v6106 = vadd.f32 %v6076, %v6104
      %6107 = vrot.lane.b32.xlu0 %v4966, 95
      %v6108 = vpop.permute.xlu0 %6107
      %6109 = vrot.lane.b32.xlu0 %v4967, 95
      %v6110 = vpop.permute.xlu0 %6109
      %vm6111 = vcmp.lt.s32.totalorder %v2529, 95
      %v6112 = vsel %vm6111, %v6108, %v6110
      %v6113 = vsel %vm6111, %v6110, %v6108
      %s6114 = scalar_lea.vmem %s9, 71
      %v6115 = vld [vmem:[%s6114] ss:$8 sm:$0x3]
      %v6117 = vlaneseq
      %v6118 = vshrl.u32 %v6117, 7
      %v6119 = vsub.s32 0, %v6118
      %v6120 = vrot.slane %v6115, %v6119
      %v6121 = vlaneseq
      %v6122 = vshrl.u32 %v6121, 7
      %v6123 = vsub.s32 1, %v6122
      %v6124 = vrot.slane %v6115, %v6123
      %v6127 = vmul.f32 %v6112, %v6120
      %v6128 = vmul.f32 %v6113, %v6124
      %6129 = vset.pattern.permute.xlu0 39
      %6130 = vperm.xlu0 %6129, %v4968
      %v6131 = vpop.permute.xlu0 %6130
      %v6133 = vmul.f32 %v6131, %v6127
      %v6134 = vmul.f32 %v6131, %v6128
      %v6135 = vadd.f32 %v6105, %v6133
      %v6136 = vadd.f32 %v6106, %v6134
      %6137 = vrot.lane.b32.xlu0 %v4966, 94
      %v6138 = vpop.permute.xlu0 %6137
      %6139 = vrot.lane.b32.xlu0 %v4967, 94
      %v6140 = vpop.permute.xlu0 %6139
      %vm6141 = vcmp.lt.s32.totalorder %v2529, 94
      %v6142 = vsel %vm6141, %v6138, %v6140
      %v6143 = vsel %vm6141, %v6140, %v6138
      %s6144 = scalar_lea.vmem %s9, 80
      %v6145 = vld [vmem:[%s6144] ss:$8 sm:$0x3]
      %v6147 = vlaneseq
      %v6148 = vshrl.u32 %v6147, 7
      %v6149 = vsub.s32 0, %v6148
      %v6150 = vrot.slane %v6145, %v6149
      %v6151 = vlaneseq
      %v6152 = vshrl.u32 %v6151, 7
      %v6153 = vsub.s32 1, %v6152
      %v6154 = vrot.slane %v6145, %v6153
      %v6157 = vmul.f32 %v6142, %v6150
      %v6158 = vmul.f32 %v6143, %v6154
      %6159 = vset.pattern.permute.xlu0 40
      %6160 = vperm.xlu0 %6159, %v4968
      %v6161 = vpop.permute.xlu0 %6160
      %v6163 = vmul.f32 %v6161, %v6157
      %v6164 = vmul.f32 %v6161, %v6158
      %v6165 = vadd.f32 %v6135, %v6163
      %v6166 = vadd.f32 %v6136, %v6164
      %6167 = vrot.lane.b32.xlu0 %v4966, 93
      %v6168 = vpop.permute.xlu0 %6167
      %6169 = vrot.lane.b32.xlu0 %v4967, 93
      %v6170 = vpop.permute.xlu0 %6169
      %vm6171 = vcmp.lt.s32.totalorder %v2529, 93
      %v6172 = vsel %vm6171, %v6168, %v6170
      %v6173 = vsel %vm6171, %v6170, %v6168
      %s6174 = scalar_lea.vmem %s9, 81
      %v6175 = vld [vmem:[%s6174] ss:$8 sm:$0x3]
      %v6177 = vlaneseq
      %v6178 = vshrl.u32 %v6177, 7
      %v6179 = vsub.s32 0, %v6178
      %v6180 = vrot.slane %v6175, %v6179
      %v6181 = vlaneseq
      %v6182 = vshrl.u32 %v6181, 7
      %v6183 = vsub.s32 1, %v6182
      %v6184 = vrot.slane %v6175, %v6183
      %v6187 = vmul.f32 %v6172, %v6180
      %v6188 = vmul.f32 %v6173, %v6184
      %6189 = vset.pattern.permute.xlu0 41
      %6190 = vperm.xlu0 %6189, %v4968
      %v6191 = vpop.permute.xlu0 %6190
      %v6193 = vmul.f32 %v6191, %v6187
      %v6194 = vmul.f32 %v6191, %v6188
      %v6195 = vadd.f32 %v6165, %v6193
      %v6196 = vadd.f32 %v6166, %v6194
      %6197 = vrot.lane.b32.xlu0 %v4966, 83
      %v6198 = vpop.permute.xlu0 %6197
      %6199 = vrot.lane.b32.xlu0 %v4967, 83
      %v6200 = vpop.permute.xlu0 %6199
      %vm6201 = vcmp.lt.s32.totalorder %v2529, 83
      %v6202 = vsel %vm6201, %v6198, %v6200
      %v6203 = vsel %vm6201, %v6200, %v6198
      %s6204 = scalar_lea.vmem %s9, 82
      %v6205 = vld [vmem:[%s6204] ss:$8 sm:$0x3]
      %v6207 = vlaneseq
      %v6208 = vshrl.u32 %v6207, 7
      %v6209 = vsub.s32 0, %v6208
      %v6210 = vrot.slane %v6205, %v6209
      %v6211 = vlaneseq
      %v6212 = vshrl.u32 %v6211, 7
      %v6213 = vsub.s32 1, %v6212
      %v6214 = vrot.slane %v6205, %v6213
      %v6217 = vmul.f32 %v6202, %v6210
      %v6218 = vmul.f32 %v6203, %v6214
      %6219 = vset.pattern.permute.xlu0 42
      %6220 = vperm.xlu0 %6219, %v4968
      %v6221 = vpop.permute.xlu0 %6220
      %v6223 = vmul.f32 %v6221, %v6217
      %v6224 = vmul.f32 %v6221, %v6218
      %v6225 = vadd.f32 %v6195, %v6223
      %v6226 = vadd.f32 %v6196, %v6224
      %6227 = vrot.lane.b32.xlu0 %v4966, 82
      %v6228 = vpop.permute.xlu0 %6227
      %6229 = vrot.lane.b32.xlu0 %v4967, 82
      %v6230 = vpop.permute.xlu0 %6229
      %vm6231 = vcmp.lt.s32.totalorder %v2529, 82
      %v6232 = vsel %vm6231, %v6228, %v6230
      %v6233 = vsel %vm6231, %v6230, %v6228
      %s6234 = scalar_lea.vmem %s9, 83
      %v6235 = vld [vmem:[%s6234] ss:$8 sm:$0x3]
      %v6237 = vlaneseq
      %v6238 = vshrl.u32 %v6237, 7
      %v6239 = vsub.s32 0, %v6238
      %v6240 = vrot.slane %v6235, %v6239
      %v6241 = vlaneseq
      %v6242 = vshrl.u32 %v6241, 7
      %v6243 = vsub.s32 1, %v6242
      %v6244 = vrot.slane %v6235, %v6243
      %v6247 = vmul.f32 %v6232, %v6240
      %v6248 = vmul.f32 %v6233, %v6244
      %6249 = vset.pattern.permute.xlu0 43
      %6250 = vperm.xlu0 %6249, %v4968
      %v6251 = vpop.permute.xlu0 %6250
      %v6253 = vmul.f32 %v6251, %v6247
      %v6254 = vmul.f32 %v6251, %v6248
      %v6255 = vadd.f32 %v6225, %v6253
      %v6256 = vadd.f32 %v6226, %v6254
      %6257 = vrot.lane.b32.xlu0 %v4966, 81
      %v6258 = vpop.permute.xlu0 %6257
      %6259 = vrot.lane.b32.xlu0 %v4967, 81
      %v6260 = vpop.permute.xlu0 %6259
      %vm6261 = vcmp.lt.s32.totalorder %v2529, 81
      %v6262 = vsel %vm6261, %v6258, %v6260
      %v6263 = vsel %vm6261, %v6260, %v6258
      %s6264 = scalar_lea.vmem %s9, 84
      %v6265 = vld [vmem:[%s6264] ss:$8 sm:$0x3]
      %v6267 = vlaneseq
      %v6268 = vshrl.u32 %v6267, 7
      %v6269 = vsub.s32 0, %v6268
      %v6270 = vrot.slane %v6265, %v6269
      %v6271 = vlaneseq
      %v6272 = vshrl.u32 %v6271, 7
      %v6273 = vsub.s32 1, %v6272
      %v6274 = vrot.slane %v6265, %v6273
      %v6277 = vmul.f32 %v6262, %v6270
      %v6278 = vmul.f32 %v6263, %v6274
      %6279 = vset.pattern.permute.xlu0 44
      %6280 = vperm.xlu0 %6279, %v4968
      %v6281 = vpop.permute.xlu0 %6280
      %v6283 = vmul.f32 %v6281, %v6277
      %v6284 = vmul.f32 %v6281, %v6278
      %v6285 = vadd.f32 %v6255, %v6283
      %v6286 = vadd.f32 %v6256, %v6284
      %6287 = vrot.lane.b32.xlu0 %v4966, 80
      %v6288 = vpop.permute.xlu0 %6287
      %6289 = vrot.lane.b32.xlu0 %v4967, 80
      %v6290 = vpop.permute.xlu0 %6289
      %vm6291 = vcmp.lt.s32.totalorder %v2529, 80
      %v6292 = vsel %vm6291, %v6288, %v6290
      %v6293 = vsel %vm6291, %v6290, %v6288
      %s6294 = scalar_lea.vmem %s9, 85
      %v6295 = vld [vmem:[%s6294] ss:$8 sm:$0x3]
      %v6297 = vlaneseq
      %v6298 = vshrl.u32 %v6297, 7
      %v6299 = vsub.s32 0, %v6298
      %v6300 = vrot.slane %v6295, %v6299
      %v6301 = vlaneseq
      %v6302 = vshrl.u32 %v6301, 7
      %v6303 = vsub.s32 1, %v6302
      %v6304 = vrot.slane %v6295, %v6303
      %v6307 = vmul.f32 %v6292, %v6300
      %v6308 = vmul.f32 %v6293, %v6304
      %6309 = vset.pattern.permute.xlu0 45
      %6310 = vperm.xlu0 %6309, %v4968
      %v6311 = vpop.permute.xlu0 %6310
      %v6313 = vmul.f32 %v6311, %v6307
      %v6314 = vmul.f32 %v6311, %v6308
      %v6315 = vadd.f32 %v6285, %v6313
      %v6316 = vadd.f32 %v6286, %v6314
      %6317 = vrot.lane.b32.xlu0 %v4966, 79
      %v6318 = vpop.permute.xlu0 %6317
      %6319 = vrot.lane.b32.xlu0 %v4967, 79
      %v6320 = vpop.permute.xlu0 %6319
      %vm6321 = vcmp.lt.s32.totalorder %v2529, 79
      %v6322 = vsel %vm6321, %v6318, %v6320
      %v6323 = vsel %vm6321, %v6320, %v6318
      %s6324 = scalar_lea.vmem %s9, 86
      %v6325 = vld [vmem:[%s6324] ss:$8 sm:$0x3]
      %v6327 = vlaneseq
      %v6328 = vshrl.u32 %v6327, 7
      %v6329 = vsub.s32 0, %v6328
      %v6330 = vrot.slane %v6325, %v6329
      %v6331 = vlaneseq
      %v6332 = vshrl.u32 %v6331, 7
      %v6333 = vsub.s32 1, %v6332
      %v6334 = vrot.slane %v6325, %v6333
      %v6337 = vmul.f32 %v6322, %v6330
      %v6338 = vmul.f32 %v6323, %v6334
      %6339 = vset.pattern.permute.xlu0 46
      %6340 = vperm.xlu0 %6339, %v4968
      %v6341 = vpop.permute.xlu0 %6340
      %v6343 = vmul.f32 %v6341, %v6337
      %v6344 = vmul.f32 %v6341, %v6338
      %v6345 = vadd.f32 %v6315, %v6343
      %v6346 = vadd.f32 %v6316, %v6344
      %6347 = vrot.lane.b32.xlu0 %v4966, 78
      %v6348 = vpop.permute.xlu0 %6347
      %6349 = vrot.lane.b32.xlu0 %v4967, 78
      %v6350 = vpop.permute.xlu0 %6349
      %vm6351 = vcmp.lt.s32.totalorder %v2529, 78
      %v6352 = vsel %vm6351, %v6348, %v6350
      %v6353 = vsel %vm6351, %v6350, %v6348
      %s6354 = scalar_lea.vmem %s9, 87
      %v6355 = vld [vmem:[%s6354] ss:$8 sm:$0x3]
      %v6357 = vlaneseq
      %v6358 = vshrl.u32 %v6357, 7
      %v6359 = vsub.s32 0, %v6358
      %v6360 = vrot.slane %v6355, %v6359
      %v6361 = vlaneseq
      %v6362 = vshrl.u32 %v6361, 7
      %v6363 = vsub.s32 1, %v6362
      %v6364 = vrot.slane %v6355, %v6363
      %v6367 = vmul.f32 %v6352, %v6360
      %v6368 = vmul.f32 %v6353, %v6364
      %6369 = vset.pattern.permute.xlu0 47
      %6370 = vperm.xlu0 %6369, %v4968
      %v6371 = vpop.permute.xlu0 %6370
      %v6373 = vmul.f32 %v6371, %v6367
      %v6374 = vmul.f32 %v6371, %v6368
      %v6375 = vadd.f32 %v6345, %v6373
      %v6376 = vadd.f32 %v6346, %v6374
      %6377 = vrot.lane.b32.xlu0 %v4966, 77
      %v6378 = vpop.permute.xlu0 %6377
      %6379 = vrot.lane.b32.xlu0 %v4967, 77
      %v6380 = vpop.permute.xlu0 %6379
      %vm6381 = vcmp.lt.s32.totalorder %v2529, 77
      %v6382 = vsel %vm6381, %v6378, %v6380
      %v6383 = vsel %vm6381, %v6380, %v6378
      %s6384 = scalar_lea.vmem %s9, 96
      %v6385 = vld [vmem:[%s6384] ss:$8 sm:$0x3]
      %v6387 = vlaneseq
      %v6388 = vshrl.u32 %v6387, 7
      %v6389 = vsub.s32 0, %v6388
      %v6390 = vrot.slane %v6385, %v6389
      %v6391 = vlaneseq
      %v6392 = vshrl.u32 %v6391, 7
      %v6393 = vsub.s32 1, %v6392
      %v6394 = vrot.slane %v6385, %v6393
      %v6397 = vmul.f32 %v6382, %v6390
      %v6398 = vmul.f32 %v6383, %v6394
      %6399 = vset.pattern.permute.xlu0 48
      %6400 = vperm.xlu0 %6399, %v4968
      %v6401 = vpop.permute.xlu0 %6400
      %v6403 = vmul.f32 %v6401, %v6397
      %v6404 = vmul.f32 %v6401, %v6398
      %v6405 = vadd.f32 %v6375, %v6403
      %v6406 = vadd.f32 %v6376, %v6404
      %v6407 = vsel %vm1310, %v6405, 0.0
      %v6408 = vrot.slane %v6407, 4
      %v6409 = vadd.f32 %v6407, %v6408
      %v6410 = vrot.slane %v6409, 2
      %v6411 = vadd.f32 %v6409, %v6410
      %v6412 = vrot.slane %v6411, 1
      %v6413 = vadd.f32 %v6411, %v6412
      %v6414 = vsel %vm1310, %v6406, 0.0
      %v6415 = vrot.slane %v6414, 4
      %v6416 = vadd.f32 %v6414, %v6415
      %v6417 = vrot.slane %v6416, 2
      %v6418 = vadd.f32 %v6416, %v6417
      %v6419 = vrot.slane %v6418, 1
      %v6420 = vadd.f32 %v6418, %v6419
      %v6421 = vsub.f32 0.0, %v6413
      %v6422 = vsub.f32 0.0, %v6420
      %v6423 = vmul.f32 %v6421, 1.442695
      %v6424 = vpow.pop %v6423
      %v6425 = vmul.f32 %v6422, 1.442695
      %v6426 = vpow.pop %v6425
      %v6427 = vadd.f32 %v6424, 1.0
      %v6428 = vadd.f32 %v6426, 1.0
      %v6429 = vrcp.pop %v6427
      %v6430 = vmul.f32 1.0, %v6429
      %v6431 = vrcp.pop %v6428
      %v6432 = vmul.f32 1.0, %v6431
      %v6433 = vadd.f32 %v4926, %v4928
      %6434 = vadd.xlane.f32.xlu0 %v6433
      %v6435 = vpop.xlane.xlu0 %6434
      %v6436 = vadd.f32 %v4930, %v4932
      %6437 = vadd.xlane.f32.xlu0 %v6436
      %v6438 = vpop.xlane.xlu0 %6437
      %v6439 = vmul.f32 %v6435, %v1218
      %v6440 = vmul.f32 %v6438, %v1218
      %v6441 = vld [vmem:[%s61] sm:$0x1]
      %v6443 = vsel %vm1222, %v6441, 0
      %6445 = vmatprep.subr.mxu0 0.0
      %6446 = vmatpush1.msra.mxu0 %v6439
      %6447 = vmatprep.subr.mxu0 0.0
      %6448 = vmatpush1.msra.mxu0 %v6440
      %6449 = vmatprep.subr.mxu0 0.0
      %6450 = vmatpush1.msra.mxu0 0.0
      %6451 = vmatprep.subr.mxu0 0.0
      %6452 = vmatpush1.msra.mxu0 0.0
      %6453 = vmatprep.subr.mxu0 0.0
      %6454 = vmatpush1.msra.mxu0 0.0
      %6455 = vmatprep.subr.mxu0 0.0
      %6456 = vmatpush1.msra.mxu0 0.0
      %6457 = vmatprep.subr.mxu0 0.0
      %6458 = vmatpush1.msra.mxu0 0.0
      %6459 = vmatprep.subr.mxu0 0.0
      %6460 = vmatpush1.msra.mxu0 0.0
      %6461 = vmatprep.subr.mxu0 0.0
      %6462 = vmatpush1.msra.mxu0 0.0
      %6463 = vmatprep.subr.mxu0 0.0
      %6464 = vmatpush1.msra.mxu0 0.0
      %6465 = vmatprep.subr.mxu0 0.0
      %6466 = vmatpush1.msra.mxu0 0.0
      %6467 = vmatprep.subr.mxu0 0.0
      %6468 = vmatpush1.msra.mxu0 0.0
      %6469 = vmatprep.subr.mxu0 0.0
      %6470 = vmatpush1.msra.mxu0 0.0
      %6471 = vmatprep.subr.mxu0 0.0
      %6472 = vmatpush1.msra.mxu0 0.0
      %6473 = vmatprep.subr.mxu0 0.0
      %6474 = vmatpush1.msra.mxu0 0.0
      %6475 = vmatprep.subr.mxu0 0.0
      %6476 = vmatpush1.msra.mxu0 0.0
      %6477 = vmatprep.subr.mxu0 0.0
      %6478 = vmatpush1.msra.mxu0 0.0
      %6479 = vmatprep.subr.mxu0 0.0
      %6480 = vmatpush1.msra.mxu0 0.0
      %6481 = vmatprep.subr.mxu0 0.0
      %6482 = vmatpush1.msra.mxu0 0.0
      %6483 = vmatprep.subr.mxu0 0.0
      %6484 = vmatpush1.msra.mxu0 0.0
      %6485 = vmatprep.subr.mxu0 0.0
      %6486 = vmatpush1.msra.mxu0 0.0
      %6487 = vmatprep.subr.mxu0 0.0
      %6488 = vmatpush1.msra.mxu0 0.0
      %6489 = vmatprep.subr.mxu0 0.0
      %6490 = vmatpush1.msra.mxu0 0.0
      %6491 = vmatprep.subr.mxu0 0.0
      %6492 = vmatpush1.msra.mxu0 0.0
      %6493 = vmatprep.subr.mxu0 0.0
      %6494 = vmatpush1.msra.mxu0 0.0
      %6495 = vmatprep.subr.mxu0 0.0
      %6496 = vmatpush1.msra.mxu0 0.0
      %6497 = vmatprep.subr.mxu0 0.0
      %6498 = vmatpush1.msra.mxu0 0.0
      %6499 = vmatprep.subr.mxu0 0.0
      %6500 = vmatpush1.msra.mxu0 0.0
      %6501 = vmatprep.subr.mxu0 0.0
      %6502 = vmatpush1.msra.mxu0 0.0
      %6503 = vmatprep.subr.mxu0 0.0
      %6504 = vmatpush1.msra.mxu0 0.0
      %6505 = vmatprep.subr.mxu0 0.0
      %6506 = vmatpush1.msra.mxu0 0.0
      %6507 = vmatprep.subr.mxu0 0.0
      %6508 = vmatpush1.msra.mxu0 0.0
      %6509 = vmatprep.mubr.f32.mxu0 0.0
      %6510 = vmatmul.mubr.f32.gmra.mrb[0].mxu0 %v6443
      %v6511 = vpop.f32.mrb[0].mxu0
      %v6512 = vadd.f32 0.0, %v6511
      %v6513 = vpop.f32.mrb[0].mxu0
      %6514 = vdwg.mxu0
      %v6515 = vmax.f32 %v6512, 0.0
      %v6516 = vld [vmem:[%s63] sm:$0xff]
      %v6517 = vld [vmem:[%s63 + $0x8] sm:$0xff]
      %v6518 = vmax.f32 %v4926, %v4928
      %6519 = vmax.xlane.f32.xlu0 %v6518
      %v6520 = vpop.xlane.xlu0 %6519
      %v6521 = vmax.f32 %v4930, %v4932
      %6522 = vmax.xlane.f32.xlu0 %v6521
      %v6523 = vpop.xlane.xlu0 %6522
      %6524 = vmatprep.subr.mxu0 0.0
      %6525 = vmatpush1.msra.mxu0 %v6520
      %6526 = vmatprep.subr.mxu0 0.0
      %6527 = vmatpush1.msra.mxu0 %v6523
      %6528 = vmatprep.subr.mxu0 0.0
      %6529 = vmatpush1.msra.mxu0 0.0
      %6530 = vmatprep.subr.mxu0 0.0
      %6531 = vmatpush1.msra.mxu0 0.0
      %6532 = vmatprep.subr.mxu0 0.0
      %6533 = vmatpush1.msra.mxu0 0.0
      %6534 = vmatprep.subr.mxu0 0.0
      %6535 = vmatpush1.msra.mxu0 0.0
      %6536 = vmatprep.subr.mxu0 0.0
      %6537 = vmatpush1.msra.mxu0 0.0
      %6538 = vmatprep.subr.mxu0 0.0
      %6539 = vmatpush1.msra.mxu0 0.0
      %6540 = vmatprep.subr.mxu0 0.0
      %6541 = vmatpush1.msra.mxu0 0.0
      %6542 = vmatprep.subr.mxu0 0.0
      %6543 = vmatpush1.msra.mxu0 0.0
      %6544 = vmatprep.subr.mxu0 0.0
      %6545 = vmatpush1.msra.mxu0 0.0
      %6546 = vmatprep.subr.mxu0 0.0
      %6547 = vmatpush1.msra.mxu0 0.0
      %6548 = vmatprep.subr.mxu0 0.0
      %6549 = vmatpush1.msra.mxu0 0.0
      %6550 = vmatprep.subr.mxu0 0.0
      %6551 = vmatpush1.msra.mxu0 0.0
      %6552 = vmatprep.subr.mxu0 0.0
      %6553 = vmatpush1.msra.mxu0 0.0
      %6554 = vmatprep.subr.mxu0 0.0
      %6555 = vmatpush1.msra.mxu0 0.0
      %6556 = vmatprep.subr.mxu0 0.0
      %6557 = vmatpush1.msra.mxu0 0.0
      %6558 = vmatprep.subr.mxu0 0.0
      %6559 = vmatpush1.msra.mxu0 0.0
      %6560 = vmatprep.subr.mxu0 0.0
      %6561 = vmatpush1.msra.mxu0 0.0
      %6562 = vmatprep.subr.mxu0 0.0
      %6563 = vmatpush1.msra.mxu0 0.0
      %6564 = vmatprep.subr.mxu0 0.0
      %6565 = vmatpush1.msra.mxu0 0.0
      %6566 = vmatprep.subr.mxu0 0.0
      %6567 = vmatpush1.msra.mxu0 0.0
      %6568 = vmatprep.subr.mxu0 0.0
      %6569 = vmatpush1.msra.mxu0 0.0
      %6570 = vmatprep.subr.mxu0 0.0
      %6571 = vmatpush1.msra.mxu0 0.0
      %6572 = vmatprep.subr.mxu0 0.0
      %6573 = vmatpush1.msra.mxu0 0.0
      %6574 = vmatprep.subr.mxu0 0.0
      %6575 = vmatpush1.msra.mxu0 0.0
      %6576 = vmatprep.subr.mxu0 0.0
      %6577 = vmatpush1.msra.mxu0 0.0
      %6578 = vmatprep.subr.mxu0 0.0
      %6579 = vmatpush1.msra.mxu0 0.0
      %6580 = vmatprep.subr.mxu0 0.0
      %6581 = vmatpush1.msra.mxu0 0.0
      %6582 = vmatprep.subr.mxu0 0.0
      %6583 = vmatpush1.msra.mxu0 0.0
      %6584 = vmatprep.subr.mxu0 0.0
      %6585 = vmatpush1.msra.mxu0 0.0
      %6586 = vmatprep.subr.mxu0 0.0
      %6587 = vmatpush1.msra.mxu0 0.0
      %6588 = vmatprep.mubr.f32.mxu0 0.0
      %6589 = vmatmul.mubr.f32.gmra.mrb[0].mxu0 %v6443
      %v6590 = vpop.f32.mrb[0].mxu0
      %v6591 = vadd.f32 0.0, %v6590
      %v6592 = vpop.f32.mrb[0].mxu0
      %6593 = vdwg.mxu0
      %v6594 = vmax.f32 %v6591, 0.0
      %vm6595 = vcmask 7168
      %v6597 = vsel %vm6595, %v6516, 0
      %v6600 = vsel %vm6595, %v6517, 0
      %v6603 = vsel %vm4965, %v6594, 0
      %6605 = vmatprep.subr.mxu0 0.0
      %6606 = vmatpush1.msra.mxu0 %v6603
      %6607 = vmatprep.subr.mxu0 0.0
      %6608 = vmatpush1.msra.mxu0 0.0
      %6609 = vmatprep.subr.mxu0 0.0
      %6610 = vmatpush1.msra.mxu0 0.0
      %6611 = vmatprep.subr.mxu0 0.0
      %6612 = vmatpush1.msra.mxu0 0.0
      %6613 = vmatprep.subr.mxu0 0.0
      %6614 = vmatpush1.msra.mxu0 0.0
      %6615 = vmatprep.subr.mxu0 0.0
      %6616 = vmatpush1.msra.mxu0 0.0
      %6617 = vmatprep.subr.mxu0 0.0
      %6618 = vmatpush1.msra.mxu0 0.0
      %6619 = vmatprep.subr.mxu0 0.0
      %6620 = vmatpush1.msra.mxu0 0.0
      %6621 = vmatprep.subr.mxu0 0.0
      %6622 = vmatpush1.msra.mxu0 0.0
      %6623 = vmatprep.subr.mxu0 0.0
      %6624 = vmatpush1.msra.mxu0 0.0
      %6625 = vmatprep.subr.mxu0 0.0
      %6626 = vmatpush1.msra.mxu0 0.0
      %6627 = vmatprep.subr.mxu0 0.0
      %6628 = vmatpush1.msra.mxu0 0.0
      %6629 = vmatprep.subr.mxu0 0.0
      %6630 = vmatpush1.msra.mxu0 0.0
      %6631 = vmatprep.subr.mxu0 0.0
      %6632 = vmatpush1.msra.mxu0 0.0
      %6633 = vmatprep.subr.mxu0 0.0
      %6634 = vmatpush1.msra.mxu0 0.0
      %6635 = vmatprep.subr.mxu0 0.0
      %6636 = vmatpush1.msra.mxu0 0.0
      %6637 = vmatprep.subr.mxu0 0.0
      %6638 = vmatpush1.msra.mxu0 0.0
      %6639 = vmatprep.subr.mxu0 0.0
      %6640 = vmatpush1.msra.mxu0 0.0
      %6641 = vmatprep.subr.mxu0 0.0
      %6642 = vmatpush1.msra.mxu0 0.0
      %6643 = vmatprep.subr.mxu0 0.0
      %6644 = vmatpush1.msra.mxu0 0.0
      %6645 = vmatprep.subr.mxu0 0.0
      %6646 = vmatpush1.msra.mxu0 0.0
      %6647 = vmatprep.subr.mxu0 0.0
      %6648 = vmatpush1.msra.mxu0 0.0
      %6649 = vmatprep.subr.mxu0 0.0
      %6650 = vmatpush1.msra.mxu0 0.0
      %6651 = vmatprep.subr.mxu0 0.0
      %6652 = vmatpush1.msra.mxu0 0.0
      %6653 = vmatprep.subr.mxu0 0.0
      %6654 = vmatpush1.msra.mxu0 0.0
      %6655 = vmatprep.subr.mxu0 0.0
      %6656 = vmatpush1.msra.mxu0 0.0
      %6657 = vmatprep.subr.mxu0 0.0
      %6658 = vmatpush1.msra.mxu0 0.0
      %6659 = vmatprep.subr.mxu0 0.0
      %6660 = vmatpush1.msra.mxu0 0.0
      %6661 = vmatprep.subr.mxu0 0.0
      %6662 = vmatpush1.msra.mxu0 0.0
      %6663 = vmatprep.subr.mxu0 0.0
      %6664 = vmatpush1.msra.mxu0 0.0
      %6665 = vmatprep.subr.mxu0 0.0
      %6666 = vmatpush1.msra.mxu0 0.0
      %6667 = vmatprep.subr.mxu0 0.0
      %6668 = vmatpush1.msra.mxu0 0.0
      %6669 = vmatprep.mubr.f32.mxu0 0.0
      %6670 = vmatmul.mubr.f32.gmra.mrb[0].mxu0 %v6597
      %v6671 = vpop.f32.mrb[0].mxu0
      %v6672 = vadd.f32 0.0, %v6671
      %v6673 = vpop.f32.mrb[0].mxu0
      %6674 = vmatprep.mubr.f32.mxu0 0.0
      %6675 = vmatmul.mubr.f32.gmra.mrb[0].mxu0 %v6600
      %v6676 = vpop.f32.mrb[0].mxu0
      %v6677 = vadd.f32 0.0, %v6676
      %v6678 = vpop.f32.mrb[0].mxu0
      %6679 = vdwg.mxu0
      %v6681 = vsel %vm4965, %v6515, 0
      %6683 = vmatprep.subr.mxu0 0.0
      %6684 = vmatpush1.msra.mxu0 %v6681
      %6685 = vmatprep.subr.mxu0 0.0
      %6686 = vmatpush1.msra.mxu0 0.0
      %6687 = vmatprep.subr.mxu0 0.0
      %6688 = vmatpush1.msra.mxu0 0.0
      %6689 = vmatprep.subr.mxu0 0.0
      %6690 = vmatpush1.msra.mxu0 0.0
      %6691 = vmatprep.subr.mxu0 0.0
      %6692 = vmatpush1.msra.mxu0 0.0
      %6693 = vmatprep.subr.mxu0 0.0
      %6694 = vmatpush1.msra.mxu0 0.0
      %6695 = vmatprep.subr.mxu0 0.0
      %6696 = vmatpush1.msra.mxu0 0.0
      %6697 = vmatprep.subr.mxu0 0.0
      %6698 = vmatpush1.msra.mxu0 0.0
      %6699 = vmatprep.subr.mxu0 0.0
      %6700 = vmatpush1.msra.mxu0 0.0
      %6701 = vmatprep.subr.mxu0 0.0
      %6702 = vmatpush1.msra.mxu0 0.0
      %6703 = vmatprep.subr.mxu0 0.0
      %6704 = vmatpush1.msra.mxu0 0.0
      %6705 = vmatprep.subr.mxu0 0.0
      %6706 = vmatpush1.msra.mxu0 0.0
      %6707 = vmatprep.subr.mxu0 0.0
      %6708 = vmatpush1.msra.mxu0 0.0
      %6709 = vmatprep.subr.mxu0 0.0
      %6710 = vmatpush1.msra.mxu0 0.0
      %6711 = vmatprep.subr.mxu0 0.0
      %6712 = vmatpush1.msra.mxu0 0.0
      %6713 = vmatprep.subr.mxu0 0.0
      %6714 = vmatpush1.msra.mxu0 0.0
      %6715 = vmatprep.subr.mxu0 0.0
      %6716 = vmatpush1.msra.mxu0 0.0
      %6717 = vmatprep.subr.mxu0 0.0
      %6718 = vmatpush1.msra.mxu0 0.0
      %6719 = vmatprep.subr.mxu0 0.0
      %6720 = vmatpush1.msra.mxu0 0.0
      %6721 = vmatprep.subr.mxu0 0.0
      %6722 = vmatpush1.msra.mxu0 0.0
      %6723 = vmatprep.subr.mxu0 0.0
      %6724 = vmatpush1.msra.mxu0 0.0
      %6725 = vmatprep.subr.mxu0 0.0
      %6726 = vmatpush1.msra.mxu0 0.0
      %6727 = vmatprep.subr.mxu0 0.0
      %6728 = vmatpush1.msra.mxu0 0.0
      %6729 = vmatprep.subr.mxu0 0.0
      %6730 = vmatpush1.msra.mxu0 0.0
      %6731 = vmatprep.subr.mxu0 0.0
      %6732 = vmatpush1.msra.mxu0 0.0
      %6733 = vmatprep.subr.mxu0 0.0
      %6734 = vmatpush1.msra.mxu0 0.0
      %6735 = vmatprep.subr.mxu0 0.0
      %6736 = vmatpush1.msra.mxu0 0.0
      %6737 = vmatprep.subr.mxu0 0.0
      %6738 = vmatpush1.msra.mxu0 0.0
      %6739 = vmatprep.subr.mxu0 0.0
      %6740 = vmatpush1.msra.mxu0 0.0
      %6741 = vmatprep.subr.mxu0 0.0
      %6742 = vmatpush1.msra.mxu0 0.0
      %6743 = vmatprep.subr.mxu0 0.0
      %6744 = vmatpush1.msra.mxu0 0.0
      %6745 = vmatprep.subr.mxu0 0.0
      %6746 = vmatpush1.msra.mxu0 0.0
      %6747 = vmatprep.mubr.f32.mxu0 0.0
      %6748 = vmatmul.mubr.f32.gmra.mrb[0].mxu0 %v6597
      %v6749 = vpop.f32.mrb[0].mxu0
      %v6750 = vadd.f32 %v6672, %v6749
      %v6751 = vpop.f32.mrb[0].mxu0
      %6752 = vmatprep.mubr.f32.mxu0 0.0
      %6753 = vmatmul.mubr.f32.gmra.mrb[0].mxu0 %v6600
      %v6754 = vpop.f32.mrb[0].mxu0
      %v6755 = vadd.f32 %v6677, %v6754
      %v6756 = vpop.f32.mrb[0].mxu0
      %6757 = vdwg.mxu0
      %v6758 = vsub.f32 0.0, %v6750
      %v6759 = vsub.f32 0.0, %v6755
      %v6760 = vmul.f32 %v6758, 1.442695
      %v6761 = vpow.pop %v6760
      %v6762 = vmul.f32 %v6759, 1.442695
      %v6763 = vpow.pop %v6762
      %v6764 = vadd.f32 %v6761, 1.0
      %v6765 = vadd.f32 %v6763, 1.0
      %v6766 = vrcp.pop %v6764
      %v6767 = vmul.f32 1.0, %v6766
      %v6768 = vrcp.pop %v6765
      %v6769 = vmul.f32 1.0, %v6768
      %v6770 = vmul.f32 %v4926, %v6430
      %v6771 = vmul.f32 %v4928, %v6432
      %v6772 = vmul.f32 %v4930, %v6430
      %v6773 = vmul.f32 %v4932, %v6432
      %6775 = vset.pattern.permute.xlu0 0
      %6776 = vperm.xlu0 %6775, %v6767
      %v6777 = vpop.permute.xlu0 %6776
      %6780 = vset.pattern.permute.xlu0 0
      %6781 = vperm.xlu0 %6780, %v6769
      %v6782 = vpop.permute.xlu0 %6781
      %v6784 = vmul.f32 %v4916, %v6777
      %v6785 = vmul.f32 %v4918, %v6777
      %v6786 = vmul.f32 %v4920, %v6782
      %v6787 = vmul.f32 %v4922, %v6782
      %v6788 = vadd.f32 %v6770, %v6784
      %v6789 = vadd.f32 %v6771, %v6785
      %v6790 = vadd.f32 %v6772, %v6786
      %v6791 = vadd.f32 %v6773, %v6787
      %v6792 = vld [vmem:[%s65] sm:$0xf]
      %v6793 = vld [vmem:[%s65 + $0x4] sm:$0xf]
      %v6794 = vpack.c.bf16 %v6790, %v6788
      %v6795 = vpack.c.bf16 %v6791, %v6789
      %v6796 = vld [vmem:[%s67] sm:$0xff]
      %v6797 = vld [vmem:[%s67 + $0x8] sm:$0xff]
      %6799 = vset.pattern.permute.xlu0 0
      %6800 = vperm.xlu0 %6799, %v6796
      %v6801 = vpop.permute.xlu0 %6800
      %6804 = vset.pattern.permute.xlu0 0
      %6805 = vperm.xlu0 %6804, %v6797
      %v6806 = vpop.permute.xlu0 %6805
      %v6810 = vunpack.c.l.b16 %v6792
      %v6811 = vunpack.c.l.b16 %v6793
      %v6812 = vpack.c.b16 %v6811, %v6810
      %v6814 = vsel %vm1222, %v6812, 0
      %6816 = vmatprep.subr.bf16.mxu0 %v6795
      %6817 = vmatpush1.bf16.msra.mxu0 %v6794
      %6818 = vmatprep.subr.bf16.mxu0 0
      %6819 = vmatpush1.bf16.msra.mxu0 0
      %6820 = vmatprep.subr.bf16.mxu0 0
      %6821 = vmatpush1.bf16.msra.mxu0 0
      %6822 = vmatprep.subr.bf16.mxu0 0
      %6823 = vmatpush1.bf16.msra.mxu0 0
      %6824 = vmatprep.subr.bf16.mxu0 0
      %6825 = vmatpush1.bf16.msra.mxu0 0
      %6826 = vmatprep.subr.bf16.mxu0 0
      %6827 = vmatpush1.bf16.msra.mxu0 0
      %6828 = vmatprep.subr.bf16.mxu0 0
      %6829 = vmatpush1.bf16.msra.mxu0 0
      %6830 = vmatprep.subr.bf16.mxu0 0
      %6831 = vmatpush1.bf16.msra.mxu0 0
      %6832 = vmatprep.subr.bf16.mxu0 0
      %6833 = vmatpush1.bf16.msra.mxu0 0
      %6834 = vmatprep.subr.bf16.mxu0 0
      %6835 = vmatpush1.bf16.msra.mxu0 0
      %6836 = vmatprep.subr.bf16.mxu0 0
      %6837 = vmatpush1.bf16.msra.mxu0 0
      %6838 = vmatprep.subr.bf16.mxu0 0
      %6839 = vmatpush1.bf16.msra.mxu0 0
      %6840 = vmatprep.subr.bf16.mxu0 0
      %6841 = vmatpush1.bf16.msra.mxu0 0
      %6842 = vmatprep.subr.bf16.mxu0 0
      %6843 = vmatpush1.bf16.msra.mxu0 0
      %6844 = vmatprep.subr.bf16.mxu0 0
      %6845 = vmatpush1.bf16.msra.mxu0 0
      %6846 = vmatprep.subr.bf16.mxu0 0
      %6847 = vmatpush1.bf16.msra.mxu0 0
      %6848 = vmatprep.mubr.bf16.mxu0 0
      %6849 = vmatmul.mubr.bf16.gmra.mrb[0].mxu0 %v6814
      %v6850 = vpop.f32.mrb[0].mxu0
      %v6851 = vadd.f32 %v6801, %v6850
      %v6852 = vpop.f32.mrb[0].mxu0
      %v6853 = vadd.f32 %v6801, %v6852
      %v6854 = vpop.f32.mrb[0].mxu0
      %v6855 = vadd.f32 %v6806, %v6854
      %v6856 = vpop.f32.mrb[0].mxu0
      %v6857 = vadd.f32 %v6806, %v6856
      %6858 = vdwg.mxu0
      %v6859 = vld [vmem:[%s45] sm:$0xf]
      %v6860 = vld [vmem:[%s45 + $0x4] sm:$0xf]
      %v6861 = vld [vmem:[%s45 + $0x8] sm:$0xf]
      %v6862 = vld [vmem:[%s45 + $0xc] sm:$0xf]
      %v6863 = vpack.c.bf16 %v6855, %v6851
      %v6864 = vpack.c.bf16 %v6857, %v6853
      %v6865 = vld [vmem:[%s47] sm:$0xff]
      %v6866 = vld [vmem:[%s47 + $0x8] sm:$0xff]
      %v6867 = vld [vmem:[%s47 + $0x10] sm:$0xff]
      %v6868 = vld [vmem:[%s47 + $0x18] sm:$0xff]
      %6870 = vset.pattern.permute.xlu0 0
      %6871 = vperm.xlu0 %6870, %v6865
      %v6872 = vpop.permute.xlu0 %6871
      %6875 = vset.pattern.permute.xlu0 0
      %6876 = vperm.xlu0 %6875, %v6866
      %v6877 = vpop.permute.xlu0 %6876
      %6880 = vset.pattern.permute.xlu0 0
      %6881 = vperm.xlu0 %6880, %v6867
      %v6882 = vpop.permute.xlu0 %6881
      %6885 = vset.pattern.permute.xlu0 0
      %6886 = vperm.xlu0 %6885, %v6868
      %v6887 = vpop.permute.xlu0 %6886
      %v6893 = vunpack.c.l.b16 %v6859
      %v6894 = vunpack.c.l.b16 %v6860
      %v6895 = vunpack.c.l.b16 %v6861
      %v6896 = vunpack.c.l.b16 %v6862
      %v6897 = vpack.c.b16 %v6894, %v6893
      %v6898 = vpack.c.b16 %v6896, %v6895
      %v6900 = vsel %vm1222, %v6897, 0
      %v6903 = vsel %vm1222, %v6898, 0
      %6905 = vmatprep.subr.bf16.mxu0 %v6864
      %6906 = vmatpush1.bf16.msra.mxu0 %v6863
      %6907 = vmatprep.subr.bf16.mxu0 0
      %6908 = vmatpush1.bf16.msra.mxu0 0
      %6909 = vmatprep.subr.bf16.mxu0 0
      %6910 = vmatpush1.bf16.msra.mxu0 0
      %6911 = vmatprep.subr.bf16.mxu0 0
      %6912 = vmatpush1.bf16.msra.mxu0 0
      %6913 = vmatprep.subr.bf16.mxu0 0
      %6914 = vmatpush1.bf16.msra.mxu0 0
      %6915 = vmatprep.subr.bf16.mxu0 0
      %6916 = vmatpush1.bf16.msra.mxu0 0
      %6917 = vmatprep.subr.bf16.mxu0 0
      %6918 = vmatpush1.bf16.msra.mxu0 0
      %6919 = vmatprep.subr.bf16.mxu0 0
      %6920 = vmatpush1.bf16.msra.mxu0 0
      %6921 = vmatprep.subr.bf16.mxu0 0
      %6922 = vmatpush1.bf16.msra.mxu0 0
      %6923 = vmatprep.subr.bf16.mxu0 0
      %6924 = vmatpush1.bf16.msra.mxu0 0
      %6925 = vmatprep.subr.bf16.mxu0 0
      %6926 = vmatpush1.bf16.msra.mxu0 0
      %6927 = vmatprep.subr.bf16.mxu0 0
      %6928 = vmatpush1.bf16.msra.mxu0 0
      %6929 = vmatprep.subr.bf16.mxu0 0
      %6930 = vmatpush1.bf16.msra.mxu0 0
      %6931 = vmatprep.subr.bf16.mxu0 0
      %6932 = vmatpush1.bf16.msra.mxu0 0
      %6933 = vmatprep.subr.bf16.mxu0 0
      %6934 = vmatpush1.bf16.msra.mxu0 0
      %6935 = vmatprep.subr.bf16.mxu0 0
      %6936 = vmatpush1.bf16.msra.mxu0 0
      %6937 = vmatprep.mubr.bf16.mxu0 0
      %6938 = vmatmul.mubr.bf16.gmra.mrb[0].mxu0 %v6900
      %v6939 = vpop.f32.mrb[0].mxu0
      %v6940 = vadd.f32 %v6872, %v6939
      %v6941 = vpop.f32.mrb[0].mxu0
      %v6942 = vadd.f32 %v6872, %v6941
      %v6943 = vpop.f32.mrb[0].mxu0
      %v6944 = vadd.f32 %v6877, %v6943
      %v6945 = vpop.f32.mrb[0].mxu0
      %v6946 = vadd.f32 %v6877, %v6945
      %6947 = vmatprep.mubr.bf16.mxu0 0
      %6948 = vmatmul.mubr.bf16.gmra.mrb[0].mxu0 %v6903
      %v6949 = vpop.f32.mrb[0].mxu0
      %v6950 = vadd.f32 %v6882, %v6949
      %v6951 = vpop.f32.mrb[0].mxu0
      %v6952 = vadd.f32 %v6882, %v6951
      %v6953 = vpop.f32.mrb[0].mxu0
      %v6954 = vadd.f32 %v6887, %v6953
      %v6955 = vpop.f32.mrb[0].mxu0
      %v6956 = vadd.f32 %v6887, %v6955
      %6957 = vdwg.mxu0
      %v6958 = vld [vmem:[%s49] sm:$0xff]
      %v6959 = vld [vmem:[%s49 + $0x8] sm:$0xff]
      %v6960 = vld [vmem:[%s49 + $0x10] sm:$0xff]
      %v6961 = vld [vmem:[%s49 + $0x18] sm:$0xff]
      %v6962 = vld [vmem:[%s51] sm:$0xff]
      %v6963 = vld [vmem:[%s51 + $0x8] sm:$0xff]
      %v6964 = vld [vmem:[%s51 + $0x10] sm:$0xff]
      %v6965 = vld [vmem:[%s51 + $0x18] sm:$0xff]
      %6967 = vset.pattern.permute.xlu0 4
      %6968 = vperm.xlu0 %6967, %v6958
      %v6969 = vpop.permute.xlu0 %6968
      %6972 = vset.pattern.permute.xlu0 4
      %6973 = vperm.xlu0 %6972, %v6959
      %v6974 = vpop.permute.xlu0 %6973
      %6977 = vset.pattern.permute.xlu0 4
      %6978 = vperm.xlu0 %6977, %v6960
      %v6979 = vpop.permute.xlu0 %6978
      %6982 = vset.pattern.permute.xlu0 4
      %6983 = vperm.xlu0 %6982, %v6961
      %v6984 = vpop.permute.xlu0 %6983
      %v6986 = vmul.f32 %v6969, %v6940
      %v6987 = vmul.f32 %v6969, %v6942
      %v6988 = vmul.f32 %v6974, %v6944
      %v6989 = vmul.f32 %v6974, %v6946
      %v6990 = vmul.f32 %v6979, %v6950
      %v6991 = vmul.f32 %v6979, %v6952
      %v6992 = vmul.f32 %v6984, %v6954
      %v6993 = vmul.f32 %v6984, %v6956
      %6995 = vset.pattern.permute.xlu0 0
      %6996 = vperm.xlu0 %6995, %v6962
      %v6997 = vpop.permute.xlu0 %6996
      %7000 = vset.pattern.permute.xlu0 0
      %7001 = vperm.xlu0 %7000, %v6963
      %v7002 = vpop.permute.xlu0 %7001
      %7005 = vset.pattern.permute.xlu0 0
      %7006 = vperm.xlu0 %7005, %v6964
      %v7007 = vpop.permute.xlu0 %7006
      %7010 = vset.pattern.permute.xlu0 0
      %7011 = vperm.xlu0 %7010, %v6965
      %v7012 = vpop.permute.xlu0 %7011
      %v7014 = vadd.f32 %v6986, %v6997
      %v7015 = vadd.f32 %v6987, %v6997
      %v7016 = vadd.f32 %v6988, %v7002
      %v7017 = vadd.f32 %v6989, %v7002
      %v7018 = vadd.f32 %v6990, %v7007
      %v7019 = vadd.f32 %v6991, %v7007
      %v7020 = vadd.f32 %v6992, %v7012
      %v7021 = vadd.f32 %v6993, %v7012
      %7022 = vrot.lane.b32.xlu0 %v6940, 17
      %v7023 = vpop.permute.xlu0 %7022
      %7024 = vrot.lane.b32.xlu0 %v6944, 17
      %v7025 = vpop.permute.xlu0 %7024
      %7026 = vrot.lane.b32.xlu0 %v6950, 17
      %v7027 = vpop.permute.xlu0 %7026
      %7028 = vrot.lane.b32.xlu0 %v6954, 17
      %v7029 = vpop.permute.xlu0 %7028
      %7030 = vrot.lane.b32.xlu0 %v6942, 17
      %v7031 = vpop.permute.xlu0 %7030
      %7032 = vrot.lane.b32.xlu0 %v6946, 17
      %v7033 = vpop.permute.xlu0 %7032
      %7034 = vrot.lane.b32.xlu0 %v6952, 17
      %v7035 = vpop.permute.xlu0 %7034
      %7036 = vrot.lane.b32.xlu0 %v6956, 17
      %v7037 = vpop.permute.xlu0 %7036
      %v7038 = vsel %vm2530, %v7023, %v7031
      %v7039 = vsel %vm2530, %v7025, %v7033
      %v7040 = vsel %vm2530, %v7027, %v7035
      %v7041 = vsel %vm2530, %v7029, %v7037
      %v7042 = vsel %vm2530, %v7031, %v7023
      %v7043 = vsel %vm2530, %v7033, %v7025
      %v7044 = vsel %vm2530, %v7035, %v7027
      %v7045 = vsel %vm2530, %v7037, %v7029
      %v7046 = vmul.f32 %v7042, %v2556
      %v7047 = vmul.f32 %v7038, %v2560
      %v7048 = vmul.f32 %v7043, %v2556
      %v7049 = vmul.f32 %v7039, %v2560
      %v7050 = vmul.f32 %v7044, %v2556
      %v7051 = vmul.f32 %v7040, %v2560
      %v7052 = vmul.f32 %v7045, %v2556
      %v7053 = vmul.f32 %v7041, %v2560
      %7054 = vset.pattern.permute.xlu0 0
      %7055 = vperm.xlu0 %7054, %v6958
      %v7056 = vpop.permute.xlu0 %7055
      %7058 = vset.pattern.permute.xlu0 0
      %7059 = vperm.xlu0 %7058, %v6959
      %v7060 = vpop.permute.xlu0 %7059
      %7062 = vset.pattern.permute.xlu0 0
      %7063 = vperm.xlu0 %7062, %v6960
      %v7064 = vpop.permute.xlu0 %7063
      %7066 = vset.pattern.permute.xlu0 0
      %7067 = vperm.xlu0 %7066, %v6961
      %v7068 = vpop.permute.xlu0 %7067
      %v7070 = vmul.f32 %v7056, %v7046
      %v7071 = vmul.f32 %v7056, %v7047
      %v7072 = vmul.f32 %v7060, %v7048
      %v7073 = vmul.f32 %v7060, %v7049
      %v7074 = vmul.f32 %v7064, %v7050
      %v7075 = vmul.f32 %v7064, %v7051
      %v7076 = vmul.f32 %v7068, %v7052
      %v7077 = vmul.f32 %v7068, %v7053
      %v7078 = vadd.f32 %v7014, %v7070
      %v7079 = vadd.f32 %v7015, %v7071
      %v7080 = vadd.f32 %v7016, %v7072
      %v7081 = vadd.f32 %v7017, %v7073
      %v7082 = vadd.f32 %v7018, %v7074
      %v7083 = vadd.f32 %v7019, %v7075
      %v7084 = vadd.f32 %v7020, %v7076
      %v7085 = vadd.f32 %v7021, %v7077
      %7086 = vrot.lane.b32.xlu0 %v6940, 16
      %v7087 = vpop.permute.xlu0 %7086
      %7088 = vrot.lane.b32.xlu0 %v6944, 16
      %v7089 = vpop.permute.xlu0 %7088
      %7090 = vrot.lane.b32.xlu0 %v6950, 16
      %v7091 = vpop.permute.xlu0 %7090
      %7092 = vrot.lane.b32.xlu0 %v6954, 16
      %v7093 = vpop.permute.xlu0 %7092
      %7094 = vrot.lane.b32.xlu0 %v6942, 16
      %v7095 = vpop.permute.xlu0 %7094
      %7096 = vrot.lane.b32.xlu0 %v6946, 16
      %v7097 = vpop.permute.xlu0 %7096
      %7098 = vrot.lane.b32.xlu0 %v6952, 16
      %v7099 = vpop.permute.xlu0 %7098
      %7100 = vrot.lane.b32.xlu0 %v6956, 16
      %v7101 = vpop.permute.xlu0 %7100
      %v7102 = vsel %vm2703, %v7087, %v7095
      %v7103 = vsel %vm2703, %v7089, %v7097
      %v7104 = vsel %vm2703, %v7091, %v7099
      %v7105 = vsel %vm2703, %v7093, %v7101
      %v7106 = vsel %vm2703, %v7095, %v7087
      %v7107 = vsel %vm2703, %v7097, %v7089
      %v7108 = vsel %vm2703, %v7099, %v7091
      %v7109 = vsel %vm2703, %v7101, %v7093
      %v7110 = vmul.f32 %v7106, %v2730
      %v7111 = vmul.f32 %v7102, %v2734
      %v7112 = vmul.f32 %v7107, %v2730
      %v7113 = vmul.f32 %v7103, %v2734
      %v7114 = vmul.f32 %v7108, %v2730
      %v7115 = vmul.f32 %v7104, %v2734
      %v7116 = vmul.f32 %v7109, %v2730
      %v7117 = vmul.f32 %v7105, %v2734
      %7118 = vset.pattern.permute.xlu0 1
      %7119 = vperm.xlu0 %7118, %v6958
      %v7120 = vpop.permute.xlu0 %7119
      %7122 = vset.pattern.permute.xlu0 1
      %7123 = vperm.xlu0 %7122, %v6959
      %v7124 = vpop.permute.xlu0 %7123
      %7126 = vset.pattern.permute.xlu0 1
      %7127 = vperm.xlu0 %7126, %v6960
      %v7128 = vpop.permute.xlu0 %7127
      %7130 = vset.pattern.permute.xlu0 1
      %7131 = vperm.xlu0 %7130, %v6961
      %v7132 = vpop.permute.xlu0 %7131
      %v7134 = vmul.f32 %v7120, %v7110
      %v7135 = vmul.f32 %v7120, %v7111
      %v7136 = vmul.f32 %v7124, %v7112
      %v7137 = vmul.f32 %v7124, %v7113
      %v7138 = vmul.f32 %v7128, %v7114
      %v7139 = vmul.f32 %v7128, %v7115
      %v7140 = vmul.f32 %v7132, %v7116
      %v7141 = vmul.f32 %v7132, %v7117
      %v7142 = vadd.f32 %v7078, %v7134
      %v7143 = vadd.f32 %v7079, %v7135
      %v7144 = vadd.f32 %v7080, %v7136
      %v7145 = vadd.f32 %v7081, %v7137
      %v7146 = vadd.f32 %v7082, %v7138
      %v7147 = vadd.f32 %v7083, %v7139
      %v7148 = vadd.f32 %v7084, %v7140
      %v7149 = vadd.f32 %v7085, %v7141
      %7150 = vrot.lane.b32.xlu0 %v6940, 15
      %v7151 = vpop.permute.xlu0 %7150
      %7152 = vrot.lane.b32.xlu0 %v6944, 15
      %v7153 = vpop.permute.xlu0 %7152
      %7154 = vrot.lane.b32.xlu0 %v6950, 15
      %v7155 = vpop.permute.xlu0 %7154
      %7156 = vrot.lane.b32.xlu0 %v6954, 15
      %v7157 = vpop.permute.xlu0 %7156
      %7158 = vrot.lane.b32.xlu0 %v6942, 15
      %v7159 = vpop.permute.xlu0 %7158
      %7160 = vrot.lane.b32.xlu0 %v6946, 15
      %v7161 = vpop.permute.xlu0 %7160
      %7162 = vrot.lane.b32.xlu0 %v6952, 15
      %v7163 = vpop.permute.xlu0 %7162
      %7164 = vrot.lane.b32.xlu0 %v6956, 15
      %v7165 = vpop.permute.xlu0 %7164
      %v7166 = vsel %vm2877, %v7151, %v7159
      %v7167 = vsel %vm2877, %v7153, %v7161
      %v7168 = vsel %vm2877, %v7155, %v7163
      %v7169 = vsel %vm2877, %v7157, %v7165
      %v7170 = vsel %vm2877, %v7159, %v7151
      %v7171 = vsel %vm2877, %v7161, %v7153
      %v7172 = vsel %vm2877, %v7163, %v7155
      %v7173 = vsel %vm2877, %v7165, %v7157
      %v7174 = vmul.f32 %v7170, %v2904
      %v7175 = vmul.f32 %v7166, %v2908
      %v7176 = vmul.f32 %v7171, %v2904
      %v7177 = vmul.f32 %v7167, %v2908
      %v7178 = vmul.f32 %v7172, %v2904
      %v7179 = vmul.f32 %v7168, %v2908
      %v7180 = vmul.f32 %v7173, %v2904
      %v7181 = vmul.f32 %v7169, %v2908
      %7182 = vset.pattern.permute.xlu0 2
      %7183 = vperm.xlu0 %7182, %v6958
      %v7184 = vpop.permute.xlu0 %7183
      %7186 = vset.pattern.permute.xlu0 2
      %7187 = vperm.xlu0 %7186, %v6959
      %v7188 = vpop.permute.xlu0 %7187
      %7190 = vset.pattern.permute.xlu0 2
      %7191 = vperm.xlu0 %7190, %v6960
      %v7192 = vpop.permute.xlu0 %7191
      %7194 = vset.pattern.permute.xlu0 2
      %7195 = vperm.xlu0 %7194, %v6961
      %v7196 = vpop.permute.xlu0 %7195
      %v7198 = vmul.f32 %v7184, %v7174
      %v7199 = vmul.f32 %v7184, %v7175
      %v7200 = vmul.f32 %v7188, %v7176
      %v7201 = vmul.f32 %v7188, %v7177
      %v7202 = vmul.f32 %v7192, %v7178
      %v7203 = vmul.f32 %v7192, %v7179
      %v7204 = vmul.f32 %v7196, %v7180
      %v7205 = vmul.f32 %v7196, %v7181
      %v7206 = vadd.f32 %v7142, %v7198
      %v7207 = vadd.f32 %v7143, %v7199
      %v7208 = vadd.f32 %v7144, %v7200
      %v7209 = vadd.f32 %v7145, %v7201
      %v7210 = vadd.f32 %v7146, %v7202
      %v7211 = vadd.f32 %v7147, %v7203
      %v7212 = vadd.f32 %v7148, %v7204
      %v7213 = vadd.f32 %v7149, %v7205
      %7214 = vrot.lane.b32.xlu0 %v6940, 1
      %v7215 = vpop.permute.xlu0 %7214
      %7216 = vrot.lane.b32.xlu0 %v6944, 1
      %v7217 = vpop.permute.xlu0 %7216
      %7218 = vrot.lane.b32.xlu0 %v6950, 1
      %v7219 = vpop.permute.xlu0 %7218
      %7220 = vrot.lane.b32.xlu0 %v6954, 1
      %v7221 = vpop.permute.xlu0 %7220
      %7222 = vrot.lane.b32.xlu0 %v6942, 1
      %v7223 = vpop.permute.xlu0 %7222
      %7224 = vrot.lane.b32.xlu0 %v6946, 1
      %v7225 = vpop.permute.xlu0 %7224
      %7226 = vrot.lane.b32.xlu0 %v6952, 1
      %v7227 = vpop.permute.xlu0 %7226
      %7228 = vrot.lane.b32.xlu0 %v6956, 1
      %v7229 = vpop.permute.xlu0 %7228
      %v7230 = vsel %vm3051, %v7215, %v7223
      %v7231 = vsel %vm3051, %v7217, %v7225
      %v7232 = vsel %vm3051, %v7219, %v7227
      %v7233 = vsel %vm3051, %v7221, %v7229
      %v7234 = vsel %vm3051, %v7223, %v7215
      %v7235 = vsel %vm3051, %v7225, %v7217
      %v7236 = vsel %vm3051, %v7227, %v7219
      %v7237 = vsel %vm3051, %v7229, %v7221
      %v7238 = vmul.f32 %v7234, %v3078
      %v7239 = vmul.f32 %v7230, %v3082
      %v7240 = vmul.f32 %v7235, %v3078
      %v7241 = vmul.f32 %v7231, %v3082
      %v7242 = vmul.f32 %v7236, %v3078
      %v7243 = vmul.f32 %v7232, %v3082
      %v7244 = vmul.f32 %v7237, %v3078
      %v7245 = vmul.f32 %v7233, %v3082
      %7246 = vset.pattern.permute.xlu0 3
      %7247 = vperm.xlu0 %7246, %v6958
      %v7248 = vpop.permute.xlu0 %7247
      %7250 = vset.pattern.permute.xlu0 3
      %7251 = vperm.xlu0 %7250, %v6959
      %v7252 = vpop.permute.xlu0 %7251
      %7254 = vset.pattern.permute.xlu0 3
      %7255 = vperm.xlu0 %7254, %v6960
      %v7256 = vpop.permute.xlu0 %7255
      %7258 = vset.pattern.permute.xlu0 3
      %7259 = vperm.xlu0 %7258, %v6961
      %v7260 = vpop.permute.xlu0 %7259
      %v7262 = vmul.f32 %v7248, %v7238
      %v7263 = vmul.f32 %v7248, %v7239
      %v7264 = vmul.f32 %v7252, %v7240
      %v7265 = vmul.f32 %v7252, %v7241
      %v7266 = vmul.f32 %v7256, %v7242
      %v7267 = vmul.f32 %v7256, %v7243
      %v7268 = vmul.f32 %v7260, %v7244
      %v7269 = vmul.f32 %v7260, %v7245
      %v7270 = vadd.f32 %v7206, %v7262
      %v7271 = vadd.f32 %v7207, %v7263
      %v7272 = vadd.f32 %v7208, %v7264
      %v7273 = vadd.f32 %v7209, %v7265
      %v7274 = vadd.f32 %v7210, %v7266
      %v7275 = vadd.f32 %v7211, %v7267
      %v7276 = vadd.f32 %v7212, %v7268
      %v7277 = vadd.f32 %v7213, %v7269
      %7278 = vrot.lane.b32.xlu0 %v6940, 127
      %v7279 = vpop.permute.xlu0 %7278
      %7280 = vrot.lane.b32.xlu0 %v6944, 127
      %v7281 = vpop.permute.xlu0 %7280
      %7282 = vrot.lane.b32.xlu0 %v6950, 127
      %v7283 = vpop.permute.xlu0 %7282
      %7284 = vrot.lane.b32.xlu0 %v6954, 127
      %v7285 = vpop.permute.xlu0 %7284
      %7286 = vrot.lane.b32.xlu0 %v6942, 127
      %v7287 = vpop.permute.xlu0 %7286
      %7288 = vrot.lane.b32.xlu0 %v6946, 127
      %v7289 = vpop.permute.xlu0 %7288
      %7290 = vrot.lane.b32.xlu0 %v6952, 127
      %v7291 = vpop.permute.xlu0 %7290
      %7292 = vrot.lane.b32.xlu0 %v6956, 127
      %v7293 = vpop.permute.xlu0 %7292
      %v7294 = vsel %vm3225, %v7279, %v7287
      %v7295 = vsel %vm3225, %v7281, %v7289
      %v7296 = vsel %vm3225, %v7283, %v7291
      %v7297 = vsel %vm3225, %v7285, %v7293
      %v7298 = vsel %vm3225, %v7287, %v7279
      %v7299 = vsel %vm3225, %v7289, %v7281
      %v7300 = vsel %vm3225, %v7291, %v7283
      %v7301 = vsel %vm3225, %v7293, %v7285
      %v7302 = vmul.f32 %v7294, %v3252
      %v7303 = vmul.f32 %v7298, %v3256
      %v7304 = vmul.f32 %v7295, %v3252
      %v7305 = vmul.f32 %v7299, %v3256
      %v7306 = vmul.f32 %v7296, %v3252
      %v7307 = vmul.f32 %v7300, %v3256
      %v7308 = vmul.f32 %v7297, %v3252
      %v7309 = vmul.f32 %v7301, %v3256
      %7310 = vset.pattern.permute.xlu0 5
      %7311 = vperm.xlu0 %7310, %v6958
      %v7312 = vpop.permute.xlu0 %7311
      %7314 = vset.pattern.permute.xlu0 5
      %7315 = vperm.xlu0 %7314, %v6959
      %v7316 = vpop.permute.xlu0 %7315
      %7318 = vset.pattern.permute.xlu0 5
      %7319 = vperm.xlu0 %7318, %v6960
      %v7320 = vpop.permute.xlu0 %7319
      %7322 = vset.pattern.permute.xlu0 5
      %7323 = vperm.xlu0 %7322, %v6961
      %v7324 = vpop.permute.xlu0 %7323
      %v7326 = vmul.f32 %v7312, %v7302
      %v7327 = vmul.f32 %v7312, %v7303
      %v7328 = vmul.f32 %v7316, %v7304
      %v7329 = vmul.f32 %v7316, %v7305
      %v7330 = vmul.f32 %v7320, %v7306
      %v7331 = vmul.f32 %v7320, %v7307
      %v7332 = vmul.f32 %v7324, %v7308
      %v7333 = vmul.f32 %v7324, %v7309
      %v7334 = vadd.f32 %v7270, %v7326
      %v7335 = vadd.f32 %v7271, %v7327
      %v7336 = vadd.f32 %v7272, %v7328
      %v7337 = vadd.f32 %v7273, %v7329
      %v7338 = vadd.f32 %v7274, %v7330
      %v7339 = vadd.f32 %v7275, %v7331
      %v7340 = vadd.f32 %v7276, %v7332
      %v7341 = vadd.f32 %v7277, %v7333
      %7342 = vrot.lane.b32.xlu0 %v6940, 113
      %v7343 = vpop.permute.xlu0 %7342
      %7344 = vrot.lane.b32.xlu0 %v6944, 113
      %v7345 = vpop.permute.xlu0 %7344
      %7346 = vrot.lane.b32.xlu0 %v6950, 113
      %v7347 = vpop.permute.xlu0 %7346
      %7348 = vrot.lane.b32.xlu0 %v6954, 113
      %v7349 = vpop.permute.xlu0 %7348
      %7350 = vrot.lane.b32.xlu0 %v6942, 113
      %v7351 = vpop.permute.xlu0 %7350
      %7352 = vrot.lane.b32.xlu0 %v6946, 113
      %v7353 = vpop.permute.xlu0 %7352
      %7354 = vrot.lane.b32.xlu0 %v6952, 113
      %v7355 = vpop.permute.xlu0 %7354
      %7356 = vrot.lane.b32.xlu0 %v6956, 113
      %v7357 = vpop.permute.xlu0 %7356
      %v7358 = vsel %vm3399, %v7343, %v7351
      %v7359 = vsel %vm3399, %v7345, %v7353
      %v7360 = vsel %vm3399, %v7347, %v7355
      %v7361 = vsel %vm3399, %v7349, %v7357
      %v7362 = vsel %vm3399, %v7351, %v7343
      %v7363 = vsel %vm3399, %v7353, %v7345
      %v7364 = vsel %vm3399, %v7355, %v7347
      %v7365 = vsel %vm3399, %v7357, %v7349
      %v7366 = vmul.f32 %v7358, %v3426
      %v7367 = vmul.f32 %v7362, %v3430
      %v7368 = vmul.f32 %v7359, %v3426
      %v7369 = vmul.f32 %v7363, %v3430
      %v7370 = vmul.f32 %v7360, %v3426
      %v7371 = vmul.f32 %v7364, %v3430
      %v7372 = vmul.f32 %v7361, %v3426
      %v7373 = vmul.f32 %v7365, %v3430
      %7374 = vset.pattern.permute.xlu0 6
      %7375 = vperm.xlu0 %7374, %v6958
      %v7376 = vpop.permute.xlu0 %7375
      %7378 = vset.pattern.permute.xlu0 6
      %7379 = vperm.xlu0 %7378, %v6959
      %v7380 = vpop.permute.xlu0 %7379
      %7382 = vset.pattern.permute.xlu0 6
      %7383 = vperm.xlu0 %7382, %v6960
      %v7384 = vpop.permute.xlu0 %7383
      %7386 = vset.pattern.permute.xlu0 6
      %7387 = vperm.xlu0 %7386, %v6961
      %v7388 = vpop.permute.xlu0 %7387
      %v7390 = vmul.f32 %v7376, %v7366
      %v7391 = vmul.f32 %v7376, %v7367
      %v7392 = vmul.f32 %v7380, %v7368
      %v7393 = vmul.f32 %v7380, %v7369
      %v7394 = vmul.f32 %v7384, %v7370
      %v7395 = vmul.f32 %v7384, %v7371
      %v7396 = vmul.f32 %v7388, %v7372
      %v7397 = vmul.f32 %v7388, %v7373
      %v7398 = vadd.f32 %v7334, %v7390
      %v7399 = vadd.f32 %v7335, %v7391
      %v7400 = vadd.f32 %v7336, %v7392
      %v7401 = vadd.f32 %v7337, %v7393
      %v7402 = vadd.f32 %v7338, %v7394
      %v7403 = vadd.f32 %v7339, %v7395
      %v7404 = vadd.f32 %v7340, %v7396
      %v7405 = vadd.f32 %v7341, %v7397
      %7406 = vrot.lane.b32.xlu0 %v6940, 112
      %v7407 = vpop.permute.xlu0 %7406
      %7408 = vrot.lane.b32.xlu0 %v6944, 112
      %v7409 = vpop.permute.xlu0 %7408
      %7410 = vrot.lane.b32.xlu0 %v6950, 112
      %v7411 = vpop.permute.xlu0 %7410
      %7412 = vrot.lane.b32.xlu0 %v6954, 112
      %v7413 = vpop.permute.xlu0 %7412
      %7414 = vrot.lane.b32.xlu0 %v6942, 112
      %v7415 = vpop.permute.xlu0 %7414
      %7416 = vrot.lane.b32.xlu0 %v6946, 112
      %v7417 = vpop.permute.xlu0 %7416
      %7418 = vrot.lane.b32.xlu0 %v6952, 112
      %v7419 = vpop.permute.xlu0 %7418
      %7420 = vrot.lane.b32.xlu0 %v6956, 112
      %v7421 = vpop.permute.xlu0 %7420
      %v7422 = vsel %vm3573, %v7407, %v7415
      %v7423 = vsel %vm3573, %v7409, %v7417
      %v7424 = vsel %vm3573, %v7411, %v7419
      %v7425 = vsel %vm3573, %v7413, %v7421
      %v7426 = vsel %vm3573, %v7415, %v7407
      %v7427 = vsel %vm3573, %v7417, %v7409
      %v7428 = vsel %vm3573, %v7419, %v7411
      %v7429 = vsel %vm3573, %v7421, %v7413
      %v7430 = vmul.f32 %v7422, %v3600
      %v7431 = vmul.f32 %v7426, %v3604
      %v7432 = vmul.f32 %v7423, %v3600
      %v7433 = vmul.f32 %v7427, %v3604
      %v7434 = vmul.f32 %v7424, %v3600
      %v7435 = vmul.f32 %v7428, %v3604
      %v7436 = vmul.f32 %v7425, %v3600
      %v7437 = vmul.f32 %v7429, %v3604
      %7438 = vset.pattern.permute.xlu0 7
      %7439 = vperm.xlu0 %7438, %v6958
      %v7440 = vpop.permute.xlu0 %7439
      %7442 = vset.pattern.permute.xlu0 7
      %7443 = vperm.xlu0 %7442, %v6959
      %v7444 = vpop.permute.xlu0 %7443
      %7446 = vset.pattern.permute.xlu0 7
      %7447 = vperm.xlu0 %7446, %v6960
      %v7448 = vpop.permute.xlu0 %7447
      %7450 = vset.pattern.permute.xlu0 7
      %7451 = vperm.xlu0 %7450, %v6961
      %v7452 = vpop.permute.xlu0 %7451
      %v7454 = vmul.f32 %v7440, %v7430
      %v7455 = vmul.f32 %v7440, %v7431
      %v7456 = vmul.f32 %v7444, %v7432
      %v7457 = vmul.f32 %v7444, %v7433
      %v7458 = vmul.f32 %v7448, %v7434
      %v7459 = vmul.f32 %v7448, %v7435
      %v7460 = vmul.f32 %v7452, %v7436
      %v7461 = vmul.f32 %v7452, %v7437
      %v7462 = vadd.f32 %v7398, %v7454
      %v7463 = vadd.f32 %v7399, %v7455
      %v7464 = vadd.f32 %v7400, %v7456
      %v7465 = vadd.f32 %v7401, %v7457
      %v7466 = vadd.f32 %v7402, %v7458
      %v7467 = vadd.f32 %v7403, %v7459
      %v7468 = vadd.f32 %v7404, %v7460
      %v7469 = vadd.f32 %v7405, %v7461
      %7470 = vrot.lane.b32.xlu0 %v6940, 111
      %v7471 = vpop.permute.xlu0 %7470
      %7472 = vrot.lane.b32.xlu0 %v6944, 111
      %v7473 = vpop.permute.xlu0 %7472
      %7474 = vrot.lane.b32.xlu0 %v6950, 111
      %v7475 = vpop.permute.xlu0 %7474
      %7476 = vrot.lane.b32.xlu0 %v6954, 111
      %v7477 = vpop.permute.xlu0 %7476
      %7478 = vrot.lane.b32.xlu0 %v6942, 111
      %v7479 = vpop.permute.xlu0 %7478
      %7480 = vrot.lane.b32.xlu0 %v6946, 111
      %v7481 = vpop.permute.xlu0 %7480
      %7482 = vrot.lane.b32.xlu0 %v6952, 111
      %v7483 = vpop.permute.xlu0 %7482
      %7484 = vrot.lane.b32.xlu0 %v6956, 111
      %v7485 = vpop.permute.xlu0 %7484
      %v7486 = vsel %vm3747, %v7471, %v7479
      %v7487 = vsel %vm3747, %v7473, %v7481
      %v7488 = vsel %vm3747, %v7475, %v7483
      %v7489 = vsel %vm3747, %v7477, %v7485
      %v7490 = vsel %vm3747, %v7479, %v7471
      %v7491 = vsel %vm3747, %v7481, %v7473
      %v7492 = vsel %vm3747, %v7483, %v7475
      %v7493 = vsel %vm3747, %v7485, %v7477
      %v7494 = vmul.f32 %v7486, %v3774
      %v7495 = vmul.f32 %v7490, %v3778
      %v7496 = vmul.f32 %v7487, %v3774
      %v7497 = vmul.f32 %v7491, %v3778
      %v7498 = vmul.f32 %v7488, %v3774
      %v7499 = vmul.f32 %v7492, %v3778
      %v7500 = vmul.f32 %v7489, %v3774
      %v7501 = vmul.f32 %v7493, %v3778
      %7502 = vset.pattern.permute.xlu0 8
      %7503 = vperm.xlu0 %7502, %v6958
      %v7504 = vpop.permute.xlu0 %7503
      %7506 = vset.pattern.permute.xlu0 8
      %7507 = vperm.xlu0 %7506, %v6959
      %v7508 = vpop.permute.xlu0 %7507
      %7510 = vset.pattern.permute.xlu0 8
      %7511 = vperm.xlu0 %7510, %v6960
      %v7512 = vpop.permute.xlu0 %7511
      %7514 = vset.pattern.permute.xlu0 8
      %7515 = vperm.xlu0 %7514, %v6961
      %v7516 = vpop.permute.xlu0 %7515
      %v7518 = vmul.f32 %v7504, %v7494
      %v7519 = vmul.f32 %v7504, %v7495
      %v7520 = vmul.f32 %v7508, %v7496
      %v7521 = vmul.f32 %v7508, %v7497
      %v7522 = vmul.f32 %v7512, %v7498
      %v7523 = vmul.f32 %v7512, %v7499
      %v7524 = vmul.f32 %v7516, %v7500
      %v7525 = vmul.f32 %v7516, %v7501
      %v7526 = vadd.f32 %v7462, %v7518
      %v7527 = vadd.f32 %v7463, %v7519
      %v7528 = vadd.f32 %v7464, %v7520
      %v7529 = vadd.f32 %v7465, %v7521
      %v7530 = vadd.f32 %v7466, %v7522
      %v7531 = vadd.f32 %v7467, %v7523
      %v7532 = vadd.f32 %v7468, %v7524
      %v7533 = vadd.f32 %v7469, %v7525
      %v7534 = vld [vmem:[%s57] sm:$0xff]
      %v7535 = vld [vmem:[%s57 + $0x8] sm:$0xff]
      %v7536 = vld [vmem:[%s13] sm:$0xff]
      %v7537 = vld [vmem:[%s13 + $0x8] sm:$0xff]
      %v7538 = vld [vmem:[%s53] sm:$0xf]
      %v7539 = vld [vmem:[%s53 + $0x4] sm:$0xf]
      %v7540 = vld [vmem:[%s55] sm:$0xff]
      %v7541 = vld [vmem:[%s55 + $0x8] sm:$0xff]
      %v7542 = vmul.f32 %v3877, %v3877
      %v7543 = vmul.f32 %v3878, %v3878
      %v7544 = vmul.f32 %v3879, %v3879
      %v7545 = vmul.f32 %v3880, %v3880
      %v7546 = vadd.f32 %v7542, %v7543
      %7547 = vadd.xlane.f32.xlu0 %v7546
      %v7548 = vpop.xlane.xlu0 %7547
      %v7549 = vadd.f32 %v7544, %v7545
      %7550 = vadd.xlane.f32.xlu0 %v7549
      %v7551 = vpop.xlane.xlu0 %7550
      %v7552 = vadd.f32 %v7548, 1e-24
      %v7553 = vadd.f32 %v7551, 1e-24
      %v7554 = vrsqrt.pop %v7552
      %v7555 = vrsqrt.pop %v7553
      %v7556 = vmul.f32 %v3877, %v7554
      %v7557 = vmul.f32 %v3878, %v7554
      %v7558 = vmul.f32 %v3879, %v7555
      %v7559 = vmul.f32 %v3880, %v7555
      %v7560 = vmul.f32 %v7526, %v7526
      %v7561 = vmul.f32 %v7527, %v7527
      %v7562 = vmul.f32 %v7528, %v7528
      %v7563 = vmul.f32 %v7529, %v7529
      %v7564 = vadd.f32 %v7560, %v7561
      %7565 = vadd.xlane.f32.xlu0 %v7564
      %v7566 = vpop.xlane.xlu0 %7565
      %v7567 = vadd.f32 %v7562, %v7563
      %7568 = vadd.xlane.f32.xlu0 %v7567
      %v7569 = vpop.xlane.xlu0 %7568
      %v7570 = vadd.f32 %v7566, 1e-24
      %v7571 = vadd.f32 %v7569, 1e-24
      %v7572 = vrsqrt.pop %v7570
      %v7573 = vrsqrt.pop %v7571
      %v7574 = vmul.f32 %v7526, %v7572
      %v7575 = vmul.f32 %v7527, %v7572
      %v7576 = vmul.f32 %v7528, %v7573
      %v7577 = vmul.f32 %v7529, %v7573
      %v7578 = vpack.c.bf16 %v7558, %v7556
      %v7579 = vpack.c.bf16 %v7559, %v7557
      %v7580 = vpack.c.bf16 %v7576, %v7574
      %v7581 = vpack.c.bf16 %v7577, %v7575
      %7582 = vmatprep.subr.bf16.mxu0 %v7581
      %7583 = vmatpush1.bf16.xpose.msra.mxu0 %v7580
      %7584 = vmatprep.subr.bf16.mxu0 0
      %7585 = vmatpush1.bf16.xpose.msra.mxu0 0
      %7586 = vmatprep.subr.bf16.mxu0 0
      %7587 = vmatpush1.bf16.xpose.msra.mxu0 0
      %7588 = vmatprep.subr.bf16.mxu0 0
      %7589 = vmatpush1.bf16.xpose.msra.mxu0 0
      %7590 = vmatprep.subr.bf16.mxu0 0
      %7591 = vmatpush1.bf16.xpose.msra.mxu0 0
      %7592 = vmatprep.subr.bf16.mxu0 0
      %7593 = vmatpush1.bf16.xpose.msra.mxu0 0
      %7594 = vmatprep.subr.bf16.mxu0 0
      %7595 = vmatpush1.bf16.xpose.msra.mxu0 0
      %7596 = vmatprep.subr.bf16.mxu0 0
      %7597 = vmatpush1.bf16.xpose.msra.mxu0 0
      %7598 = vmatprep.subr.bf16.mxu0 0
      %7599 = vmatpush1.bf16.xpose.msra.mxu0 0
      %7600 = vmatprep.subr.bf16.mxu0 0
      %7601 = vmatpush1.bf16.xpose.msra.mxu0 0
      %7602 = vmatprep.subr.bf16.mxu0 0
      %7603 = vmatpush1.bf16.xpose.msra.mxu0 0
      %7604 = vmatprep.subr.bf16.mxu0 0
      %7605 = vmatpush1.bf16.xpose.msra.mxu0 0
      %7606 = vmatprep.subr.bf16.mxu0 0
      %7607 = vmatpush1.bf16.xpose.msra.mxu0 0
      %7608 = vmatprep.subr.bf16.mxu0 0
      %7609 = vmatpush1.bf16.xpose.msra.mxu0 0
      %7610 = vmatprep.subr.bf16.mxu0 0
      %7611 = vmatpush1.bf16.xpose.msra.mxu0 0
      %7612 = vmatprep.subr.bf16.mxu0 0
      %7613 = vmatpush1.bf16.xpose.msra.mxu0 0
      %7614 = vmatprep.mubr.bf16.mxu0 %v7579
      %7615 = vmatmul.mubr.bf16.gmra.mrb[0].mxu0 %v7578
      %v7616 = vpop.f32.mrb[0].mxu0
      %v7617 = vadd.f32 0.0, %v7616
      %v7618 = vpop.f32.mrb[0].mxu0
      %v7619 = vpop.f32.mrb[0].mxu0
      %v7620 = vadd.f32 0.0, %v7619
      %v7621 = vpop.f32.mrb[0].mxu0
      %7622 = vdwg.mxu0
      %7624 = vset.pattern.permute.xlu0 0
      %7625 = vperm.xlu0 %7624, %v7534
      %v7626 = vpop.permute.xlu0 %7625
      %7629 = vset.pattern.permute.xlu0 0
      %7630 = vperm.xlu0 %7629, %v7535
      %v7631 = vpop.permute.xlu0 %7630
      %v7633 = vmul.f32 %v7617, %v7626
      %v7634 = vmul.f32 %v7620, %v7631
      %v7635 = vadd.f32 %v7633, %v7536
      %v7636 = vadd.f32 %v7634, %v7537
      %v7637 = vsel %vm1222, %v7635, -inf
      %7638 = vmax.xlane.f32.xlu0 %v7637
      %v7639 = vpop.xlane.xlu0 %7638
      %v7640 = vsel %vm1222, %v7636, -inf
      %7641 = vmax.xlane.f32.xlu0 %v7640
      %v7642 = vpop.xlane.xlu0 %7641
      %v7643 = vsub.f32 %v7635, %v7639
      %v7644 = vsub.f32 %v7636, %v7642
      %v7645 = vmul.f32 %v7643, 1.442695
      %v7646 = vpow.pop %v7645
      %v7647 = vmul.f32 %v7644, 1.442695
      %v7648 = vpow.pop %v7647
      %v7649 = vsel %vm1222, %v7646, 0.0
      %7650 = vadd.xlane.f32.xlu0 %v7649
      %v7651 = vpop.xlane.xlu0 %7650
      %v7652 = vsel %vm1222, %v7648, 0.0
      %7653 = vadd.xlane.f32.xlu0 %v7652
      %v7654 = vpop.xlane.xlu0 %7653
      %v7655 = vrcp.pop %v7651
      %v7656 = vrcp.pop %v7654
      %v7657 = vmul.f32 %v7646, %v7655
      %v7658 = vmul.f32 %v7648, %v7656
      %v7659 = vpack.c.bf16 %v7658, %v7657
      %v7660 = vpack.c.bf16 %v7532, %v7530
      %v7661 = vpack.c.bf16 %v7533, %v7531
      %v7663 = vsel %vm1222, %v7659, 0
      %7665 = vmatprep.subr.bf16.mxu0 %v7661
      %7666 = vmatpush1.bf16.msra.mxu0 %v7660
      %7667 = vmatprep.subr.bf16.mxu0 0
      %7668 = vmatpush1.bf16.msra.mxu0 0
      %7669 = vmatprep.subr.bf16.mxu0 0
      %7670 = vmatpush1.bf16.msra.mxu0 0
      %7671 = vmatprep.subr.bf16.mxu0 0
      %7672 = vmatpush1.bf16.msra.mxu0 0
      %7673 = vmatprep.subr.bf16.mxu0 0
      %7674 = vmatpush1.bf16.msra.mxu0 0
      %7675 = vmatprep.subr.bf16.mxu0 0
      %7676 = vmatpush1.bf16.msra.mxu0 0
      %7677 = vmatprep.subr.bf16.mxu0 0
      %7678 = vmatpush1.bf16.msra.mxu0 0
      %7679 = vmatprep.subr.bf16.mxu0 0
      %7680 = vmatpush1.bf16.msra.mxu0 0
      %7681 = vmatprep.subr.bf16.mxu0 0
      %7682 = vmatpush1.bf16.msra.mxu0 0
      %7683 = vmatprep.subr.bf16.mxu0 0
      %7684 = vmatpush1.bf16.msra.mxu0 0
      %7685 = vmatprep.subr.bf16.mxu0 0
      %7686 = vmatpush1.bf16.msra.mxu0 0
      %7687 = vmatprep.subr.bf16.mxu0 0
      %7688 = vmatpush1.bf16.msra.mxu0 0
      %7689 = vmatprep.subr.bf16.mxu0 0
      %7690 = vmatpush1.bf16.msra.mxu0 0
      %7691 = vmatprep.subr.bf16.mxu0 0
      %7692 = vmatpush1.bf16.msra.mxu0 0
      %7693 = vmatprep.subr.bf16.mxu0 0
      %7694 = vmatpush1.bf16.msra.mxu0 0
      %7695 = vmatprep.subr.bf16.mxu0 0
      %7696 = vmatpush1.bf16.msra.mxu0 0
      %7697 = vmatprep.mubr.bf16.mxu0 0
      %7698 = vmatmul.mubr.bf16.gmra.mrb[0].mxu0 %v7663
      %v7699 = vpop.f32.mrb[0].mxu0
      %v7700 = vadd.f32 0.0, %v7699
      %v7701 = vpop.f32.mrb[0].mxu0
      %v7702 = vadd.f32 0.0, %v7701
      %v7703 = vpop.f32.mrb[0].mxu0
      %v7704 = vadd.f32 0.0, %v7703
      %v7705 = vpop.f32.mrb[0].mxu0
      %v7706 = vadd.f32 0.0, %v7705
      %7707 = vdwg.mxu0
      %v7708 = vpack.c.bf16 %v7704, %v7700
      %v7709 = vpack.c.bf16 %v7706, %v7702
      %7711 = vset.pattern.permute.xlu0 0
      %7712 = vperm.xlu0 %7711, %v7540
      %v7713 = vpop.permute.xlu0 %7712
      %7716 = vset.pattern.permute.xlu0 0
      %7717 = vperm.xlu0 %7716, %v7541
      %v7718 = vpop.permute.xlu0 %7717
      %v7722 = vunpack.c.l.b16 %v7538
      %v7723 = vunpack.c.l.b16 %v7539
      %v7724 = vpack.c.b16 %v7723, %v7722
      %v7726 = vsel %vm1222, %v7724, 0
      %7728 = vmatprep.subr.bf16.mxu0 %v7709
      %7729 = vmatpush1.bf16.msra.mxu0 %v7708
      %7730 = vmatprep.subr.bf16.mxu0 0
      %7731 = vmatpush1.bf16.msra.mxu0 0
      %7732 = vmatprep.subr.bf16.mxu0 0
      %7733 = vmatpush1.bf16.msra.mxu0 0
      %7734 = vmatprep.subr.bf16.mxu0 0
      %7735 = vmatpush1.bf16.msra.mxu0 0
      %7736 = vmatprep.subr.bf16.mxu0 0
      %7737 = vmatpush1.bf16.msra.mxu0 0
      %7738 = vmatprep.subr.bf16.mxu0 0
      %7739 = vmatpush1.bf16.msra.mxu0 0
      %7740 = vmatprep.subr.bf16.mxu0 0
      %7741 = vmatpush1.bf16.msra.mxu0 0
      %7742 = vmatprep.subr.bf16.mxu0 0
      %7743 = vmatpush1.bf16.msra.mxu0 0
      %7744 = vmatprep.subr.bf16.mxu0 0
      %7745 = vmatpush1.bf16.msra.mxu0 0
      %7746 = vmatprep.subr.bf16.mxu0 0
      %7747 = vmatpush1.bf16.msra.mxu0 0
      %7748 = vmatprep.subr.bf16.mxu0 0
      %7749 = vmatpush1.bf16.msra.mxu0 0
      %7750 = vmatprep.subr.bf16.mxu0 0
      %7751 = vmatpush1.bf16.msra.mxu0 0
      %7752 = vmatprep.subr.bf16.mxu0 0
      %7753 = vmatpush1.bf16.msra.mxu0 0
      %7754 = vmatprep.subr.bf16.mxu0 0
      %7755 = vmatpush1.bf16.msra.mxu0 0
      %7756 = vmatprep.subr.bf16.mxu0 0
      %7757 = vmatpush1.bf16.msra.mxu0 0
      %7758 = vmatprep.subr.bf16.mxu0 0
      %7759 = vmatpush1.bf16.msra.mxu0 0
      %7760 = vmatprep.mubr.bf16.mxu0 0
      %7761 = vmatmul.mubr.bf16.gmra.mrb[0].mxu0 %v7726
      %v7762 = vpop.f32.mrb[0].mxu0
      %v7763 = vadd.f32 %v7713, %v7762
      %v7764 = vpop.f32.mrb[0].mxu0
      %v7765 = vadd.f32 %v7713, %v7764
      %v7766 = vpop.f32.mrb[0].mxu0
      %v7767 = vadd.f32 %v7718, %v7766
      %v7768 = vpop.f32.mrb[0].mxu0
      %v7769 = vadd.f32 %v7718, %v7768
      %7770 = vdwg.mxu0
      %v7771 = vld [vmem:[%s69] sm:$0xff]
      %v7772 = vld [vmem:[%s69 + $0x8] sm:$0xff]
      %7774 = vset.pattern.permute.xlu0 0
      %7775 = vperm.xlu0 %7774, %v7771
      %v7776 = vpop.permute.xlu0 %7775
      %7779 = vset.pattern.permute.xlu0 0
      %7780 = vperm.xlu0 %7779, %v7772
      %v7781 = vpop.permute.xlu0 %7780
      %v7783 = vmul.f32 %v7763, %v7776
      %v7784 = vmul.f32 %v7765, %v7776
      %v7785 = vmul.f32 %v7767, %v7781
      %v7786 = vmul.f32 %v7769, %v7781
      %v7787 = vld [vmem:[%s71] sm:$0xff]
      %v7788 = vld [vmem:[%s71 + $0x8] sm:$0xff]
      %7790 = vset.pattern.permute.xlu0 0
      %7791 = vperm.xlu0 %7790, %v7787
      %v7792 = vpop.permute.xlu0 %7791
      %7795 = vset.pattern.permute.xlu0 0
      %7796 = vperm.xlu0 %7795, %v7788
      %v7797 = vpop.permute.xlu0 %7796
      %v7799 = vmul.f32 %v1120, %v7792
      %v7800 = vmul.f32 %v1121, %v7792
      %v7801 = vmul.f32 %v1122, %v7797
      %v7802 = vmul.f32 %v1123, %v7797
      %v7803 = vadd.f32 %v7783, %v7799
      %v7804 = vadd.f32 %v7784, %v7800
      %v7805 = vadd.f32 %v7785, %v7801
      %v7806 = vadd.f32 %v7786, %v7802
      %7807 = vst [vmem:[%s1118] sm:$0xff] %v7803
      %7808 = vst [vmem:[%s1118 + $0x8] sm:$0xff] %v7804
      %7809 = vst [vmem:[%s1118 + $0x10] sm:$0xff] %v7805
      %7810 = vst [vmem:[%s1118 + $0x18] sm:$0xff] %v7806
      %p7811 = scmp.lt.s32.totalorder %s84, 1
      %s7812 = scalar_select %p7811, %s84, 1
      %s7813 = smul.addr %s7812, 4
      %s7814 = smul.addr %s7813, 8
      %s7815 = scalar_lea.vmem %s73, %s7814
      // Predicated region
      $region165: #{block_forward.1} parent=163 // pred_check
        %p7816 = pneg %p868
      $region166: #{block_forward.1} parent=163 // pred_check_branch
        %7818 = sbr.rel (%p7816) target = $region168
      $region167: #{block_forward.1} parent=163 // pred_region
        _
      $region168: #{block_forward.1} parent=163 // pred_fallthru
        _
    $region164: #{block_forward.1} parent=5 // pred_fallthru
      _
    %p7819 = scmp.le.s32.totalorder 2, %s79
    // Predicated region
    $region169: #{block_forward.1} parent=5 // pred_check
      %p7820 = pneg %p7819
    $region170: #{block_forward.1} parent=5 // pred_check_branch
      %7822 = sbr.rel (%p7820) target = $region172
    $region171: #{block_forward.1} parent=5 // pred_region
      %s7823 = ssub.s32 %s79, 2
      // Predicated region
      $region173: #{block_forward.1} parent=171 // pred_check
        %p7824 = pneg %p874
      $region174: #{block_forward.1} parent=171 // pred_check_branch
        %7826 = sbr.rel (%p7824) target = $region176
      $region175: #{block_forward.1} parent=171 // pred_region
        %p7827 = scmp.lt.s32.totalorder %s85, 1
        %s7828 = scalar_select %p7827, %s85, 1
        %s7829 = smul.addr %s7828, 4
        %s7830 = smul.addr %s7829, 8
        %s7831 = scalar_lea.vmem %s73, %s7830
      $region176: #{block_forward.1} parent=171 // pred_fallthru
        _
    $region172: #{block_forward.1} parent=5 // pred_fallthru
      _
  $region6: #{block_forward.1} parent=0 // loop_footer
    %s83 = sadd.s32 1, %s79
  $region7: #{block_forward.1} parent=0 // loop_footer_branch
    %78 = sbr.rel target = $region3
  $region8: #{block_forward.1} parent=0 // loop_exit
    _

</llo_original>
